<compile_context>
chip_gen: v5e
topology: v5e:2x2
jax: 0.10.0
libtpu: 0.0.40
codegen_flags: <defaults>
</compile_context>

<pallas_src>
import functools

import jax
import jax.numpy as jnp
from jax.experimental import pallas as pl
from jax.experimental.pallas import tpu as pltpu

# ----- logical (rubert-tiny2) dims -------------------------------------------
H_LOG = 312
N_HEADS = 12
DH_LOG = H_LOG // N_HEADS        # 26
I_LOG = 600
N_LAYERS = 3
LN_EPS = 1e-12

# ----- lane-padded dims (zero-padded; reductions use logical extents) --------
H_PAD = 384                      # 3 * 128
DH_PAD = 32
I_PAD = 640                      # 5 * 128
assert N_HEADS * DH_PAD == H_PAD

_COMPILER_PARAMS = pltpu.CompilerParams(
    dimension_semantics=("parallel",),        # 2 TCs on v7x; no-op on v5e/v6e
    vmem_limit_bytes=32 * 1024 * 1024,
)


# --------------------------- in-kernel helpers --------------------------------

def _ln_rows(x, g, b):
    """LayerNorm over the logical H_LOG columns of a (rows, H_PAD) slab.

    Padded columns of `x` are zero by construction; gamma/beta are zero there,
    so the output keeps zero padding.
    """
    mean = jnp.sum(x, axis=-1, keepdims=True) * (1.0 / H_LOG)
    lane = jax.lax.broadcasted_iota(jnp.int32, (1, H_PAD), 1)
    col_mask = (lane < H_LOG).astype(jnp.float32)
    xc = (x - mean) * col_mask
    var = jnp.sum(xc * xc, axis=-1, keepdims=True) * (1.0 / H_LOG)
    y = xc * jax.lax.rsqrt(var + LN_EPS)
    return y * g + b


def _gelu_tanh(x):
    # TODO(synk): BERT uses erf-GELU; tanh approximation differs by <1e-3.
    c = jnp.float32(0.7978845608028654)  # sqrt(2/pi)
    return 0.5 * x * (1.0 + jnp.tanh(c * (x + 0.044715 * x * x * x)))


# --------------------------- Pallas kernels -----------------------------------

def _embed_ln_kernel(x_ref, g_ref, b_ref, o_ref):
    """Pure LayerNorm (no residual read) for the embedding output."""
    o_ref[...] = _ln_rows(x_ref[...], g_ref[...], b_ref[...]).astype(o_ref.dtype)


def _attn_layer_kernel(x_ref, wqkv_ref, bqkv_ref, mask_ref,
                       wo_ref, bo_ref, g_ref, b_ref, o_ref, *, scale):
    """Fused QKV projection + MHA + output projection + residual + LayerNorm.

    One grid step = one batch element; heads are processed with small 2-D
    matmuls and the output projection is accumulated per head, so the final
    store is a lane-dense (S, H_PAD) slab.
    """
    x = x_ref[...]                                        # (S, H_PAD) f32
    xb = x.astype(jnp.bfloat16)
    qkv = jnp.dot(xb, wqkv_ref[...], preferred_element_type=jnp.float32)
    qkv = qkv + bqkv_ref[...]                             # (S, 3*H_PAD) f32
    mask = mask_ref[...]                                  # (1, S) additive

    acc = jnp.zeros((x.shape[0], H_PAD), jnp.float32)
    for h in range(N_HEADS):
        q = qkv[:, h * DH_PAD:(h + 1) * DH_PAD]
        k = qkv[:, H_PAD + h * DH_PAD: H_PAD + (h + 1) * DH_PAD]
        v = qkv[:, 2 * H_PAD + h * DH_PAD: 2 * H_PAD + (h + 1) * DH_PAD]
        s = jnp.einsum("qd,kd->qk",
                       q.astype(jnp.bfloat16), k.astype(jnp.bfloat16),
                       preferred_element_type=jnp.float32) * scale
        s = s + mask
        s = s - jnp.max(s, axis=-1, keepdims=True)
        p = jnp.exp(s)
        p = p * pl.reciprocal(jnp.sum(p, axis=-1, keepdims=True), approx=True)
        ctx = jnp.dot(p.astype(jnp.bfloat16), v.astype(jnp.bfloat16),
                      preferred_element_type=jnp.float32)     # (S, DH_PAD)
        # Accumulate the output projection per head: sum_h ctx_h @ Wo[h].
        acc = acc + jnp.dot(ctx.astype(jnp.bfloat16),
                            wo_ref[h * DH_PAD:(h + 1) * DH_PAD, :],
                            preferred_element_type=jnp.float32)

    y = acc + bo_ref[...] + x                             # bias + residual
    o_ref[...] = _ln_rows(y, g_ref[...], b_ref[...]).astype(o_ref.dtype)


def _ffn_ln_kernel(x_ref, wi_ref, bi_ref, wo_ref, bo_ref, g_ref, b_ref, o_ref):
    """Fused FFN: GELU(x@Wi+bi) @ Wo + bo, residual, LayerNorm (in VMEM)."""
    x = x_ref[...]                                        # (tm, H_PAD) f32
    mid = jnp.dot(x.astype(jnp.bfloat16), wi_ref[...],
                  preferred_element_type=jnp.float32) + bi_ref[...]
    mid = _gelu_tanh(mid)                                 # f32 epilogue
    y = jnp.dot(mid.astype(jnp.bfloat16), wo_ref[...],
                preferred_element_type=jnp.float32) + bo_ref[...]
    o_ref[...] = _ln_rows(y + x, g_ref[...], b_ref[...]).astype(o_ref.dtype)


def _cls_head_kernel(x_ref, w1_ref, b1_ref, w2_ref, b2_ref, w3_ref, b3_ref, o_ref):
    """Fused relu(fc1)->relu(fc2)->relu(fc3) head; intermediates stay in VMEM."""
    def dense_relu(x, w_ref, b_ref):
        y = jnp.dot(x.astype(jnp.bfloat16), w_ref[...],
                    preferred_element_type=jnp.float32) + b_ref[...]
        return jnp.maximum(y, 0.0)

    x = dense_relu(x_ref[...], w1_ref, b1_ref)
    x = dense_relu(x, w2_ref, b2_ref)
    # NOTE: ReLU on the final logits matches the PyTorch reference (F.relu(fc3(x))).
    x = dense_relu(x, w3_ref, b3_ref)
    o_ref[...] = x.astype(o_ref.dtype)


# --------------------------- pallas_call wrappers ------------------------------

def _row_tile(m):
    for tm in (512, 256, 128):
        if m % tm == 0:
            return tm
    return m


def embed_layernorm(x, g, b):
    M, Hp = x.shape
    tm = _row_tile(M)
    return pl.pallas_call(
        _embed_ln_kernel,
        out_shape=jax.ShapeDtypeStruct((M, Hp), jnp.float32),
        grid=(M // tm,),
        in_specs=[
            pl.BlockSpec((tm, Hp), lambda i: (i, 0)),
            pl.BlockSpec((1, Hp), lambda i: (0, 0)),
            pl.BlockSpec((1, Hp), lambda i: (0, 0)),
        ],
        out_specs=pl.BlockSpec((tm, Hp), lambda i: (i, 0)),
        compiler_params=_COMPILER_PARAMS,
    )(x, g, b)


def attention_layer(h2, lyr, add_mask, B, S):
    h3 = h2.reshape(B, S, H_PAD)
    scale = 1.0 / float(DH_LOG) ** 0.5          # scale uses the logical head dim
    out = pl.pallas_call(
        functools.partial(_attn_layer_kernel, scale=scale),
        out_shape=jax.ShapeDtypeStruct((B, S, H_PAD), jnp.float32),
        grid=(B,),
        in_specs=[
            pl.BlockSpec((None, S, H_PAD), lambda i: (i, 0, 0)),     # h block
            pl.BlockSpec((H_PAD, 3 * H_PAD), lambda i: (0, 0)),      # Wqkv (bf16, resident)
            pl.BlockSpec((1, 3 * H_PAD), lambda i: (0, 0)),          # bqkv
            pl.BlockSpec((None, 1, S), lambda i: (i, 0, 0)),         # additive mask
            pl.BlockSpec((H_PAD, H_PAD), lambda i: (0, 0)),          # Wo (bf16, resident)
            pl.BlockSpec((1, H_PAD), lambda i: (0, 0)),              # bo
            pl.BlockSpec((1, H_PAD), lambda i: (0, 0)),              # ln1 gamma
            pl.BlockSpec((1, H_PAD), lambda i: (0, 0)),              # ln1 beta
        ],
        out_specs=pl.BlockSpec((None, S, H_PAD), lambda i: (i, 0, 0)),
        compiler_params=_COMPILER_PARAMS,
    )(h3, lyr["wqkv"], lyr["bqkv"], add_mask,
      lyr["wo"], lyr["bo"], lyr["ln1_g"], lyr["ln1_b"])
    return out.reshape(B * S, H_PAD)


def ffn_layer(h2, lyr):
    M, Hp = h2.shape
    tm = _row_tile(M)
    return pl.pallas_call(
        _ffn_ln_kernel,
        out_shape=jax.ShapeDtypeStruct((M, Hp), jnp.float32),
        grid=(M // tm,),
        in_specs=[
            pl.BlockSpec((tm, Hp), lambda i: (i, 0)),
            pl.BlockSpec((Hp, I_PAD), lambda i: (0, 0)),             # Wi (bf16, resident)
            pl.BlockSpec((1, I_PAD), lambda i: (0, 0)),
            pl.BlockSpec((I_PAD, Hp), lambda i: (0, 0)),             # Wo2 (bf16, resident)
            pl.BlockSpec((1, Hp), lambda i: (0, 0)),
            pl.BlockSpec((1, Hp), lambda i: (0, 0)),                 # ln2 gamma
            pl.BlockSpec((1, Hp), lambda i: (0, 0)),                 # ln2 beta
        ],
        out_specs=pl.BlockSpec((tm, Hp), lambda i: (i, 0)),
        compiler_params=_COMPILER_PARAMS,
    )(h2, lyr["wi"], lyr["bi"], lyr["wo2"], lyr["bo2"], lyr["ln2_g"], lyr["ln2_b"])


def cls_head(cls, p):
    B, Hp = cls.shape
    nl = p["fc3_b"].shape[1]
    return pl.pallas_call(
        _cls_head_kernel,
        out_shape=jax.ShapeDtypeStruct((B, nl), jnp.float32),
        grid=(1,),
        in_specs=[
            pl.BlockSpec((B, Hp), lambda i: (0, 0)),
            pl.BlockSpec(p["fc1_w"].shape, lambda i: (0, 0)),
            pl.BlockSpec(p["fc1_b"].shape, lambda i: (0, 0)),
            pl.BlockSpec(p["fc2_w"].shape, lambda i: (0, 0)),
            pl.BlockSpec(p["fc2_b"].shape, lambda i: (0, 0)),
            pl.BlockSpec(p["fc3_w"].shape, lambda i: (0, 0)),
            pl.BlockSpec(p["fc3_b"].shape, lambda i: (0, 0)),
        ],
        out_specs=pl.BlockSpec((B, nl), lambda i: (0, 0)),
        compiler_params=_COMPILER_PARAMS,
    )(cls, p["fc1_w"], p["fc1_b"], p["fc2_w"], p["fc2_b"], p["fc3_w"], p["fc3_b"])


# --------------------------- parameters ----------------------------------------

def init_params(key, vocab_size, max_pos, num_labels):
    def nrm(k, shape, scale=0.02):
        return scale * jax.random.normal(k, shape, dtype=jnp.float32)

    def pad2(a, rows, cols):
        return jnp.pad(a, ((0, rows - a.shape[0]), (0, cols - a.shape[1])))

    def row_vec(a, n):                      # (k,) -> (1, n) zero-padded, f32
        return jnp.pad(a, (0, n - a.shape[0])).reshape(1, n)

    def pad_head_cols(w):                   # (H_LOG,H_LOG) -> (H_PAD,H_PAD), per-head out cols padded
        w = w.reshape(H_LOG, N_HEADS, DH_LOG)
        w = jnp.pad(w, ((0, H_PAD - H_LOG), (0, 0), (0, DH_PAD - DH_LOG)))
        return w.reshape(H_PAD, H_PAD)

    def pad_head_rows(w):                   # (H_LOG,H_LOG) -> (H_PAD,H_PAD), per-head in rows padded
        w = w.reshape(N_HEADS, DH_LOG, H_LOG)
        w = jnp.pad(w, ((0, 0), (0, DH_PAD - DH_LOG), (0, H_PAD - H_LOG)))
        return w.reshape(H_PAD, H_PAD)

    keys = iter(jax.random.split(key, 256))
    ones_h = row_vec(jnp.ones((H_LOG,), jnp.float32), H_PAD)   # gamma: zero in pad cols
    zeros_h = jnp.zeros((1, H_PAD), jnp.float32)

    p = {
        "word_emb": pad2(nrm(next(keys), (vocab_size, H_LOG)), vocab_size, H_PAD),
        "pos_emb": pad2(nrm(next(keys), (max_pos, H_LOG)), max_pos, H_PAD),
        "type_emb": pad2(nrm(next(keys), (2, H_LOG)), 2, H_PAD),
        "emb_ln_g": ones_h, "emb_ln_b": zeros_h,
        "layers": [],
    }
    for _ in range(N_LAYERS):
        wq = pad_head_cols(nrm(next(keys), (H_LOG, H_LOG)))
        wk = pad_head_cols(nrm(next(keys), (H_LOG, H_LOG)))
        wv = pad_head_cols(nrm(next(keys), (H_LOG, H_LOG)))
        wo = pad_head_rows(nrm(next(keys), (H_LOG, H_LOG)))
        p["layers"].append({
            "wqkv": jnp.concatenate([wq, wk, wv], axis=1).astype(jnp.bfloat16),
            "bqkv": jnp.zeros((1, 3 * H_PAD), jnp.float32),      # biases are zero-init
            "wo": wo.astype(jnp.bfloat16),
            "bo": zeros_h,
            "ln1_g": ones_h, "ln1_b": zeros_h,
            "wi": pad2(nrm(next(keys), (H_LOG, I_LOG)), H_PAD, I_PAD).astype(jnp.bfloat16),
            "bi": jnp.zeros((1, I_PAD), jnp.float32),
            "wo2": pad2(nrm(next(keys), (I_LOG, H_LOG)), I_PAD, H_PAD).astype(jnp.bfloat16),
            "bo2": zeros_h,
            "ln2_g": ones_h, "ln2_b": zeros_h,
        })
    p["fc1_w"] = pad2(nrm(next(keys), (H_LOG, 156)), H_PAD, 156).astype(jnp.bfloat16)
    p["fc1_b"] = jnp.zeros((1, 156), jnp.float32)
    p["fc2_w"] = nrm(next(keys), (156, 64)).astype(jnp.bfloat16)
    p["fc2_b"] = jnp.zeros((1, 64), jnp.float32)
    p["fc3_w"] = nrm(next(keys), (64, num_labels)).astype(jnp.bfloat16)
    p["fc3_b"] = jnp.zeros((1, num_labels), jnp.float32)
    return p


# --------------------------- forward pass ---------------------------------------

def bert_classifier_forward(params, input_ids, attention_mask):
    B, S = input_ids.shape
    M = B * S

    # Embedding gathers/sums are plain-JAX glue; everything else runs in kernels.
    e = (jnp.take(params["word_emb"], input_ids, axis=0)
         + params["pos_emb"][None, :S, :]
         + params["type_emb"][0][None, None, :])
    h2 = embed_layernorm(e.reshape(M, H_PAD), params["emb_ln_g"], params["emb_ln_b"])

    # Additive attention mask over the key axis: 0 for valid tokens, -1e9 for pads.
    add_mask = (1.0 - attention_mask.astype(jnp.float32))[:, None, :] * -1e9   # (B,1,S)

    for lyr in params["layers"]:
        h2 = attention_layer(h2, lyr, add_mask, B, S)
        h2 = ffn_layer(h2, lyr)

    # hidden_state[:, 0] -> CLS token, then fused relu(fc1)->relu(fc2)->relu(fc3).
    cls = h2.reshape(B, S, H_PAD)[:, 0]
    return cls_head(cls, params)


# --------------------------- main ------------------------------------------------

if __name__ == "__main__":
    B, S = 2, 8
    VOCAB, MAX_POS, NUM_LABELS = 128, 64, 3

    key = jax.random.PRNGKey(0)
    k_param, k_ids = jax.random.split(key)

    params = init_params(k_param, VOCAB, MAX_POS, NUM_LABELS)
    input_ids = jax.random.randint(k_ids, (B, S), 0, VOCAB, dtype=jnp.int32)
    attention_mask = jnp.ones((B, S), dtype=jnp.int32).at[:, S - 2:].set(0)

    fwd = jax.jit(bert_classifier_forward)
    logits = fwd(params, input_ids, attention_mask)
    jax.block_until_ready(logits)
    assert logits.shape == (B, NUM_LABELS) and logits.dtype == jnp.float32
    print("KERNEL_OK")
</pallas_src>

<mosaic_0001>
module attributes {stable_mosaic.version = 11 : i64} {
  func.func @_attn_layer_kernel(%arg0: i32, %arg1: memref<1x8x384xf32, #tpu.memory_space<vmem>>, %arg2: memref<384x1152xbf16, #tpu.memory_space<vmem>>, %arg3: memref<1x1152xf32, #tpu.memory_space<vmem>>, %arg4: memref<1x1x8xf32, #tpu.memory_space<vmem>>, %arg5: memref<384x384xbf16, #tpu.memory_space<vmem>>, %arg6: memref<1x384xf32, #tpu.memory_space<vmem>>, %arg7: memref<1x384xf32, #tpu.memory_space<vmem>>, %arg8: memref<1x384xf32, #tpu.memory_space<vmem>>, %arg9: memref<1x8x384xf32, #tpu.memory_space<vmem>>) attributes {dimension_semantics = [#tpu.dimension_semantics<parallel>], iteration_bounds = array<i64: 2>, scalar_prefetch = 0 : i64, scratch_operands = 0 : i64, tpu.core_type = #tpu.core_type<tc>, window_params = [{transform_indices = @transform_0, window_bounds = array<i64: 1, 8, 384>}, {pipeline_mode = #tpu.pipeline_mode<synchronous>, transform_indices = @transform_1, window_bounds = array<i64: 384, 1152>}, {pipeline_mode = #tpu.pipeline_mode<synchronous>, transform_indices = @transform_2, window_bounds = array<i64: 1, 1152>}, {transform_indices = @transform_3, window_bounds = array<i64: 1, 1, 8>}, {pipeline_mode = #tpu.pipeline_mode<synchronous>, transform_indices = @transform_4, window_bounds = array<i64: 384, 384>}, {pipeline_mode = #tpu.pipeline_mode<synchronous>, transform_indices = @transform_5, window_bounds = array<i64: 1, 384>}, {pipeline_mode = #tpu.pipeline_mode<synchronous>, transform_indices = @transform_6, window_bounds = array<i64: 1, 384>}, {pipeline_mode = #tpu.pipeline_mode<synchronous>, transform_indices = @transform_7, window_bounds = array<i64: 1, 384>}, {transform_indices = @transform_8, window_bounds = array<i64: 1, 8, 384>}]} {
    %c0 = arith.constant 0 : index
    %c0_0 = arith.constant 0 : index
    %c0_1 = arith.constant 0 : index
    %0 = vector.load %arg1[%c0, %c0_0, %c0_1] : memref<1x8x384xf32, #tpu.memory_space<vmem>>, vector<1x8x384xf32>
    %1 = vector.shape_cast %0 : vector<1x8x384xf32> to vector<8x384xf32>
    %2 = arith.truncf %1 : vector<8x384xf32> to vector<8x384xbf16>
    %c0_2 = arith.constant 0 : index
    %c0_3 = arith.constant 0 : index
    %3 = vector.load %arg2[%c0_2, %c0_3] : memref<384x1152xbf16, #tpu.memory_space<vmem>>, vector<384x1152xbf16>
    %cst = arith.constant dense<0.000000e+00> : vector<8x1152xf32>
    %4 = tpu.matmul %2, %3, %cst {dimension_numbers = #tpu.dot_dimension_numbers<[1], [0], [0], [1], [0, 0, 1, 1], [], []>} : vector<8x384xbf16>, vector<384x1152xbf16>, vector<8x1152xf32> -> vector<8x1152xf32>
    %c0_4 = arith.constant 0 : index
    %c0_5 = arith.constant 0 : index
    %5 = vector.load %arg3[%c0_4, %c0_5] : memref<1x1152xf32, #tpu.memory_space<vmem>>, vector<1x1152xf32>
    %6 = vector.broadcast %5 : vector<1x1152xf32> to vector<8x1152xf32>
    %7 = arith.addf %4, %6 : vector<8x1152xf32>
    %c0_6 = arith.constant 0 : index
    %c0_7 = arith.constant 0 : index
    %c0_8 = arith.constant 0 : index
    %8 = vector.load %arg4[%c0_6, %c0_7, %c0_8] : memref<1x1x8xf32, #tpu.memory_space<vmem>>, vector<1x1x8xf32>
    %9 = vector.shape_cast %8 : vector<1x1x8xf32> to vector<1x8xf32>
    %cst_9 = arith.constant 0.000000e+00 : f32
    %10 = vector.broadcast %cst_9 : f32 to vector<8x384xf32>
    %11 = vector.extract_strided_slice %7 {offsets = [0, 0], sizes = [8, 32], strides = [1, 1]} : vector<8x1152xf32> to vector<8x32xf32>
    %12 = vector.extract_strided_slice %7 {offsets = [0, 384], sizes = [8, 32], strides = [1, 1]} : vector<8x1152xf32> to vector<8x32xf32>
    %13 = vector.extract_strided_slice %7 {offsets = [0, 768], sizes = [8, 32], strides = [1, 1]} : vector<8x1152xf32> to vector<8x32xf32>
    %14 = arith.truncf %11 : vector<8x32xf32> to vector<8x32xbf16>
    %15 = arith.truncf %12 : vector<8x32xf32> to vector<8x32xbf16>
    "tpu.trace_start"() <{level = 10 : i32, message = "qd,kd->qk"}> : () -> ()
    %cst_10 = arith.constant dense<0.000000e+00> : vector<8x8xf32>
    %16 = tpu.matmul %14, %15, %cst_10 {dimension_numbers = #tpu.dot_dimension_numbers<[1], [1], [0], [0], [0, 0, 1, 0], [], []>} : vector<8x32xbf16>, vector<8x32xbf16>, vector<8x8xf32> -> vector<8x8xf32>
    "tpu.trace_stop"() : () -> ()
    %cst_11 = arith.constant 0.196116135 : f32
    %17 = vector.broadcast %cst_11 : f32 to vector<8x8xf32>
    %18 = arith.mulf %16, %17 : vector<8x8xf32>
    %19 = vector.broadcast %9 : vector<1x8xf32> to vector<8x8xf32>
    %20 = arith.addf %18, %19 : vector<8x8xf32>
    %cst_12 = arith.constant dense<0xFF800000> : vector<8xf32>
    %21 = vector.multi_reduction <maximumf>, %20, %cst_12 [1] : vector<8x8xf32> to vector<8xf32>
    %22 = vector.shape_cast %21 : vector<8xf32> to vector<8x1xf32>
    %23 = vector.broadcast %22 : vector<8x1xf32> to vector<8x8xf32>
    %24 = arith.subf %20, %23 : vector<8x8xf32>
    %25 = math.exp %24 : vector<8x8xf32>
    %cst_13 = arith.constant dense<0.000000e+00> : vector<8xf32>
    %26 = vector.multi_reduction <add>, %25, %cst_13 [1] : vector<8x8xf32> to vector<8xf32>
    %27 = vector.shape_cast %26 : vector<8xf32> to vector<8x1xf32>
    %28 = tpu.reciprocal %27 {approx = true} : vector<8x1xf32> -> vector<8x1xf32>
    %29 = vector.broadcast %28 : vector<8x1xf32> to vector<8x8xf32>
    %30 = arith.mulf %25, %29 : vector<8x8xf32>
    %31 = arith.truncf %30 : vector<8x8xf32> to vector<8x8xbf16>
    %32 = arith.truncf %13 : vector<8x32xf32> to vector<8x32xbf16>
    %cst_14 = arith.constant dense<0.000000e+00> : vector<8x32xf32>
    %33 = tpu.matmul %31, %32, %cst_14 {dimension_numbers = #tpu.dot_dimension_numbers<[1], [0], [0], [1], [0, 0, 1, 1], [], []>} : vector<8x8xbf16>, vector<8x32xbf16>, vector<8x32xf32> -> vector<8x32xf32>
    %34 = arith.truncf %33 : vector<8x32xf32> to vector<8x32xbf16>
    %c0_15 = arith.constant 0 : index
    %c0_16 = arith.constant 0 : index
    %35 = vector.load %arg5[%c0_15, %c0_16] : memref<384x384xbf16, #tpu.memory_space<vmem>>, vector<32x384xbf16>
    %cst_17 = arith.constant dense<0.000000e+00> : vector<8x384xf32>
    %36 = tpu.matmul %34, %35, %cst_17 {dimension_numbers = #tpu.dot_dimension_numbers<[1], [0], [0], [1], [0, 0, 1, 1], [], []>} : vector<8x32xbf16>, vector<32x384xbf16>, vector<8x384xf32> -> vector<8x384xf32>
    %37 = arith.addf %10, %36 : vector<8x384xf32>
    %38 = vector.extract_strided_slice %7 {offsets = [0, 32], sizes = [8, 32], strides = [1, 1]} : vector<8x1152xf32> to vector<8x32xf32>
    %39 = vector.extract_strided_slice %7 {offsets = [0, 416], sizes = [8, 32], strides = [1, 1]} : vector<8x1152xf32> to vector<8x32xf32>
    %40 = vector.extract_strided_slice %7 {offsets = [0, 800], sizes = [8, 32], strides = [1, 1]} : vector<8x1152xf32> to vector<8x32xf32>
    %41 = arith.truncf %38 : vector<8x32xf32> to vector<8x32xbf16>
    %42 = arith.truncf %39 : vector<8x32xf32> to vector<8x32xbf16>
    "tpu.trace_start"() <{level = 10 : i32, message = "qd,kd->qk"}> : () -> ()
    %cst_18 = arith.constant dense<0.000000e+00> : vector<8x8xf32>
    %43 = tpu.matmul %41, %42, %cst_18 {dimension_numbers = #tpu.dot_dimension_numbers<[1], [1], [0], [0], [0, 0, 1, 0], [], []>} : vector<8x32xbf16>, vector<8x32xbf16>, vector<8x8xf32> -> vector<8x8xf32>
    "tpu.trace_stop"() : () -> ()
    %cst_19 = arith.constant 0.196116135 : f32
    %44 = vector.broadcast %cst_19 : f32 to vector<8x8xf32>
    %45 = arith.mulf %43, %44 : vector<8x8xf32>
    %46 = vector.broadcast %9 : vector<1x8xf32> to vector<8x8xf32>
    %47 = arith.addf %45, %46 : vector<8x8xf32>
    %cst_20 = arith.constant dense<0xFF800000> : vector<8xf32>
    %48 = vector.multi_reduction <maximumf>, %47, %cst_20 [1] : vector<8x8xf32> to vector<8xf32>
    %49 = vector.shape_cast %48 : vector<8xf32> to vector<8x1xf32>
    %50 = vector.broadcast %49 : vector<8x1xf32> to vector<8x8xf32>
    %51 = arith.subf %47, %50 : vector<8x8xf32>
    %52 = math.exp %51 : vector<8x8xf32>
    %cst_21 = arith.constant dense<0.000000e+00> : vector<8xf32>
    %53 = vector.multi_reduction <add>, %52, %cst_21 [1] : vector<8x8xf32> to vector<8xf32>
    %54 = vector.shape_cast %53 : vector<8xf32> to vector<8x1xf32>
    %55 = tpu.reciprocal %54 {approx = true} : vector<8x1xf32> -> vector<8x1xf32>
    %56 = vector.broadcast %55 : vector<8x1xf32> to vector<8x8xf32>
    %57 = arith.mulf %52, %56 : vector<8x8xf32>
    %58 = arith.truncf %57 : vector<8x8xf32> to vector<8x8xbf16>
    %59 = arith.truncf %40 : vector<8x32xf32> to vector<8x32xbf16>
    %cst_22 = arith.constant dense<0.000000e+00> : vector<8x32xf32>
    %60 = tpu.matmul %58, %59, %cst_22 {dimension_numbers = #tpu.dot_dimension_numbers<[1], [0], [0], [1], [0, 0, 1, 1], [], []>} : vector<8x8xbf16>, vector<8x32xbf16>, vector<8x32xf32> -> vector<8x32xf32>
    %61 = arith.truncf %60 : vector<8x32xf32> to vector<8x32xbf16>
    %c32 = arith.constant 32 : index
    %c0_23 = arith.constant 0 : index
    %62 = vector.load %arg5[%c32, %c0_23] : memref<384x384xbf16, #tpu.memory_space<vmem>>, vector<32x384xbf16>
    %cst_24 = arith.constant dense<0.000000e+00> : vector<8x384xf32>
    %63 = tpu.matmul %61, %62, %cst_24 {dimension_numbers = #tpu.dot_dimension_numbers<[1], [0], [0], [1], [0, 0, 1, 1], [], []>} : vector<8x32xbf16>, vector<32x384xbf16>, vector<8x384xf32> -> vector<8x384xf32>
    %64 = arith.addf %37, %63 : vector<8x384xf32>
    %65 = vector.extract_strided_slice %7 {offsets = [0, 64], sizes = [8, 32], strides = [1, 1]} : vector<8x1152xf32> to vector<8x32xf32>
    %66 = vector.extract_strided_slice %7 {offsets = [0, 448], sizes = [8, 32], strides = [1, 1]} : vector<8x1152xf32> to vector<8x32xf32>
    %67 = vector.extract_strided_slice %7 {offsets = [0, 832], sizes = [8, 32], strides = [1, 1]} : vector<8x1152xf32> to vector<8x32xf32>
    %68 = arith.truncf %65 : vector<8x32xf32> to vector<8x32xbf16>
    %69 = arith.truncf %66 : vector<8x32xf32> to vector<8x32xbf16>
    "tpu.trace_start"() <{level = 10 : i32, message = "qd,kd->qk"}> : () -> ()
    %cst_25 = arith.constant dense<0.000000e+00> : vector<8x8xf32>
    %70 = tpu.matmul %68, %69, %cst_25 {dimension_numbers = #tpu.dot_dimension_numbers<[1], [1], [0], [0], [0, 0, 1, 0], [], []>} : vector<8x32xbf16>, vector<8x32xbf16>, vector<8x8xf32> -> vector<8x8xf32>
    "tpu.trace_stop"() : () -> ()
    %cst_26 = arith.constant 0.196116135 : f32
    %71 = vector.broadcast %cst_26 : f32 to vector<8x8xf32>
    %72 = arith.mulf %70, %71 : vector<8x8xf32>
    %73 = vector.broadcast %9 : vector<1x8xf32> to vector<8x8xf32>
    %74 = arith.addf %72, %73 : vector<8x8xf32>
    %cst_27 = arith.constant dense<0xFF800000> : vector<8xf32>
    %75 = vector.multi_reduction <maximumf>, %74, %cst_27 [1] : vector<8x8xf32> to vector<8xf32>
    %76 = vector.shape_cast %75 : vector<8xf32> to vector<8x1xf32>
    %77 = vector.broadcast %76 : vector<8x1xf32> to vector<8x8xf32>
    %78 = arith.subf %74, %77 : vector<8x8xf32>
    %79 = math.exp %78 : vector<8x8xf32>
    %cst_28 = arith.constant dense<0.000000e+00> : vector<8xf32>
    %80 = vector.multi_reduction <add>, %79, %cst_28 [1] : vector<8x8xf32> to vector<8xf32>
    %81 = vector.shape_cast %80 : vector<8xf32> to vector<8x1xf32>
    %82 = tpu.reciprocal %81 {approx = true} : vector<8x1xf32> -> vector<8x1xf32>
    %83 = vector.broadcast %82 : vector<8x1xf32> to vector<8x8xf32>
    %84 = arith.mulf %79, %83 : vector<8x8xf32>
    %85 = arith.truncf %84 : vector<8x8xf32> to vector<8x8xbf16>
    %86 = arith.truncf %67 : vector<8x32xf32> to vector<8x32xbf16>
    %cst_29 = arith.constant dense<0.000000e+00> : vector<8x32xf32>
    %87 = tpu.matmul %85, %86, %cst_29 {dimension_numbers = #tpu.dot_dimension_numbers<[1], [0], [0], [1], [0, 0, 1, 1], [], []>} : vector<8x8xbf16>, vector<8x32xbf16>, vector<8x32xf32> -> vector<8x32xf32>
    %88 = arith.truncf %87 : vector<8x32xf32> to vector<8x32xbf16>
    %c64 = arith.constant 64 : index
    %c0_30 = arith.constant 0 : index
    %89 = vector.load %arg5[%c64, %c0_30] : memref<384x384xbf16, #tpu.memory_space<vmem>>, vector<32x384xbf16>
    %cst_31 = arith.constant dense<0.000000e+00> : vector<8x384xf32>
    %90 = tpu.matmul %88, %89, %cst_31 {dimension_numbers = #tpu.dot_dimension_numbers<[1], [0], [0], [1], [0, 0, 1, 1], [], []>} : vector<8x32xbf16>, vector<32x384xbf16>, vector<8x384xf32> -> vector<8x384xf32>
    %91 = arith.addf %64, %90 : vector<8x384xf32>
    %92 = vector.extract_strided_slice %7 {offsets = [0, 96], sizes = [8, 32], strides = [1, 1]} : vector<8x1152xf32> to vector<8x32xf32>
    %93 = vector.extract_strided_slice %7 {offsets = [0, 480], sizes = [8, 32], strides = [1, 1]} : vector<8x1152xf32> to vector<8x32xf32>
    %94 = vector.extract_strided_slice %7 {offsets = [0, 864], sizes = [8, 32], strides = [1, 1]} : vector<8x1152xf32> to vector<8x32xf32>
    %95 = arith.truncf %92 : vector<8x32xf32> to vector<8x32xbf16>
    %96 = arith.truncf %93 : vector<8x32xf32> to vector<8x32xbf16>
    "tpu.trace_start"() <{level = 10 : i32, message = "qd,kd->qk"}> : () -> ()
    %cst_32 = arith.constant dense<0.000000e+00> : vector<8x8xf32>
    %97 = tpu.matmul %95, %96, %cst_32 {dimension_numbers = #tpu.dot_dimension_numbers<[1], [1], [0], [0], [0, 0, 1, 0], [], []>} : vector<8x32xbf16>, vector<8x32xbf16>, vector<8x8xf32> -> vector<8x8xf32>
    "tpu.trace_stop"() : () -> ()
    %cst_33 = arith.constant 0.196116135 : f32
    %98 = vector.broadcast %cst_33 : f32 to vector<8x8xf32>
    %99 = arith.mulf %97, %98 : vector<8x8xf32>
    %100 = vector.broadcast %9 : vector<1x8xf32> to vector<8x8xf32>
    %101 = arith.addf %99, %100 : vector<8x8xf32>
    %cst_34 = arith.constant dense<0xFF800000> : vector<8xf32>
    %102 = vector.multi_reduction <maximumf>, %101, %cst_34 [1] : vector<8x8xf32> to vector<8xf32>
    %103 = vector.shape_cast %102 : vector<8xf32> to vector<8x1xf32>
    %104 = vector.broadcast %103 : vector<8x1xf32> to vector<8x8xf32>
    %105 = arith.subf %101, %104 : vector<8x8xf32>
    %106 = math.exp %105 : vector<8x8xf32>
    %cst_35 = arith.constant dense<0.000000e+00> : vector<8xf32>
    %107 = vector.multi_reduction <add>, %106, %cst_35 [1] : vector<8x8xf32> to vector<8xf32>
    %108 = vector.shape_cast %107 : vector<8xf32> to vector<8x1xf32>
    %109 = tpu.reciprocal %108 {approx = true} : vector<8x1xf32> -> vector<8x1xf32>
    %110 = vector.broadcast %109 : vector<8x1xf32> to vector<8x8xf32>
    %111 = arith.mulf %106, %110 : vector<8x8xf32>
    %112 = arith.truncf %111 : vector<8x8xf32> to vector<8x8xbf16>
    %113 = arith.truncf %94 : vector<8x32xf32> to vector<8x32xbf16>
    %cst_36 = arith.constant dense<0.000000e+00> : vector<8x32xf32>
    %114 = tpu.matmul %112, %113, %cst_36 {dimension_numbers = #tpu.dot_dimension_numbers<[1], [0], [0], [1], [0, 0, 1, 1], [], []>} : vector<8x8xbf16>, vector<8x32xbf16>, vector<8x32xf32> -> vector<8x32xf32>
    %115 = arith.truncf %114 : vector<8x32xf32> to vector<8x32xbf16>
    %c96 = arith.constant 96 : index
    %c0_37 = arith.constant 0 : index
    %116 = vector.load %arg5[%c96, %c0_37] : memref<384x384xbf16, #tpu.memory_space<vmem>>, vector<32x384xbf16>
    %cst_38 = arith.constant dense<0.000000e+00> : vector<8x384xf32>
    %117 = tpu.matmul %115, %116, %cst_38 {dimension_numbers = #tpu.dot_dimension_numbers<[1], [0], [0], [1], [0, 0, 1, 1], [], []>} : vector<8x32xbf16>, vector<32x384xbf16>, vector<8x384xf32> -> vector<8x384xf32>
    %118 = arith.addf %91, %117 : vector<8x384xf32>
    %119 = vector.extract_strided_slice %7 {offsets = [0, 128], sizes = [8, 32], strides = [1, 1]} : vector<8x1152xf32> to vector<8x32xf32>
    %120 = vector.extract_strided_slice %7 {offsets = [0, 512], sizes = [8, 32], strides = [1, 1]} : vector<8x1152xf32> to vector<8x32xf32>
    %121 = vector.extract_strided_slice %7 {offsets = [0, 896], sizes = [8, 32], strides = [1, 1]} : vector<8x1152xf32> to vector<8x32xf32>
    %122 = arith.truncf %119 : vector<8x32xf32> to vector<8x32xbf16>
    %123 = arith.truncf %120 : vector<8x32xf32> to vector<8x32xbf16>
    "tpu.trace_start"() <{level = 10 : i32, message = "qd,kd->qk"}> : () -> ()
    %cst_39 = arith.constant dense<0.000000e+00> : vector<8x8xf32>
    %124 = tpu.matmul %122, %123, %cst_39 {dimension_numbers = #tpu.dot_dimension_numbers<[1], [1], [0], [0], [0, 0, 1, 0], [], []>} : vector<8x32xbf16>, vector<8x32xbf16>, vector<8x8xf32> -> vector<8x8xf32>
    "tpu.trace_stop"() : () -> ()
    %cst_40 = arith.constant 0.196116135 : f32
    %125 = vector.broadcast %cst_40 : f32 to vector<8x8xf32>
    %126 = arith.mulf %124, %125 : vector<8x8xf32>
    %127 = vector.broadcast %9 : vector<1x8xf32> to vector<8x8xf32>
    %128 = arith.addf %126, %127 : vector<8x8xf32>
    %cst_41 = arith.constant dense<0xFF800000> : vector<8xf32>
    %129 = vector.multi_reduction <maximumf>, %128, %cst_41 [1] : vector<8x8xf32> to vector<8xf32>
    %130 = vector.shape_cast %129 : vector<8xf32> to vector<8x1xf32>
    %131 = vector.broadcast %130 : vector<8x1xf32> to vector<8x8xf32>
    %132 = arith.subf %128, %131 : vector<8x8xf32>
    %133 = math.exp %132 : vector<8x8xf32>
    %cst_42 = arith.constant dense<0.000000e+00> : vector<8xf32>
    %134 = vector.multi_reduction <add>, %133, %cst_42 [1] : vector<8x8xf32> to vector<8xf32>
    %135 = vector.shape_cast %134 : vector<8xf32> to vector<8x1xf32>
    %136 = tpu.reciprocal %135 {approx = true} : vector<8x1xf32> -> vector<8x1xf32>
    %137 = vector.broadcast %136 : vector<8x1xf32> to vector<8x8xf32>
    %138 = arith.mulf %133, %137 : vector<8x8xf32>
    %139 = arith.truncf %138 : vector<8x8xf32> to vector<8x8xbf16>
    %140 = arith.truncf %121 : vector<8x32xf32> to vector<8x32xbf16>
    %cst_43 = arith.constant dense<0.000000e+00> : vector<8x32xf32>
    %141 = tpu.matmul %139, %140, %cst_43 {dimension_numbers = #tpu.dot_dimension_numbers<[1], [0], [0], [1], [0, 0, 1, 1], [], []>} : vector<8x8xbf16>, vector<8x32xbf16>, vector<8x32xf32> -> vector<8x32xf32>
    %142 = arith.truncf %141 : vector<8x32xf32> to vector<8x32xbf16>
    %c128 = arith.constant 128 : index
    %c0_44 = arith.constant 0 : index
    %143 = vector.load %arg5[%c128, %c0_44] : memref<384x384xbf16, #tpu.memory_space<vmem>>, vector<32x384xbf16>
    %cst_45 = arith.constant dense<0.000000e+00> : vector<8x384xf32>
    %144 = tpu.matmul %142, %143, %cst_45 {dimension_numbers = #tpu.dot_dimension_numbers<[1], [0], [0], [1], [0, 0, 1, 1], [], []>} : vector<8x32xbf16>, vector<32x384xbf16>, vector<8x384xf32> -> vector<8x384xf32>
    %145 = arith.addf %118, %144 : vector<8x384xf32>
    %146 = vector.extract_strided_slice %7 {offsets = [0, 160], sizes = [8, 32], strides = [1, 1]} : vector<8x1152xf32> to vector<8x32xf32>
    %147 = vector.extract_strided_slice %7 {offsets = [0, 544], sizes = [8, 32], strides = [1, 1]} : vector<8x1152xf32> to vector<8x32xf32>
    %148 = vector.extract_strided_slice %7 {offsets = [0, 928], sizes = [8, 32], strides = [1, 1]} : vector<8x1152xf32> to vector<8x32xf32>
    %149 = arith.truncf %146 : vector<8x32xf32> to vector<8x32xbf16>
    %150 = arith.truncf %147 : vector<8x32xf32> to vector<8x32xbf16>
    "tpu.trace_start"() <{level = 10 : i32, message = "qd,kd->qk"}> : () -> ()
    %cst_46 = arith.constant dense<0.000000e+00> : vector<8x8xf32>
    %151 = tpu.matmul %149, %150, %cst_46 {dimension_numbers = #tpu.dot_dimension_numbers<[1], [1], [0], [0], [0, 0, 1, 0], [], []>} : vector<8x32xbf16>, vector<8x32xbf16>, vector<8x8xf32> -> vector<8x8xf32>
    "tpu.trace_stop"() : () -> ()
    %cst_47 = arith.constant 0.196116135 : f32
    %152 = vector.broadcast %cst_47 : f32 to vector<8x8xf32>
    %153 = arith.mulf %151, %152 : vector<8x8xf32>
    %154 = vector.broadcast %9 : vector<1x8xf32> to vector<8x8xf32>
    %155 = arith.addf %153, %154 : vector<8x8xf32>
    %cst_48 = arith.constant dense<0xFF800000> : vector<8xf32>
    %156 = vector.multi_reduction <maximumf>, %155, %cst_48 [1] : vector<8x8xf32> to vector<8xf32>
    %157 = vector.shape_cast %156 : vector<8xf32> to vector<8x1xf32>
    %158 = vector.broadcast %157 : vector<8x1xf32> to vector<8x8xf32>
    %159 = arith.subf %155, %158 : vector<8x8xf32>
    %160 = math.exp %159 : vector<8x8xf32>
    %cst_49 = arith.constant dense<0.000000e+00> : vector<8xf32>
    %161 = vector.multi_reduction <add>, %160, %cst_49 [1] : vector<8x8xf32> to vector<8xf32>
    %162 = vector.shape_cast %161 : vector<8xf32> to vector<8x1xf32>
    %163 = tpu.reciprocal %162 {approx = true} : vector<8x1xf32> -> vector<8x1xf32>
    %164 = vector.broadcast %163 : vector<8x1xf32> to vector<8x8xf32>
    %165 = arith.mulf %160, %164 : vector<8x8xf32>
    %166 = arith.truncf %165 : vector<8x8xf32> to vector<8x8xbf16>
    %167 = arith.truncf %148 : vector<8x32xf32> to vector<8x32xbf16>
    %cst_50 = arith.constant dense<0.000000e+00> : vector<8x32xf32>
    %168 = tpu.matmul %166, %167, %cst_50 {dimension_numbers = #tpu.dot_dimension_numbers<[1], [0], [0], [1], [0, 0, 1, 1], [], []>} : vector<8x8xbf16>, vector<8x32xbf16>, vector<8x32xf32> -> vector<8x32xf32>
    %169 = arith.truncf %168 : vector<8x32xf32> to vector<8x32xbf16>
    %c160 = arith.constant 160 : index
    %c0_51 = arith.constant 0 : index
    %170 = vector.load %arg5[%c160, %c0_51] : memref<384x384xbf16, #tpu.memory_space<vmem>>, vector<32x384xbf16>
    %cst_52 = arith.constant dense<0.000000e+00> : vector<8x384xf32>
    %171 = tpu.matmul %169, %170, %cst_52 {dimension_numbers = #tpu.dot_dimension_numbers<[1], [0], [0], [1], [0, 0, 1, 1], [], []>} : vector<8x32xbf16>, vector<32x384xbf16>, vector<8x384xf32> -> vector<8x384xf32>
    %172 = arith.addf %145, %171 : vector<8x384xf32>
    %173 = vector.extract_strided_slice %7 {offsets = [0, 192], sizes = [8, 32], strides = [1, 1]} : vector<8x1152xf32> to vector<8x32xf32>
    %174 = vector.extract_strided_slice %7 {offsets = [0, 576], sizes = [8, 32], strides = [1, 1]} : vector<8x1152xf32> to vector<8x32xf32>
    %175 = vector.extract_strided_slice %7 {offsets = [0, 960], sizes = [8, 32], strides = [1, 1]} : vector<8x1152xf32> to vector<8x32xf32>
    %176 = arith.truncf %173 : vector<8x32xf32> to vector<8x32xbf16>
    %177 = arith.truncf %174 : vector<8x32xf32> to vector<8x32xbf16>
    "tpu.trace_start"() <{level = 10 : i32, message = "qd,kd->qk"}> : () -> ()
    %cst_53 = arith.constant dense<0.000000e+00> : vector<8x8xf32>
    %178 = tpu.matmul %176, %177, %cst_53 {dimension_numbers = #tpu.dot_dimension_numbers<[1], [1], [0], [0], [0, 0, 1, 0], [], []>} : vector<8x32xbf16>, vector<8x32xbf16>, vector<8x8xf32> -> vector<8x8xf32>
    "tpu.trace_stop"() : () -> ()
    %cst_54 = arith.constant 0.196116135 : f32
    %179 = vector.broadcast %cst_54 : f32 to vector<8x8xf32>
    %180 = arith.mulf %178, %179 : vector<8x8xf32>
    %181 = vector.broadcast %9 : vector<1x8xf32> to vector<8x8xf32>
    %182 = arith.addf %180, %181 : vector<8x8xf32>
    %cst_55 = arith.constant dense<0xFF800000> : vector<8xf32>
    %183 = vector.multi_reduction <maximumf>, %182, %cst_55 [1] : vector<8x8xf32> to vector<8xf32>
    %184 = vector.shape_cast %183 : vector<8xf32> to vector<8x1xf32>
    %185 = vector.broadcast %184 : vector<8x1xf32> to vector<8x8xf32>
    %186 = arith.subf %182, %185 : vector<8x8xf32>
    %187 = math.exp %186 : vector<8x8xf32>
    %cst_56 = arith.constant dense<0.000000e+00> : vector<8xf32>
    %188 = vector.multi_reduction <add>, %187, %cst_56 [1] : vector<8x8xf32> to vector<8xf32>
    %189 = vector.shape_cast %188 : vector<8xf32> to vector<8x1xf32>
    %190 = tpu.reciprocal %189 {approx = true} : vector<8x1xf32> -> vector<8x1xf32>
    %191 = vector.broadcast %190 : vector<8x1xf32> to vector<8x8xf32>
    %192 = arith.mulf %187, %191 : vector<8x8xf32>
    %193 = arith.truncf %192 : vector<8x8xf32> to vector<8x8xbf16>
    %194 = arith.truncf %175 : vector<8x32xf32> to vector<8x32xbf16>
    %cst_57 = arith.constant dense<0.000000e+00> : vector<8x32xf32>
    %195 = tpu.matmul %193, %194, %cst_57 {dimension_numbers = #tpu.dot_dimension_numbers<[1], [0], [0], [1], [0, 0, 1, 1], [], []>} : vector<8x8xbf16>, vector<8x32xbf16>, vector<8x32xf32> -> vector<8x32xf32>
    %196 = arith.truncf %195 : vector<8x32xf32> to vector<8x32xbf16>
    %c192 = arith.constant 192 : index
    %c0_58 = arith.constant 0 : index
    %197 = vector.load %arg5[%c192, %c0_58] : memref<384x384xbf16, #tpu.memory_space<vmem>>, vector<32x384xbf16>
    %cst_59 = arith.constant dense<0.000000e+00> : vector<8x384xf32>
    %198 = tpu.matmul %196, %197, %cst_59 {dimension_numbers = #tpu.dot_dimension_numbers<[1], [0], [0], [1], [0, 0, 1, 1], [], []>} : vector<8x32xbf16>, vector<32x384xbf16>, vector<8x384xf32> -> vector<8x384xf32>
    %199 = arith.addf %172, %198 : vector<8x384xf32>
    %200 = vector.extract_strided_slice %7 {offsets = [0, 224], sizes = [8, 32], strides = [1, 1]} : vector<8x1152xf32> to vector<8x32xf32>
    %201 = vector.extract_strided_slice %7 {offsets = [0, 608], sizes = [8, 32], strides = [1, 1]} : vector<8x1152xf32> to vector<8x32xf32>
    %202 = vector.extract_strided_slice %7 {offsets = [0, 992], sizes = [8, 32], strides = [1, 1]} : vector<8x1152xf32> to vector<8x32xf32>
    %203 = arith.truncf %200 : vector<8x32xf32> to vector<8x32xbf16>
    %204 = arith.truncf %201 : vector<8x32xf32> to vector<8x32xbf16>
    "tpu.trace_start"() <{level = 10 : i32, message = "qd,kd->qk"}> : () -> ()
    %cst_60 = arith.constant dense<0.000000e+00> : vector<8x8xf32>
    %205 = tpu.matmul %203, %204, %cst_60 {dimension_numbers = #tpu.dot_dimension_numbers<[1], [1], [0], [0], [0, 0, 1, 0], [], []>} : vector<8x32xbf16>, vector<8x32xbf16>, vector<8x8xf32> -> vector<8x8xf32>
    "tpu.trace_stop"() : () -> ()
    %cst_61 = arith.constant 0.196116135 : f32
    %206 = vector.broadcast %cst_61 : f32 to vector<8x8xf32>
    %207 = arith.mulf %205, %206 : vector<8x8xf32>
    %208 = vector.broadcast %9 : vector<1x8xf32> to vector<8x8xf32>
    %209 = arith.addf %207, %208 : vector<8x8xf32>
    %cst_62 = arith.constant dense<0xFF800000> : vector<8xf32>
    %210 = vector.multi_reduction <maximumf>, %209, %cst_62 [1] : vector<8x8xf32> to vector<8xf32>
    %211 = vector.shape_cast %210 : vector<8xf32> to vector<8x1xf32>
    %212 = vector.broadcast %211 : vector<8x1xf32> to vector<8x8xf32>
    %213 = arith.subf %209, %212 : vector<8x8xf32>
    %214 = math.exp %213 : vector<8x8xf32>
    %cst_63 = arith.constant dense<0.000000e+00> : vector<8xf32>
    %215 = vector.multi_reduction <add>, %214, %cst_63 [1] : vector<8x8xf32> to vector<8xf32>
    %216 = vector.shape_cast %215 : vector<8xf32> to vector<8x1xf32>
    %217 = tpu.reciprocal %216 {approx = true} : vector<8x1xf32> -> vector<8x1xf32>
    %218 = vector.broadcast %217 : vector<8x1xf32> to vector<8x8xf32>
    %219 = arith.mulf %214, %218 : vector<8x8xf32>
    %220 = arith.truncf %219 : vector<8x8xf32> to vector<8x8xbf16>
    %221 = arith.truncf %202 : vector<8x32xf32> to vector<8x32xbf16>
    %cst_64 = arith.constant dense<0.000000e+00> : vector<8x32xf32>
    %222 = tpu.matmul %220, %221, %cst_64 {dimension_numbers = #tpu.dot_dimension_numbers<[1], [0], [0], [1], [0, 0, 1, 1], [], []>} : vector<8x8xbf16>, vector<8x32xbf16>, vector<8x32xf32> -> vector<8x32xf32>
    %223 = arith.truncf %222 : vector<8x32xf32> to vector<8x32xbf16>
    %c224 = arith.constant 224 : index
    %c0_65 = arith.constant 0 : index
    %224 = vector.load %arg5[%c224, %c0_65] : memref<384x384xbf16, #tpu.memory_space<vmem>>, vector<32x384xbf16>
    %cst_66 = arith.constant dense<0.000000e+00> : vector<8x384xf32>
    %225 = tpu.matmul %223, %224, %cst_66 {dimension_numbers = #tpu.dot_dimension_numbers<[1], [0], [0], [1], [0, 0, 1, 1], [], []>} : vector<8x32xbf16>, vector<32x384xbf16>, vector<8x384xf32> -> vector<8x384xf32>
    %226 = arith.addf %199, %225 : vector<8x384xf32>
    %227 = vector.extract_strided_slice %7 {offsets = [0, 256], sizes = [8, 32], strides = [1, 1]} : vector<8x1152xf32> to vector<8x32xf32>
    %228 = vector.extract_strided_slice %7 {offsets = [0, 640], sizes = [8, 32], strides = [1, 1]} : vector<8x1152xf32> to vector<8x32xf32>
    %229 = vector.extract_strided_slice %7 {offsets = [0, 1024], sizes = [8, 32], strides = [1, 1]} : vector<8x1152xf32> to vector<8x32xf32>
    %230 = arith.truncf %227 : vector<8x32xf32> to vector<8x32xbf16>
    %231 = arith.truncf %228 : vector<8x32xf32> to vector<8x32xbf16>
    "tpu.trace_start"() <{level = 10 : i32, message = "qd,kd->qk"}> : () -> ()
    %cst_67 = arith.constant dense<0.000000e+00> : vector<8x8xf32>
    %232 = tpu.matmul %230, %231, %cst_67 {dimension_numbers = #tpu.dot_dimension_numbers<[1], [1], [0], [0], [0, 0, 1, 0], [], []>} : vector<8x32xbf16>, vector<8x32xbf16>, vector<8x8xf32> -> vector<8x8xf32>
    "tpu.trace_stop"() : () -> ()
    %cst_68 = arith.constant 0.196116135 : f32
    %233 = vector.broadcast %cst_68 : f32 to vector<8x8xf32>
    %234 = arith.mulf %232, %233 : vector<8x8xf32>
    %235 = vector.broadcast %9 : vector<1x8xf32> to vector<8x8xf32>
    %236 = arith.addf %234, %235 : vector<8x8xf32>
    %cst_69 = arith.constant dense<0xFF800000> : vector<8xf32>
    %237 = vector.multi_reduction <maximumf>, %236, %cst_69 [1] : vector<8x8xf32> to vector<8xf32>
    %238 = vector.shape_cast %237 : vector<8xf32> to vector<8x1xf32>
    %239 = vector.broadcast %238 : vector<8x1xf32> to vector<8x8xf32>
    %240 = arith.subf %236, %239 : vector<8x8xf32>
    %241 = math.exp %240 : vector<8x8xf32>
    %cst_70 = arith.constant dense<0.000000e+00> : vector<8xf32>
    %242 = vector.multi_reduction <add>, %241, %cst_70 [1] : vector<8x8xf32> to vector<8xf32>
    %243 = vector.shape_cast %242 : vector<8xf32> to vector<8x1xf32>
    %244 = tpu.reciprocal %243 {approx = true} : vector<8x1xf32> -> vector<8x1xf32>
    %245 = vector.broadcast %244 : vector<8x1xf32> to vector<8x8xf32>
    %246 = arith.mulf %241, %245 : vector<8x8xf32>
    %247 = arith.truncf %246 : vector<8x8xf32> to vector<8x8xbf16>
    %248 = arith.truncf %229 : vector<8x32xf32> to vector<8x32xbf16>
    %cst_71 = arith.constant dense<0.000000e+00> : vector<8x32xf32>
    %249 = tpu.matmul %247, %248, %cst_71 {dimension_numbers = #tpu.dot_dimension_numbers<[1], [0], [0], [1], [0, 0, 1, 1], [], []>} : vector<8x8xbf16>, vector<8x32xbf16>, vector<8x32xf32> -> vector<8x32xf32>
    %250 = arith.truncf %249 : vector<8x32xf32> to vector<8x32xbf16>
    %c256 = arith.constant 256 : index
    %c0_72 = arith.constant 0 : index
    %251 = vector.load %arg5[%c256, %c0_72] : memref<384x384xbf16, #tpu.memory_space<vmem>>, vector<32x384xbf16>
    %cst_73 = arith.constant dense<0.000000e+00> : vector<8x384xf32>
    %252 = tpu.matmul %250, %251, %cst_73 {dimension_numbers = #tpu.dot_dimension_numbers<[1], [0], [0], [1], [0, 0, 1, 1], [], []>} : vector<8x32xbf16>, vector<32x384xbf16>, vector<8x384xf32> -> vector<8x384xf32>
    %253 = arith.addf %226, %252 : vector<8x384xf32>
    %254 = vector.extract_strided_slice %7 {offsets = [0, 288], sizes = [8, 32], strides = [1, 1]} : vector<8x1152xf32> to vector<8x32xf32>
    %255 = vector.extract_strided_slice %7 {offsets = [0, 672], sizes = [8, 32], strides = [1, 1]} : vector<8x1152xf32> to vector<8x32xf32>
    %256 = vector.extract_strided_slice %7 {offsets = [0, 1056], sizes = [8, 32], strides = [1, 1]} : vector<8x1152xf32> to vector<8x32xf32>
    %257 = arith.truncf %254 : vector<8x32xf32> to vector<8x32xbf16>
    %258 = arith.truncf %255 : vector<8x32xf32> to vector<8x32xbf16>
    "tpu.trace_start"() <{level = 10 : i32, message = "qd,kd->qk"}> : () -> ()
    %cst_74 = arith.constant dense<0.000000e+00> : vector<8x8xf32>
    %259 = tpu.matmul %257, %258, %cst_74 {dimension_numbers = #tpu.dot_dimension_numbers<[1], [1], [0], [0], [0, 0, 1, 0], [], []>} : vector<8x32xbf16>, vector<8x32xbf16>, vector<8x8xf32> -> vector<8x8xf32>
    "tpu.trace_stop"() : () -> ()
    %cst_75 = arith.constant 0.196116135 : f32
    %260 = vector.broadcast %cst_75 : f32 to vector<8x8xf32>
    %261 = arith.mulf %259, %260 : vector<8x8xf32>
    %262 = vector.broadcast %9 : vector<1x8xf32> to vector<8x8xf32>
    %263 = arith.addf %261, %262 : vector<8x8xf32>
    %cst_76 = arith.constant dense<0xFF800000> : vector<8xf32>
    %264 = vector.multi_reduction <maximumf>, %263, %cst_76 [1] : vector<8x8xf32> to vector<8xf32>
    %265 = vector.shape_cast %264 : vector<8xf32> to vector<8x1xf32>
    %266 = vector.broadcast %265 : vector<8x1xf32> to vector<8x8xf32>
    %267 = arith.subf %263, %266 : vector<8x8xf32>
    %268 = math.exp %267 : vector<8x8xf32>
    %cst_77 = arith.constant dense<0.000000e+00> : vector<8xf32>
    %269 = vector.multi_reduction <add>, %268, %cst_77 [1] : vector<8x8xf32> to vector<8xf32>
    %270 = vector.shape_cast %269 : vector<8xf32> to vector<8x1xf32>
    %271 = tpu.reciprocal %270 {approx = true} : vector<8x1xf32> -> vector<8x1xf32>
    %272 = vector.broadcast %271 : vector<8x1xf32> to vector<8x8xf32>
    %273 = arith.mulf %268, %272 : vector<8x8xf32>
    %274 = arith.truncf %273 : vector<8x8xf32> to vector<8x8xbf16>
    %275 = arith.truncf %256 : vector<8x32xf32> to vector<8x32xbf16>
    %cst_78 = arith.constant dense<0.000000e+00> : vector<8x32xf32>
    %276 = tpu.matmul %274, %275, %cst_78 {dimension_numbers = #tpu.dot_dimension_numbers<[1], [0], [0], [1], [0, 0, 1, 1], [], []>} : vector<8x8xbf16>, vector<8x32xbf16>, vector<8x32xf32> -> vector<8x32xf32>
    %277 = arith.truncf %276 : vector<8x32xf32> to vector<8x32xbf16>
    %c288 = arith.constant 288 : index
    %c0_79 = arith.constant 0 : index
    %278 = vector.load %arg5[%c288, %c0_79] : memref<384x384xbf16, #tpu.memory_space<vmem>>, vector<32x384xbf16>
    %cst_80 = arith.constant dense<0.000000e+00> : vector<8x384xf32>
    %279 = tpu.matmul %277, %278, %cst_80 {dimension_numbers = #tpu.dot_dimension_numbers<[1], [0], [0], [1], [0, 0, 1, 1], [], []>} : vector<8x32xbf16>, vector<32x384xbf16>, vector<8x384xf32> -> vector<8x384xf32>
    %280 = arith.addf %253, %279 : vector<8x384xf32>
    %281 = vector.extract_strided_slice %7 {offsets = [0, 320], sizes = [8, 32], strides = [1, 1]} : vector<8x1152xf32> to vector<8x32xf32>
    %282 = vector.extract_strided_slice %7 {offsets = [0, 704], sizes = [8, 32], strides = [1, 1]} : vector<8x1152xf32> to vector<8x32xf32>
    %283 = vector.extract_strided_slice %7 {offsets = [0, 1088], sizes = [8, 32], strides = [1, 1]} : vector<8x1152xf32> to vector<8x32xf32>
    %284 = arith.truncf %281 : vector<8x32xf32> to vector<8x32xbf16>
    %285 = arith.truncf %282 : vector<8x32xf32> to vector<8x32xbf16>
    "tpu.trace_start"() <{level = 10 : i32, message = "qd,kd->qk"}> : () -> ()
    %cst_81 = arith.constant dense<0.000000e+00> : vector<8x8xf32>
    %286 = tpu.matmul %284, %285, %cst_81 {dimension_numbers = #tpu.dot_dimension_numbers<[1], [1], [0], [0], [0, 0, 1, 0], [], []>} : vector<8x32xbf16>, vector<8x32xbf16>, vector<8x8xf32> -> vector<8x8xf32>
    "tpu.trace_stop"() : () -> ()
    %cst_82 = arith.constant 0.196116135 : f32
    %287 = vector.broadcast %cst_82 : f32 to vector<8x8xf32>
    %288 = arith.mulf %286, %287 : vector<8x8xf32>
    %289 = vector.broadcast %9 : vector<1x8xf32> to vector<8x8xf32>
    %290 = arith.addf %288, %289 : vector<8x8xf32>
    %cst_83 = arith.constant dense<0xFF800000> : vector<8xf32>
    %291 = vector.multi_reduction <maximumf>, %290, %cst_83 [1] : vector<8x8xf32> to vector<8xf32>
    %292 = vector.shape_cast %291 : vector<8xf32> to vector<8x1xf32>
    %293 = vector.broadcast %292 : vector<8x1xf32> to vector<8x8xf32>
    %294 = arith.subf %290, %293 : vector<8x8xf32>
    %295 = math.exp %294 : vector<8x8xf32>
    %cst_84 = arith.constant dense<0.000000e+00> : vector<8xf32>
    %296 = vector.multi_reduction <add>, %295, %cst_84 [1] : vector<8x8xf32> to vector<8xf32>
    %297 = vector.shape_cast %296 : vector<8xf32> to vector<8x1xf32>
    %298 = tpu.reciprocal %297 {approx = true} : vector<8x1xf32> -> vector<8x1xf32>
    %299 = vector.broadcast %298 : vector<8x1xf32> to vector<8x8xf32>
    %300 = arith.mulf %295, %299 : vector<8x8xf32>
    %301 = arith.truncf %300 : vector<8x8xf32> to vector<8x8xbf16>
    %302 = arith.truncf %283 : vector<8x32xf32> to vector<8x32xbf16>
    %cst_85 = arith.constant dense<0.000000e+00> : vector<8x32xf32>
    %303 = tpu.matmul %301, %302, %cst_85 {dimension_numbers = #tpu.dot_dimension_numbers<[1], [0], [0], [1], [0, 0, 1, 1], [], []>} : vector<8x8xbf16>, vector<8x32xbf16>, vector<8x32xf32> -> vector<8x32xf32>
    %304 = arith.truncf %303 : vector<8x32xf32> to vector<8x32xbf16>
    %c320 = arith.constant 320 : index
    %c0_86 = arith.constant 0 : index
    %305 = vector.load %arg5[%c320, %c0_86] : memref<384x384xbf16, #tpu.memory_space<vmem>>, vector<32x384xbf16>
    %cst_87 = arith.constant dense<0.000000e+00> : vector<8x384xf32>
    %306 = tpu.matmul %304, %305, %cst_87 {dimension_numbers = #tpu.dot_dimension_numbers<[1], [0], [0], [1], [0, 0, 1, 1], [], []>} : vector<8x32xbf16>, vector<32x384xbf16>, vector<8x384xf32> -> vector<8x384xf32>
    %307 = arith.addf %280, %306 : vector<8x384xf32>
    %308 = vector.extract_strided_slice %7 {offsets = [0, 352], sizes = [8, 32], strides = [1, 1]} : vector<8x1152xf32> to vector<8x32xf32>
    %309 = vector.extract_strided_slice %7 {offsets = [0, 736], sizes = [8, 32], strides = [1, 1]} : vector<8x1152xf32> to vector<8x32xf32>
    %310 = vector.extract_strided_slice %7 {offsets = [0, 1120], sizes = [8, 32], strides = [1, 1]} : vector<8x1152xf32> to vector<8x32xf32>
    %311 = arith.truncf %308 : vector<8x32xf32> to vector<8x32xbf16>
    %312 = arith.truncf %309 : vector<8x32xf32> to vector<8x32xbf16>
    "tpu.trace_start"() <{level = 10 : i32, message = "qd,kd->qk"}> : () -> ()
    %cst_88 = arith.constant dense<0.000000e+00> : vector<8x8xf32>
    %313 = tpu.matmul %311, %312, %cst_88 {dimension_numbers = #tpu.dot_dimension_numbers<[1], [1], [0], [0], [0, 0, 1, 0], [], []>} : vector<8x32xbf16>, vector<8x32xbf16>, vector<8x8xf32> -> vector<8x8xf32>
    "tpu.trace_stop"() : () -> ()
    %cst_89 = arith.constant 0.196116135 : f32
    %314 = vector.broadcast %cst_89 : f32 to vector<8x8xf32>
    %315 = arith.mulf %313, %314 : vector<8x8xf32>
    %316 = vector.broadcast %9 : vector<1x8xf32> to vector<8x8xf32>
    %317 = arith.addf %315, %316 : vector<8x8xf32>
    %cst_90 = arith.constant dense<0xFF800000> : vector<8xf32>
    %318 = vector.multi_reduction <maximumf>, %317, %cst_90 [1] : vector<8x8xf32> to vector<8xf32>
    %319 = vector.shape_cast %318 : vector<8xf32> to vector<8x1xf32>
    %320 = vector.broadcast %319 : vector<8x1xf32> to vector<8x8xf32>
    %321 = arith.subf %317, %320 : vector<8x8xf32>
    %322 = math.exp %321 : vector<8x8xf32>
    %cst_91 = arith.constant dense<0.000000e+00> : vector<8xf32>
    %323 = vector.multi_reduction <add>, %322, %cst_91 [1] : vector<8x8xf32> to vector<8xf32>
    %324 = vector.shape_cast %323 : vector<8xf32> to vector<8x1xf32>
    %325 = tpu.reciprocal %324 {approx = true} : vector<8x1xf32> -> vector<8x1xf32>
    %326 = vector.broadcast %325 : vector<8x1xf32> to vector<8x8xf32>
    %327 = arith.mulf %322, %326 : vector<8x8xf32>
    %328 = arith.truncf %327 : vector<8x8xf32> to vector<8x8xbf16>
    %329 = arith.truncf %310 : vector<8x32xf32> to vector<8x32xbf16>
    %cst_92 = arith.constant dense<0.000000e+00> : vector<8x32xf32>
    %330 = tpu.matmul %328, %329, %cst_92 {dimension_numbers = #tpu.dot_dimension_numbers<[1], [0], [0], [1], [0, 0, 1, 1], [], []>} : vector<8x8xbf16>, vector<8x32xbf16>, vector<8x32xf32> -> vector<8x32xf32>
    %331 = arith.truncf %330 : vector<8x32xf32> to vector<8x32xbf16>
    %c352 = arith.constant 352 : index
    %c0_93 = arith.constant 0 : index
    %332 = vector.load %arg5[%c352, %c0_93] : memref<384x384xbf16, #tpu.memory_space<vmem>>, vector<32x384xbf16>
    %cst_94 = arith.constant dense<0.000000e+00> : vector<8x384xf32>
    %333 = tpu.matmul %331, %332, %cst_94 {dimension_numbers = #tpu.dot_dimension_numbers<[1], [0], [0], [1], [0, 0, 1, 1], [], []>} : vector<8x32xbf16>, vector<32x384xbf16>, vector<8x384xf32> -> vector<8x384xf32>
    %334 = arith.addf %307, %333 : vector<8x384xf32>
    %c0_95 = arith.constant 0 : index
    %c0_96 = arith.constant 0 : index
    %335 = vector.load %arg6[%c0_95, %c0_96] : memref<1x384xf32, #tpu.memory_space<vmem>>, vector<1x384xf32>
    %336 = vector.broadcast %335 : vector<1x384xf32> to vector<8x384xf32>
    %337 = arith.addf %334, %336 : vector<8x384xf32>
    %338 = arith.addf %337, %1 : vector<8x384xf32>
    %c0_97 = arith.constant 0 : index
    %c0_98 = arith.constant 0 : index
    %339 = vector.load %arg7[%c0_97, %c0_98] : memref<1x384xf32, #tpu.memory_space<vmem>>, vector<1x384xf32>
    %c0_99 = arith.constant 0 : index
    %c0_100 = arith.constant 0 : index
    %340 = vector.load %arg8[%c0_99, %c0_100] : memref<1x384xf32, #tpu.memory_space<vmem>>, vector<1x384xf32>
    %cst_101 = arith.constant dense<0.000000e+00> : vector<8xf32>
    %341 = vector.multi_reduction <add>, %338, %cst_101 [1] : vector<8x384xf32> to vector<8xf32>
    %342 = vector.shape_cast %341 : vector<8xf32> to vector<8x1xf32>
    %cst_102 = arith.constant 0.00320512825 : f32
    %343 = vector.broadcast %cst_102 : f32 to vector<8x1xf32>
    %344 = arith.mulf %342, %343 : vector<8x1xf32>
    %345 = tpu.iota {dimensions = array<i32: 1>} : vector<1x384xi32>
    %c312_i32 = arith.constant 312 : i32
    %346 = vector.broadcast %c312_i32 : i32 to vector<1x384xi32>
    %347 = arith.cmpi slt, %345, %346 : vector<1x384xi32>
    %348 = arith.extui %347 : vector<1x384xi1> to vector<1x384xi32>
    %349 = arith.sitofp %348 : vector<1x384xi32> to vector<1x384xf32>
    %350 = vector.broadcast %344 : vector<8x1xf32> to vector<8x384xf32>
    %351 = arith.subf %338, %350 : vector<8x384xf32>
    %352 = vector.broadcast %349 : vector<1x384xf32> to vector<8x384xf32>
    %353 = arith.mulf %351, %352 : vector<8x384xf32>
    %354 = arith.mulf %353, %353 : vector<8x384xf32>
    %cst_103 = arith.constant dense<0.000000e+00> : vector<8xf32>
    %355 = vector.multi_reduction <add>, %354, %cst_103 [1] : vector<8x384xf32> to vector<8xf32>
    %356 = vector.shape_cast %355 : vector<8xf32> to vector<8x1xf32>
    %cst_104 = arith.constant 0.00320512825 : f32
    %357 = vector.broadcast %cst_104 : f32 to vector<8x1xf32>
    %358 = arith.mulf %356, %357 : vector<8x1xf32>
    %cst_105 = arith.constant 9.99999996E-13 : f32
    %359 = vector.broadcast %cst_105 : f32 to vector<8x1xf32>
    %360 = arith.addf %358, %359 : vector<8x1xf32>
    %361 = math.rsqrt %360 : vector<8x1xf32>
    %362 = vector.broadcast %361 : vector<8x1xf32> to vector<8x384xf32>
    %363 = arith.mulf %353, %362 : vector<8x384xf32>
    %364 = vector.broadcast %339 : vector<1x384xf32> to vector<8x384xf32>
    %365 = arith.mulf %363, %364 : vector<8x384xf32>
    %366 = vector.broadcast %340 : vector<1x384xf32> to vector<8x384xf32>
    %367 = arith.addf %365, %366 : vector<8x384xf32>
    %c0_106 = arith.constant 0 : index
    %c0_107 = arith.constant 0 : index
    %c0_108 = arith.constant 0 : index
    %368 = vector.load %arg9[%c0_106, %c0_107, %c0_108] : memref<1x8x384xf32, #tpu.memory_space<vmem>>, vector<1x8x384xf32>
    %369 = vector.shape_cast %368 : vector<1x8x384xf32> to vector<8x384xf32>
    %370 = vector.shape_cast %367 : vector<8x384xf32> to vector<1x8x384xf32>
    tpu.vector_store %arg9[%c0_106, %c0_107, %c0_108], %370 {strides = array<i32>} : memref<1x8x384xf32, #tpu.memory_space<vmem>>, vector<1x8x384xf32>,
    return
  }
  func.func @transform_0(%arg0: i32) -> (i32, i32, i32) {
    %c0_i32 = arith.constant 0 : i32
    %c0_i32_0 = arith.constant 0 : i32
    %c0_i32_1 = arith.constant 0 : i32
    return %arg0, %c0_i32, %c0_i32_0 : i32, i32, i32
  }
  func.func @transform_1(%arg0: i32) -> (i32, i32) {
    %c0_i32 = arith.constant 0 : i32
    %c0_i32_0 = arith.constant 0 : i32
    %c0_i32_1 = arith.constant 0 : i32
    return %c0_i32, %c0_i32_0 : i32, i32
  }
  func.func @transform_2(%arg0: i32) -> (i32, i32) {
    %c0_i32 = arith.constant 0 : i32
    %c0_i32_0 = arith.constant 0 : i32
    %c0_i32_1 = arith.constant 0 : i32
    return %c0_i32, %c0_i32_0 : i32, i32
  }
  func.func @transform_3(%arg0: i32) -> (i32, i32, i32) {
    %c0_i32 = arith.constant 0 : i32
    %c0_i32_0 = arith.constant 0 : i32
    %c0_i32_1 = arith.constant 0 : i32
    return %arg0, %c0_i32, %c0_i32_0 : i32, i32, i32
  }
  func.func @transform_4(%arg0: i32) -> (i32, i32) {
    %c0_i32 = arith.constant 0 : i32
    %c0_i32_0 = arith.constant 0 : i32
    %c0_i32_1 = arith.constant 0 : i32
    return %c0_i32, %c0_i32_0 : i32, i32
  }
  func.func @transform_5(%arg0: i32) -> (i32, i32) {
    %c0_i32 = arith.constant 0 : i32
    %c0_i32_0 = arith.constant 0 : i32
    %c0_i32_1 = arith.constant 0 : i32
    return %c0_i32, %c0_i32_0 : i32, i32
  }
  func.func @transform_6(%arg0: i32) -> (i32, i32) {
    %c0_i32 = arith.constant 0 : i32
    %c0_i32_0 = arith.constant 0 : i32
    %c0_i32_1 = arith.constant 0 : i32
    return %c0_i32, %c0_i32_0 : i32, i32
  }
  func.func @transform_7(%arg0: i32) -> (i32, i32) {
    %c0_i32 = arith.constant 0 : i32
    %c0_i32_0 = arith.constant 0 : i32
    %c0_i32_1 = arith.constant 0 : i32
    return %c0_i32, %c0_i32_0 : i32, i32
  }
  func.func @transform_8(%arg0: i32) -> (i32, i32, i32) {
    %c0_i32 = arith.constant 0 : i32
    %c0_i32_0 = arith.constant 0 : i32
    %c0_i32_1 = arith.constant 0 : i32
    return %arg0, %c0_i32, %c0_i32_0 : i32, i32, i32
  }
}

module attributes {stable_mosaic.version = 11 : i64} {
  func.func @_embed_ln_kernel(%arg0: i32, %arg1: memref<16x384xf32, #tpu.memory_space<vmem>>, %arg2: memref<1x384xf32, #tpu.memory_space<vmem>>, %arg3: memref<1x384xf32, #tpu.memory_space<vmem>>, %arg4: memref<16x384xf32, #tpu.memory_space<vmem>>) attributes {dimension_semantics = [#tpu.dimension_semantics<parallel>], iteration_bounds = array<i64: 1>, scalar_prefetch = 0 : i64, scratch_operands = 0 : i64, tpu.core_type = #tpu.core_type<tc>, window_params = [{transform_indices = @transform_0, window_bounds = array<i64: 16, 384>}, {pipeline_mode = #tpu.pipeline_mode<synchronous>, transform_indices = @transform_1, window_bounds = array<i64: 1, 384>}, {pipeline_mode = #tpu.pipeline_mode<synchronous>, transform_indices = @transform_2, window_bounds = array<i64: 1, 384>}, {transform_indices = @transform_3, window_bounds = array<i64: 16, 384>}]} {
    %c0 = arith.constant 0 : index
    %c0_0 = arith.constant 0 : index
    %0 = vector.load %arg1[%c0, %c0_0] : memref<16x384xf32, #tpu.memory_space<vmem>>, vector<16x384xf32>
    %c0_1 = arith.constant 0 : index
    %c0_2 = arith.constant 0 : index
    %1 = vector.load %arg2[%c0_1, %c0_2] : memref<1x384xf32, #tpu.memory_space<vmem>>, vector<1x384xf32>
    %c0_3 = arith.constant 0 : index
    %c0_4 = arith.constant 0 : index
    %2 = vector.load %arg3[%c0_3, %c0_4] : memref<1x384xf32, #tpu.memory_space<vmem>>, vector<1x384xf32>
    %cst = arith.constant dense<0.000000e+00> : vector<16xf32>
    %3 = vector.multi_reduction <add>, %0, %cst [1] : vector<16x384xf32> to vector<16xf32>
    %4 = vector.shape_cast %3 : vector<16xf32> to vector<16x1xf32>
    %cst_5 = arith.constant 0.00320512825 : f32
    %5 = vector.broadcast %cst_5 : f32 to vector<16x1xf32>
    %6 = arith.mulf %4, %5 : vector<16x1xf32>
    %7 = tpu.iota {dimensions = array<i32: 1>} : vector<1x384xi32>
    %c312_i32 = arith.constant 312 : i32
    %8 = vector.broadcast %c312_i32 : i32 to vector<1x384xi32>
    %9 = arith.cmpi slt, %7, %8 : vector<1x384xi32>
    %10 = arith.extui %9 : vector<1x384xi1> to vector<1x384xi32>
    %11 = arith.sitofp %10 : vector<1x384xi32> to vector<1x384xf32>
    %12 = vector.broadcast %6 : vector<16x1xf32> to vector<16x384xf32>
    %13 = arith.subf %0, %12 : vector<16x384xf32>
    %14 = vector.broadcast %11 : vector<1x384xf32> to vector<16x384xf32>
    %15 = arith.mulf %13, %14 : vector<16x384xf32>
    %16 = arith.mulf %15, %15 : vector<16x384xf32>
    %cst_6 = arith.constant dense<0.000000e+00> : vector<16xf32>
    %17 = vector.multi_reduction <add>, %16, %cst_6 [1] : vector<16x384xf32> to vector<16xf32>
    %18 = vector.shape_cast %17 : vector<16xf32> to vector<16x1xf32>
    %cst_7 = arith.constant 0.00320512825 : f32
    %19 = vector.broadcast %cst_7 : f32 to vector<16x1xf32>
    %20 = arith.mulf %18, %19 : vector<16x1xf32>
    %cst_8 = arith.constant 9.99999996E-13 : f32
    %21 = vector.broadcast %cst_8 : f32 to vector<16x1xf32>
    %22 = arith.addf %20, %21 : vector<16x1xf32>
    %23 = math.rsqrt %22 : vector<16x1xf32>
    %24 = vector.broadcast %23 : vector<16x1xf32> to vector<16x384xf32>
    %25 = arith.mulf %15, %24 : vector<16x384xf32>
    %26 = vector.broadcast %1 : vector<1x384xf32> to vector<16x384xf32>
    %27 = arith.mulf %25, %26 : vector<16x384xf32>
    %28 = vector.broadcast %2 : vector<1x384xf32> to vector<16x384xf32>
    %29 = arith.addf %27, %28 : vector<16x384xf32>
    %c0_9 = arith.constant 0 : index
    %c0_10 = arith.constant 0 : index
    %30 = vector.load %arg4[%c0_9, %c0_10] : memref<16x384xf32, #tpu.memory_space<vmem>>, vector<16x384xf32>
    tpu.vector_store %arg4[%c0_9, %c0_10], %29 {strides = array<i32>} : memref<16x384xf32, #tpu.memory_space<vmem>>, vector<16x384xf32>,
    return
  }
  func.func @transform_0(%arg0: i32) -> (i32, i32) {
    %c0_i32 = arith.constant 0 : i32
    %c0_i32_0 = arith.constant 0 : i32
    return %arg0, %c0_i32 : i32, i32
  }
  func.func @transform_1(%arg0: i32) -> (i32, i32) {
    %c0_i32 = arith.constant 0 : i32
    %c0_i32_0 = arith.constant 0 : i32
    %c0_i32_1 = arith.constant 0 : i32
    return %c0_i32, %c0_i32_0 : i32, i32
  }
  func.func @transform_2(%arg0: i32) -> (i32, i32) {
    %c0_i32 = arith.constant 0 : i32
    %c0_i32_0 = arith.constant 0 : i32
    %c0_i32_1 = arith.constant 0 : i32
    return %c0_i32, %c0_i32_0 : i32, i32
  }
  func.func @transform_3(%arg0: i32) -> (i32, i32) {
    %c0_i32 = arith.constant 0 : i32
    %c0_i32_0 = arith.constant 0 : i32
    return %arg0, %c0_i32 : i32, i32
  }
}

module attributes {stable_mosaic.version = 11 : i64} {
  func.func @_ffn_ln_kernel(%arg0: i32, %arg1: memref<16x384xf32, #tpu.memory_space<vmem>>, %arg2: memref<384x640xbf16, #tpu.memory_space<vmem>>, %arg3: memref<1x640xf32, #tpu.memory_space<vmem>>, %arg4: memref<640x384xbf16, #tpu.memory_space<vmem>>, %arg5: memref<1x384xf32, #tpu.memory_space<vmem>>, %arg6: memref<1x384xf32, #tpu.memory_space<vmem>>, %arg7: memref<1x384xf32, #tpu.memory_space<vmem>>, %arg8: memref<16x384xf32, #tpu.memory_space<vmem>>) attributes {dimension_semantics = [#tpu.dimension_semantics<parallel>], iteration_bounds = array<i64: 1>, scalar_prefetch = 0 : i64, scratch_operands = 0 : i64, tpu.core_type = #tpu.core_type<tc>, window_params = [{transform_indices = @transform_0, window_bounds = array<i64: 16, 384>}, {pipeline_mode = #tpu.pipeline_mode<synchronous>, transform_indices = @transform_1, window_bounds = array<i64: 384, 640>}, {pipeline_mode = #tpu.pipeline_mode<synchronous>, transform_indices = @transform_2, window_bounds = array<i64: 1, 640>}, {pipeline_mode = #tpu.pipeline_mode<synchronous>, transform_indices = @transform_3, window_bounds = array<i64: 640, 384>}, {pipeline_mode = #tpu.pipeline_mode<synchronous>, transform_indices = @transform_4, window_bounds = array<i64: 1, 384>}, {pipeline_mode = #tpu.pipeline_mode<synchronous>, transform_indices = @transform_5, window_bounds = array<i64: 1, 384>}, {pipeline_mode = #tpu.pipeline_mode<synchronous>, transform_indices = @transform_6, window_bounds = array<i64: 1, 384>}, {transform_indices = @transform_7, window_bounds = array<i64: 16, 384>}]} {
    %c0 = arith.constant 0 : index
    %c0_0 = arith.constant 0 : index
    %0 = vector.load %arg1[%c0, %c0_0] : memref<16x384xf32, #tpu.memory_space<vmem>>, vector<16x384xf32>
    %1 = arith.truncf %0 : vector<16x384xf32> to vector<16x384xbf16>
    %c0_1 = arith.constant 0 : index
    %c0_2 = arith.constant 0 : index
    %2 = vector.load %arg2[%c0_1, %c0_2] : memref<384x640xbf16, #tpu.memory_space<vmem>>, vector<384x640xbf16>
    %cst = arith.constant dense<0.000000e+00> : vector<16x640xf32>
    %3 = tpu.matmul %1, %2, %cst {dimension_numbers = #tpu.dot_dimension_numbers<[1], [0], [0], [1], [0, 0, 1, 1], [], []>} : vector<16x384xbf16>, vector<384x640xbf16>, vector<16x640xf32> -> vector<16x640xf32>
    %c0_3 = arith.constant 0 : index
    %c0_4 = arith.constant 0 : index
    %4 = vector.load %arg3[%c0_3, %c0_4] : memref<1x640xf32, #tpu.memory_space<vmem>>, vector<1x640xf32>
    %5 = vector.broadcast %4 : vector<1x640xf32> to vector<16x640xf32>
    %6 = arith.addf %3, %5 : vector<16x640xf32>
    %cst_5 = arith.constant 5.000000e-01 : f32
    %7 = vector.broadcast %cst_5 : f32 to vector<16x640xf32>
    %8 = arith.mulf %7, %6 : vector<16x640xf32>
    %cst_6 = arith.constant 4.471500e-02 : f32
    %9 = vector.broadcast %cst_6 : f32 to vector<16x640xf32>
    %10 = arith.mulf %9, %6 : vector<16x640xf32>
    %11 = arith.mulf %10, %6 : vector<16x640xf32>
    %12 = arith.mulf %11, %6 : vector<16x640xf32>
    %13 = arith.addf %6, %12 : vector<16x640xf32>
    %cst_7 = arith.constant 0.797884583 : f32
    %14 = vector.broadcast %cst_7 : f32 to vector<16x640xf32>
    %15 = arith.mulf %14, %13 : vector<16x640xf32>
    %16 = math.tanh %15 : vector<16x640xf32>
    %cst_8 = arith.constant 1.000000e+00 : f32
    %17 = vector.broadcast %cst_8 : f32 to vector<16x640xf32>
    %18 = arith.addf %17, %16 : vector<16x640xf32>
    %19 = arith.mulf %8, %18 : vector<16x640xf32>
    %20 = arith.truncf %19 : vector<16x640xf32> to vector<16x640xbf16>
    %c0_9 = arith.constant 0 : index
    %c0_10 = arith.constant 0 : index
    %21 = vector.load %arg4[%c0_9, %c0_10] : memref<640x384xbf16, #tpu.memory_space<vmem>>, vector<640x384xbf16>
    %cst_11 = arith.constant dense<0.000000e+00> : vector<16x384xf32>
    %22 = tpu.matmul %20, %21, %cst_11 {dimension_numbers = #tpu.dot_dimension_numbers<[1], [0], [0], [1], [0, 0, 1, 1], [], []>} : vector<16x640xbf16>, vector<640x384xbf16>, vector<16x384xf32> -> vector<16x384xf32>
    %c0_12 = arith.constant 0 : index
    %c0_13 = arith.constant 0 : index
    %23 = vector.load %arg5[%c0_12, %c0_13] : memref<1x384xf32, #tpu.memory_space<vmem>>, vector<1x384xf32>
    %24 = vector.broadcast %23 : vector<1x384xf32> to vector<16x384xf32>
    %25 = arith.addf %22, %24 : vector<16x384xf32>
    %26 = arith.addf %25, %0 : vector<16x384xf32>
    %c0_14 = arith.constant 0 : index
    %c0_15 = arith.constant 0 : index
    %27 = vector.load %arg6[%c0_14, %c0_15] : memref<1x384xf32, #tpu.memory_space<vmem>>, vector<1x384xf32>
    %c0_16 = arith.constant 0 : index
    %c0_17 = arith.constant 0 : index
    %28 = vector.load %arg7[%c0_16, %c0_17] : memref<1x384xf32, #tpu.memory_space<vmem>>, vector<1x384xf32>
    %cst_18 = arith.constant dense<0.000000e+00> : vector<16xf32>
    %29 = vector.multi_reduction <add>, %26, %cst_18 [1] : vector<16x384xf32> to vector<16xf32>
    %30 = vector.shape_cast %29 : vector<16xf32> to vector<16x1xf32>
    %cst_19 = arith.constant 0.00320512825 : f32
    %31 = vector.broadcast %cst_19 : f32 to vector<16x1xf32>
    %32 = arith.mulf %30, %31 : vector<16x1xf32>
    %33 = tpu.iota {dimensions = array<i32: 1>} : vector<1x384xi32>
    %c312_i32 = arith.constant 312 : i32
    %34 = vector.broadcast %c312_i32 : i32 to vector<1x384xi32>
    %35 = arith.cmpi slt, %33, %34 : vector<1x384xi32>
    %36 = arith.extui %35 : vector<1x384xi1> to vector<1x384xi32>
    %37 = arith.sitofp %36 : vector<1x384xi32> to vector<1x384xf32>
    %38 = vector.broadcast %32 : vector<16x1xf32> to vector<16x384xf32>
    %39 = arith.subf %26, %38 : vector<16x384xf32>
    %40 = vector.broadcast %37 : vector<1x384xf32> to vector<16x384xf32>
    %41 = arith.mulf %39, %40 : vector<16x384xf32>
    %42 = arith.mulf %41, %41 : vector<16x384xf32>
    %cst_20 = arith.constant dense<0.000000e+00> : vector<16xf32>
    %43 = vector.multi_reduction <add>, %42, %cst_20 [1] : vector<16x384xf32> to vector<16xf32>
    %44 = vector.shape_cast %43 : vector<16xf32> to vector<16x1xf32>
    %cst_21 = arith.constant 0.00320512825 : f32
    %45 = vector.broadcast %cst_21 : f32 to vector<16x1xf32>
    %46 = arith.mulf %44, %45 : vector<16x1xf32>
    %cst_22 = arith.constant 9.99999996E-13 : f32
    %47 = vector.broadcast %cst_22 : f32 to vector<16x1xf32>
    %48 = arith.addf %46, %47 : vector<16x1xf32>
    %49 = math.rsqrt %48 : vector<16x1xf32>
    %50 = vector.broadcast %49 : vector<16x1xf32> to vector<16x384xf32>
    %51 = arith.mulf %41, %50 : vector<16x384xf32>
    %52 = vector.broadcast %27 : vector<1x384xf32> to vector<16x384xf32>
    %53 = arith.mulf %51, %52 : vector<16x384xf32>
    %54 = vector.broadcast %28 : vector<1x384xf32> to vector<16x384xf32>
    %55 = arith.addf %53, %54 : vector<16x384xf32>
    %c0_23 = arith.constant 0 : index
    %c0_24 = arith.constant 0 : index
    %56 = vector.load %arg8[%c0_23, %c0_24] : memref<16x384xf32, #tpu.memory_space<vmem>>, vector<16x384xf32>
    tpu.vector_store %arg8[%c0_23, %c0_24], %55 {strides = array<i32>} : memref<16x384xf32, #tpu.memory_space<vmem>>, vector<16x384xf32>,
    return
  }
  func.func @transform_0(%arg0: i32) -> (i32, i32) {
    %c0_i32 = arith.constant 0 : i32
    %c0_i32_0 = arith.constant 0 : i32
    return %arg0, %c0_i32 : i32, i32
  }
  func.func @transform_1(%arg0: i32) -> (i32, i32) {
    %c0_i32 = arith.constant 0 : i32
    %c0_i32_0 = arith.constant 0 : i32
    %c0_i32_1 = arith.constant 0 : i32
    return %c0_i32, %c0_i32_0 : i32, i32
  }
  func.func @transform_2(%arg0: i32) -> (i32, i32) {
    %c0_i32 = arith.constant 0 : i32
    %c0_i32_0 = arith.constant 0 : i32
    %c0_i32_1 = arith.constant 0 : i32
    return %c0_i32, %c0_i32_0 : i32, i32
  }
  func.func @transform_3(%arg0: i32) -> (i32, i32) {
    %c0_i32 = arith.constant 0 : i32
    %c0_i32_0 = arith.constant 0 : i32
    %c0_i32_1 = arith.constant 0 : i32
    return %c0_i32, %c0_i32_0 : i32, i32
  }
  func.func @transform_4(%arg0: i32) -> (i32, i32) {
    %c0_i32 = arith.constant 0 : i32
    %c0_i32_0 = arith.constant 0 : i32
    %c0_i32_1 = arith.constant 0 : i32
    return %c0_i32, %c0_i32_0 : i32, i32
  }
  func.func @transform_5(%arg0: i32) -> (i32, i32) {
    %c0_i32 = arith.constant 0 : i32
    %c0_i32_0 = arith.constant 0 : i32
    %c0_i32_1 = arith.constant 0 : i32
    return %c0_i32, %c0_i32_0 : i32, i32
  }
  func.func @transform_6(%arg0: i32) -> (i32, i32) {
    %c0_i32 = arith.constant 0 : i32
    %c0_i32_0 = arith.constant 0 : i32
    %c0_i32_1 = arith.constant 0 : i32
    return %c0_i32, %c0_i32_0 : i32, i32
  }
  func.func @transform_7(%arg0: i32) -> (i32, i32) {
    %c0_i32 = arith.constant 0 : i32
    %c0_i32_0 = arith.constant 0 : i32
    return %arg0, %c0_i32 : i32, i32
  }
}

module attributes {stable_mosaic.version = 11 : i64} {
  func.func @_cls_head_kernel(%arg0: i32, %arg1: memref<2x384xf32, #tpu.memory_space<vmem>>, %arg2: memref<384x156xbf16, #tpu.memory_space<vmem>>, %arg3: memref<1x156xf32, #tpu.memory_space<vmem>>, %arg4: memref<156x64xbf16, #tpu.memory_space<vmem>>, %arg5: memref<1x64xf32, #tpu.memory_space<vmem>>, %arg6: memref<64x3xbf16, #tpu.memory_space<vmem>>, %arg7: memref<1x3xf32, #tpu.memory_space<vmem>>, %arg8: memref<2x3xf32, #tpu.memory_space<vmem>>) attributes {dimension_semantics = [#tpu.dimension_semantics<parallel>], iteration_bounds = array<i64: 1>, scalar_prefetch = 0 : i64, scratch_operands = 0 : i64, tpu.core_type = #tpu.core_type<tc>, window_params = [{pipeline_mode = #tpu.pipeline_mode<synchronous>, transform_indices = @transform_0, window_bounds = array<i64: 2, 384>}, {pipeline_mode = #tpu.pipeline_mode<synchronous>, transform_indices = @transform_1, window_bounds = array<i64: 384, 156>}, {pipeline_mode = #tpu.pipeline_mode<synchronous>, transform_indices = @transform_2, window_bounds = array<i64: 1, 156>}, {pipeline_mode = #tpu.pipeline_mode<synchronous>, transform_indices = @transform_3, window_bounds = array<i64: 156, 64>}, {pipeline_mode = #tpu.pipeline_mode<synchronous>, transform_indices = @transform_4, window_bounds = array<i64: 1, 64>}, {pipeline_mode = #tpu.pipeline_mode<synchronous>, transform_indices = @transform_5, window_bounds = array<i64: 64, 3>}, {pipeline_mode = #tpu.pipeline_mode<synchronous>, transform_indices = @transform_6, window_bounds = array<i64: 1, 3>}, {pipeline_mode = #tpu.pipeline_mode<synchronous>, transform_indices = @transform_7, window_bounds = array<i64: 2, 3>}]} {
    %c0 = arith.constant 0 : index
    %c0_0 = arith.constant 0 : index
    %0 = vector.load %arg1[%c0, %c0_0] : memref<2x384xf32, #tpu.memory_space<vmem>>, vector<2x384xf32>
    %1 = arith.truncf %0 : vector<2x384xf32> to vector<2x384xbf16>
    %c0_1 = arith.constant 0 : index
    %c0_2 = arith.constant 0 : index
    %2 = vector.load %arg2[%c0_1, %c0_2] : memref<384x156xbf16, #tpu.memory_space<vmem>>, vector<384x156xbf16>
    %cst = arith.constant dense<0.000000e+00> : vector<2x156xf32>
    %3 = tpu.matmul %1, %2, %cst {dimension_numbers = #tpu.dot_dimension_numbers<[1], [0], [0], [1], [0, 0, 1, 1], [], []>} : vector<2x384xbf16>, vector<384x156xbf16>, vector<2x156xf32> -> vector<2x156xf32>
    %c0_3 = arith.constant 0 : index
    %c0_4 = arith.constant 0 : index
    %4 = vector.load %arg3[%c0_3, %c0_4] : memref<1x156xf32, #tpu.memory_space<vmem>>, vector<1x156xf32>
    %5 = vector.broadcast %4 : vector<1x156xf32> to vector<2x156xf32>
    %6 = arith.addf %3, %5 : vector<2x156xf32>
    %cst_5 = arith.constant 0.000000e+00 : f32
    %7 = vector.broadcast %cst_5 : f32 to vector<2x156xf32>
    %8 = arith.maximumf %6, %7 : vector<2x156xf32>
    %9 = arith.truncf %8 : vector<2x156xf32> to vector<2x156xbf16>
    %c0_6 = arith.constant 0 : index
    %c0_7 = arith.constant 0 : index
    %10 = vector.load %arg4[%c0_6, %c0_7] : memref<156x64xbf16, #tpu.memory_space<vmem>>, vector<156x64xbf16>
    %cst_8 = arith.constant dense<0.000000e+00> : vector<2x64xf32>
    %11 = tpu.matmul %9, %10, %cst_8 {dimension_numbers = #tpu.dot_dimension_numbers<[1], [0], [0], [1], [0, 0, 1, 1], [], []>} : vector<2x156xbf16>, vector<156x64xbf16>, vector<2x64xf32> -> vector<2x64xf32>
    %c0_9 = arith.constant 0 : index
    %c0_10 = arith.constant 0 : index
    %12 = vector.load %arg5[%c0_9, %c0_10] : memref<1x64xf32, #tpu.memory_space<vmem>>, vector<1x64xf32>
    %13 = vector.broadcast %12 : vector<1x64xf32> to vector<2x64xf32>
    %14 = arith.addf %11, %13 : vector<2x64xf32>
    %cst_11 = arith.constant 0.000000e+00 : f32
    %15 = vector.broadcast %cst_11 : f32 to vector<2x64xf32>
    %16 = arith.maximumf %14, %15 : vector<2x64xf32>
    %17 = arith.truncf %16 : vector<2x64xf32> to vector<2x64xbf16>
    %c0_12 = arith.constant 0 : index
    %c0_13 = arith.constant 0 : index
    %18 = vector.load %arg6[%c0_12, %c0_13] : memref<64x3xbf16, #tpu.memory_space<vmem>>, vector<64x3xbf16>
    %cst_14 = arith.constant dense<0.000000e+00> : vector<2x3xf32>
    %19 = tpu.matmul %17, %18, %cst_14 {dimension_numbers = #tpu.dot_dimension_numbers<[1], [0], [0], [1], [0, 0, 1, 1], [], []>} : vector<2x64xbf16>, vector<64x3xbf16>, vector<2x3xf32> -> vector<2x3xf32>
    %c0_15 = arith.constant 0 : index
    %c0_16 = arith.constant 0 : index
    %20 = vector.load %arg7[%c0_15, %c0_16] : memref<1x3xf32, #tpu.memory_space<vmem>>, vector<1x3xf32>
    %21 = vector.broadcast %20 : vector<1x3xf32> to vector<2x3xf32>
    %22 = arith.addf %19, %21 : vector<2x3xf32>
    %cst_17 = arith.constant 0.000000e+00 : f32
    %23 = vector.broadcast %cst_17 : f32 to vector<2x3xf32>
    %24 = arith.maximumf %22, %23 : vector<2x3xf32>
    %c0_18 = arith.constant 0 : index
    %c0_19 = arith.constant 0 : index
    %25 = vector.load %arg8[%c0_18, %c0_19] : memref<2x3xf32, #tpu.memory_space<vmem>>, vector<2x3xf32>
    tpu.vector_store %arg8[%c0_18, %c0_19], %24 {strides = array<i32>} : memref<2x3xf32, #tpu.memory_space<vmem>>, vector<2x3xf32>,
    return
  }
  func.func @transform_0(%arg0: i32) -> (i32, i32) {
    %c0_i32 = arith.constant 0 : i32
    %c0_i32_0 = arith.constant 0 : i32
    %c0_i32_1 = arith.constant 0 : i32
    return %c0_i32, %c0_i32_0 : i32, i32
  }
  func.func @transform_1(%arg0: i32) -> (i32, i32) {
    %c0_i32 = arith.constant 0 : i32
    %c0_i32_0 = arith.constant 0 : i32
    %c0_i32_1 = arith.constant 0 : i32
    return %c0_i32, %c0_i32_0 : i32, i32
  }
  func.func @transform_2(%arg0: i32) -> (i32, i32) {
    %c0_i32 = arith.constant 0 : i32
    %c0_i32_0 = arith.constant 0 : i32
    %c0_i32_1 = arith.constant 0 : i32
    return %c0_i32, %c0_i32_0 : i32, i32
  }
  func.func @transform_3(%arg0: i32) -> (i32, i32) {
    %c0_i32 = arith.constant 0 : i32
    %c0_i32_0 = arith.constant 0 : i32
    %c0_i32_1 = arith.constant 0 : i32
    return %c0_i32, %c0_i32_0 : i32, i32
  }
  func.func @transform_4(%arg0: i32) -> (i32, i32) {
    %c0_i32 = arith.constant 0 : i32
    %c0_i32_0 = arith.constant 0 : i32
    %c0_i32_1 = arith.constant 0 : i32
    return %c0_i32, %c0_i32_0 : i32, i32
  }
  func.func @transform_5(%arg0: i32) -> (i32, i32) {
    %c0_i32 = arith.constant 0 : i32
    %c0_i32_0 = arith.constant 0 : i32
    %c0_i32_1 = arith.constant 0 : i32
    return %c0_i32, %c0_i32_0 : i32, i32
  }
  func.func @transform_6(%arg0: i32) -> (i32, i32) {
    %c0_i32 = arith.constant 0 : i32
    %c0_i32_0 = arith.constant 0 : i32
    %c0_i32_1 = arith.constant 0 : i32
    return %c0_i32, %c0_i32_0 : i32, i32
  }
  func.func @transform_7(%arg0: i32) -> (i32, i32) {
    %c0_i32 = arith.constant 0 : i32
    %c0_i32_0 = arith.constant 0 : i32
    %c0_i32_1 = arith.constant 0 : i32
    return %c0_i32, %c0_i32_0 : i32, i32
  }
}

</mosaic_0001>

<llo_original>
// kernel: bert_classifier_forward.8
$region0: #{bert_classifier_forward.8}
  #allocation0 [shape = 'u32[]', space=smem, size = 0x4, offset = 0x4, fixed_abs, tag = 'smem constant byte address 0x4 - core index']
  #allocation1 [shape = 'u32[72,128]{1,0:T(1,128)}', space=vmem, size = 0x9000, scoped, tag = 'internal scratch']
  %s0 = inlined_call_operand.vmem [shape: f32[16,384], index: 0, kind: input, shape index: {}]
  %s1 = inlined_call_operand.vmem [shape: f32[1,384], index: 1, kind: input, shape index: {}]
  %s2 = inlined_call_operand.vmem [shape: f32[1,384], index: 2, kind: input, shape index: {}]
  %s3 = inlined_call_operand.vmem [shape: f32[16,384], index: 3, kind: output, shape index: {}]
  %s4 = sld [smem:[#allocation0]]
  $region22: #{bert_classifier_forward.8} parent=0
    _
  %s6 = ssub.s32 1, %s4
  %s7 = scalar_select 0, %s6, %s4
  // Predicated region
  $region2: #{bert_classifier_forward.8} parent=0 // pred_check
    _
  $region3: #{bert_classifier_forward.8} parent=0 // pred_check_branch
    %9 = sbr.rel (0) target = $region5
  $region4: #{bert_classifier_forward.8} parent=0 // pred_region
    _
  $region5: #{bert_classifier_forward.8} parent=0 // pred_fallthru
    _
  // Predicated region
  $region6: #{bert_classifier_forward.8} parent=0 // pred_check
    _
  $region7: #{bert_classifier_forward.8} parent=0 // pred_check_branch
    %11 = sbr.rel (0) target = $region9
  $region8: #{bert_classifier_forward.8} parent=0 // pred_region
    _
  $region9: #{bert_classifier_forward.8} parent=0 // pred_fallthru
    _
  // Predicated region
  $region10: #{bert_classifier_forward.8} parent=0 // pred_check
    _
  $region11: #{bert_classifier_forward.8} parent=0 // pred_check_branch
    %13 = sbr.rel (0) target = $region13
  $region12: #{bert_classifier_forward.8} parent=0 // pred_region
    _
  $region13: #{bert_classifier_forward.8} parent=0 // pred_fallthru
    _
  %v14 = vld [vmem:[%s0] sm:$0xff]
  %v15 = vld [vmem:[%s0 + $0x8] sm:$0xff]
  %v16 = vld [vmem:[%s0 + $0x10] sm:$0xff]
  %v17 = vld [vmem:[%s0 + $0x18] sm:$0xff]
  %v18 = vld [vmem:[%s0 + $0x20] sm:$0xff]
  %v19 = vld [vmem:[%s0 + $0x28] sm:$0xff]
  %v20 = vld [vmem:[%s1] sm:$0x7]
  %v21 = vld [vmem:[%s2] sm:$0x7]
  %v22 = vadd.f32 %v14, %v15
  %v23 = vadd.f32 %v22, %v16
  %24 = vadd.xlane.f32.xlu0 %v23
  %v25 = vpop.xlane.xlu0 %24
  %v26 = vadd.f32 %v17, %v18
  %v27 = vadd.f32 %v26, %v19
  %28 = vadd.xlane.f32.xlu0 %v27
  %v29 = vpop.xlane.xlu0 %28
  %v30 = vmul.f32 %v25, 0.0032051282
  %v31 = vmul.f32 %v29, 0.0032051282
  %v32 = vlaneseq
  %v33 = vand.u32 %v32, 127
  %v34 = vadd.s32 %v33, 128
  %v35 = vadd.s32 %v33, 256
  %vm36 = vcmp.lt.s32.totalorder %v33, 312
  %vm37 = vcmp.lt.s32.totalorder %v34, 312
  %vm38 = vcmp.lt.s32.totalorder %v35, 312
  %v39 = vsel %vm36, 1, 0
  %v40 = vsel %vm37, 1, 0
  %v41 = vsel %vm38, 1, 0
  %v42 = vcvt.s32.f32 %v39
  %v43 = vcvt.s32.f32 %v40
  %v44 = vcvt.s32.f32 %v41
  %v45 = vsub.f32 %v14, %v30
  %v46 = vsub.f32 %v15, %v30
  %v47 = vsub.f32 %v16, %v30
  %v48 = vsub.f32 %v17, %v31
  %v49 = vsub.f32 %v18, %v31
  %v50 = vsub.f32 %v19, %v31
  %v51 = vmul.f32 %v45, %v42
  %v52 = vmul.f32 %v46, %v43
  %v53 = vmul.f32 %v47, %v44
  %v54 = vmul.f32 %v48, %v42
  %v55 = vmul.f32 %v49, %v43
  %v56 = vmul.f32 %v50, %v44
  %v57 = vmul.f32 %v51, %v51
  %v58 = vmul.f32 %v52, %v52
  %v59 = vmul.f32 %v53, %v53
  %v60 = vmul.f32 %v54, %v54
  %v61 = vmul.f32 %v55, %v55
  %v62 = vmul.f32 %v56, %v56
  %v63 = vadd.f32 %v57, %v58
  %v64 = vadd.f32 %v63, %v59
  %65 = vadd.xlane.f32.xlu0 %v64
  %v66 = vpop.xlane.xlu0 %65
  %v67 = vadd.f32 %v60, %v61
  %v68 = vadd.f32 %v67, %v62
  %69 = vadd.xlane.f32.xlu0 %v68
  %v70 = vpop.xlane.xlu0 %69
  %v71 = vmul.f32 %v66, 0.0032051282
  %v72 = vmul.f32 %v70, 0.0032051282
  %v73 = vadd.f32 %v71, 1e-12
  %v74 = vadd.f32 %v72, 1e-12
  %v75 = vrsqrt.pop %v73
  %v76 = vmul.f32 %v75, %v73
  %v77 = vmul.f32 %v76, %v75
  %v78 = vmul.f32 0.5, %v77
  %v79 = vsub.f32 1.5, %v78
  %v80 = vmul.f32 %v75, %v79
  %vm81 = vweird.f32 %v73
  %vm82 = vweird.f32 %v75
  %vm83 = vmor %vm81, %vm82
  %v84 = vsel %vm83, %v75, %v80
  %v85 = vrsqrt.pop %v74
  %v86 = vmul.f32 %v85, %v74
  %v87 = vmul.f32 %v86, %v85
  %v88 = vmul.f32 0.5, %v87
  %v89 = vsub.f32 1.5, %v88
  %v90 = vmul.f32 %v85, %v89
  %vm91 = vweird.f32 %v74
  %vm92 = vweird.f32 %v85
  %vm93 = vmor %vm91, %vm92
  %v94 = vsel %vm93, %v85, %v90
  %v95 = vmul.f32 %v51, %v84
  %v96 = vmul.f32 %v52, %v84
  %v97 = vmul.f32 %v53, %v84
  %v98 = vmul.f32 %v54, %v94
  %v99 = vmul.f32 %v55, %v94
  %v100 = vmul.f32 %v56, %v94
  %v102 = vperm.slane %v20, 0
  %v103 = vperm.slane %v20, 1
  %v104 = vperm.slane %v20, 2
  %v108 = vmul.f32 %v95, %v102
  %v109 = vmul.f32 %v96, %v103
  %v110 = vmul.f32 %v97, %v104
  %v111 = vmul.f32 %v98, %v102
  %v112 = vmul.f32 %v99, %v103
  %v113 = vmul.f32 %v100, %v104
  %v115 = vperm.slane %v21, 0
  %v116 = vperm.slane %v21, 1
  %v117 = vperm.slane %v21, 2
  %v121 = vadd.f32 %v108, %v115
  %v122 = vadd.f32 %v109, %v116
  %v123 = vadd.f32 %v110, %v117
  %v124 = vadd.f32 %v111, %v115
  %v125 = vadd.f32 %v112, %v116
  %v126 = vadd.f32 %v113, %v117
  %127 = vst [vmem:[%s3] sm:$0xff] %v121
  %128 = vst [vmem:[%s3 + $0x8] sm:$0xff] %v122
  %129 = vst [vmem:[%s3 + $0x10] sm:$0xff] %v123
  %130 = vst [vmem:[%s3 + $0x18] sm:$0xff] %v124
  %131 = vst [vmem:[%s3 + $0x20] sm:$0xff] %v125
  %132 = vst [vmem:[%s3 + $0x28] sm:$0xff] %v126
  // Predicated region
  $region14: #{bert_classifier_forward.8} parent=0 // pred_check
    _
  $region15: #{bert_classifier_forward.8} parent=0 // pred_check_branch
    %134 = sbr.rel (0) target = $region17
  $region16: #{bert_classifier_forward.8} parent=0 // pred_region
    _
  $region17: #{bert_classifier_forward.8} parent=0 // pred_fallthru
    _
  // Predicated region
  $region18: #{bert_classifier_forward.8} parent=0 // pred_check
    _
  $region19: #{bert_classifier_forward.8} parent=0 // pred_check_branch
    %136 = sbr.rel (0) target = $region21
  $region20: #{bert_classifier_forward.8} parent=0 // pred_region
    _
  $region21: #{bert_classifier_forward.8} parent=0 // pred_fallthru
    _

// kernel: bert_classifier_forward.15
$region0: #{bert_classifier_forward.15}
  #allocation0 [shape = 'u32[]', space=smem, size = 0x4, offset = 0x4, fixed_abs, tag = 'smem constant byte address 0x4 - core index']
  #allocation1 [shape = 'u32[72,128]{1,0:T(1,128)}', space=vmem, size = 0x9000, scoped, tag = 'internal scratch']
  %s0 = inlined_call_operand.vmem [shape: f32[2,384], index: 0, kind: input, shape index: {}]
  %s1 = inlined_call_operand.vmem [shape: bf16[384,156], index: 1, kind: input, shape index: {}]
  %s2 = inlined_call_operand.vmem [shape: f32[1,156], index: 2, kind: input, shape index: {}]
  %s3 = inlined_call_operand.vmem [shape: bf16[156,64], index: 3, kind: input, shape index: {}]
  %s4 = inlined_call_operand.vmem [shape: f32[1,64], index: 4, kind: input, shape index: {}]
  %s5 = inlined_call_operand.vmem [shape: bf16[64,3], index: 5, kind: input, shape index: {}]
  %s6 = inlined_call_operand.vmem [shape: f32[1,3], index: 6, kind: input, shape index: {}]
  %s7 = inlined_call_operand.hbm [shape: f32[2,3], index: 7, kind: output, shape index: {}]
  %s8 = sld [smem:[#allocation0]]
  $region38: #{bert_classifier_forward.15} parent=0
    _
  %s10 = ssub.s32 1, %s8
  %s11 = scalar_select 0, %s10, %s8
  $region1: #{bert_classifier_forward.15} parent=0
    #allocation2 [shape = 'u8[1024]{0}', space=vmem, size = 0x400, scoped, tag = 'output window, operand 0, single buffered']
    #allocation3 [shape = 's32[1]{0}', space=sflag, size = 0x4, scoped, tag = 'scoped memory for bert_classifier_forward.15']
    %12 = vsyncpa [#allocation3], 0
    // Predicated region
    $region2: #{bert_classifier_forward.15} parent=1 // pred_check
      _
    $region3: #{bert_classifier_forward.15} parent=1 // pred_check_branch
      %14 = sbr.rel (0) target = $region5
    $region4: #{bert_classifier_forward.15} parent=1 // pred_region
      _
    $region5: #{bert_classifier_forward.15} parent=1 // pred_fallthru
      _
    // Predicated region
    $region6: #{bert_classifier_forward.15} parent=1 // pred_check
      _
    $region7: #{bert_classifier_forward.15} parent=1 // pred_check_branch
      %16 = sbr.rel (0) target = $region9
    $region8: #{bert_classifier_forward.15} parent=1 // pred_region
      _
    $region9: #{bert_classifier_forward.15} parent=1 // pred_fallthru
      _
    // Predicated region
    $region10: #{bert_classifier_forward.15} parent=1 // pred_check
      _
    $region11: #{bert_classifier_forward.15} parent=1 // pred_check_branch
      %18 = sbr.rel (0) target = $region13
    $region12: #{bert_classifier_forward.15} parent=1 // pred_region
      _
    $region13: #{bert_classifier_forward.15} parent=1 // pred_fallthru
      _
    // Predicated region
    $region14: #{bert_classifier_forward.15} parent=1 // pred_check
      _
    $region15: #{bert_classifier_forward.15} parent=1 // pred_check_branch
      %20 = sbr.rel (0) target = $region17
    $region16: #{bert_classifier_forward.15} parent=1 // pred_region
      _
    $region17: #{bert_classifier_forward.15} parent=1 // pred_fallthru
      _
    // Predicated region
    $region18: #{bert_classifier_forward.15} parent=1 // pred_check
      _
    $region19: #{bert_classifier_forward.15} parent=1 // pred_check_branch
      %22 = sbr.rel (0) target = $region21
    $region20: #{bert_classifier_forward.15} parent=1 // pred_region
      _
    $region21: #{bert_classifier_forward.15} parent=1 // pred_fallthru
      _
    // Predicated region
    $region22: #{bert_classifier_forward.15} parent=1 // pred_check
      _
    $region23: #{bert_classifier_forward.15} parent=1 // pred_check_branch
      %24 = sbr.rel (0) target = $region25
    $region24: #{bert_classifier_forward.15} parent=1 // pred_region
      _
    $region25: #{bert_classifier_forward.15} parent=1 // pred_fallthru
      _
    // Predicated region
    $region26: #{bert_classifier_forward.15} parent=1 // pred_check
      _
    $region27: #{bert_classifier_forward.15} parent=1 // pred_check_branch
      %26 = sbr.rel (0) target = $region29
    $region28: #{bert_classifier_forward.15} parent=1 // pred_region
      _
    $region29: #{bert_classifier_forward.15} parent=1 // pred_fallthru
      _
    %v28 = vld [vmem:[%s0] sm:$0x3f]
    %30 = vst [vmem:[#allocation1] ss:$4 sm:$0xff] %v28
    %v31 = vld.sshfl [vmem:[#allocation1] sm:$0xff pattern:$0x73625140]
    %v32 = vld.sshfl [vmem:[#allocation1 + $0x8] sm:$0xff pattern:$0x73625140]
    %v33 = vld.sshfl [vmem:[#allocation1 + $0x10] sm:$0xff pattern:$0x73625140]
    %v37 = vpack.c.bf16 %v31, %v31
    %v38 = vpack.c.bf16 %v32, %v32
    %v39 = vpack.c.bf16 %v33, %v33
    %v40 = vld [vmem:[%s1] sm:$0xff]
    %v41 = vld [vmem:[%s1 + $0x8] sm:$0xff]
    %v42 = vld [vmem:[%s1 + $0x10] sm:$0xff]
    %v43 = vld [vmem:[%s1 + $0x18] sm:$0xff]
    %v44 = vld [vmem:[%s1 + $0x20] sm:$0xff]
    %v45 = vld [vmem:[%s1 + $0x28] sm:$0xff]
    %v46 = vld [vmem:[%s1 + $0x30] sm:$0xff]
    %v47 = vld [vmem:[%s1 + $0x38] sm:$0xff]
    %v48 = vld [vmem:[%s1 + $0x40] sm:$0xff]
    %v49 = vld [vmem:[%s1 + $0x48] sm:$0xff]
    %v50 = vld [vmem:[%s1 + $0x50] sm:$0xff]
    %v51 = vld [vmem:[%s1 + $0x58] sm:$0xff]
    %v52 = vld [vmem:[%s1 + $0x60] sm:$0xff]
    %v53 = vld [vmem:[%s1 + $0x68] sm:$0xff]
    %v54 = vld [vmem:[%s1 + $0x70] sm:$0xff]
    %v55 = vld [vmem:[%s1 + $0x78] sm:$0xff]
    %v56 = vld [vmem:[%s1 + $0x80] sm:$0xff]
    %v57 = vld [vmem:[%s1 + $0x88] sm:$0xff]
    %v58 = vld [vmem:[%s1 + $0x90] sm:$0xff]
    %v59 = vld [vmem:[%s1 + $0x98] sm:$0xff]
    %v60 = vld [vmem:[%s1 + $0xa0] sm:$0xff]
    %v61 = vld [vmem:[%s1 + $0xa8] sm:$0xff]
    %v62 = vld [vmem:[%s1 + $0xb0] sm:$0xff]
    %v63 = vld [vmem:[%s1 + $0xb8] sm:$0xff]
    %v64 = vld [vmem:[%s1 + $0xc0] sm:$0xff]
    %v65 = vld [vmem:[%s1 + $0xc8] sm:$0xff]
    %v66 = vld [vmem:[%s1 + $0xd0] sm:$0xff]
    %v67 = vld [vmem:[%s1 + $0xd8] sm:$0xff]
    %v68 = vld [vmem:[%s1 + $0xe0] sm:$0xff]
    %v69 = vld [vmem:[%s1 + $0xe8] sm:$0xff]
    %v70 = vld [vmem:[%s1 + $0xf0] sm:$0xff]
    %v71 = vld [vmem:[%s1 + $0xf8] sm:$0xff]
    %v72 = vld [vmem:[%s1 + $0x100] sm:$0xff]
    %v73 = vld [vmem:[%s1 + $0x108] sm:$0xff]
    %v74 = vld [vmem:[%s1 + $0x110] sm:$0xff]
    %v75 = vld [vmem:[%s1 + $0x118] sm:$0xff]
    %v76 = vld [vmem:[%s1 + $0x120] sm:$0xff]
    %v77 = vld [vmem:[%s1 + $0x128] sm:$0xff]
    %v78 = vld [vmem:[%s1 + $0x130] sm:$0xff]
    %v79 = vld [vmem:[%s1 + $0x138] sm:$0xff]
    %v80 = vld [vmem:[%s1 + $0x140] sm:$0xff]
    %v81 = vld [vmem:[%s1 + $0x148] sm:$0xff]
    %v82 = vld [vmem:[%s1 + $0x150] sm:$0xff]
    %v83 = vld [vmem:[%s1 + $0x158] sm:$0xff]
    %v84 = vld [vmem:[%s1 + $0x160] sm:$0xff]
    %v85 = vld [vmem:[%s1 + $0x168] sm:$0xff]
    %v86 = vld [vmem:[%s1 + $0x170] sm:$0xff]
    %v87 = vld [vmem:[%s1 + $0x178] sm:$0xff]
    %v88 = vld [vmem:[%s2] sm:$0x3]
    %v90 = vperm.slane %v88, 0
    %v91 = vperm.slane %v88, 1
    %v142 = vunpack.c.l.b16 %v40
    %v143 = vunpack.c.h.b16 %v40
    %v144 = vunpack.c.l.b16 %v41
    %v145 = vunpack.c.h.b16 %v41
    %v146 = vunpack.c.l.b16 %v42
    %v147 = vunpack.c.h.b16 %v42
    %v148 = vunpack.c.l.b16 %v43
    %v149 = vunpack.c.h.b16 %v43
    %v150 = vunpack.c.l.b16 %v44
    %v151 = vunpack.c.h.b16 %v44
    %v152 = vunpack.c.l.b16 %v45
    %v153 = vunpack.c.h.b16 %v45
    %v154 = vunpack.c.l.b16 %v46
    %v155 = vunpack.c.h.b16 %v46
    %v156 = vunpack.c.l.b16 %v47
    %v157 = vunpack.c.h.b16 %v47
    %v158 = vunpack.c.l.b16 %v48
    %v159 = vunpack.c.h.b16 %v48
    %v160 = vunpack.c.l.b16 %v49
    %v161 = vunpack.c.h.b16 %v49
    %v162 = vunpack.c.l.b16 %v50
    %v163 = vunpack.c.h.b16 %v50
    %v164 = vunpack.c.l.b16 %v51
    %v165 = vunpack.c.h.b16 %v51
    %v166 = vunpack.c.l.b16 %v52
    %v167 = vunpack.c.h.b16 %v52
    %v168 = vunpack.c.l.b16 %v53
    %v169 = vunpack.c.h.b16 %v53
    %v170 = vunpack.c.l.b16 %v54
    %v171 = vunpack.c.h.b16 %v54
    %v172 = vunpack.c.l.b16 %v55
    %v173 = vunpack.c.h.b16 %v55
    %v174 = vunpack.c.l.b16 %v56
    %v175 = vunpack.c.h.b16 %v56
    %v176 = vunpack.c.l.b16 %v57
    %v177 = vunpack.c.h.b16 %v57
    %v178 = vunpack.c.l.b16 %v58
    %v179 = vunpack.c.h.b16 %v58
    %v180 = vunpack.c.l.b16 %v59
    %v181 = vunpack.c.h.b16 %v59
    %v182 = vunpack.c.l.b16 %v60
    %v183 = vunpack.c.h.b16 %v60
    %v184 = vunpack.c.l.b16 %v61
    %v185 = vunpack.c.h.b16 %v61
    %v186 = vunpack.c.l.b16 %v62
    %v187 = vunpack.c.h.b16 %v62
    %v188 = vunpack.c.l.b16 %v63
    %v189 = vunpack.c.h.b16 %v63
    %v190 = vunpack.c.l.b16 %v64
    %v191 = vunpack.c.h.b16 %v64
    %v192 = vunpack.c.l.b16 %v65
    %v193 = vunpack.c.h.b16 %v65
    %v194 = vunpack.c.l.b16 %v66
    %v195 = vunpack.c.h.b16 %v66
    %v196 = vunpack.c.l.b16 %v67
    %v197 = vunpack.c.h.b16 %v67
    %v198 = vunpack.c.l.b16 %v68
    %v199 = vunpack.c.h.b16 %v68
    %v200 = vunpack.c.l.b16 %v69
    %v201 = vunpack.c.h.b16 %v69
    %v202 = vunpack.c.l.b16 %v70
    %v203 = vunpack.c.h.b16 %v70
    %v204 = vunpack.c.l.b16 %v71
    %v205 = vunpack.c.h.b16 %v71
    %v206 = vunpack.c.l.b16 %v72
    %v207 = vunpack.c.h.b16 %v72
    %v208 = vunpack.c.l.b16 %v73
    %v209 = vunpack.c.h.b16 %v73
    %v210 = vunpack.c.l.b16 %v74
    %v211 = vunpack.c.h.b16 %v74
    %v212 = vunpack.c.l.b16 %v75
    %v213 = vunpack.c.h.b16 %v75
    %v214 = vunpack.c.l.b16 %v76
    %v215 = vunpack.c.h.b16 %v76
    %v216 = vunpack.c.l.b16 %v77
    %v217 = vunpack.c.h.b16 %v77
    %v218 = vunpack.c.l.b16 %v78
    %v219 = vunpack.c.h.b16 %v78
    %v220 = vunpack.c.l.b16 %v79
    %v221 = vunpack.c.h.b16 %v79
    %v222 = vunpack.c.l.b16 %v80
    %v223 = vunpack.c.h.b16 %v80
    %v224 = vunpack.c.l.b16 %v81
    %v225 = vunpack.c.h.b16 %v81
    %v226 = vunpack.c.l.b16 %v82
    %v227 = vunpack.c.h.b16 %v82
    %v228 = vunpack.c.l.b16 %v83
    %v229 = vunpack.c.h.b16 %v83
    %v230 = vunpack.c.l.b16 %v84
    %v231 = vunpack.c.h.b16 %v84
    %v232 = vunpack.c.l.b16 %v85
    %v233 = vunpack.c.h.b16 %v85
    %v234 = vunpack.c.l.b16 %v86
    %v235 = vunpack.c.h.b16 %v86
    %v236 = vunpack.c.l.b16 %v87
    %v237 = vunpack.c.h.b16 %v87
    %v238 = vpack.c.b16 %v144, %v142
    %v239 = vpack.c.b16 %v145, %v143
    %v240 = vpack.c.b16 %v148, %v146
    %v241 = vpack.c.b16 %v149, %v147
    %v242 = vpack.c.b16 %v152, %v150
    %v243 = vpack.c.b16 %v153, %v151
    %v244 = vpack.c.b16 %v156, %v154
    %v245 = vpack.c.b16 %v157, %v155
    %v246 = vpack.c.b16 %v160, %v158
    %v247 = vpack.c.b16 %v161, %v159
    %v248 = vpack.c.b16 %v164, %v162
    %v249 = vpack.c.b16 %v165, %v163
    %v250 = vpack.c.b16 %v168, %v166
    %v251 = vpack.c.b16 %v169, %v167
    %v252 = vpack.c.b16 %v172, %v170
    %v253 = vpack.c.b16 %v173, %v171
    %v254 = vpack.c.b16 %v176, %v174
    %v255 = vpack.c.b16 %v177, %v175
    %v256 = vpack.c.b16 %v180, %v178
    %v257 = vpack.c.b16 %v181, %v179
    %v258 = vpack.c.b16 %v184, %v182
    %v259 = vpack.c.b16 %v185, %v183
    %v260 = vpack.c.b16 %v188, %v186
    %v261 = vpack.c.b16 %v189, %v187
    %v262 = vpack.c.b16 %v192, %v190
    %v263 = vpack.c.b16 %v193, %v191
    %v264 = vpack.c.b16 %v196, %v194
    %v265 = vpack.c.b16 %v197, %v195
    %v266 = vpack.c.b16 %v200, %v198
    %v267 = vpack.c.b16 %v201, %v199
    %v268 = vpack.c.b16 %v204, %v202
    %v269 = vpack.c.b16 %v205, %v203
    %v270 = vpack.c.b16 %v208, %v206
    %v271 = vpack.c.b16 %v209, %v207
    %v272 = vpack.c.b16 %v212, %v210
    %v273 = vpack.c.b16 %v213, %v211
    %v274 = vpack.c.b16 %v216, %v214
    %v275 = vpack.c.b16 %v217, %v215
    %v276 = vpack.c.b16 %v220, %v218
    %v277 = vpack.c.b16 %v221, %v219
    %v278 = vpack.c.b16 %v224, %v222
    %v279 = vpack.c.b16 %v225, %v223
    %v280 = vpack.c.b16 %v228, %v226
    %v281 = vpack.c.b16 %v229, %v227
    %v282 = vpack.c.b16 %v232, %v230
    %v283 = vpack.c.b16 %v233, %v231
    %v284 = vpack.c.b16 %v236, %v234
    %v285 = vpack.c.b16 %v237, %v235
    %334 = vmatpush.bf16.msra.mxu0 %v252
    %335 = vmatpush.bf16.msra.mxu0 %v250
    %336 = vmatpush.bf16.msra.mxu0 %v248
    %337 = vmatpush.bf16.msra.mxu0 %v246
    %338 = vmatpush.bf16.msra.mxu0 %v244
    %339 = vmatpush.bf16.msra.mxu0 %v242
    %340 = vmatpush.bf16.msra.mxu0 %v240
    %341 = vmatpush.bf16.msra.mxu0 %v238
    %342 = vmatmul.bf16.gmra.mxu0 %v37
    %v343 = vpop.f32.mrf.mxu0
    %v344 = vadd.f32 %v90, %v343
    %v345 = vpop.f32.mrf.mxu0
    %346 = vdwg.mxu0
    %347 = vmatpush.bf16.msra.mxu0 %v268
    %348 = vmatpush.bf16.msra.mxu0 %v266
    %349 = vmatpush.bf16.msra.mxu0 %v264
    %350 = vmatpush.bf16.msra.mxu0 %v262
    %351 = vmatpush.bf16.msra.mxu0 %v260
    %352 = vmatpush.bf16.msra.mxu0 %v258
    %353 = vmatpush.bf16.msra.mxu0 %v256
    %354 = vmatpush.bf16.msra.mxu0 %v254
    %355 = vmatmul.bf16.gmra.mxu0 %v38
    %v356 = vpop.f32.mrf.mxu0
    %v357 = vadd.f32 %v344, %v356
    %v358 = vpop.f32.mrf.mxu0
    %359 = vdwg.mxu0
    %360 = vmatpush.bf16.msra.mxu0 %v284
    %361 = vmatpush.bf16.msra.mxu0 %v282
    %362 = vmatpush.bf16.msra.mxu0 %v280
    %363 = vmatpush.bf16.msra.mxu0 %v278
    %364 = vmatpush.bf16.msra.mxu0 %v276
    %365 = vmatpush.bf16.msra.mxu0 %v274
    %366 = vmatpush.bf16.msra.mxu0 %v272
    %367 = vmatpush.bf16.msra.mxu0 %v270
    %368 = vmatmul.bf16.gmra.mxu0 %v39
    %v369 = vpop.f32.mrf.mxu0
    %v370 = vadd.f32 %v357, %v369
    %v371 = vpop.f32.mrf.mxu0
    %372 = vdwg.mxu0
    %373 = vmatpush.bf16.msra.mxu0 %v253
    %374 = vmatpush.bf16.msra.mxu0 %v251
    %375 = vmatpush.bf16.msra.mxu0 %v249
    %376 = vmatpush.bf16.msra.mxu0 %v247
    %377 = vmatpush.bf16.msra.mxu0 %v245
    %378 = vmatpush.bf16.msra.mxu0 %v243
    %379 = vmatpush.bf16.msra.mxu0 %v241
    %380 = vmatpush.bf16.msra.mxu0 %v239
    %381 = vmatmul.bf16.gmra.mxu0 %v37
    %v382 = vpop.f32.mrf.mxu0
    %v383 = vadd.f32 %v91, %v382
    %v384 = vpop.f32.mrf.mxu0
    %385 = vdwg.mxu0
    %386 = vmatpush.bf16.msra.mxu0 %v269
    %387 = vmatpush.bf16.msra.mxu0 %v267
    %388 = vmatpush.bf16.msra.mxu0 %v265
    %389 = vmatpush.bf16.msra.mxu0 %v263
    %390 = vmatpush.bf16.msra.mxu0 %v261
    %391 = vmatpush.bf16.msra.mxu0 %v259
    %392 = vmatpush.bf16.msra.mxu0 %v257
    %393 = vmatpush.bf16.msra.mxu0 %v255
    %394 = vmatmul.bf16.gmra.mxu0 %v38
    %v395 = vpop.f32.mrf.mxu0
    %v396 = vadd.f32 %v383, %v395
    %v397 = vpop.f32.mrf.mxu0
    %398 = vdwg.mxu0
    %399 = vmatpush.bf16.msra.mxu0 %v285
    %400 = vmatpush.bf16.msra.mxu0 %v283
    %401 = vmatpush.bf16.msra.mxu0 %v281
    %402 = vmatpush.bf16.msra.mxu0 %v279
    %403 = vmatpush.bf16.msra.mxu0 %v277
    %404 = vmatpush.bf16.msra.mxu0 %v275
    %405 = vmatpush.bf16.msra.mxu0 %v273
    %406 = vmatpush.bf16.msra.mxu0 %v271
    %407 = vmatmul.bf16.gmra.mxu0 %v39
    %v408 = vpop.f32.mrf.mxu0
    %v409 = vadd.f32 %v396, %v408
    %v410 = vpop.f32.mrf.mxu0
    %411 = vdwg.mxu0
    %v412 = vmax.f32 %v370, 0.0
    %v413 = vmax.f32 %v409, 0.0
    %v414 = vpack.c.bf16 %v412, %v412
    %v415 = vpack.c.bf16 %v413, %v413
    %v416 = vld [vmem:[%s3] sm:$0xf]
    %v417 = vld [vmem:[%s3 + $0x4] sm:$0xf]
    %v418 = vld [vmem:[%s3 + $0x8] sm:$0xf]
    %v419 = vld [vmem:[%s3 + $0xc] sm:$0xf]
    %v420 = vld [vmem:[%s3 + $0x10] sm:$0xf]
    %v421 = vld [vmem:[%s3 + $0x14] sm:$0xf]
    %v422 = vld [vmem:[%s3 + $0x18] sm:$0xf]
    %v423 = vld [vmem:[%s3 + $0x1c] sm:$0xf]
    %v424 = vld [vmem:[%s3 + $0x20] sm:$0xf]
    %v425 = vld [vmem:[%s3 + $0x24] sm:$0xf]
    %v426 = vld [vmem:[%s3 + $0x28] sm:$0xf]
    %v427 = vld [vmem:[%s3 + $0x2c] sm:$0xf]
    %v428 = vld [vmem:[%s3 + $0x30] sm:$0xf]
    %v429 = vld [vmem:[%s3 + $0x34] sm:$0xf]
    %v430 = vld [vmem:[%s3 + $0x38] sm:$0xf]
    %v431 = vld [vmem:[%s3 + $0x3c] sm:$0xf]
    %v432 = vld [vmem:[%s3 + $0x40] sm:$0xf]
    %v433 = vld [vmem:[%s3 + $0x44] sm:$0xf]
    %v434 = vld [vmem:[%s3 + $0x48] sm:$0xf]
    %v435 = vld [vmem:[%s3 + $0x4c] sm:$0x3]
    %v436 = vld [vmem:[%s4] sm:$0x1]
    %v438 = vperm.slane %v436, 0
    %v460 = vunpack.c.l.b16 %v416
    %v461 = vunpack.c.l.b16 %v417
    %v462 = vunpack.c.l.b16 %v418
    %v463 = vunpack.c.l.b16 %v419
    %v464 = vunpack.c.l.b16 %v420
    %v465 = vunpack.c.l.b16 %v421
    %v466 = vunpack.c.l.b16 %v422
    %v467 = vunpack.c.l.b16 %v423
    %v468 = vunpack.c.l.b16 %v424
    %v469 = vunpack.c.l.b16 %v425
    %v470 = vunpack.c.l.b16 %v426
    %v471 = vunpack.c.l.b16 %v427
    %v472 = vunpack.c.l.b16 %v428
    %v473 = vunpack.c.l.b16 %v429
    %v474 = vunpack.c.l.b16 %v430
    %v475 = vunpack.c.l.b16 %v431
    %v476 = vunpack.c.l.b16 %v432
    %v477 = vunpack.c.l.b16 %v433
    %v478 = vunpack.c.l.b16 %v434
    %v479 = vunpack.c.l.b16 %v435
    %v480 = vpack.c.b16 %v461, %v460
    %v481 = vpack.c.b16 %v463, %v462
    %v482 = vpack.c.b16 %v465, %v464
    %v483 = vpack.c.b16 %v467, %v466
    %v484 = vpack.c.b16 %v469, %v468
    %v485 = vpack.c.b16 %v471, %v470
    %v486 = vpack.c.b16 %v473, %v472
    %v487 = vpack.c.b16 %v475, %v474
    %v488 = vpack.c.b16 %v477, %v476
    %v489 = vpack.c.b16 %v479, %v478
    %vm499 = vcmask 228352
    %v501 = vsel %vm499, %v415, 0
    %vm503 = vcmask 1045504
    %v505 = vsel %vm503, %v489, 0
    %507 = vmatpush.bf16.msra.mxu0 %v487
    %508 = vmatpush.bf16.msra.mxu0 %v486
    %509 = vmatpush.bf16.msra.mxu0 %v485
    %510 = vmatpush.bf16.msra.mxu0 %v484
    %511 = vmatpush.bf16.msra.mxu0 %v483
    %512 = vmatpush.bf16.msra.mxu0 %v482
    %513 = vmatpush.bf16.msra.mxu0 %v481
    %514 = vmatpush.bf16.msra.mxu0 %v480
    %515 = vmatmul.bf16.gmra.mxu0 %v414
    %v516 = vpop.f32.mrf.mxu0
    %v517 = vadd.f32 %v438, %v516
    %v518 = vpop.f32.mrf.mxu0
    %519 = vdwg.mxu0
    %520 = vmatpush.bf16.msra.mxu0 0
    %521 = vmatpush.bf16.msra.mxu0 0
    %522 = vmatpush.bf16.msra.mxu0 0
    %523 = vmatpush.bf16.msra.mxu0 0
    %524 = vmatpush.bf16.msra.mxu0 0
    %525 = vmatpush.bf16.msra.mxu0 0
    %526 = vmatpush.bf16.msra.mxu0 %v505
    %527 = vmatpush.bf16.msra.mxu0 %v488
    %528 = vmatmul.bf16.gmra.mxu0 %v501
    %v529 = vpop.f32.mrf.mxu0
    %v530 = vadd.f32 %v517, %v529
    %v531 = vpop.f32.mrf.mxu0
    %532 = vdwg.mxu0
    %v533 = vmax.f32 %v530, 0.0
    %v534 = vpack.c.bf16 %v533, %v533
    %v535 = vld [vmem:[%s5] sm:$0xf]
    %v536 = vld [vmem:[%s5 + $0x4] sm:$0xf]
    %v537 = vld [vmem:[%s5 + $0x8] sm:$0xf]
    %v538 = vld [vmem:[%s5 + $0xc] sm:$0xf]
    %v539 = vld [vmem:[%s5 + $0x10] sm:$0xf]
    %v540 = vld [vmem:[%s5 + $0x14] sm:$0xf]
    %v541 = vld [vmem:[%s5 + $0x18] sm:$0xf]
    %v542 = vld [vmem:[%s5 + $0x1c] sm:$0xf]
    %v543 = vld [vmem:[%s6] sm:$0x1]
    %v545 = vperm.slane %v543, 0
    %v555 = vunpack.c.l.b16 %v535
    %v556 = vunpack.c.l.b16 %v536
    %v557 = vunpack.c.l.b16 %v537
    %v558 = vunpack.c.l.b16 %v538
    %v559 = vunpack.c.l.b16 %v539
    %v560 = vunpack.c.l.b16 %v540
    %v561 = vunpack.c.l.b16 %v541
    %v562 = vunpack.c.l.b16 %v542
    %v563 = vpack.c.b16 %v556, %v555
    %v564 = vpack.c.b16 %v558, %v557
    %v565 = vpack.c.b16 %v560, %v559
    %v566 = vpack.c.b16 %v562, %v561
    %vm571 = vcmask 523264
    %v573 = vsel %vm571, %v534, 0
    %575 = vmatpush.bf16.msra.mxu0 0
    %576 = vmatpush.bf16.msra.mxu0 0
    %577 = vmatpush.bf16.msra.mxu0 0
    %578 = vmatpush.bf16.msra.mxu0 0
    %579 = vmatpush.bf16.msra.mxu0 %v566
    %580 = vmatpush.bf16.msra.mxu0 %v565
    %581 = vmatpush.bf16.msra.mxu0 %v564
    %582 = vmatpush.bf16.msra.mxu0 %v563
    %583 = vmatmul.bf16.gmra.mxu0 %v573
    %v584 = vpop.f32.mrf.mxu0
    %v585 = vadd.f32 %v545, %v584
    %v586 = vpop.f32.mrf.mxu0
    %587 = vdwg.mxu0
    %v588 = vmax.f32 %v585, 0.0
    %vm589 = vcmask 17408
    %590 = vst.msk [vmem:[#allocation2] sm:$0x3] %vm589, %v588
    // Predicated region
    $region30: #{bert_classifier_forward.15} parent=1 // pred_check
      _
    $region31: #{bert_classifier_forward.15} parent=1 // pred_check_branch
      %592 = sbr.rel (0) target = $region33
    $region32: #{bert_classifier_forward.15} parent=1 // pred_region
      %594 = vsyncadd [#allocation3], 0
      %s596 = sshll.u32 [#allocation2], 4
      %s597 = int_to_ptr.vmem [resolvable:$true] %s596
      %s598 = sshll.u32 %s7, 4
      %s599 = int_to_ptr.hbm [resolvable:$true] %s598
      %601 = dma.vmem_to_hbm [thread:$0]  %s597, 32, %s599, [#allocation3]
    $region33: #{bert_classifier_forward.15} parent=1 // pred_fallthru
      _
    // Predicated region
    $region34: #{bert_classifier_forward.15} parent=1 // pred_check
      _
    $region35: #{bert_classifier_forward.15} parent=1 // pred_check_branch
      %603 = sbr.rel (0) target = $region37
    $region36: #{bert_classifier_forward.15} parent=1 // pred_region
      %605 = dma.done [#allocation3], 32
    $region37: #{bert_classifier_forward.15} parent=1 // pred_fallthru
      _
    %606 = vsyncpa [#allocation3], 1

// kernel: bert_classifier_forward.10
$region0: #{bert_classifier_forward.10}
  #allocation0 [shape = 'u32[]', space=smem, size = 0x4, offset = 0x4, fixed_abs, tag = 'smem constant byte address 0x4 - core index']
  #allocation1 [shape = 'u32[72,128]{1,0:T(1,128)}', space=vmem, size = 0x9000, scoped, tag = 'internal scratch']
  %s0 = inlined_call_operand.vmem [shape: f32[16,384], index: 0, kind: input, shape index: {}]
  %s1 = inlined_call_operand.hbm [shape: bf16[384,640], index: 1, kind: input, shape index: {}]
  %s2 = inlined_call_operand.vmem [shape: f32[1,640], index: 2, kind: input, shape index: {}]
  %s3 = inlined_call_operand.hbm [shape: bf16[640,384], index: 3, kind: input, shape index: {}]
  %s4 = inlined_call_operand.vmem [shape: f32[1,384], index: 4, kind: input, shape index: {}]
  %s5 = inlined_call_operand.vmem [shape: f32[1,384], index: 5, kind: input, shape index: {}]
  %s6 = inlined_call_operand.vmem [shape: f32[1,384], index: 6, kind: input, shape index: {}]
  %s7 = inlined_call_operand.vmem [shape: f32[16,384], index: 7, kind: output, shape index: {}]
  %s8 = sld [smem:[#allocation0]]
  $region46: #{bert_classifier_forward.10} parent=0
    _
  %s10 = ssub.s32 1, %s8
  %s11 = scalar_select 0, %s10, %s8
  $region1: #{bert_classifier_forward.10} parent=0
    #allocation2 [shape = 'u8[491520]{0}', space=vmem, size = 0x78000, scoped, tag = 'input window, operand 1, single buffered']
    #allocation3 [shape = 's32[1]{0}', space=sflag, size = 0x4, scoped, tag = 'scoped memory for bert_classifier_forward.10']
    #allocation4 [shape = 'u8[491520]{0}', space=vmem, size = 0x78000, scoped, tag = 'input window, operand 3, single buffered']
    #allocation5 [shape = 's32[1]{0}', space=sflag, size = 0x4, scoped, tag = 'scoped memory for bert_classifier_forward.10']
    %12 = vsyncpa [#allocation3], 0
    %13 = vsyncpa [#allocation5], 0
    // Predicated region
    $region2: #{bert_classifier_forward.10} parent=1 // pred_check
      _
    $region3: #{bert_classifier_forward.10} parent=1 // pred_check_branch
      %15 = sbr.rel (0) target = $region5
    $region4: #{bert_classifier_forward.10} parent=1 // pred_region
      _
    $region5: #{bert_classifier_forward.10} parent=1 // pred_fallthru
      _
    // Predicated region
    $region6: #{bert_classifier_forward.10} parent=1 // pred_check
      _
    $region7: #{bert_classifier_forward.10} parent=1 // pred_check_branch
      %17 = sbr.rel (0) target = $region9
    $region8: #{bert_classifier_forward.10} parent=1 // pred_region
      %19 = vsyncadd [#allocation3], 0
      %s20 = sshll.u32 %s1, 4
      %s21 = int_to_ptr.hbm [resolvable:$true] %s20
      %s22 = sshll.u32 [#allocation2], 4
      %s23 = int_to_ptr.vmem [resolvable:$true] %s22
      %28 = dma.hbm_to_vmem [thread:$0]  %s21, 15360, %s23, [#allocation3], 320, 320, 20
    $region9: #{bert_classifier_forward.10} parent=1 // pred_fallthru
      _
    // Predicated region
    $region10: #{bert_classifier_forward.10} parent=1 // pred_check
      _
    $region11: #{bert_classifier_forward.10} parent=1 // pred_check_branch
      %30 = sbr.rel (0) target = $region13
    $region12: #{bert_classifier_forward.10} parent=1 // pred_region
      _
    $region13: #{bert_classifier_forward.10} parent=1 // pred_fallthru
      _
    // Predicated region
    $region14: #{bert_classifier_forward.10} parent=1 // pred_check
      _
    $region15: #{bert_classifier_forward.10} parent=1 // pred_check_branch
      %32 = sbr.rel (0) target = $region17
    $region16: #{bert_classifier_forward.10} parent=1 // pred_region
      %34 = vsyncadd [#allocation5], 0
      %s35 = sshll.u32 %s3, 4
      %s36 = int_to_ptr.hbm [resolvable:$true] %s35
      %s37 = sshll.u32 [#allocation4], 4
      %s38 = int_to_ptr.vmem [resolvable:$true] %s37
      %43 = dma.hbm_to_vmem [thread:$0]  %s36, 15360, %s38, [#allocation5], 192, 192, 12
    $region17: #{bert_classifier_forward.10} parent=1 // pred_fallthru
      _
    // Predicated region
    $region18: #{bert_classifier_forward.10} parent=1 // pred_check
      _
    $region19: #{bert_classifier_forward.10} parent=1 // pred_check_branch
      %45 = sbr.rel (0) target = $region21
    $region20: #{bert_classifier_forward.10} parent=1 // pred_region
      _
    $region21: #{bert_classifier_forward.10} parent=1 // pred_fallthru
      _
    // Predicated region
    $region22: #{bert_classifier_forward.10} parent=1 // pred_check
      _
    $region23: #{bert_classifier_forward.10} parent=1 // pred_check_branch
      %47 = sbr.rel (0) target = $region25
    $region24: #{bert_classifier_forward.10} parent=1 // pred_region
      _
    $region25: #{bert_classifier_forward.10} parent=1 // pred_fallthru
      _
    // Predicated region
    $region26: #{bert_classifier_forward.10} parent=1 // pred_check
      _
    $region27: #{bert_classifier_forward.10} parent=1 // pred_check_branch
      %49 = sbr.rel (0) target = $region29
    $region28: #{bert_classifier_forward.10} parent=1 // pred_region
      _
    $region29: #{bert_classifier_forward.10} parent=1 // pred_fallthru
      _
    // Predicated region
    $region30: #{bert_classifier_forward.10} parent=1 // pred_check
      _
    $region31: #{bert_classifier_forward.10} parent=1 // pred_check_branch
      %51 = sbr.rel (0) target = $region33
    $region32: #{bert_classifier_forward.10} parent=1 // pred_region
      %53 = dma.done [#allocation3], 15360
    $region33: #{bert_classifier_forward.10} parent=1 // pred_fallthru
      _
    // Predicated region
    $region34: #{bert_classifier_forward.10} parent=1 // pred_check
      _
    $region35: #{bert_classifier_forward.10} parent=1 // pred_check_branch
      %55 = sbr.rel (0) target = $region37
    $region36: #{bert_classifier_forward.10} parent=1 // pred_region
      %57 = dma.done [#allocation5], 15360
    $region37: #{bert_classifier_forward.10} parent=1 // pred_fallthru
      _
    %v58 = vld [vmem:[%s0] sm:$0xff]
    %v59 = vld [vmem:[%s0 + $0x8] sm:$0xff]
    %v60 = vld [vmem:[%s0 + $0x10] sm:$0xff]
    %v61 = vld [vmem:[%s0 + $0x18] sm:$0xff]
    %v62 = vld [vmem:[%s0 + $0x20] sm:$0xff]
    %v63 = vld [vmem:[%s0 + $0x28] sm:$0xff]
    %v64 = vpack.c.bf16 %v61, %v58
    %v65 = vpack.c.bf16 %v62, %v59
    %v66 = vpack.c.bf16 %v63, %v60
    %v67 = vld [vmem:[#allocation2] sm:$0xff]
    %v68 = vld [vmem:[#allocation2 + $0x8] sm:$0xff]
    %v69 = vld [vmem:[#allocation2 + $0x10] sm:$0xf]
    %v70 = vld [vmem:[#allocation2 + $0x14] sm:$0xff]
    %v71 = vld [vmem:[#allocation2 + $0x1c] sm:$0xff]
    %v72 = vld [vmem:[#allocation2 + $0x24] sm:$0xf]
    %v73 = vld [vmem:[#allocation2 + $0x28] sm:$0xff]
    %v74 = vld [vmem:[#allocation2 + $0x30] sm:$0xff]
    %v75 = vld [vmem:[#allocation2 + $0x38] sm:$0xf]
    %v76 = vld [vmem:[#allocation2 + $0x3c] sm:$0xff]
    %v77 = vld [vmem:[#allocation2 + $0x44] sm:$0xff]
    %v78 = vld [vmem:[#allocation2 + $0x4c] sm:$0xf]
    %v79 = vld [vmem:[#allocation2 + $0x50] sm:$0xff]
    %v80 = vld [vmem:[#allocation2 + $0x58] sm:$0xff]
    %v81 = vld [vmem:[#allocation2 + $0x60] sm:$0xf]
    %v82 = vld [vmem:[#allocation2 + $0x64] sm:$0xff]
    %v83 = vld [vmem:[#allocation2 + $0x6c] sm:$0xff]
    %v84 = vld [vmem:[#allocation2 + $0x74] sm:$0xf]
    %v85 = vld [vmem:[#allocation2 + $0x78] sm:$0xff]
    %v86 = vld [vmem:[#allocation2 + $0x80] sm:$0xff]
    %v87 = vld [vmem:[#allocation2 + $0x88] sm:$0xf]
    %v88 = vld [vmem:[#allocation2 + $0x8c] sm:$0xff]
    %v89 = vld [vmem:[#allocation2 + $0x94] sm:$0xff]
    %v90 = vld [vmem:[#allocation2 + $0x9c] sm:$0xf]
    %v91 = vld [vmem:[#allocation2 + $0xa0] sm:$0xff]
    %v92 = vld [vmem:[#allocation2 + $0xa8] sm:$0xff]
    %v93 = vld [vmem:[#allocation2 + $0xb0] sm:$0xf]
    %v94 = vld [vmem:[#allocation2 + $0xb4] sm:$0xff]
    %v95 = vld [vmem:[#allocation2 + $0xbc] sm:$0xff]
    %v96 = vld [vmem:[#allocation2 + $0xc4] sm:$0xf]
    %v97 = vld [vmem:[#allocation2 + $0xc8] sm:$0xff]
    %v98 = vld [vmem:[#allocation2 + $0xd0] sm:$0xff]
    %v99 = vld [vmem:[#allocation2 + $0xd8] sm:$0xf]
    %v100 = vld [vmem:[#allocation2 + $0xdc] sm:$0xff]
    %v101 = vld [vmem:[#allocation2 + $0xe4] sm:$0xff]
    %v102 = vld [vmem:[#allocation2 + $0xec] sm:$0xf]
    %v103 = vld [vmem:[#allocation2 + $0xf0] sm:$0xff]
    %v104 = vld [vmem:[#allocation2 + $0xf8] sm:$0xff]
    %v105 = vld [vmem:[#allocation2 + $0x100] sm:$0xf]
    %v106 = vld [vmem:[#allocation2 + $0x104] sm:$0xff]
    %v107 = vld [vmem:[#allocation2 + $0x10c] sm:$0xff]
    %v108 = vld [vmem:[#allocation2 + $0x114] sm:$0xf]
    %v109 = vld [vmem:[#allocation2 + $0x118] sm:$0xff]
    %v110 = vld [vmem:[#allocation2 + $0x120] sm:$0xff]
    %v111 = vld [vmem:[#allocation2 + $0x128] sm:$0xf]
    %v112 = vld [vmem:[#allocation2 + $0x12c] sm:$0xff]
    %v113 = vld [vmem:[#allocation2 + $0x134] sm:$0xff]
    %v114 = vld [vmem:[#allocation2 + $0x13c] sm:$0xf]
    %v115 = vld [vmem:[#allocation2 + $0x140] sm:$0xff]
    %v116 = vld [vmem:[#allocation2 + $0x148] sm:$0xff]
    %v117 = vld [vmem:[#allocation2 + $0x150] sm:$0xf]
    %v118 = vld [vmem:[#allocation2 + $0x154] sm:$0xff]
    %v119 = vld [vmem:[#allocation2 + $0x15c] sm:$0xff]
    %v120 = vld [vmem:[#allocation2 + $0x164] sm:$0xf]
    %v121 = vld [vmem:[#allocation2 + $0x168] sm:$0xff]
    %v122 = vld [vmem:[#allocation2 + $0x170] sm:$0xff]
    %v123 = vld [vmem:[#allocation2 + $0x178] sm:$0xf]
    %v124 = vld [vmem:[#allocation2 + $0x17c] sm:$0xff]
    %v125 = vld [vmem:[#allocation2 + $0x184] sm:$0xff]
    %v126 = vld [vmem:[#allocation2 + $0x18c] sm:$0xf]
    %v127 = vld [vmem:[#allocation2 + $0x190] sm:$0xff]
    %v128 = vld [vmem:[#allocation2 + $0x198] sm:$0xff]
    %v129 = vld [vmem:[#allocation2 + $0x1a0] sm:$0xf]
    %v130 = vld [vmem:[#allocation2 + $0x1a4] sm:$0xff]
    %v131 = vld [vmem:[#allocation2 + $0x1ac] sm:$0xff]
    %v132 = vld [vmem:[#allocation2 + $0x1b4] sm:$0xf]
    %v133 = vld [vmem:[#allocation2 + $0x1b8] sm:$0xff]
    %v134 = vld [vmem:[#allocation2 + $0x1c0] sm:$0xff]
    %v135 = vld [vmem:[#allocation2 + $0x1c8] sm:$0xf]
    %v136 = vld [vmem:[#allocation2 + $0x1cc] sm:$0xff]
    %v137 = vld [vmem:[#allocation2 + $0x1d4] sm:$0xff]
    %v138 = vld [vmem:[#allocation2 + $0x1dc] sm:$0xf]
    %v139 = vld [vmem:[#allocation2 + $0x1e0] sm:$0xff]
    %v140 = vld [vmem:[#allocation2 + $0x1e8] sm:$0xff]
    %v141 = vld [vmem:[#allocation2 + $0x1f0] sm:$0xf]
    %v142 = vld [vmem:[#allocation2 + $0x1f4] sm:$0xff]
    %v143 = vld [vmem:[#allocation2 + $0x1fc] sm:$0xff]
    %v144 = vld [vmem:[#allocation2 + $0x204] sm:$0xf]
    %v145 = vld [vmem:[#allocation2 + $0x208] sm:$0xff]
    %v146 = vld [vmem:[#allocation2 + $0x210] sm:$0xff]
    %v147 = vld [vmem:[#allocation2 + $0x218] sm:$0xf]
    %v148 = vld [vmem:[#allocation2 + $0x21c] sm:$0xff]
    %v149 = vld [vmem:[#allocation2 + $0x224] sm:$0xff]
    %v150 = vld [vmem:[#allocation2 + $0x22c] sm:$0xf]
    %v151 = vld [vmem:[#allocation2 + $0x230] sm:$0xff]
    %v152 = vld [vmem:[#allocation2 + $0x238] sm:$0xff]
    %v153 = vld [vmem:[#allocation2 + $0x240] sm:$0xf]
    %v154 = vld [vmem:[#allocation2 + $0x244] sm:$0xff]
    %v155 = vld [vmem:[#allocation2 + $0x24c] sm:$0xff]
    %v156 = vld [vmem:[#allocation2 + $0x254] sm:$0xf]
    %v157 = vld [vmem:[#allocation2 + $0x258] sm:$0xff]
    %v158 = vld [vmem:[#allocation2 + $0x260] sm:$0xff]
    %v159 = vld [vmem:[#allocation2 + $0x268] sm:$0xf]
    %v160 = vld [vmem:[#allocation2 + $0x26c] sm:$0xff]
    %v161 = vld [vmem:[#allocation2 + $0x274] sm:$0xff]
    %v162 = vld [vmem:[#allocation2 + $0x27c] sm:$0xf]
    %v163 = vld [vmem:[#allocation2 + $0x280] sm:$0xff]
    %v164 = vld [vmem:[#allocation2 + $0x288] sm:$0xff]
    %v165 = vld [vmem:[#allocation2 + $0x290] sm:$0xf]
    %v166 = vld [vmem:[#allocation2 + $0x294] sm:$0xff]
    %v167 = vld [vmem:[#allocation2 + $0x29c] sm:$0xff]
    %v168 = vld [vmem:[#allocation2 + $0x2a4] sm:$0xf]
    %v169 = vld [vmem:[#allocation2 + $0x2a8] sm:$0xff]
    %v170 = vld [vmem:[#allocation2 + $0x2b0] sm:$0xff]
    %v171 = vld [vmem:[#allocation2 + $0x2b8] sm:$0xf]
    %v172 = vld [vmem:[#allocation2 + $0x2bc] sm:$0xff]
    %v173 = vld [vmem:[#allocation2 + $0x2c4] sm:$0xff]
    %v174 = vld [vmem:[#allocation2 + $0x2cc] sm:$0xf]
    %v175 = vld [vmem:[#allocation2 + $0x2d0] sm:$0xff]
    %v176 = vld [vmem:[#allocation2 + $0x2d8] sm:$0xff]
    %v177 = vld [vmem:[#allocation2 + $0x2e0] sm:$0xf]
    %v178 = vld [vmem:[#allocation2 + $0x2e4] sm:$0xff]
    %v179 = vld [vmem:[#allocation2 + $0x2ec] sm:$0xff]
    %v180 = vld [vmem:[#allocation2 + $0x2f4] sm:$0xf]
    %v181 = vld [vmem:[#allocation2 + $0x2f8] sm:$0xff]
    %v182 = vld [vmem:[#allocation2 + $0x300] sm:$0xff]
    %v183 = vld [vmem:[#allocation2 + $0x308] sm:$0xf]
    %v184 = vld [vmem:[#allocation2 + $0x30c] sm:$0xff]
    %v185 = vld [vmem:[#allocation2 + $0x314] sm:$0xff]
    %v186 = vld [vmem:[#allocation2 + $0x31c] sm:$0xf]
    %v187 = vld [vmem:[#allocation2 + $0x320] sm:$0xff]
    %v188 = vld [vmem:[#allocation2 + $0x328] sm:$0xff]
    %v189 = vld [vmem:[#allocation2 + $0x330] sm:$0xf]
    %v190 = vld [vmem:[#allocation2 + $0x334] sm:$0xff]
    %v191 = vld [vmem:[#allocation2 + $0x33c] sm:$0xff]
    %v192 = vld [vmem:[#allocation2 + $0x344] sm:$0xf]
    %v193 = vld [vmem:[#allocation2 + $0x348] sm:$0xff]
    %v194 = vld [vmem:[#allocation2 + $0x350] sm:$0xff]
    %v195 = vld [vmem:[#allocation2 + $0x358] sm:$0xf]
    %v196 = vld [vmem:[#allocation2 + $0x35c] sm:$0xff]
    %v197 = vld [vmem:[#allocation2 + $0x364] sm:$0xff]
    %v198 = vld [vmem:[#allocation2 + $0x36c] sm:$0xf]
    %v199 = vld [vmem:[#allocation2 + $0x370] sm:$0xff]
    %v200 = vld [vmem:[#allocation2 + $0x378] sm:$0xff]
    %v201 = vld [vmem:[#allocation2 + $0x380] sm:$0xf]
    %v202 = vld [vmem:[#allocation2 + $0x384] sm:$0xff]
    %v203 = vld [vmem:[#allocation2 + $0x38c] sm:$0xff]
    %v204 = vld [vmem:[#allocation2 + $0x394] sm:$0xf]
    %v205 = vld [vmem:[#allocation2 + $0x398] sm:$0xff]
    %v206 = vld [vmem:[#allocation2 + $0x3a0] sm:$0xff]
    %v207 = vld [vmem:[#allocation2 + $0x3a8] sm:$0xf]
    %v208 = vld [vmem:[#allocation2 + $0x3ac] sm:$0xff]
    %v209 = vld [vmem:[#allocation2 + $0x3b4] sm:$0xff]
    %v210 = vld [vmem:[#allocation2 + $0x3bc] sm:$0xf]
    %v211 = vld [vmem:[%s2] sm:$0x1f]
    %v213 = vperm.slane %v211, 0
    %v214 = vperm.slane %v211, 1
    %v215 = vperm.slane %v211, 2
    %v216 = vperm.slane %v211, 3
    %v217 = vperm.slane %v211, 4
    %v367 = vunpack.c.l.b16 %v67
    %v368 = vunpack.c.h.b16 %v67
    %v369 = vunpack.c.l.b16 %v68
    %v370 = vunpack.c.h.b16 %v68
    %v371 = vunpack.c.l.b16 %v69
    %v372 = vunpack.c.l.b16 %v70
    %v373 = vunpack.c.h.b16 %v70
    %v374 = vunpack.c.l.b16 %v71
    %v375 = vunpack.c.h.b16 %v71
    %v376 = vunpack.c.l.b16 %v72
    %v377 = vunpack.c.l.b16 %v73
    %v378 = vunpack.c.h.b16 %v73
    %v379 = vunpack.c.l.b16 %v74
    %v380 = vunpack.c.h.b16 %v74
    %v381 = vunpack.c.l.b16 %v75
    %v382 = vunpack.c.l.b16 %v76
    %v383 = vunpack.c.h.b16 %v76
    %v384 = vunpack.c.l.b16 %v77
    %v385 = vunpack.c.h.b16 %v77
    %v386 = vunpack.c.l.b16 %v78
    %v387 = vunpack.c.l.b16 %v79
    %v388 = vunpack.c.h.b16 %v79
    %v389 = vunpack.c.l.b16 %v80
    %v390 = vunpack.c.h.b16 %v80
    %v391 = vunpack.c.l.b16 %v81
    %v392 = vunpack.c.l.b16 %v82
    %v393 = vunpack.c.h.b16 %v82
    %v394 = vunpack.c.l.b16 %v83
    %v395 = vunpack.c.h.b16 %v83
    %v396 = vunpack.c.l.b16 %v84
    %v397 = vunpack.c.l.b16 %v85
    %v398 = vunpack.c.h.b16 %v85
    %v399 = vunpack.c.l.b16 %v86
    %v400 = vunpack.c.h.b16 %v86
    %v401 = vunpack.c.l.b16 %v87
    %v402 = vunpack.c.l.b16 %v88
    %v403 = vunpack.c.h.b16 %v88
    %v404 = vunpack.c.l.b16 %v89
    %v405 = vunpack.c.h.b16 %v89
    %v406 = vunpack.c.l.b16 %v90
    %v407 = vunpack.c.l.b16 %v91
    %v408 = vunpack.c.h.b16 %v91
    %v409 = vunpack.c.l.b16 %v92
    %v410 = vunpack.c.h.b16 %v92
    %v411 = vunpack.c.l.b16 %v93
    %v412 = vunpack.c.l.b16 %v94
    %v413 = vunpack.c.h.b16 %v94
    %v414 = vunpack.c.l.b16 %v95
    %v415 = vunpack.c.h.b16 %v95
    %v416 = vunpack.c.l.b16 %v96
    %v417 = vunpack.c.l.b16 %v97
    %v418 = vunpack.c.h.b16 %v97
    %v419 = vunpack.c.l.b16 %v98
    %v420 = vunpack.c.h.b16 %v98
    %v421 = vunpack.c.l.b16 %v99
    %v422 = vunpack.c.l.b16 %v100
    %v423 = vunpack.c.h.b16 %v100
    %v424 = vunpack.c.l.b16 %v101
    %v425 = vunpack.c.h.b16 %v101
    %v426 = vunpack.c.l.b16 %v102
    %v427 = vunpack.c.l.b16 %v103
    %v428 = vunpack.c.h.b16 %v103
    %v429 = vunpack.c.l.b16 %v104
    %v430 = vunpack.c.h.b16 %v104
    %v431 = vunpack.c.l.b16 %v105
    %v432 = vunpack.c.l.b16 %v106
    %v433 = vunpack.c.h.b16 %v106
    %v434 = vunpack.c.l.b16 %v107
    %v435 = vunpack.c.h.b16 %v107
    %v436 = vunpack.c.l.b16 %v108
    %v437 = vunpack.c.l.b16 %v109
    %v438 = vunpack.c.h.b16 %v109
    %v439 = vunpack.c.l.b16 %v110
    %v440 = vunpack.c.h.b16 %v110
    %v441 = vunpack.c.l.b16 %v111
    %v442 = vunpack.c.l.b16 %v112
    %v443 = vunpack.c.h.b16 %v112
    %v444 = vunpack.c.l.b16 %v113
    %v445 = vunpack.c.h.b16 %v113
    %v446 = vunpack.c.l.b16 %v114
    %v447 = vunpack.c.l.b16 %v115
    %v448 = vunpack.c.h.b16 %v115
    %v449 = vunpack.c.l.b16 %v116
    %v450 = vunpack.c.h.b16 %v116
    %v451 = vunpack.c.l.b16 %v117
    %v452 = vunpack.c.l.b16 %v118
    %v453 = vunpack.c.h.b16 %v118
    %v454 = vunpack.c.l.b16 %v119
    %v455 = vunpack.c.h.b16 %v119
    %v456 = vunpack.c.l.b16 %v120
    %v457 = vunpack.c.l.b16 %v121
    %v458 = vunpack.c.h.b16 %v121
    %v459 = vunpack.c.l.b16 %v122
    %v460 = vunpack.c.h.b16 %v122
    %v461 = vunpack.c.l.b16 %v123
    %v462 = vunpack.c.l.b16 %v124
    %v463 = vunpack.c.h.b16 %v124
    %v464 = vunpack.c.l.b16 %v125
    %v465 = vunpack.c.h.b16 %v125
    %v466 = vunpack.c.l.b16 %v126
    %v467 = vunpack.c.l.b16 %v127
    %v468 = vunpack.c.h.b16 %v127
    %v469 = vunpack.c.l.b16 %v128
    %v470 = vunpack.c.h.b16 %v128
    %v471 = vunpack.c.l.b16 %v129
    %v472 = vunpack.c.l.b16 %v130
    %v473 = vunpack.c.h.b16 %v130
    %v474 = vunpack.c.l.b16 %v131
    %v475 = vunpack.c.h.b16 %v131
    %v476 = vunpack.c.l.b16 %v132
    %v477 = vunpack.c.l.b16 %v133
    %v478 = vunpack.c.h.b16 %v133
    %v479 = vunpack.c.l.b16 %v134
    %v480 = vunpack.c.h.b16 %v134
    %v481 = vunpack.c.l.b16 %v135
    %v482 = vunpack.c.l.b16 %v136
    %v483 = vunpack.c.h.b16 %v136
    %v484 = vunpack.c.l.b16 %v137
    %v485 = vunpack.c.h.b16 %v137
    %v486 = vunpack.c.l.b16 %v138
    %v487 = vunpack.c.l.b16 %v139
    %v488 = vunpack.c.h.b16 %v139
    %v489 = vunpack.c.l.b16 %v140
    %v490 = vunpack.c.h.b16 %v140
    %v491 = vunpack.c.l.b16 %v141
    %v492 = vunpack.c.l.b16 %v142
    %v493 = vunpack.c.h.b16 %v142
    %v494 = vunpack.c.l.b16 %v143
    %v495 = vunpack.c.h.b16 %v143
    %v496 = vunpack.c.l.b16 %v144
    %v497 = vunpack.c.l.b16 %v145
    %v498 = vunpack.c.h.b16 %v145
    %v499 = vunpack.c.l.b16 %v146
    %v500 = vunpack.c.h.b16 %v146
    %v501 = vunpack.c.l.b16 %v147
    %v502 = vunpack.c.l.b16 %v148
    %v503 = vunpack.c.h.b16 %v148
    %v504 = vunpack.c.l.b16 %v149
    %v505 = vunpack.c.h.b16 %v149
    %v506 = vunpack.c.l.b16 %v150
    %v507 = vunpack.c.l.b16 %v151
    %v508 = vunpack.c.h.b16 %v151
    %v509 = vunpack.c.l.b16 %v152
    %v510 = vunpack.c.h.b16 %v152
    %v511 = vunpack.c.l.b16 %v153
    %v512 = vunpack.c.l.b16 %v154
    %v513 = vunpack.c.h.b16 %v154
    %v514 = vunpack.c.l.b16 %v155
    %v515 = vunpack.c.h.b16 %v155
    %v516 = vunpack.c.l.b16 %v156
    %v517 = vunpack.c.l.b16 %v157
    %v518 = vunpack.c.h.b16 %v157
    %v519 = vunpack.c.l.b16 %v158
    %v520 = vunpack.c.h.b16 %v158
    %v521 = vunpack.c.l.b16 %v159
    %v522 = vunpack.c.l.b16 %v160
    %v523 = vunpack.c.h.b16 %v160
    %v524 = vunpack.c.l.b16 %v161
    %v525 = vunpack.c.h.b16 %v161
    %v526 = vunpack.c.l.b16 %v162
    %v527 = vunpack.c.l.b16 %v163
    %v528 = vunpack.c.h.b16 %v163
    %v529 = vunpack.c.l.b16 %v164
    %v530 = vunpack.c.h.b16 %v164
    %v531 = vunpack.c.l.b16 %v165
    %v532 = vunpack.c.l.b16 %v166
    %v533 = vunpack.c.h.b16 %v166
    %v534 = vunpack.c.l.b16 %v167
    %v535 = vunpack.c.h.b16 %v167
    %v536 = vunpack.c.l.b16 %v168
    %v537 = vunpack.c.l.b16 %v169
    %v538 = vunpack.c.h.b16 %v169
    %v539 = vunpack.c.l.b16 %v170
    %v540 = vunpack.c.h.b16 %v170
    %v541 = vunpack.c.l.b16 %v171
    %v542 = vunpack.c.l.b16 %v172
    %v543 = vunpack.c.h.b16 %v172
    %v544 = vunpack.c.l.b16 %v173
    %v545 = vunpack.c.h.b16 %v173
    %v546 = vunpack.c.l.b16 %v174
    %v547 = vunpack.c.l.b16 %v175
    %v548 = vunpack.c.h.b16 %v175
    %v549 = vunpack.c.l.b16 %v176
    %v550 = vunpack.c.h.b16 %v176
    %v551 = vunpack.c.l.b16 %v177
    %v552 = vunpack.c.l.b16 %v178
    %v553 = vunpack.c.h.b16 %v178
    %v554 = vunpack.c.l.b16 %v179
    %v555 = vunpack.c.h.b16 %v179
    %v556 = vunpack.c.l.b16 %v180
    %v557 = vunpack.c.l.b16 %v181
    %v558 = vunpack.c.h.b16 %v181
    %v559 = vunpack.c.l.b16 %v182
    %v560 = vunpack.c.h.b16 %v182
    %v561 = vunpack.c.l.b16 %v183
    %v562 = vunpack.c.l.b16 %v184
    %v563 = vunpack.c.h.b16 %v184
    %v564 = vunpack.c.l.b16 %v185
    %v565 = vunpack.c.h.b16 %v185
    %v566 = vunpack.c.l.b16 %v186
    %v567 = vunpack.c.l.b16 %v187
    %v568 = vunpack.c.h.b16 %v187
    %v569 = vunpack.c.l.b16 %v188
    %v570 = vunpack.c.h.b16 %v188
    %v571 = vunpack.c.l.b16 %v189
    %v572 = vunpack.c.l.b16 %v190
    %v573 = vunpack.c.h.b16 %v190
    %v574 = vunpack.c.l.b16 %v191
    %v575 = vunpack.c.h.b16 %v191
    %v576 = vunpack.c.l.b16 %v192
    %v577 = vunpack.c.l.b16 %v193
    %v578 = vunpack.c.h.b16 %v193
    %v579 = vunpack.c.l.b16 %v194
    %v580 = vunpack.c.h.b16 %v194
    %v581 = vunpack.c.l.b16 %v195
    %v582 = vunpack.c.l.b16 %v196
    %v583 = vunpack.c.h.b16 %v196
    %v584 = vunpack.c.l.b16 %v197
    %v585 = vunpack.c.h.b16 %v197
    %v586 = vunpack.c.l.b16 %v198
    %v587 = vunpack.c.l.b16 %v199
    %v588 = vunpack.c.h.b16 %v199
    %v589 = vunpack.c.l.b16 %v200
    %v590 = vunpack.c.h.b16 %v200
    %v591 = vunpack.c.l.b16 %v201
    %v592 = vunpack.c.l.b16 %v202
    %v593 = vunpack.c.h.b16 %v202
    %v594 = vunpack.c.l.b16 %v203
    %v595 = vunpack.c.h.b16 %v203
    %v596 = vunpack.c.l.b16 %v204
    %v597 = vunpack.c.l.b16 %v205
    %v598 = vunpack.c.h.b16 %v205
    %v599 = vunpack.c.l.b16 %v206
    %v600 = vunpack.c.h.b16 %v206
    %v601 = vunpack.c.l.b16 %v207
    %v602 = vunpack.c.l.b16 %v208
    %v603 = vunpack.c.h.b16 %v208
    %v604 = vunpack.c.l.b16 %v209
    %v605 = vunpack.c.h.b16 %v209
    %v606 = vunpack.c.l.b16 %v210
    %v607 = vpack.c.b16 %v372, %v367
    %v608 = vpack.c.b16 %v373, %v368
    %v609 = vpack.c.b16 %v374, %v369
    %v610 = vpack.c.b16 %v375, %v370
    %v611 = vpack.c.b16 %v376, %v371
    %v612 = vpack.c.b16 %v382, %v377
    %v613 = vpack.c.b16 %v383, %v378
    %v614 = vpack.c.b16 %v384, %v379
    %v615 = vpack.c.b16 %v385, %v380
    %v616 = vpack.c.b16 %v386, %v381
    %v617 = vpack.c.b16 %v392, %v387
    %v618 = vpack.c.b16 %v393, %v388
    %v619 = vpack.c.b16 %v394, %v389
    %v620 = vpack.c.b16 %v395, %v390
    %v621 = vpack.c.b16 %v396, %v391
    %v622 = vpack.c.b16 %v402, %v397
    %v623 = vpack.c.b16 %v403, %v398
    %v624 = vpack.c.b16 %v404, %v399
    %v625 = vpack.c.b16 %v405, %v400
    %v626 = vpack.c.b16 %v406, %v401
    %v627 = vpack.c.b16 %v412, %v407
    %v628 = vpack.c.b16 %v413, %v408
    %v629 = vpack.c.b16 %v414, %v409
    %v630 = vpack.c.b16 %v415, %v410
    %v631 = vpack.c.b16 %v416, %v411
    %v632 = vpack.c.b16 %v422, %v417
    %v633 = vpack.c.b16 %v423, %v418
    %v634 = vpack.c.b16 %v424, %v419
    %v635 = vpack.c.b16 %v425, %v420
    %v636 = vpack.c.b16 %v426, %v421
    %v637 = vpack.c.b16 %v432, %v427
    %v638 = vpack.c.b16 %v433, %v428
    %v639 = vpack.c.b16 %v434, %v429
    %v640 = vpack.c.b16 %v435, %v430
    %v641 = vpack.c.b16 %v436, %v431
    %v642 = vpack.c.b16 %v442, %v437
    %v643 = vpack.c.b16 %v443, %v438
    %v644 = vpack.c.b16 %v444, %v439
    %v645 = vpack.c.b16 %v445, %v440
    %v646 = vpack.c.b16 %v446, %v441
    %v647 = vpack.c.b16 %v452, %v447
    %v648 = vpack.c.b16 %v453, %v448
    %v649 = vpack.c.b16 %v454, %v449
    %v650 = vpack.c.b16 %v455, %v450
    %v651 = vpack.c.b16 %v456, %v451
    %v652 = vpack.c.b16 %v462, %v457
    %v653 = vpack.c.b16 %v463, %v458
    %v654 = vpack.c.b16 %v464, %v459
    %v655 = vpack.c.b16 %v465, %v460
    %v656 = vpack.c.b16 %v466, %v461
    %v657 = vpack.c.b16 %v472, %v467
    %v658 = vpack.c.b16 %v473, %v468
    %v659 = vpack.c.b16 %v474, %v469
    %v660 = vpack.c.b16 %v475, %v470
    %v661 = vpack.c.b16 %v476, %v471
    %v662 = vpack.c.b16 %v482, %v477
    %v663 = vpack.c.b16 %v483, %v478
    %v664 = vpack.c.b16 %v484, %v479
    %v665 = vpack.c.b16 %v485, %v480
    %v666 = vpack.c.b16 %v486, %v481
    %v667 = vpack.c.b16 %v492, %v487
    %v668 = vpack.c.b16 %v493, %v488
    %v669 = vpack.c.b16 %v494, %v489
    %v670 = vpack.c.b16 %v495, %v490
    %v671 = vpack.c.b16 %v496, %v491
    %v672 = vpack.c.b16 %v502, %v497
    %v673 = vpack.c.b16 %v503, %v498
    %v674 = vpack.c.b16 %v504, %v499
    %v675 = vpack.c.b16 %v505, %v500
    %v676 = vpack.c.b16 %v506, %v501
    %v677 = vpack.c.b16 %v512, %v507
    %v678 = vpack.c.b16 %v513, %v508
    %v679 = vpack.c.b16 %v514, %v509
    %v680 = vpack.c.b16 %v515, %v510
    %v681 = vpack.c.b16 %v516, %v511
    %v682 = vpack.c.b16 %v522, %v517
    %v683 = vpack.c.b16 %v523, %v518
    %v684 = vpack.c.b16 %v524, %v519
    %v685 = vpack.c.b16 %v525, %v520
    %v686 = vpack.c.b16 %v526, %v521
    %v687 = vpack.c.b16 %v532, %v527
    %v688 = vpack.c.b16 %v533, %v528
    %v689 = vpack.c.b16 %v534, %v529
    %v690 = vpack.c.b16 %v535, %v530
    %v691 = vpack.c.b16 %v536, %v531
    %v692 = vpack.c.b16 %v542, %v537
    %v693 = vpack.c.b16 %v543, %v538
    %v694 = vpack.c.b16 %v544, %v539
    %v695 = vpack.c.b16 %v545, %v540
    %v696 = vpack.c.b16 %v546, %v541
    %v697 = vpack.c.b16 %v552, %v547
    %v698 = vpack.c.b16 %v553, %v548
    %v699 = vpack.c.b16 %v554, %v549
    %v700 = vpack.c.b16 %v555, %v550
    %v701 = vpack.c.b16 %v556, %v551
    %v702 = vpack.c.b16 %v562, %v557
    %v703 = vpack.c.b16 %v563, %v558
    %v704 = vpack.c.b16 %v564, %v559
    %v705 = vpack.c.b16 %v565, %v560
    %v706 = vpack.c.b16 %v566, %v561
    %v707 = vpack.c.b16 %v572, %v567
    %v708 = vpack.c.b16 %v573, %v568
    %v709 = vpack.c.b16 %v574, %v569
    %v710 = vpack.c.b16 %v575, %v570
    %v711 = vpack.c.b16 %v576, %v571
    %v712 = vpack.c.b16 %v582, %v577
    %v713 = vpack.c.b16 %v583, %v578
    %v714 = vpack.c.b16 %v584, %v579
    %v715 = vpack.c.b16 %v585, %v580
    %v716 = vpack.c.b16 %v586, %v581
    %v717 = vpack.c.b16 %v592, %v587
    %v718 = vpack.c.b16 %v593, %v588
    %v719 = vpack.c.b16 %v594, %v589
    %v720 = vpack.c.b16 %v595, %v590
    %v721 = vpack.c.b16 %v596, %v591
    %v722 = vpack.c.b16 %v602, %v597
    %v723 = vpack.c.b16 %v603, %v598
    %v724 = vpack.c.b16 %v604, %v599
    %v725 = vpack.c.b16 %v605, %v600
    %v726 = vpack.c.b16 %v606, %v601
    %847 = vmatpush.bf16.msra.mxu0 %v642
    %848 = vmatpush.bf16.msra.mxu0 %v637
    %849 = vmatpush.bf16.msra.mxu0 %v632
    %850 = vmatpush.bf16.msra.mxu0 %v627
    %851 = vmatpush.bf16.msra.mxu0 %v622
    %852 = vmatpush.bf16.msra.mxu0 %v617
    %853 = vmatpush.bf16.msra.mxu0 %v612
    %854 = vmatpush.bf16.msra.mxu0 %v607
    %855 = vmatmul.bf16.gmra.mxu0 %v64
    %v856 = vpop.f32.mrf.mxu0
    %v857 = vadd.f32 %v213, %v856
    %v858 = vpop.f32.mrf.mxu0
    %v859 = vadd.f32 %v213, %v858
    %860 = vdwg.mxu0
    %861 = vmatpush.bf16.msra.mxu0 %v682
    %862 = vmatpush.bf16.msra.mxu0 %v677
    %863 = vmatpush.bf16.msra.mxu0 %v672
    %864 = vmatpush.bf16.msra.mxu0 %v667
    %865 = vmatpush.bf16.msra.mxu0 %v662
    %866 = vmatpush.bf16.msra.mxu0 %v657
    %867 = vmatpush.bf16.msra.mxu0 %v652
    %868 = vmatpush.bf16.msra.mxu0 %v647
    %869 = vmatmul.bf16.gmra.mxu0 %v65
    %v870 = vpop.f32.mrf.mxu0
    %v871 = vadd.f32 %v857, %v870
    %v872 = vpop.f32.mrf.mxu0
    %v873 = vadd.f32 %v859, %v872
    %874 = vdwg.mxu0
    %875 = vmatpush.bf16.msra.mxu0 %v722
    %876 = vmatpush.bf16.msra.mxu0 %v717
    %877 = vmatpush.bf16.msra.mxu0 %v712
    %878 = vmatpush.bf16.msra.mxu0 %v707
    %879 = vmatpush.bf16.msra.mxu0 %v702
    %880 = vmatpush.bf16.msra.mxu0 %v697
    %881 = vmatpush.bf16.msra.mxu0 %v692
    %882 = vmatpush.bf16.msra.mxu0 %v687
    %883 = vmatmul.bf16.gmra.mxu0 %v66
    %v884 = vpop.f32.mrf.mxu0
    %v885 = vadd.f32 %v871, %v884
    %v886 = vpop.f32.mrf.mxu0
    %v887 = vadd.f32 %v873, %v886
    %888 = vdwg.mxu0
    %889 = vmatpush.bf16.msra.mxu0 %v643
    %890 = vmatpush.bf16.msra.mxu0 %v638
    %891 = vmatpush.bf16.msra.mxu0 %v633
    %892 = vmatpush.bf16.msra.mxu0 %v628
    %893 = vmatpush.bf16.msra.mxu0 %v623
    %894 = vmatpush.bf16.msra.mxu0 %v618
    %895 = vmatpush.bf16.msra.mxu0 %v613
    %896 = vmatpush.bf16.msra.mxu0 %v608
    %897 = vmatmul.bf16.gmra.mxu0 %v64
    %v898 = vpop.f32.mrf.mxu0
    %v899 = vadd.f32 %v214, %v898
    %v900 = vpop.f32.mrf.mxu0
    %v901 = vadd.f32 %v214, %v900
    %902 = vdwg.mxu0
    %903 = vmatpush.bf16.msra.mxu0 %v683
    %904 = vmatpush.bf16.msra.mxu0 %v678
    %905 = vmatpush.bf16.msra.mxu0 %v673
    %906 = vmatpush.bf16.msra.mxu0 %v668
    %907 = vmatpush.bf16.msra.mxu0 %v663
    %908 = vmatpush.bf16.msra.mxu0 %v658
    %909 = vmatpush.bf16.msra.mxu0 %v653
    %910 = vmatpush.bf16.msra.mxu0 %v648
    %911 = vmatmul.bf16.gmra.mxu0 %v65
    %v912 = vpop.f32.mrf.mxu0
    %v913 = vadd.f32 %v899, %v912
    %v914 = vpop.f32.mrf.mxu0
    %v915 = vadd.f32 %v901, %v914
    %916 = vdwg.mxu0
    %917 = vmatpush.bf16.msra.mxu0 %v723
    %918 = vmatpush.bf16.msra.mxu0 %v718
    %919 = vmatpush.bf16.msra.mxu0 %v713
    %920 = vmatpush.bf16.msra.mxu0 %v708
    %921 = vmatpush.bf16.msra.mxu0 %v703
    %922 = vmatpush.bf16.msra.mxu0 %v698
    %923 = vmatpush.bf16.msra.mxu0 %v693
    %924 = vmatpush.bf16.msra.mxu0 %v688
    %925 = vmatmul.bf16.gmra.mxu0 %v66
    %v926 = vpop.f32.mrf.mxu0
    %v927 = vadd.f32 %v913, %v926
    %v928 = vpop.f32.mrf.mxu0
    %v929 = vadd.f32 %v915, %v928
    %930 = vdwg.mxu0
    %931 = vmatpush.bf16.msra.mxu0 %v644
    %932 = vmatpush.bf16.msra.mxu0 %v639
    %933 = vmatpush.bf16.msra.mxu0 %v634
    %934 = vmatpush.bf16.msra.mxu0 %v629
    %935 = vmatpush.bf16.msra.mxu0 %v624
    %936 = vmatpush.bf16.msra.mxu0 %v619
    %937 = vmatpush.bf16.msra.mxu0 %v614
    %938 = vmatpush.bf16.msra.mxu0 %v609
    %939 = vmatmul.bf16.gmra.mxu0 %v64
    %v940 = vpop.f32.mrf.mxu0
    %v941 = vadd.f32 %v215, %v940
    %v942 = vpop.f32.mrf.mxu0
    %v943 = vadd.f32 %v215, %v942
    %944 = vdwg.mxu0
    %945 = vmatpush.bf16.msra.mxu0 %v684
    %946 = vmatpush.bf16.msra.mxu0 %v679
    %947 = vmatpush.bf16.msra.mxu0 %v674
    %948 = vmatpush.bf16.msra.mxu0 %v669
    %949 = vmatpush.bf16.msra.mxu0 %v664
    %950 = vmatpush.bf16.msra.mxu0 %v659
    %951 = vmatpush.bf16.msra.mxu0 %v654
    %952 = vmatpush.bf16.msra.mxu0 %v649
    %953 = vmatmul.bf16.gmra.mxu0 %v65
    %v954 = vpop.f32.mrf.mxu0
    %v955 = vadd.f32 %v941, %v954
    %v956 = vpop.f32.mrf.mxu0
    %v957 = vadd.f32 %v943, %v956
    %958 = vdwg.mxu0
    %959 = vmatpush.bf16.msra.mxu0 %v724
    %960 = vmatpush.bf16.msra.mxu0 %v719
    %961 = vmatpush.bf16.msra.mxu0 %v714
    %962 = vmatpush.bf16.msra.mxu0 %v709
    %963 = vmatpush.bf16.msra.mxu0 %v704
    %964 = vmatpush.bf16.msra.mxu0 %v699
    %965 = vmatpush.bf16.msra.mxu0 %v694
    %966 = vmatpush.bf16.msra.mxu0 %v689
    %967 = vmatmul.bf16.gmra.mxu0 %v66
    %v968 = vpop.f32.mrf.mxu0
    %v969 = vadd.f32 %v955, %v968
    %v970 = vpop.f32.mrf.mxu0
    %v971 = vadd.f32 %v957, %v970
    %972 = vdwg.mxu0
    %973 = vmatpush.bf16.msra.mxu0 %v645
    %974 = vmatpush.bf16.msra.mxu0 %v640
    %975 = vmatpush.bf16.msra.mxu0 %v635
    %976 = vmatpush.bf16.msra.mxu0 %v630
    %977 = vmatpush.bf16.msra.mxu0 %v625
    %978 = vmatpush.bf16.msra.mxu0 %v620
    %979 = vmatpush.bf16.msra.mxu0 %v615
    %980 = vmatpush.bf16.msra.mxu0 %v610
    %981 = vmatmul.bf16.gmra.mxu0 %v64
    %v982 = vpop.f32.mrf.mxu0
    %v983 = vadd.f32 %v216, %v982
    %v984 = vpop.f32.mrf.mxu0
    %v985 = vadd.f32 %v216, %v984
    %986 = vdwg.mxu0
    %987 = vmatpush.bf16.msra.mxu0 %v685
    %988 = vmatpush.bf16.msra.mxu0 %v680
    %989 = vmatpush.bf16.msra.mxu0 %v675
    %990 = vmatpush.bf16.msra.mxu0 %v670
    %991 = vmatpush.bf16.msra.mxu0 %v665
    %992 = vmatpush.bf16.msra.mxu0 %v660
    %993 = vmatpush.bf16.msra.mxu0 %v655
    %994 = vmatpush.bf16.msra.mxu0 %v650
    %995 = vmatmul.bf16.gmra.mxu0 %v65
    %v996 = vpop.f32.mrf.mxu0
    %v997 = vadd.f32 %v983, %v996
    %v998 = vpop.f32.mrf.mxu0
    %v999 = vadd.f32 %v985, %v998
    %1000 = vdwg.mxu0
    %1001 = vmatpush.bf16.msra.mxu0 %v725
    %1002 = vmatpush.bf16.msra.mxu0 %v720
    %1003 = vmatpush.bf16.msra.mxu0 %v715
    %1004 = vmatpush.bf16.msra.mxu0 %v710
    %1005 = vmatpush.bf16.msra.mxu0 %v705
    %1006 = vmatpush.bf16.msra.mxu0 %v700
    %1007 = vmatpush.bf16.msra.mxu0 %v695
    %1008 = vmatpush.bf16.msra.mxu0 %v690
    %1009 = vmatmul.bf16.gmra.mxu0 %v66
    %v1010 = vpop.f32.mrf.mxu0
    %v1011 = vadd.f32 %v997, %v1010
    %v1012 = vpop.f32.mrf.mxu0
    %v1013 = vadd.f32 %v999, %v1012
    %1014 = vdwg.mxu0
    %1015 = vmatpush.bf16.msra.mxu0 %v646
    %1016 = vmatpush.bf16.msra.mxu0 %v641
    %1017 = vmatpush.bf16.msra.mxu0 %v636
    %1018 = vmatpush.bf16.msra.mxu0 %v631
    %1019 = vmatpush.bf16.msra.mxu0 %v626
    %1020 = vmatpush.bf16.msra.mxu0 %v621
    %1021 = vmatpush.bf16.msra.mxu0 %v616
    %1022 = vmatpush.bf16.msra.mxu0 %v611
    %1023 = vmatmul.bf16.gmra.mxu0 %v64
    %v1024 = vpop.f32.mrf.mxu0
    %v1025 = vadd.f32 %v217, %v1024
    %v1026 = vpop.f32.mrf.mxu0
    %v1027 = vadd.f32 %v217, %v1026
    %1028 = vdwg.mxu0
    %1029 = vmatpush.bf16.msra.mxu0 %v686
    %1030 = vmatpush.bf16.msra.mxu0 %v681
    %1031 = vmatpush.bf16.msra.mxu0 %v676
    %1032 = vmatpush.bf16.msra.mxu0 %v671
    %1033 = vmatpush.bf16.msra.mxu0 %v666
    %1034 = vmatpush.bf16.msra.mxu0 %v661
    %1035 = vmatpush.bf16.msra.mxu0 %v656
    %1036 = vmatpush.bf16.msra.mxu0 %v651
    %1037 = vmatmul.bf16.gmra.mxu0 %v65
    %v1038 = vpop.f32.mrf.mxu0
    %v1039 = vadd.f32 %v1025, %v1038
    %v1040 = vpop.f32.mrf.mxu0
    %v1041 = vadd.f32 %v1027, %v1040
    %1042 = vdwg.mxu0
    %1043 = vmatpush.bf16.msra.mxu0 %v726
    %1044 = vmatpush.bf16.msra.mxu0 %v721
    %1045 = vmatpush.bf16.msra.mxu0 %v716
    %1046 = vmatpush.bf16.msra.mxu0 %v711
    %1047 = vmatpush.bf16.msra.mxu0 %v706
    %1048 = vmatpush.bf16.msra.mxu0 %v701
    %1049 = vmatpush.bf16.msra.mxu0 %v696
    %1050 = vmatpush.bf16.msra.mxu0 %v691
    %1051 = vmatmul.bf16.gmra.mxu0 %v66
    %v1052 = vpop.f32.mrf.mxu0
    %v1053 = vadd.f32 %v1039, %v1052
    %v1054 = vpop.f32.mrf.mxu0
    %v1055 = vadd.f32 %v1041, %v1054
    %1056 = vdwg.mxu0
    %v1057 = vmul.f32 %v885, 0.5
    %v1058 = vmul.f32 %v927, 0.5
    %v1059 = vmul.f32 %v969, 0.5
    %v1060 = vmul.f32 %v1011, 0.5
    %v1061 = vmul.f32 %v1053, 0.5
    %v1062 = vmul.f32 %v887, 0.5
    %v1063 = vmul.f32 %v929, 0.5
    %v1064 = vmul.f32 %v971, 0.5
    %v1065 = vmul.f32 %v1013, 0.5
    %v1066 = vmul.f32 %v1055, 0.5
    %v1067 = vmul.f32 %v885, 0.044715
    %v1068 = vmul.f32 %v927, 0.044715
    %v1069 = vmul.f32 %v969, 0.044715
    %v1070 = vmul.f32 %v1011, 0.044715
    %v1071 = vmul.f32 %v1053, 0.044715
    %v1072 = vmul.f32 %v887, 0.044715
    %v1073 = vmul.f32 %v929, 0.044715
    %v1074 = vmul.f32 %v971, 0.044715
    %v1075 = vmul.f32 %v1013, 0.044715
    %v1076 = vmul.f32 %v1055, 0.044715
    %v1077 = vmul.f32 %v1067, %v885
    %v1078 = vmul.f32 %v1068, %v927
    %v1079 = vmul.f32 %v1069, %v969
    %v1080 = vmul.f32 %v1070, %v1011
    %v1081 = vmul.f32 %v1071, %v1053
    %v1082 = vmul.f32 %v1072, %v887
    %v1083 = vmul.f32 %v1073, %v929
    %v1084 = vmul.f32 %v1074, %v971
    %v1085 = vmul.f32 %v1075, %v1013
    %v1086 = vmul.f32 %v1076, %v1055
    %v1087 = vmul.f32 %v1077, %v885
    %v1088 = vmul.f32 %v1078, %v927
    %v1089 = vmul.f32 %v1079, %v969
    %v1090 = vmul.f32 %v1080, %v1011
    %v1091 = vmul.f32 %v1081, %v1053
    %v1092 = vmul.f32 %v1082, %v887
    %v1093 = vmul.f32 %v1083, %v929
    %v1094 = vmul.f32 %v1084, %v971
    %v1095 = vmul.f32 %v1085, %v1013
    %v1096 = vmul.f32 %v1086, %v1055
    %v1097 = vadd.f32 %v885, %v1087
    %v1098 = vadd.f32 %v927, %v1088
    %v1099 = vadd.f32 %v969, %v1089
    %v1100 = vadd.f32 %v1011, %v1090
    %v1101 = vadd.f32 %v1053, %v1091
    %v1102 = vadd.f32 %v887, %v1092
    %v1103 = vadd.f32 %v929, %v1093
    %v1104 = vadd.f32 %v971, %v1094
    %v1105 = vadd.f32 %v1013, %v1095
    %v1106 = vadd.f32 %v1055, %v1096
    %v1107 = vmul.f32 %v1097, 0.7978846
    %v1108 = vmul.f32 %v1098, 0.7978846
    %v1109 = vmul.f32 %v1099, 0.7978846
    %v1110 = vmul.f32 %v1100, 0.7978846
    %v1111 = vmul.f32 %v1101, 0.7978846
    %v1112 = vmul.f32 %v1102, 0.7978846
    %v1113 = vmul.f32 %v1103, 0.7978846
    %v1114 = vmul.f32 %v1104, 0.7978846
    %v1115 = vmul.f32 %v1105, 0.7978846
    %v1116 = vmul.f32 %v1106, 0.7978846
    %v1117 = vtanh.pop %v1107
    %v1118 = vtanh.pop %v1108
    %v1119 = vtanh.pop %v1109
    %v1120 = vtanh.pop %v1110
    %v1121 = vtanh.pop %v1111
    %v1122 = vtanh.pop %v1112
    %v1123 = vtanh.pop %v1113
    %v1124 = vtanh.pop %v1114
    %v1125 = vtanh.pop %v1115
    %v1126 = vtanh.pop %v1116
    %v1127 = vadd.f32 %v1117, 1.0
    %v1128 = vadd.f32 %v1118, 1.0
    %v1129 = vadd.f32 %v1119, 1.0
    %v1130 = vadd.f32 %v1120, 1.0
    %v1131 = vadd.f32 %v1121, 1.0
    %v1132 = vadd.f32 %v1122, 1.0
    %v1133 = vadd.f32 %v1123, 1.0
    %v1134 = vadd.f32 %v1124, 1.0
    %v1135 = vadd.f32 %v1125, 1.0
    %v1136 = vadd.f32 %v1126, 1.0
    %v1137 = vmul.f32 %v1057, %v1127
    %v1138 = vmul.f32 %v1058, %v1128
    %v1139 = vmul.f32 %v1059, %v1129
    %v1140 = vmul.f32 %v1060, %v1130
    %v1141 = vmul.f32 %v1061, %v1131
    %v1142 = vmul.f32 %v1062, %v1132
    %v1143 = vmul.f32 %v1063, %v1133
    %v1144 = vmul.f32 %v1064, %v1134
    %v1145 = vmul.f32 %v1065, %v1135
    %v1146 = vmul.f32 %v1066, %v1136
    %v1147 = vpack.c.bf16 %v1142, %v1137
    %v1148 = vpack.c.bf16 %v1143, %v1138
    %v1149 = vpack.c.bf16 %v1144, %v1139
    %v1150 = vpack.c.bf16 %v1145, %v1140
    %v1151 = vpack.c.bf16 %v1146, %v1141
    %v1152 = vld [vmem:[#allocation4] sm:$0xff]
    %v1153 = vld [vmem:[#allocation4 + $0x8] sm:$0xf]
    %v1154 = vld [vmem:[#allocation4 + $0xc] sm:$0xff]
    %v1155 = vld [vmem:[#allocation4 + $0x14] sm:$0xf]
    %v1156 = vld [vmem:[#allocation4 + $0x18] sm:$0xff]
    %v1157 = vld [vmem:[#allocation4 + $0x20] sm:$0xf]
    %v1158 = vld [vmem:[#allocation4 + $0x24] sm:$0xff]
    %v1159 = vld [vmem:[#allocation4 + $0x2c] sm:$0xf]
    %v1160 = vld [vmem:[#allocation4 + $0x30] sm:$0xff]
    %v1161 = vld [vmem:[#allocation4 + $0x38] sm:$0xf]
    %v1162 = vld [vmem:[#allocation4 + $0x3c] sm:$0xff]
    %v1163 = vld [vmem:[#allocation4 + $0x44] sm:$0xf]
    %v1164 = vld [vmem:[#allocation4 + $0x48] sm:$0xff]
    %v1165 = vld [vmem:[#allocation4 + $0x50] sm:$0xf]
    %v1166 = vld [vmem:[#allocation4 + $0x54] sm:$0xff]
    %v1167 = vld [vmem:[#allocation4 + $0x5c] sm:$0xf]
    %v1168 = vld [vmem:[#allocation4 + $0x60] sm:$0xff]
    %v1169 = vld [vmem:[#allocation4 + $0x68] sm:$0xf]
    %v1170 = vld [vmem:[#allocation4 + $0x6c] sm:$0xff]
    %v1171 = vld [vmem:[#allocation4 + $0x74] sm:$0xf]
    %v1172 = vld [vmem:[#allocation4 + $0x78] sm:$0xff]
    %v1173 = vld [vmem:[#allocation4 + $0x80] sm:$0xf]
    %v1174 = vld [vmem:[#allocation4 + $0x84] sm:$0xff]
    %v1175 = vld [vmem:[#allocation4 + $0x8c] sm:$0xf]
    %v1176 = vld [vmem:[#allocation4 + $0x90] sm:$0xff]
    %v1177 = vld [vmem:[#allocation4 + $0x98] sm:$0xf]
    %v1178 = vld [vmem:[#allocation4 + $0x9c] sm:$0xff]
    %v1179 = vld [vmem:[#allocation4 + $0xa4] sm:$0xf]
    %v1180 = vld [vmem:[#allocation4 + $0xa8] sm:$0xff]
    %v1181 = vld [vmem:[#allocation4 + $0xb0] sm:$0xf]
    %v1182 = vld [vmem:[#allocation4 + $0xb4] sm:$0xff]
    %v1183 = vld [vmem:[#allocation4 + $0xbc] sm:$0xf]
    %v1184 = vld [vmem:[#allocation4 + $0xc0] sm:$0xff]
    %v1185 = vld [vmem:[#allocation4 + $0xc8] sm:$0xf]
    %v1186 = vld [vmem:[#allocation4 + $0xcc] sm:$0xff]
    %v1187 = vld [vmem:[#allocation4 + $0xd4] sm:$0xf]
    %v1188 = vld [vmem:[#allocation4 + $0xd8] sm:$0xff]
    %v1189 = vld [vmem:[#allocation4 + $0xe0] sm:$0xf]
    %v1190 = vld [vmem:[#allocation4 + $0xe4] sm:$0xff]
    %v1191 = vld [vmem:[#allocation4 + $0xec] sm:$0xf]
    %v1192 = vld [vmem:[#allocation4 + $0xf0] sm:$0xff]
    %v1193 = vld [vmem:[#allocation4 + $0xf8] sm:$0xf]
    %v1194 = vld [vmem:[#allocation4 + $0xfc] sm:$0xff]
    %v1195 = vld [vmem:[#allocation4 + $0x104] sm:$0xf]
    %v1196 = vld [vmem:[#allocation4 + $0x108] sm:$0xff]
    %v1197 = vld [vmem:[#allocation4 + $0x110] sm:$0xf]
    %v1198 = vld [vmem:[#allocation4 + $0x114] sm:$0xff]
    %v1199 = vld [vmem:[#allocation4 + $0x11c] sm:$0xf]
    %v1200 = vld [vmem:[#allocation4 + $0x120] sm:$0xff]
    %v1201 = vld [vmem:[#allocation4 + $0x128] sm:$0xf]
    %v1202 = vld [vmem:[#allocation4 + $0x12c] sm:$0xff]
    %v1203 = vld [vmem:[#allocation4 + $0x134] sm:$0xf]
    %v1204 = vld [vmem:[#allocation4 + $0x138] sm:$0xff]
    %v1205 = vld [vmem:[#allocation4 + $0x140] sm:$0xf]
    %v1206 = vld [vmem:[#allocation4 + $0x144] sm:$0xff]
    %v1207 = vld [vmem:[#allocation4 + $0x14c] sm:$0xf]
    %v1208 = vld [vmem:[#allocation4 + $0x150] sm:$0xff]
    %v1209 = vld [vmem:[#allocation4 + $0x158] sm:$0xf]
    %v1210 = vld [vmem:[#allocation4 + $0x15c] sm:$0xff]
    %v1211 = vld [vmem:[#allocation4 + $0x164] sm:$0xf]
    %v1212 = vld [vmem:[#allocation4 + $0x168] sm:$0xff]
    %v1213 = vld [vmem:[#allocation4 + $0x170] sm:$0xf]
    %v1214 = vld [vmem:[#allocation4 + $0x174] sm:$0xff]
    %v1215 = vld [vmem:[#allocation4 + $0x17c] sm:$0xf]
    %v1216 = vld [vmem:[#allocation4 + $0x180] sm:$0xff]
    %v1217 = vld [vmem:[#allocation4 + $0x188] sm:$0xf]
    %v1218 = vld [vmem:[#allocation4 + $0x18c] sm:$0xff]
    %v1219 = vld [vmem:[#allocation4 + $0x194] sm:$0xf]
    %v1220 = vld [vmem:[#allocation4 + $0x198] sm:$0xff]
    %v1221 = vld [vmem:[#allocation4 + $0x1a0] sm:$0xf]
    %v1222 = vld [vmem:[#allocation4 + $0x1a4] sm:$0xff]
    %v1223 = vld [vmem:[#allocation4 + $0x1ac] sm:$0xf]
    %v1224 = vld [vmem:[#allocation4 + $0x1b0] sm:$0xff]
    %v1225 = vld [vmem:[#allocation4 + $0x1b8] sm:$0xf]
    %v1226 = vld [vmem:[#allocation4 + $0x1bc] sm:$0xff]
    %v1227 = vld [vmem:[#allocation4 + $0x1c4] sm:$0xf]
    %v1228 = vld [vmem:[#allocation4 + $0x1c8] sm:$0xff]
    %v1229 = vld [vmem:[#allocation4 + $0x1d0] sm:$0xf]
    %v1230 = vld [vmem:[#allocation4 + $0x1d4] sm:$0xff]
    %v1231 = vld [vmem:[#allocation4 + $0x1dc] sm:$0xf]
    %v1232 = vld [vmem:[#allocation4 + $0x1e0] sm:$0xff]
    %v1233 = vld [vmem:[#allocation4 + $0x1e8] sm:$0xf]
    %v1234 = vld [vmem:[#allocation4 + $0x1ec] sm:$0xff]
    %v1235 = vld [vmem:[#allocation4 + $0x1f4] sm:$0xf]
    %v1236 = vld [vmem:[#allocation4 + $0x1f8] sm:$0xff]
    %v1237 = vld [vmem:[#allocation4 + $0x200] sm:$0xf]
    %v1238 = vld [vmem:[#allocation4 + $0x204] sm:$0xff]
    %v1239 = vld [vmem:[#allocation4 + $0x20c] sm:$0xf]
    %v1240 = vld [vmem:[#allocation4 + $0x210] sm:$0xff]
    %v1241 = vld [vmem:[#allocation4 + $0x218] sm:$0xf]
    %v1242 = vld [vmem:[#allocation4 + $0x21c] sm:$0xff]
    %v1243 = vld [vmem:[#allocation4 + $0x224] sm:$0xf]
    %v1244 = vld [vmem:[#allocation4 + $0x228] sm:$0xff]
    %v1245 = vld [vmem:[#allocation4 + $0x230] sm:$0xf]
    %v1246 = vld [vmem:[#allocation4 + $0x234] sm:$0xff]
    %v1247 = vld [vmem:[#allocation4 + $0x23c] sm:$0xf]
    %v1248 = vld [vmem:[#allocation4 + $0x240] sm:$0xff]
    %v1249 = vld [vmem:[#allocation4 + $0x248] sm:$0xf]
    %v1250 = vld [vmem:[#allocation4 + $0x24c] sm:$0xff]
    %v1251 = vld [vmem:[#allocation4 + $0x254] sm:$0xf]
    %v1252 = vld [vmem:[#allocation4 + $0x258] sm:$0xff]
    %v1253 = vld [vmem:[#allocation4 + $0x260] sm:$0xf]
    %v1254 = vld [vmem:[#allocation4 + $0x264] sm:$0xff]
    %v1255 = vld [vmem:[#allocation4 + $0x26c] sm:$0xf]
    %v1256 = vld [vmem:[#allocation4 + $0x270] sm:$0xff]
    %v1257 = vld [vmem:[#allocation4 + $0x278] sm:$0xf]
    %v1258 = vld [vmem:[#allocation4 + $0x27c] sm:$0xff]
    %v1259 = vld [vmem:[#allocation4 + $0x284] sm:$0xf]
    %v1260 = vld [vmem:[#allocation4 + $0x288] sm:$0xff]
    %v1261 = vld [vmem:[#allocation4 + $0x290] sm:$0xf]
    %v1262 = vld [vmem:[#allocation4 + $0x294] sm:$0xff]
    %v1263 = vld [vmem:[#allocation4 + $0x29c] sm:$0xf]
    %v1264 = vld [vmem:[#allocation4 + $0x2a0] sm:$0xff]
    %v1265 = vld [vmem:[#allocation4 + $0x2a8] sm:$0xf]
    %v1266 = vld [vmem:[#allocation4 + $0x2ac] sm:$0xff]
    %v1267 = vld [vmem:[#allocation4 + $0x2b4] sm:$0xf]
    %v1268 = vld [vmem:[#allocation4 + $0x2b8] sm:$0xff]
    %v1269 = vld [vmem:[#allocation4 + $0x2c0] sm:$0xf]
    %v1270 = vld [vmem:[#allocation4 + $0x2c4] sm:$0xff]
    %v1271 = vld [vmem:[#allocation4 + $0x2cc] sm:$0xf]
    %v1272 = vld [vmem:[#allocation4 + $0x2d0] sm:$0xff]
    %v1273 = vld [vmem:[#allocation4 + $0x2d8] sm:$0xf]
    %v1274 = vld [vmem:[#allocation4 + $0x2dc] sm:$0xff]
    %v1275 = vld [vmem:[#allocation4 + $0x2e4] sm:$0xf]
    %v1276 = vld [vmem:[#allocation4 + $0x2e8] sm:$0xff]
    %v1277 = vld [vmem:[#allocation4 + $0x2f0] sm:$0xf]
    %v1278 = vld [vmem:[#allocation4 + $0x2f4] sm:$0xff]
    %v1279 = vld [vmem:[#allocation4 + $0x2fc] sm:$0xf]
    %v1280 = vld [vmem:[#allocation4 + $0x300] sm:$0xff]
    %v1281 = vld [vmem:[#allocation4 + $0x308] sm:$0xf]
    %v1282 = vld [vmem:[#allocation4 + $0x30c] sm:$0xff]
    %v1283 = vld [vmem:[#allocation4 + $0x314] sm:$0xf]
    %v1284 = vld [vmem:[#allocation4 + $0x318] sm:$0xff]
    %v1285 = vld [vmem:[#allocation4 + $0x320] sm:$0xf]
    %v1286 = vld [vmem:[#allocation4 + $0x324] sm:$0xff]
    %v1287 = vld [vmem:[#allocation4 + $0x32c] sm:$0xf]
    %v1288 = vld [vmem:[#allocation4 + $0x330] sm:$0xff]
    %v1289 = vld [vmem:[#allocation4 + $0x338] sm:$0xf]
    %v1290 = vld [vmem:[#allocation4 + $0x33c] sm:$0xff]
    %v1291 = vld [vmem:[#allocation4 + $0x344] sm:$0xf]
    %v1292 = vld [vmem:[#allocation4 + $0x348] sm:$0xff]
    %v1293 = vld [vmem:[#allocation4 + $0x350] sm:$0xf]
    %v1294 = vld [vmem:[#allocation4 + $0x354] sm:$0xff]
    %v1295 = vld [vmem:[#allocation4 + $0x35c] sm:$0xf]
    %v1296 = vld [vmem:[#allocation4 + $0x360] sm:$0xff]
    %v1297 = vld [vmem:[#allocation4 + $0x368] sm:$0xf]
    %v1298 = vld [vmem:[#allocation4 + $0x36c] sm:$0xff]
    %v1299 = vld [vmem:[#allocation4 + $0x374] sm:$0xf]
    %v1300 = vld [vmem:[#allocation4 + $0x378] sm:$0xff]
    %v1301 = vld [vmem:[#allocation4 + $0x380] sm:$0xf]
    %v1302 = vld [vmem:[#allocation4 + $0x384] sm:$0xff]
    %v1303 = vld [vmem:[#allocation4 + $0x38c] sm:$0xf]
    %v1304 = vld [vmem:[#allocation4 + $0x390] sm:$0xff]
    %v1305 = vld [vmem:[#allocation4 + $0x398] sm:$0xf]
    %v1306 = vld [vmem:[#allocation4 + $0x39c] sm:$0xff]
    %v1307 = vld [vmem:[#allocation4 + $0x3a4] sm:$0xf]
    %v1308 = vld [vmem:[#allocation4 + $0x3a8] sm:$0xff]
    %v1309 = vld [vmem:[#allocation4 + $0x3b0] sm:$0xf]
    %v1310 = vld [vmem:[#allocation4 + $0x3b4] sm:$0xff]
    %v1311 = vld [vmem:[#allocation4 + $0x3bc] sm:$0xf]
    %v1312 = vld [vmem:[%s4] sm:$0x7]
    %v1314 = vperm.slane %v1312, 0
    %v1315 = vperm.slane %v1312, 1
    %v1316 = vperm.slane %v1312, 2
    %v1480 = vunpack.c.l.b16 %v1152
    %v1481 = vunpack.c.h.b16 %v1152
    %v1482 = vunpack.c.l.b16 %v1153
    %v1483 = vunpack.c.l.b16 %v1154
    %v1484 = vunpack.c.h.b16 %v1154
    %v1485 = vunpack.c.l.b16 %v1155
    %v1486 = vunpack.c.l.b16 %v1156
    %v1487 = vunpack.c.h.b16 %v1156
    %v1488 = vunpack.c.l.b16 %v1157
    %v1489 = vunpack.c.l.b16 %v1158
    %v1490 = vunpack.c.h.b16 %v1158
    %v1491 = vunpack.c.l.b16 %v1159
    %v1492 = vunpack.c.l.b16 %v1160
    %v1493 = vunpack.c.h.b16 %v1160
    %v1494 = vunpack.c.l.b16 %v1161
    %v1495 = vunpack.c.l.b16 %v1162
    %v1496 = vunpack.c.h.b16 %v1162
    %v1497 = vunpack.c.l.b16 %v1163
    %v1498 = vunpack.c.l.b16 %v1164
    %v1499 = vunpack.c.h.b16 %v1164
    %v1500 = vunpack.c.l.b16 %v1165
    %v1501 = vunpack.c.l.b16 %v1166
    %v1502 = vunpack.c.h.b16 %v1166
    %v1503 = vunpack.c.l.b16 %v1167
    %v1504 = vunpack.c.l.b16 %v1168
    %v1505 = vunpack.c.h.b16 %v1168
    %v1506 = vunpack.c.l.b16 %v1169
    %v1507 = vunpack.c.l.b16 %v1170
    %v1508 = vunpack.c.h.b16 %v1170
    %v1509 = vunpack.c.l.b16 %v1171
    %v1510 = vunpack.c.l.b16 %v1172
    %v1511 = vunpack.c.h.b16 %v1172
    %v1512 = vunpack.c.l.b16 %v1173
    %v1513 = vunpack.c.l.b16 %v1174
    %v1514 = vunpack.c.h.b16 %v1174
    %v1515 = vunpack.c.l.b16 %v1175
    %v1516 = vunpack.c.l.b16 %v1176
    %v1517 = vunpack.c.h.b16 %v1176
    %v1518 = vunpack.c.l.b16 %v1177
    %v1519 = vunpack.c.l.b16 %v1178
    %v1520 = vunpack.c.h.b16 %v1178
    %v1521 = vunpack.c.l.b16 %v1179
    %v1522 = vunpack.c.l.b16 %v1180
    %v1523 = vunpack.c.h.b16 %v1180
    %v1524 = vunpack.c.l.b16 %v1181
    %v1525 = vunpack.c.l.b16 %v1182
    %v1526 = vunpack.c.h.b16 %v1182
    %v1527 = vunpack.c.l.b16 %v1183
    %v1528 = vunpack.c.l.b16 %v1184
    %v1529 = vunpack.c.h.b16 %v1184
    %v1530 = vunpack.c.l.b16 %v1185
    %v1531 = vunpack.c.l.b16 %v1186
    %v1532 = vunpack.c.h.b16 %v1186
    %v1533 = vunpack.c.l.b16 %v1187
    %v1534 = vunpack.c.l.b16 %v1188
    %v1535 = vunpack.c.h.b16 %v1188
    %v1536 = vunpack.c.l.b16 %v1189
    %v1537 = vunpack.c.l.b16 %v1190
    %v1538 = vunpack.c.h.b16 %v1190
    %v1539 = vunpack.c.l.b16 %v1191
    %v1540 = vunpack.c.l.b16 %v1192
    %v1541 = vunpack.c.h.b16 %v1192
    %v1542 = vunpack.c.l.b16 %v1193
    %v1543 = vunpack.c.l.b16 %v1194
    %v1544 = vunpack.c.h.b16 %v1194
    %v1545 = vunpack.c.l.b16 %v1195
    %v1546 = vunpack.c.l.b16 %v1196
    %v1547 = vunpack.c.h.b16 %v1196
    %v1548 = vunpack.c.l.b16 %v1197
    %v1549 = vunpack.c.l.b16 %v1198
    %v1550 = vunpack.c.h.b16 %v1198
    %v1551 = vunpack.c.l.b16 %v1199
    %v1552 = vunpack.c.l.b16 %v1200
    %v1553 = vunpack.c.h.b16 %v1200
    %v1554 = vunpack.c.l.b16 %v1201
    %v1555 = vunpack.c.l.b16 %v1202
    %v1556 = vunpack.c.h.b16 %v1202
    %v1557 = vunpack.c.l.b16 %v1203
    %v1558 = vunpack.c.l.b16 %v1204
    %v1559 = vunpack.c.h.b16 %v1204
    %v1560 = vunpack.c.l.b16 %v1205
    %v1561 = vunpack.c.l.b16 %v1206
    %v1562 = vunpack.c.h.b16 %v1206
    %v1563 = vunpack.c.l.b16 %v1207
    %v1564 = vunpack.c.l.b16 %v1208
    %v1565 = vunpack.c.h.b16 %v1208
    %v1566 = vunpack.c.l.b16 %v1209
    %v1567 = vunpack.c.l.b16 %v1210
    %v1568 = vunpack.c.h.b16 %v1210
    %v1569 = vunpack.c.l.b16 %v1211
    %v1570 = vunpack.c.l.b16 %v1212
    %v1571 = vunpack.c.h.b16 %v1212
    %v1572 = vunpack.c.l.b16 %v1213
    %v1573 = vunpack.c.l.b16 %v1214
    %v1574 = vunpack.c.h.b16 %v1214
    %v1575 = vunpack.c.l.b16 %v1215
    %v1576 = vunpack.c.l.b16 %v1216
    %v1577 = vunpack.c.h.b16 %v1216
    %v1578 = vunpack.c.l.b16 %v1217
    %v1579 = vunpack.c.l.b16 %v1218
    %v1580 = vunpack.c.h.b16 %v1218
    %v1581 = vunpack.c.l.b16 %v1219
    %v1582 = vunpack.c.l.b16 %v1220
    %v1583 = vunpack.c.h.b16 %v1220
    %v1584 = vunpack.c.l.b16 %v1221
    %v1585 = vunpack.c.l.b16 %v1222
    %v1586 = vunpack.c.h.b16 %v1222
    %v1587 = vunpack.c.l.b16 %v1223
    %v1588 = vunpack.c.l.b16 %v1224
    %v1589 = vunpack.c.h.b16 %v1224
    %v1590 = vunpack.c.l.b16 %v1225
    %v1591 = vunpack.c.l.b16 %v1226
    %v1592 = vunpack.c.h.b16 %v1226
    %v1593 = vunpack.c.l.b16 %v1227
    %v1594 = vunpack.c.l.b16 %v1228
    %v1595 = vunpack.c.h.b16 %v1228
    %v1596 = vunpack.c.l.b16 %v1229
    %v1597 = vunpack.c.l.b16 %v1230
    %v1598 = vunpack.c.h.b16 %v1230
    %v1599 = vunpack.c.l.b16 %v1231
    %v1600 = vunpack.c.l.b16 %v1232
    %v1601 = vunpack.c.h.b16 %v1232
    %v1602 = vunpack.c.l.b16 %v1233
    %v1603 = vunpack.c.l.b16 %v1234
    %v1604 = vunpack.c.h.b16 %v1234
    %v1605 = vunpack.c.l.b16 %v1235
    %v1606 = vunpack.c.l.b16 %v1236
    %v1607 = vunpack.c.h.b16 %v1236
    %v1608 = vunpack.c.l.b16 %v1237
    %v1609 = vunpack.c.l.b16 %v1238
    %v1610 = vunpack.c.h.b16 %v1238
    %v1611 = vunpack.c.l.b16 %v1239
    %v1612 = vunpack.c.l.b16 %v1240
    %v1613 = vunpack.c.h.b16 %v1240
    %v1614 = vunpack.c.l.b16 %v1241
    %v1615 = vunpack.c.l.b16 %v1242
    %v1616 = vunpack.c.h.b16 %v1242
    %v1617 = vunpack.c.l.b16 %v1243
    %v1618 = vunpack.c.l.b16 %v1244
    %v1619 = vunpack.c.h.b16 %v1244
    %v1620 = vunpack.c.l.b16 %v1245
    %v1621 = vunpack.c.l.b16 %v1246
    %v1622 = vunpack.c.h.b16 %v1246
    %v1623 = vunpack.c.l.b16 %v1247
    %v1624 = vunpack.c.l.b16 %v1248
    %v1625 = vunpack.c.h.b16 %v1248
    %v1626 = vunpack.c.l.b16 %v1249
    %v1627 = vunpack.c.l.b16 %v1250
    %v1628 = vunpack.c.h.b16 %v1250
    %v1629 = vunpack.c.l.b16 %v1251
    %v1630 = vunpack.c.l.b16 %v1252
    %v1631 = vunpack.c.h.b16 %v1252
    %v1632 = vunpack.c.l.b16 %v1253
    %v1633 = vunpack.c.l.b16 %v1254
    %v1634 = vunpack.c.h.b16 %v1254
    %v1635 = vunpack.c.l.b16 %v1255
    %v1636 = vunpack.c.l.b16 %v1256
    %v1637 = vunpack.c.h.b16 %v1256
    %v1638 = vunpack.c.l.b16 %v1257
    %v1639 = vunpack.c.l.b16 %v1258
    %v1640 = vunpack.c.h.b16 %v1258
    %v1641 = vunpack.c.l.b16 %v1259
    %v1642 = vunpack.c.l.b16 %v1260
    %v1643 = vunpack.c.h.b16 %v1260
    %v1644 = vunpack.c.l.b16 %v1261
    %v1645 = vunpack.c.l.b16 %v1262
    %v1646 = vunpack.c.h.b16 %v1262
    %v1647 = vunpack.c.l.b16 %v1263
    %v1648 = vunpack.c.l.b16 %v1264
    %v1649 = vunpack.c.h.b16 %v1264
    %v1650 = vunpack.c.l.b16 %v1265
    %v1651 = vunpack.c.l.b16 %v1266
    %v1652 = vunpack.c.h.b16 %v1266
    %v1653 = vunpack.c.l.b16 %v1267
    %v1654 = vunpack.c.l.b16 %v1268
    %v1655 = vunpack.c.h.b16 %v1268
    %v1656 = vunpack.c.l.b16 %v1269
    %v1657 = vunpack.c.l.b16 %v1270
    %v1658 = vunpack.c.h.b16 %v1270
    %v1659 = vunpack.c.l.b16 %v1271
    %v1660 = vunpack.c.l.b16 %v1272
    %v1661 = vunpack.c.h.b16 %v1272
    %v1662 = vunpack.c.l.b16 %v1273
    %v1663 = vunpack.c.l.b16 %v1274
    %v1664 = vunpack.c.h.b16 %v1274
    %v1665 = vunpack.c.l.b16 %v1275
    %v1666 = vunpack.c.l.b16 %v1276
    %v1667 = vunpack.c.h.b16 %v1276
    %v1668 = vunpack.c.l.b16 %v1277
    %v1669 = vunpack.c.l.b16 %v1278
    %v1670 = vunpack.c.h.b16 %v1278
    %v1671 = vunpack.c.l.b16 %v1279
    %v1672 = vunpack.c.l.b16 %v1280
    %v1673 = vunpack.c.h.b16 %v1280
    %v1674 = vunpack.c.l.b16 %v1281
    %v1675 = vunpack.c.l.b16 %v1282
    %v1676 = vunpack.c.h.b16 %v1282
    %v1677 = vunpack.c.l.b16 %v1283
    %v1678 = vunpack.c.l.b16 %v1284
    %v1679 = vunpack.c.h.b16 %v1284
    %v1680 = vunpack.c.l.b16 %v1285
    %v1681 = vunpack.c.l.b16 %v1286
    %v1682 = vunpack.c.h.b16 %v1286
    %v1683 = vunpack.c.l.b16 %v1287
    %v1684 = vunpack.c.l.b16 %v1288
    %v1685 = vunpack.c.h.b16 %v1288
    %v1686 = vunpack.c.l.b16 %v1289
    %v1687 = vunpack.c.l.b16 %v1290
    %v1688 = vunpack.c.h.b16 %v1290
    %v1689 = vunpack.c.l.b16 %v1291
    %v1690 = vunpack.c.l.b16 %v1292
    %v1691 = vunpack.c.h.b16 %v1292
    %v1692 = vunpack.c.l.b16 %v1293
    %v1693 = vunpack.c.l.b16 %v1294
    %v1694 = vunpack.c.h.b16 %v1294
    %v1695 = vunpack.c.l.b16 %v1295
    %v1696 = vunpack.c.l.b16 %v1296
    %v1697 = vunpack.c.h.b16 %v1296
    %v1698 = vunpack.c.l.b16 %v1297
    %v1699 = vunpack.c.l.b16 %v1298
    %v1700 = vunpack.c.h.b16 %v1298
    %v1701 = vunpack.c.l.b16 %v1299
    %v1702 = vunpack.c.l.b16 %v1300
    %v1703 = vunpack.c.h.b16 %v1300
    %v1704 = vunpack.c.l.b16 %v1301
    %v1705 = vunpack.c.l.b16 %v1302
    %v1706 = vunpack.c.h.b16 %v1302
    %v1707 = vunpack.c.l.b16 %v1303
    %v1708 = vunpack.c.l.b16 %v1304
    %v1709 = vunpack.c.h.b16 %v1304
    %v1710 = vunpack.c.l.b16 %v1305
    %v1711 = vunpack.c.l.b16 %v1306
    %v1712 = vunpack.c.h.b16 %v1306
    %v1713 = vunpack.c.l.b16 %v1307
    %v1714 = vunpack.c.l.b16 %v1308
    %v1715 = vunpack.c.h.b16 %v1308
    %v1716 = vunpack.c.l.b16 %v1309
    %v1717 = vunpack.c.l.b16 %v1310
    %v1718 = vunpack.c.h.b16 %v1310
    %v1719 = vunpack.c.l.b16 %v1311
    %v1720 = vpack.c.b16 %v1483, %v1480
    %v1721 = vpack.c.b16 %v1484, %v1481
    %v1722 = vpack.c.b16 %v1485, %v1482
    %v1723 = vpack.c.b16 %v1489, %v1486
    %v1724 = vpack.c.b16 %v1490, %v1487
    %v1725 = vpack.c.b16 %v1491, %v1488
    %v1726 = vpack.c.b16 %v1495, %v1492
    %v1727 = vpack.c.b16 %v1496, %v1493
    %v1728 = vpack.c.b16 %v1497, %v1494
    %v1729 = vpack.c.b16 %v1501, %v1498
    %v1730 = vpack.c.b16 %v1502, %v1499
    %v1731 = vpack.c.b16 %v1503, %v1500
    %v1732 = vpack.c.b16 %v1507, %v1504
    %v1733 = vpack.c.b16 %v1508, %v1505
    %v1734 = vpack.c.b16 %v1509, %v1506
    %v1735 = vpack.c.b16 %v1513, %v1510
    %v1736 = vpack.c.b16 %v1514, %v1511
    %v1737 = vpack.c.b16 %v1515, %v1512
    %v1738 = vpack.c.b16 %v1519, %v1516
    %v1739 = vpack.c.b16 %v1520, %v1517
    %v1740 = vpack.c.b16 %v1521, %v1518
    %v1741 = vpack.c.b16 %v1525, %v1522
    %v1742 = vpack.c.b16 %v1526, %v1523
    %v1743 = vpack.c.b16 %v1527, %v1524
    %v1744 = vpack.c.b16 %v1531, %v1528
    %v1745 = vpack.c.b16 %v1532, %v1529
    %v1746 = vpack.c.b16 %v1533, %v1530
    %v1747 = vpack.c.b16 %v1537, %v1534
    %v1748 = vpack.c.b16 %v1538, %v1535
    %v1749 = vpack.c.b16 %v1539, %v1536
    %v1750 = vpack.c.b16 %v1543, %v1540
    %v1751 = vpack.c.b16 %v1544, %v1541
    %v1752 = vpack.c.b16 %v1545, %v1542
    %v1753 = vpack.c.b16 %v1549, %v1546
    %v1754 = vpack.c.b16 %v1550, %v1547
    %v1755 = vpack.c.b16 %v1551, %v1548
    %v1756 = vpack.c.b16 %v1555, %v1552
    %v1757 = vpack.c.b16 %v1556, %v1553
    %v1758 = vpack.c.b16 %v1557, %v1554
    %v1759 = vpack.c.b16 %v1561, %v1558
    %v1760 = vpack.c.b16 %v1562, %v1559
    %v1761 = vpack.c.b16 %v1563, %v1560
    %v1762 = vpack.c.b16 %v1567, %v1564
    %v1763 = vpack.c.b16 %v1568, %v1565
    %v1764 = vpack.c.b16 %v1569, %v1566
    %v1765 = vpack.c.b16 %v1573, %v1570
    %v1766 = vpack.c.b16 %v1574, %v1571
    %v1767 = vpack.c.b16 %v1575, %v1572
    %v1768 = vpack.c.b16 %v1579, %v1576
    %v1769 = vpack.c.b16 %v1580, %v1577
    %v1770 = vpack.c.b16 %v1581, %v1578
    %v1771 = vpack.c.b16 %v1585, %v1582
    %v1772 = vpack.c.b16 %v1586, %v1583
    %v1773 = vpack.c.b16 %v1587, %v1584
    %v1774 = vpack.c.b16 %v1591, %v1588
    %v1775 = vpack.c.b16 %v1592, %v1589
    %v1776 = vpack.c.b16 %v1593, %v1590
    %v1777 = vpack.c.b16 %v1597, %v1594
    %v1778 = vpack.c.b16 %v1598, %v1595
    %v1779 = vpack.c.b16 %v1599, %v1596
    %v1780 = vpack.c.b16 %v1603, %v1600
    %v1781 = vpack.c.b16 %v1604, %v1601
    %v1782 = vpack.c.b16 %v1605, %v1602
    %v1783 = vpack.c.b16 %v1609, %v1606
    %v1784 = vpack.c.b16 %v1610, %v1607
    %v1785 = vpack.c.b16 %v1611, %v1608
    %v1786 = vpack.c.b16 %v1615, %v1612
    %v1787 = vpack.c.b16 %v1616, %v1613
    %v1788 = vpack.c.b16 %v1617, %v1614
    %v1789 = vpack.c.b16 %v1621, %v1618
    %v1790 = vpack.c.b16 %v1622, %v1619
    %v1791 = vpack.c.b16 %v1623, %v1620
    %v1792 = vpack.c.b16 %v1627, %v1624
    %v1793 = vpack.c.b16 %v1628, %v1625
    %v1794 = vpack.c.b16 %v1629, %v1626
    %v1795 = vpack.c.b16 %v1633, %v1630
    %v1796 = vpack.c.b16 %v1634, %v1631
    %v1797 = vpack.c.b16 %v1635, %v1632
    %v1798 = vpack.c.b16 %v1639, %v1636
    %v1799 = vpack.c.b16 %v1640, %v1637
    %v1800 = vpack.c.b16 %v1641, %v1638
    %v1801 = vpack.c.b16 %v1645, %v1642
    %v1802 = vpack.c.b16 %v1646, %v1643
    %v1803 = vpack.c.b16 %v1647, %v1644
    %v1804 = vpack.c.b16 %v1651, %v1648
    %v1805 = vpack.c.b16 %v1652, %v1649
    %v1806 = vpack.c.b16 %v1653, %v1650
    %v1807 = vpack.c.b16 %v1657, %v1654
    %v1808 = vpack.c.b16 %v1658, %v1655
    %v1809 = vpack.c.b16 %v1659, %v1656
    %v1810 = vpack.c.b16 %v1663, %v1660
    %v1811 = vpack.c.b16 %v1664, %v1661
    %v1812 = vpack.c.b16 %v1665, %v1662
    %v1813 = vpack.c.b16 %v1669, %v1666
    %v1814 = vpack.c.b16 %v1670, %v1667
    %v1815 = vpack.c.b16 %v1671, %v1668
    %v1816 = vpack.c.b16 %v1675, %v1672
    %v1817 = vpack.c.b16 %v1676, %v1673
    %v1818 = vpack.c.b16 %v1677, %v1674
    %v1819 = vpack.c.b16 %v1681, %v1678
    %v1820 = vpack.c.b16 %v1682, %v1679
    %v1821 = vpack.c.b16 %v1683, %v1680
    %v1822 = vpack.c.b16 %v1687, %v1684
    %v1823 = vpack.c.b16 %v1688, %v1685
    %v1824 = vpack.c.b16 %v1689, %v1686
    %v1825 = vpack.c.b16 %v1693, %v1690
    %v1826 = vpack.c.b16 %v1694, %v1691
    %v1827 = vpack.c.b16 %v1695, %v1692
    %v1828 = vpack.c.b16 %v1699, %v1696
    %v1829 = vpack.c.b16 %v1700, %v1697
    %v1830 = vpack.c.b16 %v1701, %v1698
    %v1831 = vpack.c.b16 %v1705, %v1702
    %v1832 = vpack.c.b16 %v1706, %v1703
    %v1833 = vpack.c.b16 %v1707, %v1704
    %v1834 = vpack.c.b16 %v1711, %v1708
    %v1835 = vpack.c.b16 %v1712, %v1709
    %v1836 = vpack.c.b16 %v1713, %v1710
    %v1837 = vpack.c.b16 %v1717, %v1714
    %v1838 = vpack.c.b16 %v1718, %v1715
    %v1839 = vpack.c.b16 %v1719, %v1716
    %1960 = vmatpush.bf16.msra.mxu0 %v1741
    %1961 = vmatpush.bf16.msra.mxu0 %v1738
    %1962 = vmatpush.bf16.msra.mxu0 %v1735
    %1963 = vmatpush.bf16.msra.mxu0 %v1732
    %1964 = vmatpush.bf16.msra.mxu0 %v1729
    %1965 = vmatpush.bf16.msra.mxu0 %v1726
    %1966 = vmatpush.bf16.msra.mxu0 %v1723
    %1967 = vmatpush.bf16.msra.mxu0 %v1720
    %1968 = vmatmul.bf16.gmra.mxu0 %v1147
    %v1969 = vpop.f32.mrf.mxu0
    %v1970 = vadd.f32 %v1314, %v1969
    %v1971 = vpop.f32.mrf.mxu0
    %v1972 = vadd.f32 %v1314, %v1971
    %1973 = vdwg.mxu0
    %1974 = vmatpush.bf16.msra.mxu0 %v1765
    %1975 = vmatpush.bf16.msra.mxu0 %v1762
    %1976 = vmatpush.bf16.msra.mxu0 %v1759
    %1977 = vmatpush.bf16.msra.mxu0 %v1756
    %1978 = vmatpush.bf16.msra.mxu0 %v1753
    %1979 = vmatpush.bf16.msra.mxu0 %v1750
    %1980 = vmatpush.bf16.msra.mxu0 %v1747
    %1981 = vmatpush.bf16.msra.mxu0 %v1744
    %1982 = vmatmul.bf16.gmra.mxu0 %v1148
    %v1983 = vpop.f32.mrf.mxu0
    %v1984 = vadd.f32 %v1970, %v1983
    %v1985 = vpop.f32.mrf.mxu0
    %v1986 = vadd.f32 %v1972, %v1985
    %1987 = vdwg.mxu0
    %1988 = vmatpush.bf16.msra.mxu0 %v1789
    %1989 = vmatpush.bf16.msra.mxu0 %v1786
    %1990 = vmatpush.bf16.msra.mxu0 %v1783
    %1991 = vmatpush.bf16.msra.mxu0 %v1780
    %1992 = vmatpush.bf16.msra.mxu0 %v1777
    %1993 = vmatpush.bf16.msra.mxu0 %v1774
    %1994 = vmatpush.bf16.msra.mxu0 %v1771
    %1995 = vmatpush.bf16.msra.mxu0 %v1768
    %1996 = vmatmul.bf16.gmra.mxu0 %v1149
    %v1997 = vpop.f32.mrf.mxu0
    %v1998 = vadd.f32 %v1984, %v1997
    %v1999 = vpop.f32.mrf.mxu0
    %v2000 = vadd.f32 %v1986, %v1999
    %2001 = vdwg.mxu0
    %2002 = vmatpush.bf16.msra.mxu0 %v1813
    %2003 = vmatpush.bf16.msra.mxu0 %v1810
    %2004 = vmatpush.bf16.msra.mxu0 %v1807
    %2005 = vmatpush.bf16.msra.mxu0 %v1804
    %2006 = vmatpush.bf16.msra.mxu0 %v1801
    %2007 = vmatpush.bf16.msra.mxu0 %v1798
    %2008 = vmatpush.bf16.msra.mxu0 %v1795
    %2009 = vmatpush.bf16.msra.mxu0 %v1792
    %2010 = vmatmul.bf16.gmra.mxu0 %v1150
    %v2011 = vpop.f32.mrf.mxu0
    %v2012 = vadd.f32 %v1998, %v2011
    %v2013 = vpop.f32.mrf.mxu0
    %v2014 = vadd.f32 %v2000, %v2013
    %2015 = vdwg.mxu0
    %2016 = vmatpush.bf16.msra.mxu0 %v1837
    %2017 = vmatpush.bf16.msra.mxu0 %v1834
    %2018 = vmatpush.bf16.msra.mxu0 %v1831
    %2019 = vmatpush.bf16.msra.mxu0 %v1828
    %2020 = vmatpush.bf16.msra.mxu0 %v1825
    %2021 = vmatpush.bf16.msra.mxu0 %v1822
    %2022 = vmatpush.bf16.msra.mxu0 %v1819
    %2023 = vmatpush.bf16.msra.mxu0 %v1816
    %2024 = vmatmul.bf16.gmra.mxu0 %v1151
    %v2025 = vpop.f32.mrf.mxu0
    %v2026 = vadd.f32 %v2012, %v2025
    %v2027 = vpop.f32.mrf.mxu0
    %v2028 = vadd.f32 %v2014, %v2027
    %2029 = vdwg.mxu0
    %2030 = vmatpush.bf16.msra.mxu0 %v1742
    %2031 = vmatpush.bf16.msra.mxu0 %v1739
    %2032 = vmatpush.bf16.msra.mxu0 %v1736
    %2033 = vmatpush.bf16.msra.mxu0 %v1733
    %2034 = vmatpush.bf16.msra.mxu0 %v1730
    %2035 = vmatpush.bf16.msra.mxu0 %v1727
    %2036 = vmatpush.bf16.msra.mxu0 %v1724
    %2037 = vmatpush.bf16.msra.mxu0 %v1721
    %2038 = vmatmul.bf16.gmra.mxu0 %v1147
    %v2039 = vpop.f32.mrf.mxu0
    %v2040 = vadd.f32 %v1315, %v2039
    %v2041 = vpop.f32.mrf.mxu0
    %v2042 = vadd.f32 %v1315, %v2041
    %2043 = vdwg.mxu0
    %2044 = vmatpush.bf16.msra.mxu0 %v1766
    %2045 = vmatpush.bf16.msra.mxu0 %v1763
    %2046 = vmatpush.bf16.msra.mxu0 %v1760
    %2047 = vmatpush.bf16.msra.mxu0 %v1757
    %2048 = vmatpush.bf16.msra.mxu0 %v1754
    %2049 = vmatpush.bf16.msra.mxu0 %v1751
    %2050 = vmatpush.bf16.msra.mxu0 %v1748
    %2051 = vmatpush.bf16.msra.mxu0 %v1745
    %2052 = vmatmul.bf16.gmra.mxu0 %v1148
    %v2053 = vpop.f32.mrf.mxu0
    %v2054 = vadd.f32 %v2040, %v2053
    %v2055 = vpop.f32.mrf.mxu0
    %v2056 = vadd.f32 %v2042, %v2055
    %2057 = vdwg.mxu0
    %2058 = vmatpush.bf16.msra.mxu0 %v1790
    %2059 = vmatpush.bf16.msra.mxu0 %v1787
    %2060 = vmatpush.bf16.msra.mxu0 %v1784
    %2061 = vmatpush.bf16.msra.mxu0 %v1781
    %2062 = vmatpush.bf16.msra.mxu0 %v1778
    %2063 = vmatpush.bf16.msra.mxu0 %v1775
    %2064 = vmatpush.bf16.msra.mxu0 %v1772
    %2065 = vmatpush.bf16.msra.mxu0 %v1769
    %2066 = vmatmul.bf16.gmra.mxu0 %v1149
    %v2067 = vpop.f32.mrf.mxu0
    %v2068 = vadd.f32 %v2054, %v2067
    %v2069 = vpop.f32.mrf.mxu0
    %v2070 = vadd.f32 %v2056, %v2069
    %2071 = vdwg.mxu0
    %2072 = vmatpush.bf16.msra.mxu0 %v1814
    %2073 = vmatpush.bf16.msra.mxu0 %v1811
    %2074 = vmatpush.bf16.msra.mxu0 %v1808
    %2075 = vmatpush.bf16.msra.mxu0 %v1805
    %2076 = vmatpush.bf16.msra.mxu0 %v1802
    %2077 = vmatpush.bf16.msra.mxu0 %v1799
    %2078 = vmatpush.bf16.msra.mxu0 %v1796
    %2079 = vmatpush.bf16.msra.mxu0 %v1793
    %2080 = vmatmul.bf16.gmra.mxu0 %v1150
    %v2081 = vpop.f32.mrf.mxu0
    %v2082 = vadd.f32 %v2068, %v2081
    %v2083 = vpop.f32.mrf.mxu0
    %v2084 = vadd.f32 %v2070, %v2083
    %2085 = vdwg.mxu0
    %2086 = vmatpush.bf16.msra.mxu0 %v1838
    %2087 = vmatpush.bf16.msra.mxu0 %v1835
    %2088 = vmatpush.bf16.msra.mxu0 %v1832
    %2089 = vmatpush.bf16.msra.mxu0 %v1829
    %2090 = vmatpush.bf16.msra.mxu0 %v1826
    %2091 = vmatpush.bf16.msra.mxu0 %v1823
    %2092 = vmatpush.bf16.msra.mxu0 %v1820
    %2093 = vmatpush.bf16.msra.mxu0 %v1817
    %2094 = vmatmul.bf16.gmra.mxu0 %v1151
    %v2095 = vpop.f32.mrf.mxu0
    %v2096 = vadd.f32 %v2082, %v2095
    %v2097 = vpop.f32.mrf.mxu0
    %v2098 = vadd.f32 %v2084, %v2097
    %2099 = vdwg.mxu0
    %2100 = vmatpush.bf16.msra.mxu0 %v1743
    %2101 = vmatpush.bf16.msra.mxu0 %v1740
    %2102 = vmatpush.bf16.msra.mxu0 %v1737
    %2103 = vmatpush.bf16.msra.mxu0 %v1734
    %2104 = vmatpush.bf16.msra.mxu0 %v1731
    %2105 = vmatpush.bf16.msra.mxu0 %v1728
    %2106 = vmatpush.bf16.msra.mxu0 %v1725
    %2107 = vmatpush.bf16.msra.mxu0 %v1722
    %2108 = vmatmul.bf16.gmra.mxu0 %v1147
    %v2109 = vpop.f32.mrf.mxu0
    %v2110 = vadd.f32 %v1316, %v2109
    %v2111 = vpop.f32.mrf.mxu0
    %v2112 = vadd.f32 %v1316, %v2111
    %2113 = vdwg.mxu0
    %2114 = vmatpush.bf16.msra.mxu0 %v1767
    %2115 = vmatpush.bf16.msra.mxu0 %v1764
    %2116 = vmatpush.bf16.msra.mxu0 %v1761
    %2117 = vmatpush.bf16.msra.mxu0 %v1758
    %2118 = vmatpush.bf16.msra.mxu0 %v1755
    %2119 = vmatpush.bf16.msra.mxu0 %v1752
    %2120 = vmatpush.bf16.msra.mxu0 %v1749
    %2121 = vmatpush.bf16.msra.mxu0 %v1746
    %2122 = vmatmul.bf16.gmra.mxu0 %v1148
    %v2123 = vpop.f32.mrf.mxu0
    %v2124 = vadd.f32 %v2110, %v2123
    %v2125 = vpop.f32.mrf.mxu0
    %v2126 = vadd.f32 %v2112, %v2125
    %2127 = vdwg.mxu0
    %2128 = vmatpush.bf16.msra.mxu0 %v1791
    %2129 = vmatpush.bf16.msra.mxu0 %v1788
    %2130 = vmatpush.bf16.msra.mxu0 %v1785
    %2131 = vmatpush.bf16.msra.mxu0 %v1782
    %2132 = vmatpush.bf16.msra.mxu0 %v1779
    %2133 = vmatpush.bf16.msra.mxu0 %v1776
    %2134 = vmatpush.bf16.msra.mxu0 %v1773
    %2135 = vmatpush.bf16.msra.mxu0 %v1770
    %2136 = vmatmul.bf16.gmra.mxu0 %v1149
    %v2137 = vpop.f32.mrf.mxu0
    %v2138 = vadd.f32 %v2124, %v2137
    %v2139 = vpop.f32.mrf.mxu0
    %v2140 = vadd.f32 %v2126, %v2139
    %2141 = vdwg.mxu0
    %2142 = vmatpush.bf16.msra.mxu0 %v1815
    %2143 = vmatpush.bf16.msra.mxu0 %v1812
    %2144 = vmatpush.bf16.msra.mxu0 %v1809
    %2145 = vmatpush.bf16.msra.mxu0 %v1806
    %2146 = vmatpush.bf16.msra.mxu0 %v1803
    %2147 = vmatpush.bf16.msra.mxu0 %v1800
    %2148 = vmatpush.bf16.msra.mxu0 %v1797
    %2149 = vmatpush.bf16.msra.mxu0 %v1794
    %2150 = vmatmul.bf16.gmra.mxu0 %v1150
    %v2151 = vpop.f32.mrf.mxu0
    %v2152 = vadd.f32 %v2138, %v2151
    %v2153 = vpop.f32.mrf.mxu0
    %v2154 = vadd.f32 %v2140, %v2153
    %2155 = vdwg.mxu0
    %2156 = vmatpush.bf16.msra.mxu0 %v1839
    %2157 = vmatpush.bf16.msra.mxu0 %v1836
    %2158 = vmatpush.bf16.msra.mxu0 %v1833
    %2159 = vmatpush.bf16.msra.mxu0 %v1830
    %2160 = vmatpush.bf16.msra.mxu0 %v1827
    %2161 = vmatpush.bf16.msra.mxu0 %v1824
    %2162 = vmatpush.bf16.msra.mxu0 %v1821
    %2163 = vmatpush.bf16.msra.mxu0 %v1818
    %2164 = vmatmul.bf16.gmra.mxu0 %v1151
    %v2165 = vpop.f32.mrf.mxu0
    %v2166 = vadd.f32 %v2152, %v2165
    %v2167 = vpop.f32.mrf.mxu0
    %v2168 = vadd.f32 %v2154, %v2167
    %2169 = vdwg.mxu0
    %v2170 = vadd.f32 %v2026, %v58
    %v2171 = vadd.f32 %v2096, %v59
    %v2172 = vadd.f32 %v2166, %v60
    %v2173 = vadd.f32 %v2028, %v61
    %v2174 = vadd.f32 %v2098, %v62
    %v2175 = vadd.f32 %v2168, %v63
    %v2176 = vld [vmem:[%s5] sm:$0x7]
    %v2177 = vld [vmem:[%s6] sm:$0x7]
    %v2178 = vadd.f32 %v2170, %v2171
    %v2179 = vadd.f32 %v2178, %v2172
    %2180 = vadd.xlane.f32.xlu0 %v2179
    %v2181 = vpop.xlane.xlu0 %2180
    %v2182 = vadd.f32 %v2173, %v2174
    %v2183 = vadd.f32 %v2182, %v2175
    %2184 = vadd.xlane.f32.xlu0 %v2183
    %v2185 = vpop.xlane.xlu0 %2184
    %v2186 = vmul.f32 %v2181, 0.0032051282
    %v2187 = vmul.f32 %v2185, 0.0032051282
    %v2188 = vlaneseq
    %v2189 = vand.u32 %v2188, 127
    %v2190 = vadd.s32 %v2189, 128
    %v2191 = vadd.s32 %v2189, 256
    %vm2192 = vcmp.lt.s32.totalorder %v2189, 312
    %vm2193 = vcmp.lt.s32.totalorder %v2190, 312
    %vm2194 = vcmp.lt.s32.totalorder %v2191, 312
    %v2195 = vsel %vm2192, 1, 0
    %v2196 = vsel %vm2193, 1, 0
    %v2197 = vsel %vm2194, 1, 0
    %v2198 = vcvt.s32.f32 %v2195
    %v2199 = vcvt.s32.f32 %v2196
    %v2200 = vcvt.s32.f32 %v2197
    %v2201 = vsub.f32 %v2170, %v2186
    %v2202 = vsub.f32 %v2171, %v2186
    %v2203 = vsub.f32 %v2172, %v2186
    %v2204 = vsub.f32 %v2173, %v2187
    %v2205 = vsub.f32 %v2174, %v2187
    %v2206 = vsub.f32 %v2175, %v2187
    %v2207 = vmul.f32 %v2201, %v2198
    %v2208 = vmul.f32 %v2202, %v2199
    %v2209 = vmul.f32 %v2203, %v2200
    %v2210 = vmul.f32 %v2204, %v2198
    %v2211 = vmul.f32 %v2205, %v2199
    %v2212 = vmul.f32 %v2206, %v2200
    %v2213 = vmul.f32 %v2207, %v2207
    %v2214 = vmul.f32 %v2208, %v2208
    %v2215 = vmul.f32 %v2209, %v2209
    %v2216 = vmul.f32 %v2210, %v2210
    %v2217 = vmul.f32 %v2211, %v2211
    %v2218 = vmul.f32 %v2212, %v2212
    %v2219 = vadd.f32 %v2213, %v2214
    %v2220 = vadd.f32 %v2219, %v2215
    %2221 = vadd.xlane.f32.xlu0 %v2220
    %v2222 = vpop.xlane.xlu0 %2221
    %v2223 = vadd.f32 %v2216, %v2217
    %v2224 = vadd.f32 %v2223, %v2218
    %2225 = vadd.xlane.f32.xlu0 %v2224
    %v2226 = vpop.xlane.xlu0 %2225
    %v2227 = vmul.f32 %v2222, 0.0032051282
    %v2228 = vmul.f32 %v2226, 0.0032051282
    %v2229 = vadd.f32 %v2227, 1e-12
    %v2230 = vadd.f32 %v2228, 1e-12
    %v2231 = vrsqrt.pop %v2229
    %v2232 = vmul.f32 %v2231, %v2229
    %v2233 = vmul.f32 %v2232, %v2231
    %v2234 = vmul.f32 0.5, %v2233
    %v2235 = vsub.f32 1.5, %v2234
    %v2236 = vmul.f32 %v2231, %v2235
    %vm2237 = vweird.f32 %v2229
    %vm2238 = vweird.f32 %v2231
    %vm2239 = vmor %vm2237, %vm2238
    %v2240 = vsel %vm2239, %v2231, %v2236
    %v2241 = vrsqrt.pop %v2230
    %v2242 = vmul.f32 %v2241, %v2230
    %v2243 = vmul.f32 %v2242, %v2241
    %v2244 = vmul.f32 0.5, %v2243
    %v2245 = vsub.f32 1.5, %v2244
    %v2246 = vmul.f32 %v2241, %v2245
    %vm2247 = vweird.f32 %v2230
    %vm2248 = vweird.f32 %v2241
    %vm2249 = vmor %vm2247, %vm2248
    %v2250 = vsel %vm2249, %v2241, %v2246
    %v2251 = vmul.f32 %v2207, %v2240
    %v2252 = vmul.f32 %v2208, %v2240
    %v2253 = vmul.f32 %v2209, %v2240
    %v2254 = vmul.f32 %v2210, %v2250
    %v2255 = vmul.f32 %v2211, %v2250
    %v2256 = vmul.f32 %v2212, %v2250
    %v2258 = vperm.slane %v2176, 0
    %v2259 = vperm.slane %v2176, 1
    %v2260 = vperm.slane %v2176, 2
    %v2264 = vmul.f32 %v2251, %v2258
    %v2265 = vmul.f32 %v2252, %v2259
    %v2266 = vmul.f32 %v2253, %v2260
    %v2267 = vmul.f32 %v2254, %v2258
    %v2268 = vmul.f32 %v2255, %v2259
    %v2269 = vmul.f32 %v2256, %v2260
    %v2271 = vperm.slane %v2177, 0
    %v2272 = vperm.slane %v2177, 1
    %v2273 = vperm.slane %v2177, 2
    %v2277 = vadd.f32 %v2264, %v2271
    %v2278 = vadd.f32 %v2265, %v2272
    %v2279 = vadd.f32 %v2266, %v2273
    %v2280 = vadd.f32 %v2267, %v2271
    %v2281 = vadd.f32 %v2268, %v2272
    %v2282 = vadd.f32 %v2269, %v2273
    %2283 = vst [vmem:[%s7] sm:$0xff] %v2277
    %2284 = vst [vmem:[%s7 + $0x8] sm:$0xff] %v2278
    %2285 = vst [vmem:[%s7 + $0x10] sm:$0xff] %v2279
    %2286 = vst [vmem:[%s7 + $0x18] sm:$0xff] %v2280
    %2287 = vst [vmem:[%s7 + $0x20] sm:$0xff] %v2281
    %2288 = vst [vmem:[%s7 + $0x28] sm:$0xff] %v2282
    // Predicated region
    $region38: #{bert_classifier_forward.10} parent=1 // pred_check
      _
    $region39: #{bert_classifier_forward.10} parent=1 // pred_check_branch
      %2290 = sbr.rel (0) target = $region41
    $region40: #{bert_classifier_forward.10} parent=1 // pred_region
      _
    $region41: #{bert_classifier_forward.10} parent=1 // pred_fallthru
      _
    // Predicated region
    $region42: #{bert_classifier_forward.10} parent=1 // pred_check
      _
    $region43: #{bert_classifier_forward.10} parent=1 // pred_check_branch
      %2292 = sbr.rel (0) target = $region45
    $region44: #{bert_classifier_forward.10} parent=1 // pred_region
      _
    $region45: #{bert_classifier_forward.10} parent=1 // pred_fallthru
      _
    %2293 = vsyncpa [#allocation3], 1
    %2294 = vsyncpa [#allocation5], 1

// kernel: bert_classifier_forward.9
$region0: #{bert_classifier_forward.9}
  #allocation0 [shape = 'u32[]', space=smem, size = 0x4, offset = 0x4, fixed_abs, tag = 'smem constant byte address 0x4 - core index']
  #allocation1 [shape = 'u32[72,128]{1,0:T(1,128)}', space=vmem, size = 0x9000, scoped, tag = 'internal scratch']
  %s0 = inlined_call_operand.vmem [shape: f32[2,8,384], index: 0, kind: input, shape index: {}]
  %s1 = inlined_call_operand.hbm [shape: bf16[384,1152], index: 1, kind: input, shape index: {}]
  %s2 = inlined_call_operand.vmem [shape: f32[1,1152], index: 2, kind: input, shape index: {}]
  %s3 = inlined_call_operand.vmem [shape: f32[2,1,8], index: 3, kind: input, shape index: {}]
  %s4 = inlined_call_operand.hbm [shape: bf16[384,384], index: 4, kind: input, shape index: {}]
  %s5 = inlined_call_operand.vmem [shape: f32[1,384], index: 5, kind: input, shape index: {}]
  %s6 = inlined_call_operand.vmem [shape: f32[1,384], index: 6, kind: input, shape index: {}]
  %s7 = inlined_call_operand.vmem [shape: f32[1,384], index: 7, kind: input, shape index: {}]
  %s8 = inlined_call_operand.vmem [shape: f32[2,8,384], index: 8, kind: output, shape index: {}]
  %s9 = sld [smem:[#allocation0]]
  $region73: #{bert_classifier_forward.9} parent=0
    _
  %s11 = ssub.s32 1, %s9
  %s12 = scalar_select 0, %s11, %s9
  $region1: #{bert_classifier_forward.9} parent=0
    #allocation2 [shape = 'u8[884736]{0}', space=vmem, size = 0xd8000, scoped, tag = 'input window, operand 1, single buffered']
    #allocation3 [shape = 's32[2]{0}', space=sflag, size = 0x8, scoped, tag = 'scoped memory for bert_classifier_forward.9']
    #allocation4 [shape = 'u8[294912]{0}', space=vmem, size = 0x48000, scoped, tag = 'input window, operand 4, single buffered']
    #allocation5 [shape = 's32[1]{0}', space=sflag, size = 0x4, scoped, tag = 'scoped memory for bert_classifier_forward.9']
    %13 = vsyncpa [#allocation3], 0
    %14 = vsyncpa [#allocation5], 0
    loop: start=0, step=1, limit=4
    $region2: #{bert_classifier_forward.9} parent=1 // loop_pre_header
      _
    $region3: #{bert_classifier_forward.9} parent=1 // loop_header
      %s16 = sphi 0, %s20
      %p17 = scmp.ge.s32.totalorder %s16, 4
      %s26 = sphi 0, %s28
      %s29 = sphi 0, %s26
      %s30 = sphi 0, %s29
      %s46 = sphi 0, %s30
      %s50 = sphi 0, %s50
      %s52 = sphi 0, %s50
      %s53 = sphi 0, %s52
      %s67 = sphi 0, %s53
      %s71 = sphi 0, %s71
      %s73 = sphi 0, %s71
      %s74 = sphi 0, %s73
      %s88 = sphi 0, %s74
      %s94 = sphi 0, %s96
      %s97 = sphi 0, %s94
      %s98 = sphi 0, %s97
      %s114 = sphi 0, %s98
      %s118 = sphi 0, %s118
      %s120 = sphi 0, %s118
      %s121 = sphi 0, %s120
      %s135 = sphi 0, %s121
      %s139 = sphi 0, %s139
      %s141 = sphi 0, %s139
      %s142 = sphi 0, %s141
      %s156 = sphi 0, %s142
      %s160 = sphi 0, %s160
      %s162 = sphi 0, %s160
      %s163 = sphi 0, %s162
      %s177 = sphi 0, %s163
      %s181 = sphi 0, %s181
      %s183 = sphi 0, %s181
      %s184 = sphi 0, %s183
      %s198 = sphi 0, %s184
      %s204 = sphi 0, %s206
      %s207 = sphi 0, %s204
      %s208 = sphi 0, %s207
      %s224 = sphi 0, %s208
    $region4: #{bert_classifier_forward.9} parent=1 // loop_header_branch
      %19 = sbr.rel (%p17) target = $region8
    $region5: #{bert_classifier_forward.9} parent=1 // loop_body
      %s21 = ssub.s32 %s16, 1
      %s22 = ssub.s32 %s16, 2
      %s23 = sadd.s32 %s16, 1
      %s24 = ssub.s32 %s16, %s23
      %p25 = scmp.eq.s32.totalorder %s24, 0
      %s27 = sadd.s32 %s26, 1
      %s28 = scalar_select %p25, %s26, %s27
      %p31 = pneg %p25
      %p32 = scmp.eq.s32.totalorder %s16, 1
      %p33 = por %p31, %p32
      %p34 = scmp.ne.s32.totalorder %s26, %s29
      %p35 = scmp.eq.s32.totalorder %s16, 0
      %p36 = por %p34, %p35
      %p37 = scmp.ne.s32.totalorder %s26, %s29
      %p38 = scmp.eq.s32.totalorder %s21, 1
      %p39 = por %p37, %p38
      %p40 = scmp.ne.s32.totalorder %s29, %s30
      %p41 = scmp.eq.s32.totalorder %s21, 0
      %p42 = por %p40, %p41
      %p43 = scmp.ne.s32.totalorder %s29, %s30
      %p44 = scmp.eq.s32.totalorder %s22, 1
      %p45 = por %p43, %p44
      %p47 = scmp.ne.s32.totalorder %s30, %s46
      %p48 = scmp.eq.s32.totalorder %s22, 0
      %p49 = por %p47, %p48
      %s51 = sadd.s32 %s50, 1
      %p54 = scmp.eq.s32.totalorder %s16, 1
      %p55 = scmp.ne.s32.totalorder %s50, %s52
      %p56 = scmp.eq.s32.totalorder %s16, 0
      %p57 = por %p55, %p56
      %p58 = scmp.ne.s32.totalorder %s50, %s52
      %p59 = scmp.eq.s32.totalorder %s21, 1
      %p60 = por %p58, %p59
      %p61 = scmp.ne.s32.totalorder %s52, %s53
      %p62 = scmp.eq.s32.totalorder %s21, 0
      %p63 = por %p61, %p62
      %p64 = scmp.ne.s32.totalorder %s52, %s53
      %p65 = scmp.eq.s32.totalorder %s22, 1
      %p66 = por %p64, %p65
      %p68 = scmp.ne.s32.totalorder %s53, %s67
      %p69 = scmp.eq.s32.totalorder %s22, 0
      %p70 = por %p68, %p69
      %s72 = sadd.s32 %s71, 1
      %p75 = scmp.eq.s32.totalorder %s16, 1
      %p76 = scmp.ne.s32.totalorder %s71, %s73
      %p77 = scmp.eq.s32.totalorder %s16, 0
      %p78 = por %p76, %p77
      %p79 = scmp.ne.s32.totalorder %s71, %s73
      %p80 = scmp.eq.s32.totalorder %s21, 1
      %p81 = por %p79, %p80
      %p82 = scmp.ne.s32.totalorder %s73, %s74
      %p83 = scmp.eq.s32.totalorder %s21, 0
      %p84 = por %p82, %p83
      %p85 = scmp.ne.s32.totalorder %s73, %s74
      %p86 = scmp.eq.s32.totalorder %s22, 1
      %p87 = por %p85, %p86
      %p89 = scmp.ne.s32.totalorder %s74, %s88
      %p90 = scmp.eq.s32.totalorder %s22, 0
      %p91 = por %p89, %p90
      %s92 = ssub.s32 %s16, %s23
      %p93 = scmp.eq.s32.totalorder %s92, 0
      %s95 = sadd.s32 %s94, 1
      %s96 = scalar_select %p93, %s94, %s95
      %p99 = pneg %p93
      %p100 = scmp.eq.s32.totalorder %s16, 1
      %p101 = por %p99, %p100
      %p102 = scmp.ne.s32.totalorder %s94, %s97
      %p103 = scmp.eq.s32.totalorder %s16, 0
      %p104 = por %p102, %p103
      %p105 = scmp.ne.s32.totalorder %s94, %s97
      %p106 = scmp.eq.s32.totalorder %s21, 1
      %p107 = por %p105, %p106
      %p108 = scmp.ne.s32.totalorder %s97, %s98
      %p109 = scmp.eq.s32.totalorder %s21, 0
      %p110 = por %p108, %p109
      %p111 = scmp.ne.s32.totalorder %s97, %s98
      %p112 = scmp.eq.s32.totalorder %s22, 1
      %p113 = por %p111, %p112
      %p115 = scmp.ne.s32.totalorder %s98, %s114
      %p116 = scmp.eq.s32.totalorder %s22, 0
      %p117 = por %p115, %p116
      %s119 = sadd.s32 %s118, 1
      %p122 = scmp.eq.s32.totalorder %s16, 1
      %p123 = scmp.ne.s32.totalorder %s118, %s120
      %p124 = scmp.eq.s32.totalorder %s16, 0
      %p125 = por %p123, %p124
      %p126 = scmp.ne.s32.totalorder %s118, %s120
      %p127 = scmp.eq.s32.totalorder %s21, 1
      %p128 = por %p126, %p127
      %p129 = scmp.ne.s32.totalorder %s120, %s121
      %p130 = scmp.eq.s32.totalorder %s21, 0
      %p131 = por %p129, %p130
      %p132 = scmp.ne.s32.totalorder %s120, %s121
      %p133 = scmp.eq.s32.totalorder %s22, 1
      %p134 = por %p132, %p133
      %p136 = scmp.ne.s32.totalorder %s121, %s135
      %p137 = scmp.eq.s32.totalorder %s22, 0
      %p138 = por %p136, %p137
      %s140 = sadd.s32 %s139, 1
      %p143 = scmp.eq.s32.totalorder %s16, 1
      %p144 = scmp.ne.s32.totalorder %s139, %s141
      %p145 = scmp.eq.s32.totalorder %s16, 0
      %p146 = por %p144, %p145
      %p147 = scmp.ne.s32.totalorder %s139, %s141
      %p148 = scmp.eq.s32.totalorder %s21, 1
      %p149 = por %p147, %p148
      %p150 = scmp.ne.s32.totalorder %s141, %s142
      %p151 = scmp.eq.s32.totalorder %s21, 0
      %p152 = por %p150, %p151
      %p153 = scmp.ne.s32.totalorder %s141, %s142
      %p154 = scmp.eq.s32.totalorder %s22, 1
      %p155 = por %p153, %p154
      %p157 = scmp.ne.s32.totalorder %s142, %s156
      %p158 = scmp.eq.s32.totalorder %s22, 0
      %p159 = por %p157, %p158
      %s161 = sadd.s32 %s160, 1
      %p164 = scmp.eq.s32.totalorder %s16, 1
      %p165 = scmp.ne.s32.totalorder %s160, %s162
      %p166 = scmp.eq.s32.totalorder %s16, 0
      %p167 = por %p165, %p166
      %p168 = scmp.ne.s32.totalorder %s160, %s162
      %p169 = scmp.eq.s32.totalorder %s21, 1
      %p170 = por %p168, %p169
      %p171 = scmp.ne.s32.totalorder %s162, %s163
      %p172 = scmp.eq.s32.totalorder %s21, 0
      %p173 = por %p171, %p172
      %p174 = scmp.ne.s32.totalorder %s162, %s163
      %p175 = scmp.eq.s32.totalorder %s22, 1
      %p176 = por %p174, %p175
      %p178 = scmp.ne.s32.totalorder %s163, %s177
      %p179 = scmp.eq.s32.totalorder %s22, 0
      %p180 = por %p178, %p179
      %s182 = sadd.s32 %s181, 1
      %p185 = scmp.eq.s32.totalorder %s16, 1
      %p186 = scmp.ne.s32.totalorder %s181, %s183
      %p187 = scmp.eq.s32.totalorder %s16, 0
      %p188 = por %p186, %p187
      %p189 = scmp.ne.s32.totalorder %s181, %s183
      %p190 = scmp.eq.s32.totalorder %s21, 1
      %p191 = por %p189, %p190
      %p192 = scmp.ne.s32.totalorder %s183, %s184
      %p193 = scmp.eq.s32.totalorder %s21, 0
      %p194 = por %p192, %p193
      %p195 = scmp.ne.s32.totalorder %s183, %s184
      %p196 = scmp.eq.s32.totalorder %s22, 1
      %p197 = por %p195, %p196
      %p199 = scmp.ne.s32.totalorder %s184, %s198
      %p200 = scmp.eq.s32.totalorder %s22, 0
      %p201 = por %p199, %p200
      %s202 = ssub.s32 %s16, %s23
      %p203 = scmp.eq.s32.totalorder %s202, 0
      %s205 = sadd.s32 %s204, 1
      %s206 = scalar_select %p203, %s204, %s205
      %p209 = pneg %p203
      %p210 = scmp.eq.s32.totalorder %s16, 1
      %p211 = por %p209, %p210
      %p212 = scmp.ne.s32.totalorder %s204, %s207
      %p213 = scmp.eq.s32.totalorder %s16, 0
      %p214 = por %p212, %p213
      %p215 = scmp.ne.s32.totalorder %s204, %s207
      %p216 = scmp.eq.s32.totalorder %s21, 1
      %p217 = por %p215, %p216
      %p218 = scmp.ne.s32.totalorder %s207, %s208
      %p219 = scmp.eq.s32.totalorder %s21, 0
      %p220 = por %p218, %p219
      %p221 = scmp.ne.s32.totalorder %s207, %s208
      %p222 = scmp.eq.s32.totalorder %s22, 1
      %p223 = por %p221, %p222
      %p225 = scmp.ne.s32.totalorder %s208, %s224
      %p226 = scmp.eq.s32.totalorder %s22, 0
      %p227 = por %p225, %p226
      %p228 = scmp.le.s32.totalorder 1, %s16
      %p229 = scmp.lt.s32.totalorder %s16, 3
      %p230 = pnand %p228, %p229
      %p231 = pneg %p230
      // Predicated region
      $region9: #{bert_classifier_forward.9} parent=5 // pred_check
        _
      $region10: #{bert_classifier_forward.9} parent=5 // pred_check_branch
        %233 = sbr.rel (%p230) target = $region12
      $region11: #{bert_classifier_forward.9} parent=5 // pred_region
        %s234 = ssub.s32 %s16, 1
        // Predicated region
        $region13: #{bert_classifier_forward.9} parent=11 // pred_check
          %p235 = pneg %p63
        $region14: #{bert_classifier_forward.9} parent=11 // pred_check_branch
          %237 = sbr.rel (%p235) target = $region16
        $region15: #{bert_classifier_forward.9} parent=11 // pred_region
          %239 = vsyncadd [#allocation3], 0
          %s240 = sshll.u32 %s1, 4
          %s241 = int_to_ptr.hbm [resolvable:$true] %s240
          %s242 = sshll.u32 [#allocation2], 4
          %s243 = int_to_ptr.vmem [resolvable:$true] %s242
          %248 = dma.hbm_to_vmem [thread:$0]  %s241, 27648, %s243, [#allocation3], 576, 576, 36
        $region16: #{bert_classifier_forward.9} parent=11 // pred_fallthru
          _
        // Predicated region
        $region17: #{bert_classifier_forward.9} parent=11 // pred_check
          %p249 = pneg %p84
        $region18: #{bert_classifier_forward.9} parent=11 // pred_check_branch
          %251 = sbr.rel (%p249) target = $region20
        $region19: #{bert_classifier_forward.9} parent=11 // pred_region
          _
        $region20: #{bert_classifier_forward.9} parent=11 // pred_fallthru
          _
        // Predicated region
        $region21: #{bert_classifier_forward.9} parent=11 // pred_check
          %p252 = pneg %p131
        $region22: #{bert_classifier_forward.9} parent=11 // pred_check_branch
          %254 = sbr.rel (%p252) target = $region24
        $region23: #{bert_classifier_forward.9} parent=11 // pred_region
          %256 = vsyncadd [#allocation5], 0
          %s257 = sshll.u32 %s4, 4
          %s258 = int_to_ptr.hbm [resolvable:$true] %s257
          %s259 = sshll.u32 [#allocation4], 4
          %s260 = int_to_ptr.vmem [resolvable:$true] %s259
          %265 = dma.hbm_to_vmem [thread:$0]  %s258, 9216, %s260, [#allocation5], 192, 192, 12
        $region24: #{bert_classifier_forward.9} parent=11 // pred_fallthru
          _
        // Predicated region
        $region25: #{bert_classifier_forward.9} parent=11 // pred_check
          %p266 = pneg %p152
        $region26: #{bert_classifier_forward.9} parent=11 // pred_check_branch
          %268 = sbr.rel (%p266) target = $region28
        $region27: #{bert_classifier_forward.9} parent=11 // pred_region
          _
        $region28: #{bert_classifier_forward.9} parent=11 // pred_fallthru
          _
        // Predicated region
        $region29: #{bert_classifier_forward.9} parent=11 // pred_check
          %p269 = pneg %p173
        $region30: #{bert_classifier_forward.9} parent=11 // pred_check_branch
          %271 = sbr.rel (%p269) target = $region32
        $region31: #{bert_classifier_forward.9} parent=11 // pred_region
          _
        $region32: #{bert_classifier_forward.9} parent=11 // pred_fallthru
          _
        // Predicated region
        $region33: #{bert_classifier_forward.9} parent=11 // pred_check
          %p272 = pneg %p194
        $region34: #{bert_classifier_forward.9} parent=11 // pred_check_branch
          %274 = sbr.rel (%p272) target = $region36
        $region35: #{bert_classifier_forward.9} parent=11 // pred_region
          _
        $region36: #{bert_classifier_forward.9} parent=11 // pred_fallthru
          _
      $region12: #{bert_classifier_forward.9} parent=5 // pred_fallthru
        _
      %p275 = scmp.lt.s32.totalorder %s16, 2
      // Predicated region
      $region37: #{bert_classifier_forward.9} parent=5 // pred_check
        %p276 = pneg %p275
      $region38: #{bert_classifier_forward.9} parent=5 // pred_check_branch
        %278 = sbr.rel (%p276) target = $region40
      $region39: #{bert_classifier_forward.9} parent=5 // pred_region
        // Predicated region
        $region41: #{bert_classifier_forward.9} parent=39 // pred_check
          %p279 = pneg %p36
        $region42: #{bert_classifier_forward.9} parent=39 // pred_check_branch
          %281 = sbr.rel (%p279) target = $region44
        $region43: #{bert_classifier_forward.9} parent=39 // pred_region
          %p282 = scmp.lt.s32.totalorder %s16, 1
          %s283 = scalar_select %p282, %s16, 1
          %s284 = smul.addr %s283, 3
          %s285 = smul.addr %s284, 8
          %s286 = scalar_lea.vmem %s0, %s285
        $region44: #{bert_classifier_forward.9} parent=39 // pred_fallthru
          _
        // Predicated region
        $region45: #{bert_classifier_forward.9} parent=39 // pred_check
          %p287 = pneg %p104
        $region46: #{bert_classifier_forward.9} parent=39 // pred_check_branch
          %289 = sbr.rel (%p287) target = $region48
        $region47: #{bert_classifier_forward.9} parent=39 // pred_region
          %p290 = scmp.lt.s32.totalorder %s16, 1
          %s291 = scalar_select %p290, %s16, 1
          %s292 = scalar_lea.vmem %s3, %s291
        $region48: #{bert_classifier_forward.9} parent=39 // pred_fallthru
          _
      $region40: #{bert_classifier_forward.9} parent=5 // pred_fallthru
        _
      %p293 = scmp.le.s32.totalorder 1, %s16
      %p294 = scmp.lt.s32.totalorder %s16, 3
      %p295 = pnand %p293, %p294
      %p296 = pneg %p295
      // Predicated region
      $region49: #{bert_classifier_forward.9} parent=5 // pred_check
        _
      $region50: #{bert_classifier_forward.9} parent=5 // pred_check_branch
        %298 = sbr.rel (%p295) target = $region52
      $region51: #{bert_classifier_forward.9} parent=5 // pred_region
        %s299 = ssub.s32 %s16, 1
        // Predicated region
        $region53: #{bert_classifier_forward.9} parent=51 // pred_check
          %p300 = pneg %p63
        $region54: #{bert_classifier_forward.9} parent=51 // pred_check_branch
          %302 = sbr.rel (%p300) target = $region56
        $region55: #{bert_classifier_forward.9} parent=51 // pred_region
          %304 = dma.done [#allocation3], 27648
        $region56: #{bert_classifier_forward.9} parent=51 // pred_fallthru
          _
        // Predicated region
        $region57: #{bert_classifier_forward.9} parent=51 // pred_check
          %p305 = pneg %p131
        $region58: #{bert_classifier_forward.9} parent=51 // pred_check_branch
          %307 = sbr.rel (%p305) target = $region60
        $region59: #{bert_classifier_forward.9} parent=51 // pred_region
          %309 = dma.done [#allocation5], 9216
        $region60: #{bert_classifier_forward.9} parent=51 // pred_fallthru
          _
        %p310 = scmp.lt.s32.totalorder %s21, 1
        %s311 = scalar_select %p310, %s21, 1
        %s312 = smul.addr %s311, 3
        %s313 = smul.addr %s312, 8
        %s314 = scalar_lea.vmem %s0, %s313
        %p315 = pneg %p42
        %p316 = pneg %p39
        %p317 = pneg %p63
        %p318 = pneg %p60
        %p319 = pneg %p84
        %p320 = pneg %p81
        %p321 = scmp.lt.s32.totalorder %s21, 1
        %s322 = scalar_select %p321, %s21, 1
        %s323 = scalar_lea.vmem %s3, %s322
        %p324 = pneg %p110
        %p325 = pneg %p107
        %p326 = pneg %p131
        %p327 = pneg %p128
        %p328 = pneg %p152
        %p329 = pneg %p149
        %p330 = pneg %p173
        %p331 = pneg %p170
        %p332 = pneg %p194
        %p333 = pneg %p191
        %p334 = pneg %p220
        %p335 = pneg %p217
        %p336 = scmp.lt.s32.totalorder %s21, 1
        %s337 = scalar_select %p336, %s21, 1
        %s338 = smul.addr %s337, 3
        %s339 = smul.addr %s338, 8
        %s340 = scalar_lea.vmem %s8, %s339
        %p341 = scmp.lt.s32.totalorder %s21, 1
        %s342 = scalar_select %p341, %s21, 1
        %s343 = smul.addr %s342, 3
        %s344 = smul.addr %s343, 8
        %s345 = scalar_lea.vmem %s0, %s344
        %p346 = scmp.lt.s32.totalorder %s21, 1
        %s347 = scalar_select %p346, %s21, 1
        %s348 = scalar_lea.vmem %s3, %s347
        %p349 = scmp.lt.s32.totalorder %s21, 1
        %s350 = scalar_select %p349, %s21, 1
        %s351 = smul.addr %s350, 3
        %s352 = smul.addr %s351, 8
        %s353 = scalar_lea.vmem %s8, %s352
        %v355 = vld [vmem:[%s345] sm:$0xff]
        %v356 = vld [vmem:[%s345 + $0x8] sm:$0xff]
        %v357 = vld [vmem:[%s345 + $0x10] sm:$0xff]
        %v358 = vpack.c.bf16 %v355, %v355
        %v359 = vpack.c.bf16 %v356, %v356
        %v360 = vpack.c.bf16 %v357, %v357
        %v361 = vld [vmem:[#allocation2] sm:$0xff]
        %v362 = vld [vmem:[#allocation2 + $0x8] sm:$0xff]
        %v363 = vld [vmem:[#allocation2 + $0x10] sm:$0xff]
        %v364 = vld [vmem:[#allocation2 + $0x18] sm:$0xff]
        %v365 = vld [vmem:[#allocation2 + $0x20] sm:$0xf]
        %v366 = vld [vmem:[#allocation2 + $0x24] sm:$0xff]
        %v367 = vld [vmem:[#allocation2 + $0x2c] sm:$0xff]
        %v368 = vld [vmem:[#allocation2 + $0x34] sm:$0xff]
        %v369 = vld [vmem:[#allocation2 + $0x3c] sm:$0xff]
        %v370 = vld [vmem:[#allocation2 + $0x44] sm:$0xf]
        %v371 = vld [vmem:[#allocation2 + $0x48] sm:$0xff]
        %v372 = vld [vmem:[#allocation2 + $0x50] sm:$0xff]
        %v373 = vld [vmem:[#allocation2 + $0x58] sm:$0xff]
        %v374 = vld [vmem:[#allocation2 + $0x60] sm:$0xff]
        %v375 = vld [vmem:[#allocation2 + $0x68] sm:$0xf]
        %v376 = vld [vmem:[#allocation2 + $0x6c] sm:$0xff]
        %v377 = vld [vmem:[#allocation2 + $0x74] sm:$0xff]
        %v378 = vld [vmem:[#allocation2 + $0x7c] sm:$0xff]
        %v379 = vld [vmem:[#allocation2 + $0x84] sm:$0xff]
        %v380 = vld [vmem:[#allocation2 + $0x8c] sm:$0xf]
        %v381 = vld [vmem:[#allocation2 + $0x90] sm:$0xff]
        %v382 = vld [vmem:[#allocation2 + $0x98] sm:$0xff]
        %v383 = vld [vmem:[#allocation2 + $0xa0] sm:$0xff]
        %v384 = vld [vmem:[#allocation2 + $0xa8] sm:$0xff]
        %v385 = vld [vmem:[#allocation2 + $0xb0] sm:$0xf]
        %v386 = vld [vmem:[#allocation2 + $0xb4] sm:$0xff]
        %v387 = vld [vmem:[#allocation2 + $0xbc] sm:$0xff]
        %v388 = vld [vmem:[#allocation2 + $0xc4] sm:$0xff]
        %v389 = vld [vmem:[#allocation2 + $0xcc] sm:$0xff]
        %v390 = vld [vmem:[#allocation2 + $0xd4] sm:$0xf]
        %v391 = vld [vmem:[#allocation2 + $0xd8] sm:$0xff]
        %v392 = vld [vmem:[#allocation2 + $0xe0] sm:$0xff]
        %v393 = vld [vmem:[#allocation2 + $0xe8] sm:$0xff]
        %v394 = vld [vmem:[#allocation2 + $0xf0] sm:$0xff]
        %v395 = vld [vmem:[#allocation2 + $0xf8] sm:$0xf]
        %v396 = vld [vmem:[#allocation2 + $0xfc] sm:$0xff]
        %v397 = vld [vmem:[#allocation2 + $0x104] sm:$0xff]
        %v398 = vld [vmem:[#allocation2 + $0x10c] sm:$0xff]
        %v399 = vld [vmem:[#allocation2 + $0x114] sm:$0xff]
        %v400 = vld [vmem:[#allocation2 + $0x11c] sm:$0xf]
        %v401 = vld [vmem:[#allocation2 + $0x120] sm:$0xff]
        %v402 = vld [vmem:[#allocation2 + $0x128] sm:$0xff]
        %v403 = vld [vmem:[#allocation2 + $0x130] sm:$0xff]
        %v404 = vld [vmem:[#allocation2 + $0x138] sm:$0xff]
        %v405 = vld [vmem:[#allocation2 + $0x140] sm:$0xf]
        %v406 = vld [vmem:[#allocation2 + $0x144] sm:$0xff]
        %v407 = vld [vmem:[#allocation2 + $0x14c] sm:$0xff]
        %v408 = vld [vmem:[#allocation2 + $0x154] sm:$0xff]
        %v409 = vld [vmem:[#allocation2 + $0x15c] sm:$0xff]
        %v410 = vld [vmem:[#allocation2 + $0x164] sm:$0xf]
        %v411 = vld [vmem:[#allocation2 + $0x168] sm:$0xff]
        %v412 = vld [vmem:[#allocation2 + $0x170] sm:$0xff]
        %v413 = vld [vmem:[#allocation2 + $0x178] sm:$0xff]
        %v414 = vld [vmem:[#allocation2 + $0x180] sm:$0xff]
        %v415 = vld [vmem:[#allocation2 + $0x188] sm:$0xf]
        %v416 = vld [vmem:[#allocation2 + $0x18c] sm:$0xff]
        %v417 = vld [vmem:[#allocation2 + $0x194] sm:$0xff]
        %v418 = vld [vmem:[#allocation2 + $0x19c] sm:$0xff]
        %v419 = vld [vmem:[#allocation2 + $0x1a4] sm:$0xff]
        %v420 = vld [vmem:[#allocation2 + $0x1ac] sm:$0xf]
        %v421 = vld [vmem:[#allocation2 + $0x1b0] sm:$0xff]
        %v422 = vld [vmem:[#allocation2 + $0x1b8] sm:$0xff]
        %v423 = vld [vmem:[#allocation2 + $0x1c0] sm:$0xff]
        %v424 = vld [vmem:[#allocation2 + $0x1c8] sm:$0xff]
        %v425 = vld [vmem:[#allocation2 + $0x1d0] sm:$0xf]
        %v426 = vld [vmem:[#allocation2 + $0x1d4] sm:$0xff]
        %v427 = vld [vmem:[#allocation2 + $0x1dc] sm:$0xff]
        %v428 = vld [vmem:[#allocation2 + $0x1e4] sm:$0xff]
        %v429 = vld [vmem:[#allocation2 + $0x1ec] sm:$0xff]
        %v430 = vld [vmem:[#allocation2 + $0x1f4] sm:$0xf]
        %v431 = vld [vmem:[#allocation2 + $0x1f8] sm:$0xff]
        %v432 = vld [vmem:[#allocation2 + $0x200] sm:$0xff]
        %v433 = vld [vmem:[#allocation2 + $0x208] sm:$0xff]
        %v434 = vld [vmem:[#allocation2 + $0x210] sm:$0xff]
        %v435 = vld [vmem:[#allocation2 + $0x218] sm:$0xf]
        %v436 = vld [vmem:[#allocation2 + $0x21c] sm:$0xff]
        %v437 = vld [vmem:[#allocation2 + $0x224] sm:$0xff]
        %v438 = vld [vmem:[#allocation2 + $0x22c] sm:$0xff]
        %v439 = vld [vmem:[#allocation2 + $0x234] sm:$0xff]
        %v440 = vld [vmem:[#allocation2 + $0x23c] sm:$0xf]
        %v441 = vld [vmem:[#allocation2 + $0x240] sm:$0xff]
        %v442 = vld [vmem:[#allocation2 + $0x248] sm:$0xff]
        %v443 = vld [vmem:[#allocation2 + $0x250] sm:$0xff]
        %v444 = vld [vmem:[#allocation2 + $0x258] sm:$0xff]
        %v445 = vld [vmem:[#allocation2 + $0x260] sm:$0xf]
        %v446 = vld [vmem:[#allocation2 + $0x264] sm:$0xff]
        %v447 = vld [vmem:[#allocation2 + $0x26c] sm:$0xff]
        %v448 = vld [vmem:[#allocation2 + $0x274] sm:$0xff]
        %v449 = vld [vmem:[#allocation2 + $0x27c] sm:$0xff]
        %v450 = vld [vmem:[#allocation2 + $0x284] sm:$0xf]
        %v451 = vld [vmem:[#allocation2 + $0x288] sm:$0xff]
        %v452 = vld [vmem:[#allocation2 + $0x290] sm:$0xff]
        %v453 = vld [vmem:[#allocation2 + $0x298] sm:$0xff]
        %v454 = vld [vmem:[#allocation2 + $0x2a0] sm:$0xff]
        %v455 = vld [vmem:[#allocation2 + $0x2a8] sm:$0xf]
        %v456 = vld [vmem:[#allocation2 + $0x2ac] sm:$0xff]
        %v457 = vld [vmem:[#allocation2 + $0x2b4] sm:$0xff]
        %v458 = vld [vmem:[#allocation2 + $0x2bc] sm:$0xff]
        %v459 = vld [vmem:[#allocation2 + $0x2c4] sm:$0xff]
        %v460 = vld [vmem:[#allocation2 + $0x2cc] sm:$0xf]
        %v461 = vld [vmem:[#allocation2 + $0x2d0] sm:$0xff]
        %v462 = vld [vmem:[#allocation2 + $0x2d8] sm:$0xff]
        %v463 = vld [vmem:[#allocation2 + $0x2e0] sm:$0xff]
        %v464 = vld [vmem:[#allocation2 + $0x2e8] sm:$0xff]
        %v465 = vld [vmem:[#allocation2 + $0x2f0] sm:$0xf]
        %v466 = vld [vmem:[#allocation2 + $0x2f4] sm:$0xff]
        %v467 = vld [vmem:[#allocation2 + $0x2fc] sm:$0xff]
        %v468 = vld [vmem:[#allocation2 + $0x304] sm:$0xff]
        %v469 = vld [vmem:[#allocation2 + $0x30c] sm:$0xff]
        %v470 = vld [vmem:[#allocation2 + $0x314] sm:$0xf]
        %v471 = vld [vmem:[#allocation2 + $0x318] sm:$0xff]
        %v472 = vld [vmem:[#allocation2 + $0x320] sm:$0xff]
        %v473 = vld [vmem:[#allocation2 + $0x328] sm:$0xff]
        %v474 = vld [vmem:[#allocation2 + $0x330] sm:$0xff]
        %v475 = vld [vmem:[#allocation2 + $0x338] sm:$0xf]
        %v476 = vld [vmem:[#allocation2 + $0x33c] sm:$0xff]
        %v477 = vld [vmem:[#allocation2 + $0x344] sm:$0xff]
        %v478 = vld [vmem:[#allocation2 + $0x34c] sm:$0xff]
        %v479 = vld [vmem:[#allocation2 + $0x354] sm:$0xff]
        %v480 = vld [vmem:[#allocation2 + $0x35c] sm:$0xf]
        %v481 = vld [vmem:[#allocation2 + $0x360] sm:$0xff]
        %v482 = vld [vmem:[#allocation2 + $0x368] sm:$0xff]
        %v483 = vld [vmem:[#allocation2 + $0x370] sm:$0xff]
        %v484 = vld [vmem:[#allocation2 + $0x378] sm:$0xff]
        %v485 = vld [vmem:[#allocation2 + $0x380] sm:$0xf]
        %v486 = vld [vmem:[#allocation2 + $0x384] sm:$0xff]
        %v487 = vld [vmem:[#allocation2 + $0x38c] sm:$0xff]
        %v488 = vld [vmem:[#allocation2 + $0x394] sm:$0xff]
        %v489 = vld [vmem:[#allocation2 + $0x39c] sm:$0xff]
        %v490 = vld [vmem:[#allocation2 + $0x3a4] sm:$0xf]
        %v491 = vld [vmem:[#allocation2 + $0x3a8] sm:$0xff]
        %v492 = vld [vmem:[#allocation2 + $0x3b0] sm:$0xff]
        %v493 = vld [vmem:[#allocation2 + $0x3b8] sm:$0xff]
        %v494 = vld [vmem:[#allocation2 + $0x3c0] sm:$0xff]
        %v495 = vld [vmem:[#allocation2 + $0x3c8] sm:$0xf]
        %v496 = vld [vmem:[#allocation2 + $0x3cc] sm:$0xff]
        %v497 = vld [vmem:[#allocation2 + $0x3d4] sm:$0xff]
        %v498 = vld [vmem:[#allocation2 + $0x3dc] sm:$0xff]
        %v499 = vld [vmem:[#allocation2 + $0x3e4] sm:$0xff]
        %v500 = vld [vmem:[#allocation2 + $0x3ec] sm:$0xf]
        %v501 = vld [vmem:[#allocation2 + $0x3f0] sm:$0xff]
        %v502 = vld [vmem:[#allocation2 + $0x3f8] sm:$0xff]
        %v503 = vld [vmem:[#allocation2 + $0x400] sm:$0xff]
        %v504 = vld [vmem:[#allocation2 + $0x408] sm:$0xff]
        %v505 = vld [vmem:[#allocation2 + $0x410] sm:$0xf]
        %v506 = vld [vmem:[#allocation2 + $0x414] sm:$0xff]
        %v507 = vld [vmem:[#allocation2 + $0x41c] sm:$0xff]
        %v508 = vld [vmem:[#allocation2 + $0x424] sm:$0xff]
        %v509 = vld [vmem:[#allocation2 + $0x42c] sm:$0xff]
        %v510 = vld [vmem:[#allocation2 + $0x434] sm:$0xf]
        %v511 = vld [vmem:[#allocation2 + $0x438] sm:$0xff]
        %v512 = vld [vmem:[#allocation2 + $0x440] sm:$0xff]
        %v513 = vld [vmem:[#allocation2 + $0x448] sm:$0xff]
        %v514 = vld [vmem:[#allocation2 + $0x450] sm:$0xff]
        %v515 = vld [vmem:[#allocation2 + $0x458] sm:$0xf]
        %v516 = vld [vmem:[#allocation2 + $0x45c] sm:$0xff]
        %v517 = vld [vmem:[#allocation2 + $0x464] sm:$0xff]
        %v518 = vld [vmem:[#allocation2 + $0x46c] sm:$0xff]
        %v519 = vld [vmem:[#allocation2 + $0x474] sm:$0xff]
        %v520 = vld [vmem:[#allocation2 + $0x47c] sm:$0xf]
        %v521 = vld [vmem:[#allocation2 + $0x480] sm:$0xff]
        %v522 = vld [vmem:[#allocation2 + $0x488] sm:$0xff]
        %v523 = vld [vmem:[#allocation2 + $0x490] sm:$0xff]
        %v524 = vld [vmem:[#allocation2 + $0x498] sm:$0xff]
        %v525 = vld [vmem:[#allocation2 + $0x4a0] sm:$0xf]
        %v526 = vld [vmem:[#allocation2 + $0x4a4] sm:$0xff]
        %v527 = vld [vmem:[#allocation2 + $0x4ac] sm:$0xff]
        %v528 = vld [vmem:[#allocation2 + $0x4b4] sm:$0xff]
        %v529 = vld [vmem:[#allocation2 + $0x4bc] sm:$0xff]
        %v530 = vld [vmem:[#allocation2 + $0x4c4] sm:$0xf]
        %v531 = vld [vmem:[#allocation2 + $0x4c8] sm:$0xff]
        %v532 = vld [vmem:[#allocation2 + $0x4d0] sm:$0xff]
        %v533 = vld [vmem:[#allocation2 + $0x4d8] sm:$0xff]
        %v534 = vld [vmem:[#allocation2 + $0x4e0] sm:$0xff]
        %v535 = vld [vmem:[#allocation2 + $0x4e8] sm:$0xf]
        %v536 = vld [vmem:[#allocation2 + $0x4ec] sm:$0xff]
        %v537 = vld [vmem:[#allocation2 + $0x4f4] sm:$0xff]
        %v538 = vld [vmem:[#allocation2 + $0x4fc] sm:$0xff]
        %v539 = vld [vmem:[#allocation2 + $0x504] sm:$0xff]
        %v540 = vld [vmem:[#allocation2 + $0x50c] sm:$0xf]
        %v541 = vld [vmem:[#allocation2 + $0x510] sm:$0xff]
        %v542 = vld [vmem:[#allocation2 + $0x518] sm:$0xff]
        %v543 = vld [vmem:[#allocation2 + $0x520] sm:$0xff]
        %v544 = vld [vmem:[#allocation2 + $0x528] sm:$0xff]
        %v545 = vld [vmem:[#allocation2 + $0x530] sm:$0xf]
        %v546 = vld [vmem:[#allocation2 + $0x534] sm:$0xff]
        %v547 = vld [vmem:[#allocation2 + $0x53c] sm:$0xff]
        %v548 = vld [vmem:[#allocation2 + $0x544] sm:$0xff]
        %v549 = vld [vmem:[#allocation2 + $0x54c] sm:$0xff]
        %v550 = vld [vmem:[#allocation2 + $0x554] sm:$0xf]
        %v551 = vld [vmem:[#allocation2 + $0x558] sm:$0xff]
        %v552 = vld [vmem:[#allocation2 + $0x560] sm:$0xff]
        %v553 = vld [vmem:[#allocation2 + $0x568] sm:$0xff]
        %v554 = vld [vmem:[#allocation2 + $0x570] sm:$0xff]
        %v555 = vld [vmem:[#allocation2 + $0x578] sm:$0xf]
        %v556 = vld [vmem:[#allocation2 + $0x57c] sm:$0xff]
        %v557 = vld [vmem:[#allocation2 + $0x584] sm:$0xff]
        %v558 = vld [vmem:[#allocation2 + $0x58c] sm:$0xff]
        %v559 = vld [vmem:[#allocation2 + $0x594] sm:$0xff]
        %v560 = vld [vmem:[#allocation2 + $0x59c] sm:$0xf]
        %v561 = vld [vmem:[#allocation2 + $0x5a0] sm:$0xff]
        %v562 = vld [vmem:[#allocation2 + $0x5a8] sm:$0xff]
        %v563 = vld [vmem:[#allocation2 + $0x5b0] sm:$0xff]
        %v564 = vld [vmem:[#allocation2 + $0x5b8] sm:$0xff]
        %v565 = vld [vmem:[#allocation2 + $0x5c0] sm:$0xf]
        %v566 = vld [vmem:[#allocation2 + $0x5c4] sm:$0xff]
        %v567 = vld [vmem:[#allocation2 + $0x5cc] sm:$0xff]
        %v568 = vld [vmem:[#allocation2 + $0x5d4] sm:$0xff]
        %v569 = vld [vmem:[#allocation2 + $0x5dc] sm:$0xff]
        %v570 = vld [vmem:[#allocation2 + $0x5e4] sm:$0xf]
        %v571 = vld [vmem:[#allocation2 + $0x5e8] sm:$0xff]
        %v572 = vld [vmem:[#allocation2 + $0x5f0] sm:$0xff]
        %v573 = vld [vmem:[#allocation2 + $0x5f8] sm:$0xff]
        %v574 = vld [vmem:[#allocation2 + $0x600] sm:$0xff]
        %v575 = vld [vmem:[#allocation2 + $0x608] sm:$0xf]
        %v576 = vld [vmem:[#allocation2 + $0x60c] sm:$0xff]
        %v577 = vld [vmem:[#allocation2 + $0x614] sm:$0xff]
        %v578 = vld [vmem:[#allocation2 + $0x61c] sm:$0xff]
        %v579 = vld [vmem:[#allocation2 + $0x624] sm:$0xff]
        %v580 = vld [vmem:[#allocation2 + $0x62c] sm:$0xf]
        %v581 = vld [vmem:[#allocation2 + $0x630] sm:$0xff]
        %v582 = vld [vmem:[#allocation2 + $0x638] sm:$0xff]
        %v583 = vld [vmem:[#allocation2 + $0x640] sm:$0xff]
        %v584 = vld [vmem:[#allocation2 + $0x648] sm:$0xff]
        %v585 = vld [vmem:[#allocation2 + $0x650] sm:$0xf]
        %v586 = vld [vmem:[#allocation2 + $0x654] sm:$0xff]
        %v587 = vld [vmem:[#allocation2 + $0x65c] sm:$0xff]
        %v588 = vld [vmem:[#allocation2 + $0x664] sm:$0xff]
        %v589 = vld [vmem:[#allocation2 + $0x66c] sm:$0xff]
        %v590 = vld [vmem:[#allocation2 + $0x674] sm:$0xf]
        %v591 = vld [vmem:[#allocation2 + $0x678] sm:$0xff]
        %v592 = vld [vmem:[#allocation2 + $0x680] sm:$0xff]
        %v593 = vld [vmem:[#allocation2 + $0x688] sm:$0xff]
        %v594 = vld [vmem:[#allocation2 + $0x690] sm:$0xff]
        %v595 = vld [vmem:[#allocation2 + $0x698] sm:$0xf]
        %v596 = vld [vmem:[#allocation2 + $0x69c] sm:$0xff]
        %v597 = vld [vmem:[#allocation2 + $0x6a4] sm:$0xff]
        %v598 = vld [vmem:[#allocation2 + $0x6ac] sm:$0xff]
        %v599 = vld [vmem:[#allocation2 + $0x6b4] sm:$0xff]
        %v600 = vld [vmem:[#allocation2 + $0x6bc] sm:$0xf]
        %v601 = vld [vmem:[%s2] sm:$0xff]
        %v602 = vld [vmem:[%s2 + $0x8] sm:$0x1]
        %v605 = vperm.slane %v601, 0
        %v606 = vperm.slane %v601, 1
        %v607 = vperm.slane %v601, 2
        %v608 = vperm.slane %v601, 3
        %v609 = vperm.slane %v601, 4
        %v610 = vperm.slane %v601, 5
        %v611 = vperm.slane %v601, 6
        %v612 = vperm.slane %v601, 7
        %v613 = vperm.slane %v602, 0
        %v863 = vunpack.c.l.b16 %v361
        %v864 = vunpack.c.h.b16 %v361
        %v865 = vunpack.c.l.b16 %v362
        %v866 = vunpack.c.h.b16 %v362
        %v867 = vunpack.c.l.b16 %v363
        %v868 = vunpack.c.h.b16 %v363
        %v869 = vunpack.c.l.b16 %v364
        %v870 = vunpack.c.h.b16 %v364
        %v871 = vunpack.c.l.b16 %v365
        %v872 = vunpack.c.l.b16 %v366
        %v873 = vunpack.c.h.b16 %v366
        %v874 = vunpack.c.l.b16 %v367
        %v875 = vunpack.c.h.b16 %v367
        %v876 = vunpack.c.l.b16 %v368
        %v877 = vunpack.c.h.b16 %v368
        %v878 = vunpack.c.l.b16 %v369
        %v879 = vunpack.c.h.b16 %v369
        %v880 = vunpack.c.l.b16 %v370
        %v881 = vunpack.c.l.b16 %v371
        %v882 = vunpack.c.h.b16 %v371
        %v883 = vunpack.c.l.b16 %v372
        %v884 = vunpack.c.h.b16 %v372
        %v885 = vunpack.c.l.b16 %v373
        %v886 = vunpack.c.h.b16 %v373
        %v887 = vunpack.c.l.b16 %v374
        %v888 = vunpack.c.h.b16 %v374
        %v889 = vunpack.c.l.b16 %v375
        %v890 = vunpack.c.l.b16 %v376
        %v891 = vunpack.c.h.b16 %v376
        %v892 = vunpack.c.l.b16 %v377
        %v893 = vunpack.c.h.b16 %v377
        %v894 = vunpack.c.l.b16 %v378
        %v895 = vunpack.c.h.b16 %v378
        %v896 = vunpack.c.l.b16 %v379
        %v897 = vunpack.c.h.b16 %v379
        %v898 = vunpack.c.l.b16 %v380
        %v899 = vunpack.c.l.b16 %v381
        %v900 = vunpack.c.h.b16 %v381
        %v901 = vunpack.c.l.b16 %v382
        %v902 = vunpack.c.h.b16 %v382
        %v903 = vunpack.c.l.b16 %v383
        %v904 = vunpack.c.h.b16 %v383
        %v905 = vunpack.c.l.b16 %v384
        %v906 = vunpack.c.h.b16 %v384
        %v907 = vunpack.c.l.b16 %v385
        %v908 = vunpack.c.l.b16 %v386
        %v909 = vunpack.c.h.b16 %v386
        %v910 = vunpack.c.l.b16 %v387
        %v911 = vunpack.c.h.b16 %v387
        %v912 = vunpack.c.l.b16 %v388
        %v913 = vunpack.c.h.b16 %v388
        %v914 = vunpack.c.l.b16 %v389
        %v915 = vunpack.c.h.b16 %v389
        %v916 = vunpack.c.l.b16 %v390
        %v917 = vunpack.c.l.b16 %v391
        %v918 = vunpack.c.h.b16 %v391
        %v919 = vunpack.c.l.b16 %v392
        %v920 = vunpack.c.h.b16 %v392
        %v921 = vunpack.c.l.b16 %v393
        %v922 = vunpack.c.h.b16 %v393
        %v923 = vunpack.c.l.b16 %v394
        %v924 = vunpack.c.h.b16 %v394
        %v925 = vunpack.c.l.b16 %v395
        %v926 = vunpack.c.l.b16 %v396
        %v927 = vunpack.c.h.b16 %v396
        %v928 = vunpack.c.l.b16 %v397
        %v929 = vunpack.c.h.b16 %v397
        %v930 = vunpack.c.l.b16 %v398
        %v931 = vunpack.c.h.b16 %v398
        %v932 = vunpack.c.l.b16 %v399
        %v933 = vunpack.c.h.b16 %v399
        %v934 = vunpack.c.l.b16 %v400
        %v935 = vunpack.c.l.b16 %v401
        %v936 = vunpack.c.h.b16 %v401
        %v937 = vunpack.c.l.b16 %v402
        %v938 = vunpack.c.h.b16 %v402
        %v939 = vunpack.c.l.b16 %v403
        %v940 = vunpack.c.h.b16 %v403
        %v941 = vunpack.c.l.b16 %v404
        %v942 = vunpack.c.h.b16 %v404
        %v943 = vunpack.c.l.b16 %v405
        %v944 = vunpack.c.l.b16 %v406
        %v945 = vunpack.c.h.b16 %v406
        %v946 = vunpack.c.l.b16 %v407
        %v947 = vunpack.c.h.b16 %v407
        %v948 = vunpack.c.l.b16 %v408
        %v949 = vunpack.c.h.b16 %v408
        %v950 = vunpack.c.l.b16 %v409
        %v951 = vunpack.c.h.b16 %v409
        %v952 = vunpack.c.l.b16 %v410
        %v953 = vunpack.c.l.b16 %v411
        %v954 = vunpack.c.h.b16 %v411
        %v955 = vunpack.c.l.b16 %v412
        %v956 = vunpack.c.h.b16 %v412
        %v957 = vunpack.c.l.b16 %v413
        %v958 = vunpack.c.h.b16 %v413
        %v959 = vunpack.c.l.b16 %v414
        %v960 = vunpack.c.h.b16 %v414
        %v961 = vunpack.c.l.b16 %v415
        %v962 = vunpack.c.l.b16 %v416
        %v963 = vunpack.c.h.b16 %v416
        %v964 = vunpack.c.l.b16 %v417
        %v965 = vunpack.c.h.b16 %v417
        %v966 = vunpack.c.l.b16 %v418
        %v967 = vunpack.c.h.b16 %v418
        %v968 = vunpack.c.l.b16 %v419
        %v969 = vunpack.c.h.b16 %v419
        %v970 = vunpack.c.l.b16 %v420
        %v971 = vunpack.c.l.b16 %v421
        %v972 = vunpack.c.h.b16 %v421
        %v973 = vunpack.c.l.b16 %v422
        %v974 = vunpack.c.h.b16 %v422
        %v975 = vunpack.c.l.b16 %v423
        %v976 = vunpack.c.h.b16 %v423
        %v977 = vunpack.c.l.b16 %v424
        %v978 = vunpack.c.h.b16 %v424
        %v979 = vunpack.c.l.b16 %v425
        %v980 = vunpack.c.l.b16 %v426
        %v981 = vunpack.c.h.b16 %v426
        %v982 = vunpack.c.l.b16 %v427
        %v983 = vunpack.c.h.b16 %v427
        %v984 = vunpack.c.l.b16 %v428
        %v985 = vunpack.c.h.b16 %v428
        %v986 = vunpack.c.l.b16 %v429
        %v987 = vunpack.c.h.b16 %v429
        %v988 = vunpack.c.l.b16 %v430
        %v989 = vunpack.c.l.b16 %v431
        %v990 = vunpack.c.h.b16 %v431
        %v991 = vunpack.c.l.b16 %v432
        %v992 = vunpack.c.h.b16 %v432
        %v993 = vunpack.c.l.b16 %v433
        %v994 = vunpack.c.h.b16 %v433
        %v995 = vunpack.c.l.b16 %v434
        %v996 = vunpack.c.h.b16 %v434
        %v997 = vunpack.c.l.b16 %v435
        %v998 = vunpack.c.l.b16 %v436
        %v999 = vunpack.c.h.b16 %v436
        %v1000 = vunpack.c.l.b16 %v437
        %v1001 = vunpack.c.h.b16 %v437
        %v1002 = vunpack.c.l.b16 %v438
        %v1003 = vunpack.c.h.b16 %v438
        %v1004 = vunpack.c.l.b16 %v439
        %v1005 = vunpack.c.h.b16 %v439
        %v1006 = vunpack.c.l.b16 %v440
        %v1007 = vunpack.c.l.b16 %v441
        %v1008 = vunpack.c.h.b16 %v441
        %v1009 = vunpack.c.l.b16 %v442
        %v1010 = vunpack.c.h.b16 %v442
        %v1011 = vunpack.c.l.b16 %v443
        %v1012 = vunpack.c.h.b16 %v443
        %v1013 = vunpack.c.l.b16 %v444
        %v1014 = vunpack.c.h.b16 %v444
        %v1015 = vunpack.c.l.b16 %v445
        %v1016 = vunpack.c.l.b16 %v446
        %v1017 = vunpack.c.h.b16 %v446
        %v1018 = vunpack.c.l.b16 %v447
        %v1019 = vunpack.c.h.b16 %v447
        %v1020 = vunpack.c.l.b16 %v448
        %v1021 = vunpack.c.h.b16 %v448
        %v1022 = vunpack.c.l.b16 %v449
        %v1023 = vunpack.c.h.b16 %v449
        %v1024 = vunpack.c.l.b16 %v450
        %v1025 = vunpack.c.l.b16 %v451
        %v1026 = vunpack.c.h.b16 %v451
        %v1027 = vunpack.c.l.b16 %v452
        %v1028 = vunpack.c.h.b16 %v452
        %v1029 = vunpack.c.l.b16 %v453
        %v1030 = vunpack.c.h.b16 %v453
        %v1031 = vunpack.c.l.b16 %v454
        %v1032 = vunpack.c.h.b16 %v454
        %v1033 = vunpack.c.l.b16 %v455
        %v1034 = vunpack.c.l.b16 %v456
        %v1035 = vunpack.c.h.b16 %v456
        %v1036 = vunpack.c.l.b16 %v457
        %v1037 = vunpack.c.h.b16 %v457
        %v1038 = vunpack.c.l.b16 %v458
        %v1039 = vunpack.c.h.b16 %v458
        %v1040 = vunpack.c.l.b16 %v459
        %v1041 = vunpack.c.h.b16 %v459
        %v1042 = vunpack.c.l.b16 %v460
        %v1043 = vunpack.c.l.b16 %v461
        %v1044 = vunpack.c.h.b16 %v461
        %v1045 = vunpack.c.l.b16 %v462
        %v1046 = vunpack.c.h.b16 %v462
        %v1047 = vunpack.c.l.b16 %v463
        %v1048 = vunpack.c.h.b16 %v463
        %v1049 = vunpack.c.l.b16 %v464
        %v1050 = vunpack.c.h.b16 %v464
        %v1051 = vunpack.c.l.b16 %v465
        %v1052 = vunpack.c.l.b16 %v466
        %v1053 = vunpack.c.h.b16 %v466
        %v1054 = vunpack.c.l.b16 %v467
        %v1055 = vunpack.c.h.b16 %v467
        %v1056 = vunpack.c.l.b16 %v468
        %v1057 = vunpack.c.h.b16 %v468
        %v1058 = vunpack.c.l.b16 %v469
        %v1059 = vunpack.c.h.b16 %v469
        %v1060 = vunpack.c.l.b16 %v470
        %v1061 = vunpack.c.l.b16 %v471
        %v1062 = vunpack.c.h.b16 %v471
        %v1063 = vunpack.c.l.b16 %v472
        %v1064 = vunpack.c.h.b16 %v472
        %v1065 = vunpack.c.l.b16 %v473
        %v1066 = vunpack.c.h.b16 %v473
        %v1067 = vunpack.c.l.b16 %v474
        %v1068 = vunpack.c.h.b16 %v474
        %v1069 = vunpack.c.l.b16 %v475
        %v1070 = vunpack.c.l.b16 %v476
        %v1071 = vunpack.c.h.b16 %v476
        %v1072 = vunpack.c.l.b16 %v477
        %v1073 = vunpack.c.h.b16 %v477
        %v1074 = vunpack.c.l.b16 %v478
        %v1075 = vunpack.c.h.b16 %v478
        %v1076 = vunpack.c.l.b16 %v479
        %v1077 = vunpack.c.h.b16 %v479
        %v1078 = vunpack.c.l.b16 %v480
        %v1079 = vunpack.c.l.b16 %v481
        %v1080 = vunpack.c.h.b16 %v481
        %v1081 = vunpack.c.l.b16 %v482
        %v1082 = vunpack.c.h.b16 %v482
        %v1083 = vunpack.c.l.b16 %v483
        %v1084 = vunpack.c.h.b16 %v483
        %v1085 = vunpack.c.l.b16 %v484
        %v1086 = vunpack.c.h.b16 %v484
        %v1087 = vunpack.c.l.b16 %v485
        %v1088 = vunpack.c.l.b16 %v486
        %v1089 = vunpack.c.h.b16 %v486
        %v1090 = vunpack.c.l.b16 %v487
        %v1091 = vunpack.c.h.b16 %v487
        %v1092 = vunpack.c.l.b16 %v488
        %v1093 = vunpack.c.h.b16 %v488
        %v1094 = vunpack.c.l.b16 %v489
        %v1095 = vunpack.c.h.b16 %v489
        %v1096 = vunpack.c.l.b16 %v490
        %v1097 = vunpack.c.l.b16 %v491
        %v1098 = vunpack.c.h.b16 %v491
        %v1099 = vunpack.c.l.b16 %v492
        %v1100 = vunpack.c.h.b16 %v492
        %v1101 = vunpack.c.l.b16 %v493
        %v1102 = vunpack.c.h.b16 %v493
        %v1103 = vunpack.c.l.b16 %v494
        %v1104 = vunpack.c.h.b16 %v494
        %v1105 = vunpack.c.l.b16 %v495
        %v1106 = vunpack.c.l.b16 %v496
        %v1107 = vunpack.c.h.b16 %v496
        %v1108 = vunpack.c.l.b16 %v497
        %v1109 = vunpack.c.h.b16 %v497
        %v1110 = vunpack.c.l.b16 %v498
        %v1111 = vunpack.c.h.b16 %v498
        %v1112 = vunpack.c.l.b16 %v499
        %v1113 = vunpack.c.h.b16 %v499
        %v1114 = vunpack.c.l.b16 %v500
        %v1115 = vunpack.c.l.b16 %v501
        %v1116 = vunpack.c.h.b16 %v501
        %v1117 = vunpack.c.l.b16 %v502
        %v1118 = vunpack.c.h.b16 %v502
        %v1119 = vunpack.c.l.b16 %v503
        %v1120 = vunpack.c.h.b16 %v503
        %v1121 = vunpack.c.l.b16 %v504
        %v1122 = vunpack.c.h.b16 %v504
        %v1123 = vunpack.c.l.b16 %v505
        %v1124 = vunpack.c.l.b16 %v506
        %v1125 = vunpack.c.h.b16 %v506
        %v1126 = vunpack.c.l.b16 %v507
        %v1127 = vunpack.c.h.b16 %v507
        %v1128 = vunpack.c.l.b16 %v508
        %v1129 = vunpack.c.h.b16 %v508
        %v1130 = vunpack.c.l.b16 %v509
        %v1131 = vunpack.c.h.b16 %v509
        %v1132 = vunpack.c.l.b16 %v510
        %v1133 = vunpack.c.l.b16 %v511
        %v1134 = vunpack.c.h.b16 %v511
        %v1135 = vunpack.c.l.b16 %v512
        %v1136 = vunpack.c.h.b16 %v512
        %v1137 = vunpack.c.l.b16 %v513
        %v1138 = vunpack.c.h.b16 %v513
        %v1139 = vunpack.c.l.b16 %v514
        %v1140 = vunpack.c.h.b16 %v514
        %v1141 = vunpack.c.l.b16 %v515
        %v1142 = vunpack.c.l.b16 %v516
        %v1143 = vunpack.c.h.b16 %v516
        %v1144 = vunpack.c.l.b16 %v517
        %v1145 = vunpack.c.h.b16 %v517
        %v1146 = vunpack.c.l.b16 %v518
        %v1147 = vunpack.c.h.b16 %v518
        %v1148 = vunpack.c.l.b16 %v519
        %v1149 = vunpack.c.h.b16 %v519
        %v1150 = vunpack.c.l.b16 %v520
        %v1151 = vunpack.c.l.b16 %v521
        %v1152 = vunpack.c.h.b16 %v521
        %v1153 = vunpack.c.l.b16 %v522
        %v1154 = vunpack.c.h.b16 %v522
        %v1155 = vunpack.c.l.b16 %v523
        %v1156 = vunpack.c.h.b16 %v523
        %v1157 = vunpack.c.l.b16 %v524
        %v1158 = vunpack.c.h.b16 %v524
        %v1159 = vunpack.c.l.b16 %v525
        %v1160 = vunpack.c.l.b16 %v526
        %v1161 = vunpack.c.h.b16 %v526
        %v1162 = vunpack.c.l.b16 %v527
        %v1163 = vunpack.c.h.b16 %v527
        %v1164 = vunpack.c.l.b16 %v528
        %v1165 = vunpack.c.h.b16 %v528
        %v1166 = vunpack.c.l.b16 %v529
        %v1167 = vunpack.c.h.b16 %v529
        %v1168 = vunpack.c.l.b16 %v530
        %v1169 = vunpack.c.l.b16 %v531
        %v1170 = vunpack.c.h.b16 %v531
        %v1171 = vunpack.c.l.b16 %v532
        %v1172 = vunpack.c.h.b16 %v532
        %v1173 = vunpack.c.l.b16 %v533
        %v1174 = vunpack.c.h.b16 %v533
        %v1175 = vunpack.c.l.b16 %v534
        %v1176 = vunpack.c.h.b16 %v534
        %v1177 = vunpack.c.l.b16 %v535
        %v1178 = vunpack.c.l.b16 %v536
        %v1179 = vunpack.c.h.b16 %v536
        %v1180 = vunpack.c.l.b16 %v537
        %v1181 = vunpack.c.h.b16 %v537
        %v1182 = vunpack.c.l.b16 %v538
        %v1183 = vunpack.c.h.b16 %v538
        %v1184 = vunpack.c.l.b16 %v539
        %v1185 = vunpack.c.h.b16 %v539
        %v1186 = vunpack.c.l.b16 %v540
        %v1187 = vunpack.c.l.b16 %v541
        %v1188 = vunpack.c.h.b16 %v541
        %v1189 = vunpack.c.l.b16 %v542
        %v1190 = vunpack.c.h.b16 %v542
        %v1191 = vunpack.c.l.b16 %v543
        %v1192 = vunpack.c.h.b16 %v543
        %v1193 = vunpack.c.l.b16 %v544
        %v1194 = vunpack.c.h.b16 %v544
        %v1195 = vunpack.c.l.b16 %v545
        %v1196 = vunpack.c.l.b16 %v546
        %v1197 = vunpack.c.h.b16 %v546
        %v1198 = vunpack.c.l.b16 %v547
        %v1199 = vunpack.c.h.b16 %v547
        %v1200 = vunpack.c.l.b16 %v548
        %v1201 = vunpack.c.h.b16 %v548
        %v1202 = vunpack.c.l.b16 %v549
        %v1203 = vunpack.c.h.b16 %v549
        %v1204 = vunpack.c.l.b16 %v550
        %v1205 = vunpack.c.l.b16 %v551
        %v1206 = vunpack.c.h.b16 %v551
        %v1207 = vunpack.c.l.b16 %v552
        %v1208 = vunpack.c.h.b16 %v552
        %v1209 = vunpack.c.l.b16 %v553
        %v1210 = vunpack.c.h.b16 %v553
        %v1211 = vunpack.c.l.b16 %v554
        %v1212 = vunpack.c.h.b16 %v554
        %v1213 = vunpack.c.l.b16 %v555
        %v1214 = vunpack.c.l.b16 %v556
        %v1215 = vunpack.c.h.b16 %v556
        %v1216 = vunpack.c.l.b16 %v557
        %v1217 = vunpack.c.h.b16 %v557
        %v1218 = vunpack.c.l.b16 %v558
        %v1219 = vunpack.c.h.b16 %v558
        %v1220 = vunpack.c.l.b16 %v559
        %v1221 = vunpack.c.h.b16 %v559
        %v1222 = vunpack.c.l.b16 %v560
        %v1223 = vunpack.c.l.b16 %v561
        %v1224 = vunpack.c.h.b16 %v561
        %v1225 = vunpack.c.l.b16 %v562
        %v1226 = vunpack.c.h.b16 %v562
        %v1227 = vunpack.c.l.b16 %v563
        %v1228 = vunpack.c.h.b16 %v563
        %v1229 = vunpack.c.l.b16 %v564
        %v1230 = vunpack.c.h.b16 %v564
        %v1231 = vunpack.c.l.b16 %v565
        %v1232 = vunpack.c.l.b16 %v566
        %v1233 = vunpack.c.h.b16 %v566
        %v1234 = vunpack.c.l.b16 %v567
        %v1235 = vunpack.c.h.b16 %v567
        %v1236 = vunpack.c.l.b16 %v568
        %v1237 = vunpack.c.h.b16 %v568
        %v1238 = vunpack.c.l.b16 %v569
        %v1239 = vunpack.c.h.b16 %v569
        %v1240 = vunpack.c.l.b16 %v570
        %v1241 = vunpack.c.l.b16 %v571
        %v1242 = vunpack.c.h.b16 %v571
        %v1243 = vunpack.c.l.b16 %v572
        %v1244 = vunpack.c.h.b16 %v572
        %v1245 = vunpack.c.l.b16 %v573
        %v1246 = vunpack.c.h.b16 %v573
        %v1247 = vunpack.c.l.b16 %v574
        %v1248 = vunpack.c.h.b16 %v574
        %v1249 = vunpack.c.l.b16 %v575
        %v1250 = vunpack.c.l.b16 %v576
        %v1251 = vunpack.c.h.b16 %v576
        %v1252 = vunpack.c.l.b16 %v577
        %v1253 = vunpack.c.h.b16 %v577
        %v1254 = vunpack.c.l.b16 %v578
        %v1255 = vunpack.c.h.b16 %v578
        %v1256 = vunpack.c.l.b16 %v579
        %v1257 = vunpack.c.h.b16 %v579
        %v1258 = vunpack.c.l.b16 %v580
        %v1259 = vunpack.c.l.b16 %v581
        %v1260 = vunpack.c.h.b16 %v581
        %v1261 = vunpack.c.l.b16 %v582
        %v1262 = vunpack.c.h.b16 %v582
        %v1263 = vunpack.c.l.b16 %v583
        %v1264 = vunpack.c.h.b16 %v583
        %v1265 = vunpack.c.l.b16 %v584
        %v1266 = vunpack.c.h.b16 %v584
        %v1267 = vunpack.c.l.b16 %v585
        %v1268 = vunpack.c.l.b16 %v586
        %v1269 = vunpack.c.h.b16 %v586
        %v1270 = vunpack.c.l.b16 %v587
        %v1271 = vunpack.c.h.b16 %v587
        %v1272 = vunpack.c.l.b16 %v588
        %v1273 = vunpack.c.h.b16 %v588
        %v1274 = vunpack.c.l.b16 %v589
        %v1275 = vunpack.c.h.b16 %v589
        %v1276 = vunpack.c.l.b16 %v590
        %v1277 = vunpack.c.l.b16 %v591
        %v1278 = vunpack.c.h.b16 %v591
        %v1279 = vunpack.c.l.b16 %v592
        %v1280 = vunpack.c.h.b16 %v592
        %v1281 = vunpack.c.l.b16 %v593
        %v1282 = vunpack.c.h.b16 %v593
        %v1283 = vunpack.c.l.b16 %v594
        %v1284 = vunpack.c.h.b16 %v594
        %v1285 = vunpack.c.l.b16 %v595
        %v1286 = vunpack.c.l.b16 %v596
        %v1287 = vunpack.c.h.b16 %v596
        %v1288 = vunpack.c.l.b16 %v597
        %v1289 = vunpack.c.h.b16 %v597
        %v1290 = vunpack.c.l.b16 %v598
        %v1291 = vunpack.c.h.b16 %v598
        %v1292 = vunpack.c.l.b16 %v599
        %v1293 = vunpack.c.h.b16 %v599
        %v1294 = vunpack.c.l.b16 %v600
        %v1295 = vpack.c.b16 %v872, %v863
        %v1296 = vpack.c.b16 %v873, %v864
        %v1297 = vpack.c.b16 %v874, %v865
        %v1298 = vpack.c.b16 %v875, %v866
        %v1299 = vpack.c.b16 %v876, %v867
        %v1300 = vpack.c.b16 %v877, %v868
        %v1301 = vpack.c.b16 %v878, %v869
        %v1302 = vpack.c.b16 %v879, %v870
        %v1303 = vpack.c.b16 %v880, %v871
        %v1304 = vpack.c.b16 %v890, %v881
        %v1305 = vpack.c.b16 %v891, %v882
        %v1306 = vpack.c.b16 %v892, %v883
        %v1307 = vpack.c.b16 %v893, %v884
        %v1308 = vpack.c.b16 %v894, %v885
        %v1309 = vpack.c.b16 %v895, %v886
        %v1310 = vpack.c.b16 %v896, %v887
        %v1311 = vpack.c.b16 %v897, %v888
        %v1312 = vpack.c.b16 %v898, %v889
        %v1313 = vpack.c.b16 %v908, %v899
        %v1314 = vpack.c.b16 %v909, %v900
        %v1315 = vpack.c.b16 %v910, %v901
        %v1316 = vpack.c.b16 %v911, %v902
        %v1317 = vpack.c.b16 %v912, %v903
        %v1318 = vpack.c.b16 %v913, %v904
        %v1319 = vpack.c.b16 %v914, %v905
        %v1320 = vpack.c.b16 %v915, %v906
        %v1321 = vpack.c.b16 %v916, %v907
        %v1322 = vpack.c.b16 %v926, %v917
        %v1323 = vpack.c.b16 %v927, %v918
        %v1324 = vpack.c.b16 %v928, %v919
        %v1325 = vpack.c.b16 %v929, %v920
        %v1326 = vpack.c.b16 %v930, %v921
        %v1327 = vpack.c.b16 %v931, %v922
        %v1328 = vpack.c.b16 %v932, %v923
        %v1329 = vpack.c.b16 %v933, %v924
        %v1330 = vpack.c.b16 %v934, %v925
        %v1331 = vpack.c.b16 %v944, %v935
        %v1332 = vpack.c.b16 %v945, %v936
        %v1333 = vpack.c.b16 %v946, %v937
        %v1334 = vpack.c.b16 %v947, %v938
        %v1335 = vpack.c.b16 %v948, %v939
        %v1336 = vpack.c.b16 %v949, %v940
        %v1337 = vpack.c.b16 %v950, %v941
        %v1338 = vpack.c.b16 %v951, %v942
        %v1339 = vpack.c.b16 %v952, %v943
        %v1340 = vpack.c.b16 %v962, %v953
        %v1341 = vpack.c.b16 %v963, %v954
        %v1342 = vpack.c.b16 %v964, %v955
        %v1343 = vpack.c.b16 %v965, %v956
        %v1344 = vpack.c.b16 %v966, %v957
        %v1345 = vpack.c.b16 %v967, %v958
        %v1346 = vpack.c.b16 %v968, %v959
        %v1347 = vpack.c.b16 %v969, %v960
        %v1348 = vpack.c.b16 %v970, %v961
        %v1349 = vpack.c.b16 %v980, %v971
        %v1350 = vpack.c.b16 %v981, %v972
        %v1351 = vpack.c.b16 %v982, %v973
        %v1352 = vpack.c.b16 %v983, %v974
        %v1353 = vpack.c.b16 %v984, %v975
        %v1354 = vpack.c.b16 %v985, %v976
        %v1355 = vpack.c.b16 %v986, %v977
        %v1356 = vpack.c.b16 %v987, %v978
        %v1357 = vpack.c.b16 %v988, %v979
        %v1358 = vpack.c.b16 %v998, %v989
        %v1359 = vpack.c.b16 %v999, %v990
        %v1360 = vpack.c.b16 %v1000, %v991
        %v1361 = vpack.c.b16 %v1001, %v992
        %v1362 = vpack.c.b16 %v1002, %v993
        %v1363 = vpack.c.b16 %v1003, %v994
        %v1364 = vpack.c.b16 %v1004, %v995
        %v1365 = vpack.c.b16 %v1005, %v996
        %v1366 = vpack.c.b16 %v1006, %v997
        %v1367 = vpack.c.b16 %v1016, %v1007
        %v1368 = vpack.c.b16 %v1017, %v1008
        %v1369 = vpack.c.b16 %v1018, %v1009
        %v1370 = vpack.c.b16 %v1019, %v1010
        %v1371 = vpack.c.b16 %v1020, %v1011
        %v1372 = vpack.c.b16 %v1021, %v1012
        %v1373 = vpack.c.b16 %v1022, %v1013
        %v1374 = vpack.c.b16 %v1023, %v1014
        %v1375 = vpack.c.b16 %v1024, %v1015
        %v1376 = vpack.c.b16 %v1034, %v1025
        %v1377 = vpack.c.b16 %v1035, %v1026
        %v1378 = vpack.c.b16 %v1036, %v1027
        %v1379 = vpack.c.b16 %v1037, %v1028
        %v1380 = vpack.c.b16 %v1038, %v1029
        %v1381 = vpack.c.b16 %v1039, %v1030
        %v1382 = vpack.c.b16 %v1040, %v1031
        %v1383 = vpack.c.b16 %v1041, %v1032
        %v1384 = vpack.c.b16 %v1042, %v1033
        %v1385 = vpack.c.b16 %v1052, %v1043
        %v1386 = vpack.c.b16 %v1053, %v1044
        %v1387 = vpack.c.b16 %v1054, %v1045
        %v1388 = vpack.c.b16 %v1055, %v1046
        %v1389 = vpack.c.b16 %v1056, %v1047
        %v1390 = vpack.c.b16 %v1057, %v1048
        %v1391 = vpack.c.b16 %v1058, %v1049
        %v1392 = vpack.c.b16 %v1059, %v1050
        %v1393 = vpack.c.b16 %v1060, %v1051
        %v1394 = vpack.c.b16 %v1070, %v1061
        %v1395 = vpack.c.b16 %v1071, %v1062
        %v1396 = vpack.c.b16 %v1072, %v1063
        %v1397 = vpack.c.b16 %v1073, %v1064
        %v1398 = vpack.c.b16 %v1074, %v1065
        %v1399 = vpack.c.b16 %v1075, %v1066
        %v1400 = vpack.c.b16 %v1076, %v1067
        %v1401 = vpack.c.b16 %v1077, %v1068
        %v1402 = vpack.c.b16 %v1078, %v1069
        %v1403 = vpack.c.b16 %v1088, %v1079
        %v1404 = vpack.c.b16 %v1089, %v1080
        %v1405 = vpack.c.b16 %v1090, %v1081
        %v1406 = vpack.c.b16 %v1091, %v1082
        %v1407 = vpack.c.b16 %v1092, %v1083
        %v1408 = vpack.c.b16 %v1093, %v1084
        %v1409 = vpack.c.b16 %v1094, %v1085
        %v1410 = vpack.c.b16 %v1095, %v1086
        %v1411 = vpack.c.b16 %v1096, %v1087
        %v1412 = vpack.c.b16 %v1106, %v1097
        %v1413 = vpack.c.b16 %v1107, %v1098
        %v1414 = vpack.c.b16 %v1108, %v1099
        %v1415 = vpack.c.b16 %v1109, %v1100
        %v1416 = vpack.c.b16 %v1110, %v1101
        %v1417 = vpack.c.b16 %v1111, %v1102
        %v1418 = vpack.c.b16 %v1112, %v1103
        %v1419 = vpack.c.b16 %v1113, %v1104
        %v1420 = vpack.c.b16 %v1114, %v1105
        %v1421 = vpack.c.b16 %v1124, %v1115
        %v1422 = vpack.c.b16 %v1125, %v1116
        %v1423 = vpack.c.b16 %v1126, %v1117
        %v1424 = vpack.c.b16 %v1127, %v1118
        %v1425 = vpack.c.b16 %v1128, %v1119
        %v1426 = vpack.c.b16 %v1129, %v1120
        %v1427 = vpack.c.b16 %v1130, %v1121
        %v1428 = vpack.c.b16 %v1131, %v1122
        %v1429 = vpack.c.b16 %v1132, %v1123
        %v1430 = vpack.c.b16 %v1142, %v1133
        %v1431 = vpack.c.b16 %v1143, %v1134
        %v1432 = vpack.c.b16 %v1144, %v1135
        %v1433 = vpack.c.b16 %v1145, %v1136
        %v1434 = vpack.c.b16 %v1146, %v1137
        %v1435 = vpack.c.b16 %v1147, %v1138
        %v1436 = vpack.c.b16 %v1148, %v1139
        %v1437 = vpack.c.b16 %v1149, %v1140
        %v1438 = vpack.c.b16 %v1150, %v1141
        %v1439 = vpack.c.b16 %v1160, %v1151
        %v1440 = vpack.c.b16 %v1161, %v1152
        %v1441 = vpack.c.b16 %v1162, %v1153
        %v1442 = vpack.c.b16 %v1163, %v1154
        %v1443 = vpack.c.b16 %v1164, %v1155
        %v1444 = vpack.c.b16 %v1165, %v1156
        %v1445 = vpack.c.b16 %v1166, %v1157
        %v1446 = vpack.c.b16 %v1167, %v1158
        %v1447 = vpack.c.b16 %v1168, %v1159
        %v1448 = vpack.c.b16 %v1178, %v1169
        %v1449 = vpack.c.b16 %v1179, %v1170
        %v1450 = vpack.c.b16 %v1180, %v1171
        %v1451 = vpack.c.b16 %v1181, %v1172
        %v1452 = vpack.c.b16 %v1182, %v1173
        %v1453 = vpack.c.b16 %v1183, %v1174
        %v1454 = vpack.c.b16 %v1184, %v1175
        %v1455 = vpack.c.b16 %v1185, %v1176
        %v1456 = vpack.c.b16 %v1186, %v1177
        %v1457 = vpack.c.b16 %v1196, %v1187
        %v1458 = vpack.c.b16 %v1197, %v1188
        %v1459 = vpack.c.b16 %v1198, %v1189
        %v1460 = vpack.c.b16 %v1199, %v1190
        %v1461 = vpack.c.b16 %v1200, %v1191
        %v1462 = vpack.c.b16 %v1201, %v1192
        %v1463 = vpack.c.b16 %v1202, %v1193
        %v1464 = vpack.c.b16 %v1203, %v1194
        %v1465 = vpack.c.b16 %v1204, %v1195
        %v1466 = vpack.c.b16 %v1214, %v1205
        %v1467 = vpack.c.b16 %v1215, %v1206
        %v1468 = vpack.c.b16 %v1216, %v1207
        %v1469 = vpack.c.b16 %v1217, %v1208
        %v1470 = vpack.c.b16 %v1218, %v1209
        %v1471 = vpack.c.b16 %v1219, %v1210
        %v1472 = vpack.c.b16 %v1220, %v1211
        %v1473 = vpack.c.b16 %v1221, %v1212
        %v1474 = vpack.c.b16 %v1222, %v1213
        %v1475 = vpack.c.b16 %v1232, %v1223
        %v1476 = vpack.c.b16 %v1233, %v1224
        %v1477 = vpack.c.b16 %v1234, %v1225
        %v1478 = vpack.c.b16 %v1235, %v1226
        %v1479 = vpack.c.b16 %v1236, %v1227
        %v1480 = vpack.c.b16 %v1237, %v1228
        %v1481 = vpack.c.b16 %v1238, %v1229
        %v1482 = vpack.c.b16 %v1239, %v1230
        %v1483 = vpack.c.b16 %v1240, %v1231
        %v1484 = vpack.c.b16 %v1250, %v1241
        %v1485 = vpack.c.b16 %v1251, %v1242
        %v1486 = vpack.c.b16 %v1252, %v1243
        %v1487 = vpack.c.b16 %v1253, %v1244
        %v1488 = vpack.c.b16 %v1254, %v1245
        %v1489 = vpack.c.b16 %v1255, %v1246
        %v1490 = vpack.c.b16 %v1256, %v1247
        %v1491 = vpack.c.b16 %v1257, %v1248
        %v1492 = vpack.c.b16 %v1258, %v1249
        %v1493 = vpack.c.b16 %v1268, %v1259
        %v1494 = vpack.c.b16 %v1269, %v1260
        %v1495 = vpack.c.b16 %v1270, %v1261
        %v1496 = vpack.c.b16 %v1271, %v1262
        %v1497 = vpack.c.b16 %v1272, %v1263
        %v1498 = vpack.c.b16 %v1273, %v1264
        %v1499 = vpack.c.b16 %v1274, %v1265
        %v1500 = vpack.c.b16 %v1275, %v1266
        %v1501 = vpack.c.b16 %v1276, %v1267
        %v1502 = vpack.c.b16 %v1286, %v1277
        %v1503 = vpack.c.b16 %v1287, %v1278
        %v1504 = vpack.c.b16 %v1288, %v1279
        %v1505 = vpack.c.b16 %v1289, %v1280
        %v1506 = vpack.c.b16 %v1290, %v1281
        %v1507 = vpack.c.b16 %v1291, %v1282
        %v1508 = vpack.c.b16 %v1292, %v1283
        %v1509 = vpack.c.b16 %v1293, %v1284
        %v1510 = vpack.c.b16 %v1294, %v1285
        %1727 = vmatpush.bf16.msra.mxu0 %v1358
        %1728 = vmatpush.bf16.msra.mxu0 %v1349
        %1729 = vmatpush.bf16.msra.mxu0 %v1340
        %1730 = vmatpush.bf16.msra.mxu0 %v1331
        %1731 = vmatpush.bf16.msra.mxu0 %v1322
        %1732 = vmatpush.bf16.msra.mxu0 %v1313
        %1733 = vmatpush.bf16.msra.mxu0 %v1304
        %1734 = vmatpush.bf16.msra.mxu0 %v1295
        %1735 = vmatmul.bf16.gmra.mxu0 %v358
        %v1736 = vpop.f32.mrf.mxu0
        %v1737 = vadd.f32 %v605, %v1736
        %v1738 = vpop.f32.mrf.mxu0
        %1739 = vdwg.mxu0
        %1740 = vmatpush.bf16.msra.mxu0 %v1430
        %1741 = vmatpush.bf16.msra.mxu0 %v1421
        %1742 = vmatpush.bf16.msra.mxu0 %v1412
        %1743 = vmatpush.bf16.msra.mxu0 %v1403
        %1744 = vmatpush.bf16.msra.mxu0 %v1394
        %1745 = vmatpush.bf16.msra.mxu0 %v1385
        %1746 = vmatpush.bf16.msra.mxu0 %v1376
        %1747 = vmatpush.bf16.msra.mxu0 %v1367
        %1748 = vmatmul.bf16.gmra.mxu0 %v359
        %v1749 = vpop.f32.mrf.mxu0
        %v1750 = vadd.f32 %v1737, %v1749
        %v1751 = vpop.f32.mrf.mxu0
        %1752 = vdwg.mxu0
        %1753 = vmatpush.bf16.msra.mxu0 %v1502
        %1754 = vmatpush.bf16.msra.mxu0 %v1493
        %1755 = vmatpush.bf16.msra.mxu0 %v1484
        %1756 = vmatpush.bf16.msra.mxu0 %v1475
        %1757 = vmatpush.bf16.msra.mxu0 %v1466
        %1758 = vmatpush.bf16.msra.mxu0 %v1457
        %1759 = vmatpush.bf16.msra.mxu0 %v1448
        %1760 = vmatpush.bf16.msra.mxu0 %v1439
        %1761 = vmatmul.bf16.gmra.mxu0 %v360
        %v1762 = vpop.f32.mrf.mxu0
        %v1763 = vadd.f32 %v1750, %v1762
        %v1764 = vpop.f32.mrf.mxu0
        %1765 = vdwg.mxu0
        %1766 = vmatpush.bf16.msra.mxu0 %v1359
        %1767 = vmatpush.bf16.msra.mxu0 %v1350
        %1768 = vmatpush.bf16.msra.mxu0 %v1341
        %1769 = vmatpush.bf16.msra.mxu0 %v1332
        %1770 = vmatpush.bf16.msra.mxu0 %v1323
        %1771 = vmatpush.bf16.msra.mxu0 %v1314
        %1772 = vmatpush.bf16.msra.mxu0 %v1305
        %1773 = vmatpush.bf16.msra.mxu0 %v1296
        %1774 = vmatmul.bf16.gmra.mxu0 %v358
        %v1775 = vpop.f32.mrf.mxu0
        %v1776 = vadd.f32 %v606, %v1775
        %v1777 = vpop.f32.mrf.mxu0
        %1778 = vdwg.mxu0
        %1779 = vmatpush.bf16.msra.mxu0 %v1431
        %1780 = vmatpush.bf16.msra.mxu0 %v1422
        %1781 = vmatpush.bf16.msra.mxu0 %v1413
        %1782 = vmatpush.bf16.msra.mxu0 %v1404
        %1783 = vmatpush.bf16.msra.mxu0 %v1395
        %1784 = vmatpush.bf16.msra.mxu0 %v1386
        %1785 = vmatpush.bf16.msra.mxu0 %v1377
        %1786 = vmatpush.bf16.msra.mxu0 %v1368
        %1787 = vmatmul.bf16.gmra.mxu0 %v359
        %v1788 = vpop.f32.mrf.mxu0
        %v1789 = vadd.f32 %v1776, %v1788
        %v1790 = vpop.f32.mrf.mxu0
        %1791 = vdwg.mxu0
        %1792 = vmatpush.bf16.msra.mxu0 %v1503
        %1793 = vmatpush.bf16.msra.mxu0 %v1494
        %1794 = vmatpush.bf16.msra.mxu0 %v1485
        %1795 = vmatpush.bf16.msra.mxu0 %v1476
        %1796 = vmatpush.bf16.msra.mxu0 %v1467
        %1797 = vmatpush.bf16.msra.mxu0 %v1458
        %1798 = vmatpush.bf16.msra.mxu0 %v1449
        %1799 = vmatpush.bf16.msra.mxu0 %v1440
        %1800 = vmatmul.bf16.gmra.mxu0 %v360
        %v1801 = vpop.f32.mrf.mxu0
        %v1802 = vadd.f32 %v1789, %v1801
        %v1803 = vpop.f32.mrf.mxu0
        %1804 = vdwg.mxu0
        %1805 = vmatpush.bf16.msra.mxu0 %v1360
        %1806 = vmatpush.bf16.msra.mxu0 %v1351
        %1807 = vmatpush.bf16.msra.mxu0 %v1342
        %1808 = vmatpush.bf16.msra.mxu0 %v1333
        %1809 = vmatpush.bf16.msra.mxu0 %v1324
        %1810 = vmatpush.bf16.msra.mxu0 %v1315
        %1811 = vmatpush.bf16.msra.mxu0 %v1306
        %1812 = vmatpush.bf16.msra.mxu0 %v1297
        %1813 = vmatmul.bf16.gmra.mxu0 %v358
        %v1814 = vpop.f32.mrf.mxu0
        %v1815 = vadd.f32 %v607, %v1814
        %v1816 = vpop.f32.mrf.mxu0
        %1817 = vdwg.mxu0
        %1818 = vmatpush.bf16.msra.mxu0 %v1432
        %1819 = vmatpush.bf16.msra.mxu0 %v1423
        %1820 = vmatpush.bf16.msra.mxu0 %v1414
        %1821 = vmatpush.bf16.msra.mxu0 %v1405
        %1822 = vmatpush.bf16.msra.mxu0 %v1396
        %1823 = vmatpush.bf16.msra.mxu0 %v1387
        %1824 = vmatpush.bf16.msra.mxu0 %v1378
        %1825 = vmatpush.bf16.msra.mxu0 %v1369
        %1826 = vmatmul.bf16.gmra.mxu0 %v359
        %v1827 = vpop.f32.mrf.mxu0
        %v1828 = vadd.f32 %v1815, %v1827
        %v1829 = vpop.f32.mrf.mxu0
        %1830 = vdwg.mxu0
        %1831 = vmatpush.bf16.msra.mxu0 %v1504
        %1832 = vmatpush.bf16.msra.mxu0 %v1495
        %1833 = vmatpush.bf16.msra.mxu0 %v1486
        %1834 = vmatpush.bf16.msra.mxu0 %v1477
        %1835 = vmatpush.bf16.msra.mxu0 %v1468
        %1836 = vmatpush.bf16.msra.mxu0 %v1459
        %1837 = vmatpush.bf16.msra.mxu0 %v1450
        %1838 = vmatpush.bf16.msra.mxu0 %v1441
        %1839 = vmatmul.bf16.gmra.mxu0 %v360
        %v1840 = vpop.f32.mrf.mxu0
        %v1841 = vadd.f32 %v1828, %v1840
        %v1842 = vpop.f32.mrf.mxu0
        %1843 = vdwg.mxu0
        %1844 = vmatpush.bf16.msra.mxu0 %v1361
        %1845 = vmatpush.bf16.msra.mxu0 %v1352
        %1846 = vmatpush.bf16.msra.mxu0 %v1343
        %1847 = vmatpush.bf16.msra.mxu0 %v1334
        %1848 = vmatpush.bf16.msra.mxu0 %v1325
        %1849 = vmatpush.bf16.msra.mxu0 %v1316
        %1850 = vmatpush.bf16.msra.mxu0 %v1307
        %1851 = vmatpush.bf16.msra.mxu0 %v1298
        %1852 = vmatmul.bf16.gmra.mxu0 %v358
        %v1853 = vpop.f32.mrf.mxu0
        %v1854 = vadd.f32 %v608, %v1853
        %v1855 = vpop.f32.mrf.mxu0
        %1856 = vdwg.mxu0
        %1857 = vmatpush.bf16.msra.mxu0 %v1433
        %1858 = vmatpush.bf16.msra.mxu0 %v1424
        %1859 = vmatpush.bf16.msra.mxu0 %v1415
        %1860 = vmatpush.bf16.msra.mxu0 %v1406
        %1861 = vmatpush.bf16.msra.mxu0 %v1397
        %1862 = vmatpush.bf16.msra.mxu0 %v1388
        %1863 = vmatpush.bf16.msra.mxu0 %v1379
        %1864 = vmatpush.bf16.msra.mxu0 %v1370
        %1865 = vmatmul.bf16.gmra.mxu0 %v359
        %v1866 = vpop.f32.mrf.mxu0
        %v1867 = vadd.f32 %v1854, %v1866
        %v1868 = vpop.f32.mrf.mxu0
        %1869 = vdwg.mxu0
        %1870 = vmatpush.bf16.msra.mxu0 %v1505
        %1871 = vmatpush.bf16.msra.mxu0 %v1496
        %1872 = vmatpush.bf16.msra.mxu0 %v1487
        %1873 = vmatpush.bf16.msra.mxu0 %v1478
        %1874 = vmatpush.bf16.msra.mxu0 %v1469
        %1875 = vmatpush.bf16.msra.mxu0 %v1460
        %1876 = vmatpush.bf16.msra.mxu0 %v1451
        %1877 = vmatpush.bf16.msra.mxu0 %v1442
        %1878 = vmatmul.bf16.gmra.mxu0 %v360
        %v1879 = vpop.f32.mrf.mxu0
        %v1880 = vadd.f32 %v1867, %v1879
        %v1881 = vpop.f32.mrf.mxu0
        %1882 = vdwg.mxu0
        %1883 = vmatpush.bf16.msra.mxu0 %v1362
        %1884 = vmatpush.bf16.msra.mxu0 %v1353
        %1885 = vmatpush.bf16.msra.mxu0 %v1344
        %1886 = vmatpush.bf16.msra.mxu0 %v1335
        %1887 = vmatpush.bf16.msra.mxu0 %v1326
        %1888 = vmatpush.bf16.msra.mxu0 %v1317
        %1889 = vmatpush.bf16.msra.mxu0 %v1308
        %1890 = vmatpush.bf16.msra.mxu0 %v1299
        %1891 = vmatmul.bf16.gmra.mxu0 %v358
        %v1892 = vpop.f32.mrf.mxu0
        %v1893 = vadd.f32 %v609, %v1892
        %v1894 = vpop.f32.mrf.mxu0
        %1895 = vdwg.mxu0
        %1896 = vmatpush.bf16.msra.mxu0 %v1434
        %1897 = vmatpush.bf16.msra.mxu0 %v1425
        %1898 = vmatpush.bf16.msra.mxu0 %v1416
        %1899 = vmatpush.bf16.msra.mxu0 %v1407
        %1900 = vmatpush.bf16.msra.mxu0 %v1398
        %1901 = vmatpush.bf16.msra.mxu0 %v1389
        %1902 = vmatpush.bf16.msra.mxu0 %v1380
        %1903 = vmatpush.bf16.msra.mxu0 %v1371
        %1904 = vmatmul.bf16.gmra.mxu0 %v359
        %v1905 = vpop.f32.mrf.mxu0
        %v1906 = vadd.f32 %v1893, %v1905
        %v1907 = vpop.f32.mrf.mxu0
        %1908 = vdwg.mxu0
        %1909 = vmatpush.bf16.msra.mxu0 %v1506
        %1910 = vmatpush.bf16.msra.mxu0 %v1497
        %1911 = vmatpush.bf16.msra.mxu0 %v1488
        %1912 = vmatpush.bf16.msra.mxu0 %v1479
        %1913 = vmatpush.bf16.msra.mxu0 %v1470
        %1914 = vmatpush.bf16.msra.mxu0 %v1461
        %1915 = vmatpush.bf16.msra.mxu0 %v1452
        %1916 = vmatpush.bf16.msra.mxu0 %v1443
        %1917 = vmatmul.bf16.gmra.mxu0 %v360
        %v1918 = vpop.f32.mrf.mxu0
        %v1919 = vadd.f32 %v1906, %v1918
        %v1920 = vpop.f32.mrf.mxu0
        %1921 = vdwg.mxu0
        %1922 = vmatpush.bf16.msra.mxu0 %v1363
        %1923 = vmatpush.bf16.msra.mxu0 %v1354
        %1924 = vmatpush.bf16.msra.mxu0 %v1345
        %1925 = vmatpush.bf16.msra.mxu0 %v1336
        %1926 = vmatpush.bf16.msra.mxu0 %v1327
        %1927 = vmatpush.bf16.msra.mxu0 %v1318
        %1928 = vmatpush.bf16.msra.mxu0 %v1309
        %1929 = vmatpush.bf16.msra.mxu0 %v1300
        %1930 = vmatmul.bf16.gmra.mxu0 %v358
        %v1931 = vpop.f32.mrf.mxu0
        %v1932 = vadd.f32 %v610, %v1931
        %v1933 = vpop.f32.mrf.mxu0
        %1934 = vdwg.mxu0
        %1935 = vmatpush.bf16.msra.mxu0 %v1435
        %1936 = vmatpush.bf16.msra.mxu0 %v1426
        %1937 = vmatpush.bf16.msra.mxu0 %v1417
        %1938 = vmatpush.bf16.msra.mxu0 %v1408
        %1939 = vmatpush.bf16.msra.mxu0 %v1399
        %1940 = vmatpush.bf16.msra.mxu0 %v1390
        %1941 = vmatpush.bf16.msra.mxu0 %v1381
        %1942 = vmatpush.bf16.msra.mxu0 %v1372
        %1943 = vmatmul.bf16.gmra.mxu0 %v359
        %v1944 = vpop.f32.mrf.mxu0
        %v1945 = vadd.f32 %v1932, %v1944
        %v1946 = vpop.f32.mrf.mxu0
        %1947 = vdwg.mxu0
        %1948 = vmatpush.bf16.msra.mxu0 %v1507
        %1949 = vmatpush.bf16.msra.mxu0 %v1498
        %1950 = vmatpush.bf16.msra.mxu0 %v1489
        %1951 = vmatpush.bf16.msra.mxu0 %v1480
        %1952 = vmatpush.bf16.msra.mxu0 %v1471
        %1953 = vmatpush.bf16.msra.mxu0 %v1462
        %1954 = vmatpush.bf16.msra.mxu0 %v1453
        %1955 = vmatpush.bf16.msra.mxu0 %v1444
        %1956 = vmatmul.bf16.gmra.mxu0 %v360
        %v1957 = vpop.f32.mrf.mxu0
        %v1958 = vadd.f32 %v1945, %v1957
        %v1959 = vpop.f32.mrf.mxu0
        %1960 = vdwg.mxu0
        %1961 = vmatpush.bf16.msra.mxu0 %v1364
        %1962 = vmatpush.bf16.msra.mxu0 %v1355
        %1963 = vmatpush.bf16.msra.mxu0 %v1346
        %1964 = vmatpush.bf16.msra.mxu0 %v1337
        %1965 = vmatpush.bf16.msra.mxu0 %v1328
        %1966 = vmatpush.bf16.msra.mxu0 %v1319
        %1967 = vmatpush.bf16.msra.mxu0 %v1310
        %1968 = vmatpush.bf16.msra.mxu0 %v1301
        %1969 = vmatmul.bf16.gmra.mxu0 %v358
        %v1970 = vpop.f32.mrf.mxu0
        %v1971 = vadd.f32 %v611, %v1970
        %v1972 = vpop.f32.mrf.mxu0
        %1973 = vdwg.mxu0
        %1974 = vmatpush.bf16.msra.mxu0 %v1436
        %1975 = vmatpush.bf16.msra.mxu0 %v1427
        %1976 = vmatpush.bf16.msra.mxu0 %v1418
        %1977 = vmatpush.bf16.msra.mxu0 %v1409
        %1978 = vmatpush.bf16.msra.mxu0 %v1400
        %1979 = vmatpush.bf16.msra.mxu0 %v1391
        %1980 = vmatpush.bf16.msra.mxu0 %v1382
        %1981 = vmatpush.bf16.msra.mxu0 %v1373
        %1982 = vmatmul.bf16.gmra.mxu0 %v359
        %v1983 = vpop.f32.mrf.mxu0
        %v1984 = vadd.f32 %v1971, %v1983
        %v1985 = vpop.f32.mrf.mxu0
        %1986 = vdwg.mxu0
        %1987 = vmatpush.bf16.msra.mxu0 %v1508
        %1988 = vmatpush.bf16.msra.mxu0 %v1499
        %1989 = vmatpush.bf16.msra.mxu0 %v1490
        %1990 = vmatpush.bf16.msra.mxu0 %v1481
        %1991 = vmatpush.bf16.msra.mxu0 %v1472
        %1992 = vmatpush.bf16.msra.mxu0 %v1463
        %1993 = vmatpush.bf16.msra.mxu0 %v1454
        %1994 = vmatpush.bf16.msra.mxu0 %v1445
        %1995 = vmatmul.bf16.gmra.mxu0 %v360
        %v1996 = vpop.f32.mrf.mxu0
        %v1997 = vadd.f32 %v1984, %v1996
        %v1998 = vpop.f32.mrf.mxu0
        %1999 = vdwg.mxu0
        %2000 = vmatpush.bf16.msra.mxu0 %v1365
        %2001 = vmatpush.bf16.msra.mxu0 %v1356
        %2002 = vmatpush.bf16.msra.mxu0 %v1347
        %2003 = vmatpush.bf16.msra.mxu0 %v1338
        %2004 = vmatpush.bf16.msra.mxu0 %v1329
        %2005 = vmatpush.bf16.msra.mxu0 %v1320
        %2006 = vmatpush.bf16.msra.mxu0 %v1311
        %2007 = vmatpush.bf16.msra.mxu0 %v1302
        %2008 = vmatmul.bf16.gmra.mxu0 %v358
        %v2009 = vpop.f32.mrf.mxu0
        %v2010 = vadd.f32 %v612, %v2009
        %v2011 = vpop.f32.mrf.mxu0
        %2012 = vdwg.mxu0
        %2013 = vmatpush.bf16.msra.mxu0 %v1437
        %2014 = vmatpush.bf16.msra.mxu0 %v1428
        %2015 = vmatpush.bf16.msra.mxu0 %v1419
        %2016 = vmatpush.bf16.msra.mxu0 %v1410
        %2017 = vmatpush.bf16.msra.mxu0 %v1401
        %2018 = vmatpush.bf16.msra.mxu0 %v1392
        %2019 = vmatpush.bf16.msra.mxu0 %v1383
        %2020 = vmatpush.bf16.msra.mxu0 %v1374
        %2021 = vmatmul.bf16.gmra.mxu0 %v359
        %v2022 = vpop.f32.mrf.mxu0
        %v2023 = vadd.f32 %v2010, %v2022
        %v2024 = vpop.f32.mrf.mxu0
        %2025 = vdwg.mxu0
        %2026 = vmatpush.bf16.msra.mxu0 %v1509
        %2027 = vmatpush.bf16.msra.mxu0 %v1500
        %2028 = vmatpush.bf16.msra.mxu0 %v1491
        %2029 = vmatpush.bf16.msra.mxu0 %v1482
        %2030 = vmatpush.bf16.msra.mxu0 %v1473
        %2031 = vmatpush.bf16.msra.mxu0 %v1464
        %2032 = vmatpush.bf16.msra.mxu0 %v1455
        %2033 = vmatpush.bf16.msra.mxu0 %v1446
        %2034 = vmatmul.bf16.gmra.mxu0 %v360
        %v2035 = vpop.f32.mrf.mxu0
        %v2036 = vadd.f32 %v2023, %v2035
        %v2037 = vpop.f32.mrf.mxu0
        %2038 = vdwg.mxu0
        %2039 = vmatpush.bf16.msra.mxu0 %v1366
        %2040 = vmatpush.bf16.msra.mxu0 %v1357
        %2041 = vmatpush.bf16.msra.mxu0 %v1348
        %2042 = vmatpush.bf16.msra.mxu0 %v1339
        %2043 = vmatpush.bf16.msra.mxu0 %v1330
        %2044 = vmatpush.bf16.msra.mxu0 %v1321
        %2045 = vmatpush.bf16.msra.mxu0 %v1312
        %2046 = vmatpush.bf16.msra.mxu0 %v1303
        %2047 = vmatmul.bf16.gmra.mxu0 %v358
        %v2048 = vpop.f32.mrf.mxu0
        %v2049 = vadd.f32 %v613, %v2048
        %v2050 = vpop.f32.mrf.mxu0
        %2051 = vdwg.mxu0
        %2052 = vmatpush.bf16.msra.mxu0 %v1438
        %2053 = vmatpush.bf16.msra.mxu0 %v1429
        %2054 = vmatpush.bf16.msra.mxu0 %v1420
        %2055 = vmatpush.bf16.msra.mxu0 %v1411
        %2056 = vmatpush.bf16.msra.mxu0 %v1402
        %2057 = vmatpush.bf16.msra.mxu0 %v1393
        %2058 = vmatpush.bf16.msra.mxu0 %v1384
        %2059 = vmatpush.bf16.msra.mxu0 %v1375
        %2060 = vmatmul.bf16.gmra.mxu0 %v359
        %v2061 = vpop.f32.mrf.mxu0
        %v2062 = vadd.f32 %v2049, %v2061
        %v2063 = vpop.f32.mrf.mxu0
        %2064 = vdwg.mxu0
        %2065 = vmatpush.bf16.msra.mxu0 %v1510
        %2066 = vmatpush.bf16.msra.mxu0 %v1501
        %2067 = vmatpush.bf16.msra.mxu0 %v1492
        %2068 = vmatpush.bf16.msra.mxu0 %v1483
        %2069 = vmatpush.bf16.msra.mxu0 %v1474
        %2070 = vmatpush.bf16.msra.mxu0 %v1465
        %2071 = vmatpush.bf16.msra.mxu0 %v1456
        %2072 = vmatpush.bf16.msra.mxu0 %v1447
        %2073 = vmatmul.bf16.gmra.mxu0 %v360
        %v2074 = vpop.f32.mrf.mxu0
        %v2075 = vadd.f32 %v2062, %v2074
        %v2076 = vpop.f32.mrf.mxu0
        %2077 = vdwg.mxu0
        %v2078 = vld [vmem:[%s348] sm:$0x1]
        %v2079 = vpack.c.bf16 %v1763, %v1763
        %v2080 = vpack.c.bf16 %v1880, %v1880
        %vm2081 = vcmask 261120
        %v2083 = vsel %vm2081, %v2079, 0
        %v2086 = vsel %vm2081, %v2080, 0
        %2088 = vmatpush.bf16.xpose.msra.mxu0 0
        %2089 = vmatpush.bf16.xpose.msra.mxu0 0
        %2090 = vmatpush.bf16.xpose.msra.mxu0 0
        %2091 = vmatpush.bf16.xpose.msra.mxu0 0
        %2092 = vmatpush.bf16.xpose.msra.mxu0 0
        %2093 = vmatpush.bf16.xpose.msra.mxu0 0
        %2094 = vmatpush.bf16.xpose.msra.mxu0 0
        %2095 = vmatpush.bf16.xpose.msra.mxu0 %v2086
        %2096 = vmatmul.bf16.gmra.mxu0 %v2083
        %v2097 = vpop.f32.mrf.mxu0
        %v2098 = vadd.f32 0.0, %v2097
        %v2099 = vpop.f32.mrf.mxu0
        %2100 = vdwg.mxu0
        %v2101 = vmul.f32 %v2098, 0.19611613
        %v2103 = vperm.slane %v2078, 0
        %v2105 = vadd.f32 %v2101, %v2103
        %vm2106 = vcmask 64512
        %v2107 = vsel %vm2106, %v2105, -inf
        %2108 = vmax.xlane.f32.xlu0 %v2107
        %v2109 = vpop.xlane.xlu0 %2108
        %v2110 = vsub.f32 %v2105, %v2109
        %v2111 = vmul.f32 %v2110, 1.442695
        %v2112 = vpow.pop %v2111
        %v2113 = vsel %vm2106, %v2112, 0.0
        %2114 = vadd.xlane.f32.xlu0 %v2113
        %v2115 = vpop.xlane.xlu0 %2114
        %v2116 = vrcp.pop %v2115
        %v2117 = vmul.f32 %v2112, %v2116
        %v2118 = vpack.c.bf16 %v2117, %v2117
        %v2119 = vpack.c.bf16 %v1997, %v1997
        %v2121 = vsel %vm2106, %v2118, 0
        %vm2123 = vcmask 1043456
        %v2125 = vsel %vm2123, %v2119, 0
        %2127 = vmatpush.bf16.msra.mxu0 0
        %2128 = vmatpush.bf16.msra.mxu0 0
        %2129 = vmatpush.bf16.msra.mxu0 0
        %2130 = vmatpush.bf16.msra.mxu0 0
        %2131 = vmatpush.bf16.msra.mxu0 0
        %2132 = vmatpush.bf16.msra.mxu0 0
        %2133 = vmatpush.bf16.msra.mxu0 0
        %2134 = vmatpush.bf16.msra.mxu0 %v2125
        %2135 = vmatmul.bf16.gmra.mxu0 %v2121
        %v2136 = vpop.f32.mrf.mxu0
        %v2137 = vadd.f32 0.0, %v2136
        %v2138 = vpop.f32.mrf.mxu0
        %2139 = vdwg.mxu0
        %v2140 = vpack.c.bf16 %v2137, %v2137
        %v2141 = vld [vmem:[#allocation4] sm:$0xff]
        %v2142 = vld [vmem:[#allocation4 + $0x8] sm:$0xf]
        %v2143 = vld [vmem:[#allocation4 + $0xc] sm:$0xff]
        %v2144 = vld [vmem:[#allocation4 + $0x14] sm:$0xf]
        %v2145 = vld [vmem:[#allocation4 + $0x18] sm:$0xff]
        %v2146 = vld [vmem:[#allocation4 + $0x20] sm:$0xf]
        %v2147 = vld [vmem:[#allocation4 + $0x24] sm:$0xff]
        %v2148 = vld [vmem:[#allocation4 + $0x2c] sm:$0xf]
        %2150 = vrot.lane.b32.xlu0 %v2079, 96
        %v2151 = vpop.permute.xlu0 %2150
        %2153 = vrot.lane.b32.xlu0 %v2080, 96
        %v2154 = vpop.permute.xlu0 %2153
        %v2156 = vsel %vm2081, %v2151, 0
        %v2159 = vsel %vm2081, %v2154, 0
        %2161 = vmatpush.bf16.xpose.msra.mxu0 0
        %2162 = vmatpush.bf16.xpose.msra.mxu0 0
        %2163 = vmatpush.bf16.xpose.msra.mxu0 0
        %2164 = vmatpush.bf16.xpose.msra.mxu0 0
        %2165 = vmatpush.bf16.xpose.msra.mxu0 0
        %2166 = vmatpush.bf16.xpose.msra.mxu0 0
        %2167 = vmatpush.bf16.xpose.msra.mxu0 0
        %2168 = vmatpush.bf16.xpose.msra.mxu0 %v2159
        %2169 = vmatmul.bf16.gmra.mxu0 %v2156
        %v2170 = vpop.f32.mrf.mxu0
        %v2171 = vadd.f32 0.0, %v2170
        %v2172 = vpop.f32.mrf.mxu0
        %2173 = vdwg.mxu0
        %v2174 = vmul.f32 %v2171, 0.19611613
        %v2175 = vadd.f32 %v2174, %v2103
        %v2176 = vsel %vm2106, %v2175, -inf
        %2177 = vmax.xlane.f32.xlu0 %v2176
        %v2178 = vpop.xlane.xlu0 %2177
        %v2179 = vsub.f32 %v2175, %v2178
        %v2180 = vmul.f32 %v2179, 1.442695
        %v2181 = vpow.pop %v2180
        %v2182 = vsel %vm2106, %v2181, 0.0
        %2183 = vadd.xlane.f32.xlu0 %v2182
        %v2184 = vpop.xlane.xlu0 %2183
        %v2185 = vrcp.pop %v2184
        %v2186 = vmul.f32 %v2181, %v2185
        %v2187 = vpack.c.bf16 %v2186, %v2186
        %2189 = vrot.lane.b32.xlu0 %v2119, 96
        %v2190 = vpop.permute.xlu0 %2189
        %v2192 = vsel %vm2106, %v2187, 0
        %v2195 = vsel %vm2123, %v2190, 0
        %2197 = vmatpush.bf16.msra.mxu0 0
        %2198 = vmatpush.bf16.msra.mxu0 0
        %2199 = vmatpush.bf16.msra.mxu0 0
        %2200 = vmatpush.bf16.msra.mxu0 0
        %2201 = vmatpush.bf16.msra.mxu0 0
        %2202 = vmatpush.bf16.msra.mxu0 0
        %2203 = vmatpush.bf16.msra.mxu0 0
        %2204 = vmatpush.bf16.msra.mxu0 %v2195
        %2205 = vmatmul.bf16.gmra.mxu0 %v2192
        %v2206 = vpop.f32.mrf.mxu0
        %v2207 = vadd.f32 0.0, %v2206
        %v2208 = vpop.f32.mrf.mxu0
        %2209 = vdwg.mxu0
        %v2210 = vpack.c.bf16 %v2207, %v2207
        %v2211 = vld [vmem:[#allocation4 + $0x30] sm:$0xff]
        %v2212 = vld [vmem:[#allocation4 + $0x38] sm:$0xf]
        %v2213 = vld [vmem:[#allocation4 + $0x3c] sm:$0xff]
        %v2214 = vld [vmem:[#allocation4 + $0x44] sm:$0xf]
        %v2215 = vld [vmem:[#allocation4 + $0x48] sm:$0xff]
        %v2216 = vld [vmem:[#allocation4 + $0x50] sm:$0xf]
        %v2217 = vld [vmem:[#allocation4 + $0x54] sm:$0xff]
        %v2218 = vld [vmem:[#allocation4 + $0x5c] sm:$0xf]
        %v2227 = vunpack.c.l.b16 %v2211
        %v2228 = vunpack.c.h.b16 %v2211
        %v2229 = vunpack.c.l.b16 %v2212
        %v2230 = vunpack.c.l.b16 %v2213
        %v2231 = vunpack.c.h.b16 %v2213
        %v2232 = vunpack.c.l.b16 %v2214
        %v2233 = vunpack.c.l.b16 %v2215
        %v2234 = vunpack.c.h.b16 %v2215
        %v2235 = vunpack.c.l.b16 %v2216
        %v2236 = vunpack.c.l.b16 %v2217
        %v2237 = vunpack.c.h.b16 %v2217
        %v2238 = vunpack.c.l.b16 %v2218
        %v2239 = vpack.c.b16 %v2230, %v2227
        %v2240 = vpack.c.b16 %v2231, %v2228
        %v2241 = vpack.c.b16 %v2232, %v2229
        %v2242 = vpack.c.b16 %v2236, %v2233
        %v2243 = vpack.c.b16 %v2237, %v2234
        %v2244 = vpack.c.b16 %v2238, %v2235
        %v2252 = vsel %vm2081, %v2210, 0
        %2254 = vmatpush.bf16.msra.mxu0 0
        %2255 = vmatpush.bf16.msra.mxu0 0
        %2256 = vmatpush.bf16.msra.mxu0 0
        %2257 = vmatpush.bf16.msra.mxu0 0
        %2258 = vmatpush.bf16.msra.mxu0 0
        %2259 = vmatpush.bf16.msra.mxu0 0
        %2260 = vmatpush.bf16.msra.mxu0 %v2242
        %2261 = vmatpush.bf16.msra.mxu0 %v2239
        %2262 = vmatmul.bf16.gmra.mxu0 %v2252
        %v2263 = vpop.f32.mrf.mxu0
        %v2264 = vadd.f32 0.0, %v2263
        %v2265 = vpop.f32.mrf.mxu0
        %2266 = vdwg.mxu0
        %2267 = vmatpush.bf16.msra.mxu0 0
        %2268 = vmatpush.bf16.msra.mxu0 0
        %2269 = vmatpush.bf16.msra.mxu0 0
        %2270 = vmatpush.bf16.msra.mxu0 0
        %2271 = vmatpush.bf16.msra.mxu0 0
        %2272 = vmatpush.bf16.msra.mxu0 0
        %2273 = vmatpush.bf16.msra.mxu0 %v2243
        %2274 = vmatpush.bf16.msra.mxu0 %v2240
        %2275 = vmatmul.bf16.gmra.mxu0 %v2252
        %v2276 = vpop.f32.mrf.mxu0
        %v2277 = vadd.f32 0.0, %v2276
        %v2278 = vpop.f32.mrf.mxu0
        %2279 = vdwg.mxu0
        %2280 = vmatpush.bf16.msra.mxu0 0
        %2281 = vmatpush.bf16.msra.mxu0 0
        %2282 = vmatpush.bf16.msra.mxu0 0
        %2283 = vmatpush.bf16.msra.mxu0 0
        %2284 = vmatpush.bf16.msra.mxu0 0
        %2285 = vmatpush.bf16.msra.mxu0 0
        %2286 = vmatpush.bf16.msra.mxu0 %v2244
        %2287 = vmatpush.bf16.msra.mxu0 %v2241
        %2288 = vmatmul.bf16.gmra.mxu0 %v2252
        %v2289 = vpop.f32.mrf.mxu0
        %v2290 = vadd.f32 0.0, %v2289
        %v2291 = vpop.f32.mrf.mxu0
        %2292 = vdwg.mxu0
        %v2301 = vunpack.c.l.b16 %v2141
        %v2302 = vunpack.c.h.b16 %v2141
        %v2303 = vunpack.c.l.b16 %v2142
        %v2304 = vunpack.c.l.b16 %v2143
        %v2305 = vunpack.c.h.b16 %v2143
        %v2306 = vunpack.c.l.b16 %v2144
        %v2307 = vunpack.c.l.b16 %v2145
        %v2308 = vunpack.c.h.b16 %v2145
        %v2309 = vunpack.c.l.b16 %v2146
        %v2310 = vunpack.c.l.b16 %v2147
        %v2311 = vunpack.c.h.b16 %v2147
        %v2312 = vunpack.c.l.b16 %v2148
        %v2313 = vpack.c.b16 %v2304, %v2301
        %v2314 = vpack.c.b16 %v2305, %v2302
        %v2315 = vpack.c.b16 %v2306, %v2303
        %v2316 = vpack.c.b16 %v2310, %v2307
        %v2317 = vpack.c.b16 %v2311, %v2308
        %v2318 = vpack.c.b16 %v2312, %v2309
        %v2326 = vsel %vm2081, %v2140, 0
        %2328 = vmatpush.bf16.msra.mxu0 0
        %2329 = vmatpush.bf16.msra.mxu0 0
        %2330 = vmatpush.bf16.msra.mxu0 0
        %2331 = vmatpush.bf16.msra.mxu0 0
        %2332 = vmatpush.bf16.msra.mxu0 0
        %2333 = vmatpush.bf16.msra.mxu0 0
        %2334 = vmatpush.bf16.msra.mxu0 %v2316
        %2335 = vmatpush.bf16.msra.mxu0 %v2313
        %2336 = vmatmul.bf16.gmra.mxu0 %v2326
        %v2337 = vpop.f32.mrf.mxu0
        %v2338 = vadd.f32 %v2264, %v2337
        %v2339 = vpop.f32.mrf.mxu0
        %2340 = vdwg.mxu0
        %2341 = vmatpush.bf16.msra.mxu0 0
        %2342 = vmatpush.bf16.msra.mxu0 0
        %2343 = vmatpush.bf16.msra.mxu0 0
        %2344 = vmatpush.bf16.msra.mxu0 0
        %2345 = vmatpush.bf16.msra.mxu0 0
        %2346 = vmatpush.bf16.msra.mxu0 0
        %2347 = vmatpush.bf16.msra.mxu0 %v2317
        %2348 = vmatpush.bf16.msra.mxu0 %v2314
        %2349 = vmatmul.bf16.gmra.mxu0 %v2326
        %v2350 = vpop.f32.mrf.mxu0
        %v2351 = vadd.f32 %v2277, %v2350
        %v2352 = vpop.f32.mrf.mxu0
        %2353 = vdwg.mxu0
        %2354 = vmatpush.bf16.msra.mxu0 0
        %2355 = vmatpush.bf16.msra.mxu0 0
        %2356 = vmatpush.bf16.msra.mxu0 0
        %2357 = vmatpush.bf16.msra.mxu0 0
        %2358 = vmatpush.bf16.msra.mxu0 0
        %2359 = vmatpush.bf16.msra.mxu0 0
        %2360 = vmatpush.bf16.msra.mxu0 %v2318
        %2361 = vmatpush.bf16.msra.mxu0 %v2315
        %2362 = vmatmul.bf16.gmra.mxu0 %v2326
        %v2363 = vpop.f32.mrf.mxu0
        %v2364 = vadd.f32 %v2290, %v2363
        %v2365 = vpop.f32.mrf.mxu0
        %2366 = vdwg.mxu0
        %2367 = vrot.lane.b32.xlu0 %v2079, 64
        %v2368 = vpop.permute.xlu0 %2367
        %2369 = vrot.lane.b32.xlu0 %v2080, 64
        %v2370 = vpop.permute.xlu0 %2369
        %v2372 = vsel %vm2081, %v2368, 0
        %v2375 = vsel %vm2081, %v2370, 0
        %2377 = vmatpush.bf16.xpose.msra.mxu0 0
        %2378 = vmatpush.bf16.xpose.msra.mxu0 0
        %2379 = vmatpush.bf16.xpose.msra.mxu0 0
        %2380 = vmatpush.bf16.xpose.msra.mxu0 0
        %2381 = vmatpush.bf16.xpose.msra.mxu0 0
        %2382 = vmatpush.bf16.xpose.msra.mxu0 0
        %2383 = vmatpush.bf16.xpose.msra.mxu0 0
        %2384 = vmatpush.bf16.xpose.msra.mxu0 %v2375
        %2385 = vmatmul.bf16.gmra.mxu0 %v2372
        %v2386 = vpop.f32.mrf.mxu0
        %v2387 = vadd.f32 0.0, %v2386
        %v2388 = vpop.f32.mrf.mxu0
        %2389 = vdwg.mxu0
        %v2390 = vmul.f32 %v2387, 0.19611613
        %v2391 = vadd.f32 %v2390, %v2103
        %v2392 = vsel %vm2106, %v2391, -inf
        %2393 = vmax.xlane.f32.xlu0 %v2392
        %v2394 = vpop.xlane.xlu0 %2393
        %v2395 = vsub.f32 %v2391, %v2394
        %v2396 = vmul.f32 %v2395, 1.442695
        %v2397 = vpow.pop %v2396
        %v2398 = vsel %vm2106, %v2397, 0.0
        %2399 = vadd.xlane.f32.xlu0 %v2398
        %v2400 = vpop.xlane.xlu0 %2399
        %v2401 = vrcp.pop %v2400
        %v2402 = vmul.f32 %v2397, %v2401
        %v2403 = vpack.c.bf16 %v2402, %v2402
        %2404 = vrot.lane.b32.xlu0 %v2119, 64
        %v2405 = vpop.permute.xlu0 %2404
        %v2407 = vsel %vm2106, %v2403, 0
        %v2410 = vsel %vm2123, %v2405, 0
        %2412 = vmatpush.bf16.msra.mxu0 0
        %2413 = vmatpush.bf16.msra.mxu0 0
        %2414 = vmatpush.bf16.msra.mxu0 0
        %2415 = vmatpush.bf16.msra.mxu0 0
        %2416 = vmatpush.bf16.msra.mxu0 0
        %2417 = vmatpush.bf16.msra.mxu0 0
        %2418 = vmatpush.bf16.msra.mxu0 0
        %2419 = vmatpush.bf16.msra.mxu0 %v2410
        %2420 = vmatmul.bf16.gmra.mxu0 %v2407
        %v2421 = vpop.f32.mrf.mxu0
        %v2422 = vadd.f32 0.0, %v2421
        %v2423 = vpop.f32.mrf.mxu0
        %2424 = vdwg.mxu0
        %v2425 = vpack.c.bf16 %v2422, %v2422
        %v2426 = vld [vmem:[#allocation4 + $0x60] sm:$0xff]
        %v2427 = vld [vmem:[#allocation4 + $0x68] sm:$0xf]
        %v2428 = vld [vmem:[#allocation4 + $0x6c] sm:$0xff]
        %v2429 = vld [vmem:[#allocation4 + $0x74] sm:$0xf]
        %v2430 = vld [vmem:[#allocation4 + $0x78] sm:$0xff]
        %v2431 = vld [vmem:[#allocation4 + $0x80] sm:$0xf]
        %v2432 = vld [vmem:[#allocation4 + $0x84] sm:$0xff]
        %v2433 = vld [vmem:[#allocation4 + $0x8c] sm:$0xf]
        %v2442 = vunpack.c.l.b16 %v2426
        %v2443 = vunpack.c.h.b16 %v2426
        %v2444 = vunpack.c.l.b16 %v2427
        %v2445 = vunpack.c.l.b16 %v2428
        %v2446 = vunpack.c.h.b16 %v2428
        %v2447 = vunpack.c.l.b16 %v2429
        %v2448 = vunpack.c.l.b16 %v2430
        %v2449 = vunpack.c.h.b16 %v2430
        %v2450 = vunpack.c.l.b16 %v2431
        %v2451 = vunpack.c.l.b16 %v2432
        %v2452 = vunpack.c.h.b16 %v2432
        %v2453 = vunpack.c.l.b16 %v2433
        %v2454 = vpack.c.b16 %v2445, %v2442
        %v2455 = vpack.c.b16 %v2446, %v2443
        %v2456 = vpack.c.b16 %v2447, %v2444
        %v2457 = vpack.c.b16 %v2451, %v2448
        %v2458 = vpack.c.b16 %v2452, %v2449
        %v2459 = vpack.c.b16 %v2453, %v2450
        %v2467 = vsel %vm2081, %v2425, 0
        %2469 = vmatpush.bf16.msra.mxu0 0
        %2470 = vmatpush.bf16.msra.mxu0 0
        %2471 = vmatpush.bf16.msra.mxu0 0
        %2472 = vmatpush.bf16.msra.mxu0 0
        %2473 = vmatpush.bf16.msra.mxu0 0
        %2474 = vmatpush.bf16.msra.mxu0 0
        %2475 = vmatpush.bf16.msra.mxu0 %v2457
        %2476 = vmatpush.bf16.msra.mxu0 %v2454
        %2477 = vmatmul.bf16.gmra.mxu0 %v2467
        %v2478 = vpop.f32.mrf.mxu0
        %v2479 = vadd.f32 0.0, %v2478
        %v2480 = vpop.f32.mrf.mxu0
        %2481 = vdwg.mxu0
        %2482 = vmatpush.bf16.msra.mxu0 0
        %2483 = vmatpush.bf16.msra.mxu0 0
        %2484 = vmatpush.bf16.msra.mxu0 0
        %2485 = vmatpush.bf16.msra.mxu0 0
        %2486 = vmatpush.bf16.msra.mxu0 0
        %2487 = vmatpush.bf16.msra.mxu0 0
        %2488 = vmatpush.bf16.msra.mxu0 %v2458
        %2489 = vmatpush.bf16.msra.mxu0 %v2455
        %2490 = vmatmul.bf16.gmra.mxu0 %v2467
        %v2491 = vpop.f32.mrf.mxu0
        %v2492 = vadd.f32 0.0, %v2491
        %v2493 = vpop.f32.mrf.mxu0
        %2494 = vdwg.mxu0
        %2495 = vmatpush.bf16.msra.mxu0 0
        %2496 = vmatpush.bf16.msra.mxu0 0
        %2497 = vmatpush.bf16.msra.mxu0 0
        %2498 = vmatpush.bf16.msra.mxu0 0
        %2499 = vmatpush.bf16.msra.mxu0 0
        %2500 = vmatpush.bf16.msra.mxu0 0
        %2501 = vmatpush.bf16.msra.mxu0 %v2459
        %2502 = vmatpush.bf16.msra.mxu0 %v2456
        %2503 = vmatmul.bf16.gmra.mxu0 %v2467
        %v2504 = vpop.f32.mrf.mxu0
        %v2505 = vadd.f32 0.0, %v2504
        %v2506 = vpop.f32.mrf.mxu0
        %2507 = vdwg.mxu0
        %v2508 = vadd.f32 %v2338, %v2479
        %v2509 = vadd.f32 %v2351, %v2492
        %v2510 = vadd.f32 %v2364, %v2505
        %2511 = vrot.lane.b32.xlu0 %v2079, 32
        %v2512 = vpop.permute.xlu0 %2511
        %2513 = vrot.lane.b32.xlu0 %v2080, 32
        %v2514 = vpop.permute.xlu0 %2513
        %v2516 = vsel %vm2081, %v2512, 0
        %v2519 = vsel %vm2081, %v2514, 0
        %2521 = vmatpush.bf16.xpose.msra.mxu0 0
        %2522 = vmatpush.bf16.xpose.msra.mxu0 0
        %2523 = vmatpush.bf16.xpose.msra.mxu0 0
        %2524 = vmatpush.bf16.xpose.msra.mxu0 0
        %2525 = vmatpush.bf16.xpose.msra.mxu0 0
        %2526 = vmatpush.bf16.xpose.msra.mxu0 0
        %2527 = vmatpush.bf16.xpose.msra.mxu0 0
        %2528 = vmatpush.bf16.xpose.msra.mxu0 %v2519
        %2529 = vmatmul.bf16.gmra.mxu0 %v2516
        %v2530 = vpop.f32.mrf.mxu0
        %v2531 = vadd.f32 0.0, %v2530
        %v2532 = vpop.f32.mrf.mxu0
        %2533 = vdwg.mxu0
        %v2534 = vmul.f32 %v2531, 0.19611613
        %v2535 = vadd.f32 %v2534, %v2103
        %v2536 = vsel %vm2106, %v2535, -inf
        %2537 = vmax.xlane.f32.xlu0 %v2536
        %v2538 = vpop.xlane.xlu0 %2537
        %v2539 = vsub.f32 %v2535, %v2538
        %v2540 = vmul.f32 %v2539, 1.442695
        %v2541 = vpow.pop %v2540
        %v2542 = vsel %vm2106, %v2541, 0.0
        %2543 = vadd.xlane.f32.xlu0 %v2542
        %v2544 = vpop.xlane.xlu0 %2543
        %v2545 = vrcp.pop %v2544
        %v2546 = vmul.f32 %v2541, %v2545
        %v2547 = vpack.c.bf16 %v2546, %v2546
        %2548 = vrot.lane.b32.xlu0 %v2119, 32
        %v2549 = vpop.permute.xlu0 %2548
        %v2551 = vsel %vm2106, %v2547, 0
        %v2554 = vsel %vm2123, %v2549, 0
        %2556 = vmatpush.bf16.msra.mxu0 0
        %2557 = vmatpush.bf16.msra.mxu0 0
        %2558 = vmatpush.bf16.msra.mxu0 0
        %2559 = vmatpush.bf16.msra.mxu0 0
        %2560 = vmatpush.bf16.msra.mxu0 0
        %2561 = vmatpush.bf16.msra.mxu0 0
        %2562 = vmatpush.bf16.msra.mxu0 0
        %2563 = vmatpush.bf16.msra.mxu0 %v2554
        %2564 = vmatmul.bf16.gmra.mxu0 %v2551
        %v2565 = vpop.f32.mrf.mxu0
        %v2566 = vadd.f32 0.0, %v2565
        %v2567 = vpop.f32.mrf.mxu0
        %2568 = vdwg.mxu0
        %v2569 = vpack.c.bf16 %v2566, %v2566
        %v2570 = vld [vmem:[#allocation4 + $0x90] sm:$0xff]
        %v2571 = vld [vmem:[#allocation4 + $0x98] sm:$0xf]
        %v2572 = vld [vmem:[#allocation4 + $0x9c] sm:$0xff]
        %v2573 = vld [vmem:[#allocation4 + $0xa4] sm:$0xf]
        %v2574 = vld [vmem:[#allocation4 + $0xa8] sm:$0xff]
        %v2575 = vld [vmem:[#allocation4 + $0xb0] sm:$0xf]
        %v2576 = vld [vmem:[#allocation4 + $0xb4] sm:$0xff]
        %v2577 = vld [vmem:[#allocation4 + $0xbc] sm:$0xf]
        %v2586 = vunpack.c.l.b16 %v2570
        %v2587 = vunpack.c.h.b16 %v2570
        %v2588 = vunpack.c.l.b16 %v2571
        %v2589 = vunpack.c.l.b16 %v2572
        %v2590 = vunpack.c.h.b16 %v2572
        %v2591 = vunpack.c.l.b16 %v2573
        %v2592 = vunpack.c.l.b16 %v2574
        %v2593 = vunpack.c.h.b16 %v2574
        %v2594 = vunpack.c.l.b16 %v2575
        %v2595 = vunpack.c.l.b16 %v2576
        %v2596 = vunpack.c.h.b16 %v2576
        %v2597 = vunpack.c.l.b16 %v2577
        %v2598 = vpack.c.b16 %v2589, %v2586
        %v2599 = vpack.c.b16 %v2590, %v2587
        %v2600 = vpack.c.b16 %v2591, %v2588
        %v2601 = vpack.c.b16 %v2595, %v2592
        %v2602 = vpack.c.b16 %v2596, %v2593
        %v2603 = vpack.c.b16 %v2597, %v2594
        %v2611 = vsel %vm2081, %v2569, 0
        %2613 = vmatpush.bf16.msra.mxu0 0
        %2614 = vmatpush.bf16.msra.mxu0 0
        %2615 = vmatpush.bf16.msra.mxu0 0
        %2616 = vmatpush.bf16.msra.mxu0 0
        %2617 = vmatpush.bf16.msra.mxu0 0
        %2618 = vmatpush.bf16.msra.mxu0 0
        %2619 = vmatpush.bf16.msra.mxu0 %v2601
        %2620 = vmatpush.bf16.msra.mxu0 %v2598
        %2621 = vmatmul.bf16.gmra.mxu0 %v2611
        %v2622 = vpop.f32.mrf.mxu0
        %v2623 = vadd.f32 0.0, %v2622
        %v2624 = vpop.f32.mrf.mxu0
        %2625 = vdwg.mxu0
        %2626 = vmatpush.bf16.msra.mxu0 0
        %2627 = vmatpush.bf16.msra.mxu0 0
        %2628 = vmatpush.bf16.msra.mxu0 0
        %2629 = vmatpush.bf16.msra.mxu0 0
        %2630 = vmatpush.bf16.msra.mxu0 0
        %2631 = vmatpush.bf16.msra.mxu0 0
        %2632 = vmatpush.bf16.msra.mxu0 %v2602
        %2633 = vmatpush.bf16.msra.mxu0 %v2599
        %2634 = vmatmul.bf16.gmra.mxu0 %v2611
        %v2635 = vpop.f32.mrf.mxu0
        %v2636 = vadd.f32 0.0, %v2635
        %v2637 = vpop.f32.mrf.mxu0
        %2638 = vdwg.mxu0
        %2639 = vmatpush.bf16.msra.mxu0 0
        %2640 = vmatpush.bf16.msra.mxu0 0
        %2641 = vmatpush.bf16.msra.mxu0 0
        %2642 = vmatpush.bf16.msra.mxu0 0
        %2643 = vmatpush.bf16.msra.mxu0 0
        %2644 = vmatpush.bf16.msra.mxu0 0
        %2645 = vmatpush.bf16.msra.mxu0 %v2603
        %2646 = vmatpush.bf16.msra.mxu0 %v2600
        %2647 = vmatmul.bf16.gmra.mxu0 %v2611
        %v2648 = vpop.f32.mrf.mxu0
        %v2649 = vadd.f32 0.0, %v2648
        %v2650 = vpop.f32.mrf.mxu0
        %2651 = vdwg.mxu0
        %v2652 = vadd.f32 %v2508, %v2623
        %v2653 = vadd.f32 %v2509, %v2636
        %v2654 = vadd.f32 %v2510, %v2649
        %v2655 = vpack.c.bf16 %v1802, %v1802
        %v2656 = vpack.c.bf16 %v1919, %v1919
        %v2658 = vsel %vm2081, %v2655, 0
        %v2661 = vsel %vm2081, %v2656, 0
        %2663 = vmatpush.bf16.xpose.msra.mxu0 0
        %2664 = vmatpush.bf16.xpose.msra.mxu0 0
        %2665 = vmatpush.bf16.xpose.msra.mxu0 0
        %2666 = vmatpush.bf16.xpose.msra.mxu0 0
        %2667 = vmatpush.bf16.xpose.msra.mxu0 0
        %2668 = vmatpush.bf16.xpose.msra.mxu0 0
        %2669 = vmatpush.bf16.xpose.msra.mxu0 0
        %2670 = vmatpush.bf16.xpose.msra.mxu0 %v2661
        %2671 = vmatmul.bf16.gmra.mxu0 %v2658
        %v2672 = vpop.f32.mrf.mxu0
        %v2673 = vadd.f32 0.0, %v2672
        %v2674 = vpop.f32.mrf.mxu0
        %2675 = vdwg.mxu0
        %v2676 = vmul.f32 %v2673, 0.19611613
        %v2677 = vadd.f32 %v2676, %v2103
        %v2678 = vsel %vm2106, %v2677, -inf
        %2679 = vmax.xlane.f32.xlu0 %v2678
        %v2680 = vpop.xlane.xlu0 %2679
        %v2681 = vsub.f32 %v2677, %v2680
        %v2682 = vmul.f32 %v2681, 1.442695
        %v2683 = vpow.pop %v2682
        %v2684 = vsel %vm2106, %v2683, 0.0
        %2685 = vadd.xlane.f32.xlu0 %v2684
        %v2686 = vpop.xlane.xlu0 %2685
        %v2687 = vrcp.pop %v2686
        %v2688 = vmul.f32 %v2683, %v2687
        %v2689 = vpack.c.bf16 %v2688, %v2688
        %v2690 = vpack.c.bf16 %v2036, %v2036
        %v2692 = vsel %vm2106, %v2689, 0
        %v2695 = vsel %vm2123, %v2690, 0
        %2697 = vmatpush.bf16.msra.mxu0 0
        %2698 = vmatpush.bf16.msra.mxu0 0
        %2699 = vmatpush.bf16.msra.mxu0 0
        %2700 = vmatpush.bf16.msra.mxu0 0
        %2701 = vmatpush.bf16.msra.mxu0 0
        %2702 = vmatpush.bf16.msra.mxu0 0
        %2703 = vmatpush.bf16.msra.mxu0 0
        %2704 = vmatpush.bf16.msra.mxu0 %v2695
        %2705 = vmatmul.bf16.gmra.mxu0 %v2692
        %v2706 = vpop.f32.mrf.mxu0
        %v2707 = vadd.f32 0.0, %v2706
        %v2708 = vpop.f32.mrf.mxu0
        %2709 = vdwg.mxu0
        %v2710 = vpack.c.bf16 %v2707, %v2707
        %v2711 = vld [vmem:[#allocation4 + $0xc0] sm:$0xff]
        %v2712 = vld [vmem:[#allocation4 + $0xc8] sm:$0xf]
        %v2713 = vld [vmem:[#allocation4 + $0xcc] sm:$0xff]
        %v2714 = vld [vmem:[#allocation4 + $0xd4] sm:$0xf]
        %v2715 = vld [vmem:[#allocation4 + $0xd8] sm:$0xff]
        %v2716 = vld [vmem:[#allocation4 + $0xe0] sm:$0xf]
        %v2717 = vld [vmem:[#allocation4 + $0xe4] sm:$0xff]
        %v2718 = vld [vmem:[#allocation4 + $0xec] sm:$0xf]
        %v2727 = vunpack.c.l.b16 %v2711
        %v2728 = vunpack.c.h.b16 %v2711
        %v2729 = vunpack.c.l.b16 %v2712
        %v2730 = vunpack.c.l.b16 %v2713
        %v2731 = vunpack.c.h.b16 %v2713
        %v2732 = vunpack.c.l.b16 %v2714
        %v2733 = vunpack.c.l.b16 %v2715
        %v2734 = vunpack.c.h.b16 %v2715
        %v2735 = vunpack.c.l.b16 %v2716
        %v2736 = vunpack.c.l.b16 %v2717
        %v2737 = vunpack.c.h.b16 %v2717
        %v2738 = vunpack.c.l.b16 %v2718
        %v2739 = vpack.c.b16 %v2730, %v2727
        %v2740 = vpack.c.b16 %v2731, %v2728
        %v2741 = vpack.c.b16 %v2732, %v2729
        %v2742 = vpack.c.b16 %v2736, %v2733
        %v2743 = vpack.c.b16 %v2737, %v2734
        %v2744 = vpack.c.b16 %v2738, %v2735
        %v2752 = vsel %vm2081, %v2710, 0
        %2754 = vmatpush.bf16.msra.mxu0 0
        %2755 = vmatpush.bf16.msra.mxu0 0
        %2756 = vmatpush.bf16.msra.mxu0 0
        %2757 = vmatpush.bf16.msra.mxu0 0
        %2758 = vmatpush.bf16.msra.mxu0 0
        %2759 = vmatpush.bf16.msra.mxu0 0
        %2760 = vmatpush.bf16.msra.mxu0 %v2742
        %2761 = vmatpush.bf16.msra.mxu0 %v2739
        %2762 = vmatmul.bf16.gmra.mxu0 %v2752
        %v2763 = vpop.f32.mrf.mxu0
        %v2764 = vadd.f32 0.0, %v2763
        %v2765 = vpop.f32.mrf.mxu0
        %2766 = vdwg.mxu0
        %2767 = vmatpush.bf16.msra.mxu0 0
        %2768 = vmatpush.bf16.msra.mxu0 0
        %2769 = vmatpush.bf16.msra.mxu0 0
        %2770 = vmatpush.bf16.msra.mxu0 0
        %2771 = vmatpush.bf16.msra.mxu0 0
        %2772 = vmatpush.bf16.msra.mxu0 0
        %2773 = vmatpush.bf16.msra.mxu0 %v2743
        %2774 = vmatpush.bf16.msra.mxu0 %v2740
        %2775 = vmatmul.bf16.gmra.mxu0 %v2752
        %v2776 = vpop.f32.mrf.mxu0
        %v2777 = vadd.f32 0.0, %v2776
        %v2778 = vpop.f32.mrf.mxu0
        %2779 = vdwg.mxu0
        %2780 = vmatpush.bf16.msra.mxu0 0
        %2781 = vmatpush.bf16.msra.mxu0 0
        %2782 = vmatpush.bf16.msra.mxu0 0
        %2783 = vmatpush.bf16.msra.mxu0 0
        %2784 = vmatpush.bf16.msra.mxu0 0
        %2785 = vmatpush.bf16.msra.mxu0 0
        %2786 = vmatpush.bf16.msra.mxu0 %v2744
        %2787 = vmatpush.bf16.msra.mxu0 %v2741
        %2788 = vmatmul.bf16.gmra.mxu0 %v2752
        %v2789 = vpop.f32.mrf.mxu0
        %v2790 = vadd.f32 0.0, %v2789
        %v2791 = vpop.f32.mrf.mxu0
        %2792 = vdwg.mxu0
        %v2793 = vadd.f32 %v2652, %v2764
        %v2794 = vadd.f32 %v2653, %v2777
        %v2795 = vadd.f32 %v2654, %v2790
        %2797 = vrot.lane.b32.xlu0 %v2655, 96
        %v2798 = vpop.permute.xlu0 %2797
        %2800 = vrot.lane.b32.xlu0 %v2656, 96
        %v2801 = vpop.permute.xlu0 %2800
        %v2803 = vsel %vm2081, %v2798, 0
        %v2806 = vsel %vm2081, %v2801, 0
        %2808 = vmatpush.bf16.xpose.msra.mxu0 0
        %2809 = vmatpush.bf16.xpose.msra.mxu0 0
        %2810 = vmatpush.bf16.xpose.msra.mxu0 0
        %2811 = vmatpush.bf16.xpose.msra.mxu0 0
        %2812 = vmatpush.bf16.xpose.msra.mxu0 0
        %2813 = vmatpush.bf16.xpose.msra.mxu0 0
        %2814 = vmatpush.bf16.xpose.msra.mxu0 0
        %2815 = vmatpush.bf16.xpose.msra.mxu0 %v2806
        %2816 = vmatmul.bf16.gmra.mxu0 %v2803
        %v2817 = vpop.f32.mrf.mxu0
        %v2818 = vadd.f32 0.0, %v2817
        %v2819 = vpop.f32.mrf.mxu0
        %2820 = vdwg.mxu0
        %v2821 = vmul.f32 %v2818, 0.19611613
        %v2822 = vadd.f32 %v2821, %v2103
        %v2823 = vsel %vm2106, %v2822, -inf
        %2824 = vmax.xlane.f32.xlu0 %v2823
        %v2825 = vpop.xlane.xlu0 %2824
        %v2826 = vsub.f32 %v2822, %v2825
        %v2827 = vmul.f32 %v2826, 1.442695
        %v2828 = vpow.pop %v2827
        %v2829 = vsel %vm2106, %v2828, 0.0
        %2830 = vadd.xlane.f32.xlu0 %v2829
        %v2831 = vpop.xlane.xlu0 %2830
        %v2832 = vrcp.pop %v2831
        %v2833 = vmul.f32 %v2828, %v2832
        %v2834 = vpack.c.bf16 %v2833, %v2833
        %2836 = vrot.lane.b32.xlu0 %v2690, 96
        %v2837 = vpop.permute.xlu0 %2836
        %v2839 = vsel %vm2106, %v2834, 0
        %v2842 = vsel %vm2123, %v2837, 0
        %2844 = vmatpush.bf16.msra.mxu0 0
        %2845 = vmatpush.bf16.msra.mxu0 0
        %2846 = vmatpush.bf16.msra.mxu0 0
        %2847 = vmatpush.bf16.msra.mxu0 0
        %2848 = vmatpush.bf16.msra.mxu0 0
        %2849 = vmatpush.bf16.msra.mxu0 0
        %2850 = vmatpush.bf16.msra.mxu0 0
        %2851 = vmatpush.bf16.msra.mxu0 %v2842
        %2852 = vmatmul.bf16.gmra.mxu0 %v2839
        %v2853 = vpop.f32.mrf.mxu0
        %v2854 = vadd.f32 0.0, %v2853
        %v2855 = vpop.f32.mrf.mxu0
        %2856 = vdwg.mxu0
        %v2857 = vpack.c.bf16 %v2854, %v2854
        %v2858 = vld [vmem:[#allocation4 + $0xf0] sm:$0xff]
        %v2859 = vld [vmem:[#allocation4 + $0xf8] sm:$0xf]
        %v2860 = vld [vmem:[#allocation4 + $0xfc] sm:$0xff]
        %v2861 = vld [vmem:[#allocation4 + $0x104] sm:$0xf]
        %v2862 = vld [vmem:[#allocation4 + $0x108] sm:$0xff]
        %v2863 = vld [vmem:[#allocation4 + $0x110] sm:$0xf]
        %v2864 = vld [vmem:[#allocation4 + $0x114] sm:$0xff]
        %v2865 = vld [vmem:[#allocation4 + $0x11c] sm:$0xf]
        %v2874 = vunpack.c.l.b16 %v2858
        %v2875 = vunpack.c.h.b16 %v2858
        %v2876 = vunpack.c.l.b16 %v2859
        %v2877 = vunpack.c.l.b16 %v2860
        %v2878 = vunpack.c.h.b16 %v2860
        %v2879 = vunpack.c.l.b16 %v2861
        %v2880 = vunpack.c.l.b16 %v2862
        %v2881 = vunpack.c.h.b16 %v2862
        %v2882 = vunpack.c.l.b16 %v2863
        %v2883 = vunpack.c.l.b16 %v2864
        %v2884 = vunpack.c.h.b16 %v2864
        %v2885 = vunpack.c.l.b16 %v2865
        %v2886 = vpack.c.b16 %v2877, %v2874
        %v2887 = vpack.c.b16 %v2878, %v2875
        %v2888 = vpack.c.b16 %v2879, %v2876
        %v2889 = vpack.c.b16 %v2883, %v2880
        %v2890 = vpack.c.b16 %v2884, %v2881
        %v2891 = vpack.c.b16 %v2885, %v2882
        %v2899 = vsel %vm2081, %v2857, 0
        %2901 = vmatpush.bf16.msra.mxu0 0
        %2902 = vmatpush.bf16.msra.mxu0 0
        %2903 = vmatpush.bf16.msra.mxu0 0
        %2904 = vmatpush.bf16.msra.mxu0 0
        %2905 = vmatpush.bf16.msra.mxu0 0
        %2906 = vmatpush.bf16.msra.mxu0 0
        %2907 = vmatpush.bf16.msra.mxu0 %v2889
        %2908 = vmatpush.bf16.msra.mxu0 %v2886
        %2909 = vmatmul.bf16.gmra.mxu0 %v2899
        %v2910 = vpop.f32.mrf.mxu0
        %v2911 = vadd.f32 0.0, %v2910
        %v2912 = vpop.f32.mrf.mxu0
        %2913 = vdwg.mxu0
        %2914 = vmatpush.bf16.msra.mxu0 0
        %2915 = vmatpush.bf16.msra.mxu0 0
        %2916 = vmatpush.bf16.msra.mxu0 0
        %2917 = vmatpush.bf16.msra.mxu0 0
        %2918 = vmatpush.bf16.msra.mxu0 0
        %2919 = vmatpush.bf16.msra.mxu0 0
        %2920 = vmatpush.bf16.msra.mxu0 %v2890
        %2921 = vmatpush.bf16.msra.mxu0 %v2887
        %2922 = vmatmul.bf16.gmra.mxu0 %v2899
        %v2923 = vpop.f32.mrf.mxu0
        %v2924 = vadd.f32 0.0, %v2923
        %v2925 = vpop.f32.mrf.mxu0
        %2926 = vdwg.mxu0
        %2927 = vmatpush.bf16.msra.mxu0 0
        %2928 = vmatpush.bf16.msra.mxu0 0
        %2929 = vmatpush.bf16.msra.mxu0 0
        %2930 = vmatpush.bf16.msra.mxu0 0
        %2931 = vmatpush.bf16.msra.mxu0 0
        %2932 = vmatpush.bf16.msra.mxu0 0
        %2933 = vmatpush.bf16.msra.mxu0 %v2891
        %2934 = vmatpush.bf16.msra.mxu0 %v2888
        %2935 = vmatmul.bf16.gmra.mxu0 %v2899
        %v2936 = vpop.f32.mrf.mxu0
        %v2937 = vadd.f32 0.0, %v2936
        %v2938 = vpop.f32.mrf.mxu0
        %2939 = vdwg.mxu0
        %v2940 = vadd.f32 %v2793, %v2911
        %v2941 = vadd.f32 %v2794, %v2924
        %v2942 = vadd.f32 %v2795, %v2937
        %2943 = vrot.lane.b32.xlu0 %v2655, 64
        %v2944 = vpop.permute.xlu0 %2943
        %2945 = vrot.lane.b32.xlu0 %v2656, 64
        %v2946 = vpop.permute.xlu0 %2945
        %v2948 = vsel %vm2081, %v2944, 0
        %v2951 = vsel %vm2081, %v2946, 0
        %2953 = vmatpush.bf16.xpose.msra.mxu0 0
        %2954 = vmatpush.bf16.xpose.msra.mxu0 0
        %2955 = vmatpush.bf16.xpose.msra.mxu0 0
        %2956 = vmatpush.bf16.xpose.msra.mxu0 0
        %2957 = vmatpush.bf16.xpose.msra.mxu0 0
        %2958 = vmatpush.bf16.xpose.msra.mxu0 0
        %2959 = vmatpush.bf16.xpose.msra.mxu0 0
        %2960 = vmatpush.bf16.xpose.msra.mxu0 %v2951
        %2961 = vmatmul.bf16.gmra.mxu0 %v2948
        %v2962 = vpop.f32.mrf.mxu0
        %v2963 = vadd.f32 0.0, %v2962
        %v2964 = vpop.f32.mrf.mxu0
        %2965 = vdwg.mxu0
        %v2966 = vmul.f32 %v2963, 0.19611613
        %v2967 = vadd.f32 %v2966, %v2103
        %v2968 = vsel %vm2106, %v2967, -inf
        %2969 = vmax.xlane.f32.xlu0 %v2968
        %v2970 = vpop.xlane.xlu0 %2969
        %v2971 = vsub.f32 %v2967, %v2970
        %v2972 = vmul.f32 %v2971, 1.442695
        %v2973 = vpow.pop %v2972
        %v2974 = vsel %vm2106, %v2973, 0.0
        %2975 = vadd.xlane.f32.xlu0 %v2974
        %v2976 = vpop.xlane.xlu0 %2975
        %v2977 = vrcp.pop %v2976
        %v2978 = vmul.f32 %v2973, %v2977
        %v2979 = vpack.c.bf16 %v2978, %v2978
        %2980 = vrot.lane.b32.xlu0 %v2690, 64
        %v2981 = vpop.permute.xlu0 %2980
        %v2983 = vsel %vm2106, %v2979, 0
        %v2986 = vsel %vm2123, %v2981, 0
        %2988 = vmatpush.bf16.msra.mxu0 0
        %2989 = vmatpush.bf16.msra.mxu0 0
        %2990 = vmatpush.bf16.msra.mxu0 0
        %2991 = vmatpush.bf16.msra.mxu0 0
        %2992 = vmatpush.bf16.msra.mxu0 0
        %2993 = vmatpush.bf16.msra.mxu0 0
        %2994 = vmatpush.bf16.msra.mxu0 0
        %2995 = vmatpush.bf16.msra.mxu0 %v2986
        %2996 = vmatmul.bf16.gmra.mxu0 %v2983
        %v2997 = vpop.f32.mrf.mxu0
        %v2998 = vadd.f32 0.0, %v2997
        %v2999 = vpop.f32.mrf.mxu0
        %3000 = vdwg.mxu0
        %v3001 = vpack.c.bf16 %v2998, %v2998
        %v3002 = vld [vmem:[#allocation4 + $0x120] sm:$0xff]
        %v3003 = vld [vmem:[#allocation4 + $0x128] sm:$0xf]
        %v3004 = vld [vmem:[#allocation4 + $0x12c] sm:$0xff]
        %v3005 = vld [vmem:[#allocation4 + $0x134] sm:$0xf]
        %v3006 = vld [vmem:[#allocation4 + $0x138] sm:$0xff]
        %v3007 = vld [vmem:[#allocation4 + $0x140] sm:$0xf]
        %v3008 = vld [vmem:[#allocation4 + $0x144] sm:$0xff]
        %v3009 = vld [vmem:[#allocation4 + $0x14c] sm:$0xf]
        %v3018 = vunpack.c.l.b16 %v3002
        %v3019 = vunpack.c.h.b16 %v3002
        %v3020 = vunpack.c.l.b16 %v3003
        %v3021 = vunpack.c.l.b16 %v3004
        %v3022 = vunpack.c.h.b16 %v3004
        %v3023 = vunpack.c.l.b16 %v3005
        %v3024 = vunpack.c.l.b16 %v3006
        %v3025 = vunpack.c.h.b16 %v3006
        %v3026 = vunpack.c.l.b16 %v3007
        %v3027 = vunpack.c.l.b16 %v3008
        %v3028 = vunpack.c.h.b16 %v3008
        %v3029 = vunpack.c.l.b16 %v3009
        %v3030 = vpack.c.b16 %v3021, %v3018
        %v3031 = vpack.c.b16 %v3022, %v3019
        %v3032 = vpack.c.b16 %v3023, %v3020
        %v3033 = vpack.c.b16 %v3027, %v3024
        %v3034 = vpack.c.b16 %v3028, %v3025
        %v3035 = vpack.c.b16 %v3029, %v3026
        %v3043 = vsel %vm2081, %v3001, 0
        %3045 = vmatpush.bf16.msra.mxu0 0
        %3046 = vmatpush.bf16.msra.mxu0 0
        %3047 = vmatpush.bf16.msra.mxu0 0
        %3048 = vmatpush.bf16.msra.mxu0 0
        %3049 = vmatpush.bf16.msra.mxu0 0
        %3050 = vmatpush.bf16.msra.mxu0 0
        %3051 = vmatpush.bf16.msra.mxu0 %v3033
        %3052 = vmatpush.bf16.msra.mxu0 %v3030
        %3053 = vmatmul.bf16.gmra.mxu0 %v3043
        %v3054 = vpop.f32.mrf.mxu0
        %v3055 = vadd.f32 0.0, %v3054
        %v3056 = vpop.f32.mrf.mxu0
        %3057 = vdwg.mxu0
        %3058 = vmatpush.bf16.msra.mxu0 0
        %3059 = vmatpush.bf16.msra.mxu0 0
        %3060 = vmatpush.bf16.msra.mxu0 0
        %3061 = vmatpush.bf16.msra.mxu0 0
        %3062 = vmatpush.bf16.msra.mxu0 0
        %3063 = vmatpush.bf16.msra.mxu0 0
        %3064 = vmatpush.bf16.msra.mxu0 %v3034
        %3065 = vmatpush.bf16.msra.mxu0 %v3031
        %3066 = vmatmul.bf16.gmra.mxu0 %v3043
        %v3067 = vpop.f32.mrf.mxu0
        %v3068 = vadd.f32 0.0, %v3067
        %v3069 = vpop.f32.mrf.mxu0
        %3070 = vdwg.mxu0
        %3071 = vmatpush.bf16.msra.mxu0 0
        %3072 = vmatpush.bf16.msra.mxu0 0
        %3073 = vmatpush.bf16.msra.mxu0 0
        %3074 = vmatpush.bf16.msra.mxu0 0
        %3075 = vmatpush.bf16.msra.mxu0 0
        %3076 = vmatpush.bf16.msra.mxu0 0
        %3077 = vmatpush.bf16.msra.mxu0 %v3035
        %3078 = vmatpush.bf16.msra.mxu0 %v3032
        %3079 = vmatmul.bf16.gmra.mxu0 %v3043
        %v3080 = vpop.f32.mrf.mxu0
        %v3081 = vadd.f32 0.0, %v3080
        %v3082 = vpop.f32.mrf.mxu0
        %3083 = vdwg.mxu0
        %v3084 = vadd.f32 %v2940, %v3055
        %v3085 = vadd.f32 %v2941, %v3068
        %v3086 = vadd.f32 %v2942, %v3081
        %3087 = vrot.lane.b32.xlu0 %v2655, 32
        %v3088 = vpop.permute.xlu0 %3087
        %3089 = vrot.lane.b32.xlu0 %v2656, 32
        %v3090 = vpop.permute.xlu0 %3089
        %v3092 = vsel %vm2081, %v3088, 0
        %v3095 = vsel %vm2081, %v3090, 0
        %3097 = vmatpush.bf16.xpose.msra.mxu0 0
        %3098 = vmatpush.bf16.xpose.msra.mxu0 0
        %3099 = vmatpush.bf16.xpose.msra.mxu0 0
        %3100 = vmatpush.bf16.xpose.msra.mxu0 0
        %3101 = vmatpush.bf16.xpose.msra.mxu0 0
        %3102 = vmatpush.bf16.xpose.msra.mxu0 0
        %3103 = vmatpush.bf16.xpose.msra.mxu0 0
        %3104 = vmatpush.bf16.xpose.msra.mxu0 %v3095
        %3105 = vmatmul.bf16.gmra.mxu0 %v3092
        %v3106 = vpop.f32.mrf.mxu0
        %v3107 = vadd.f32 0.0, %v3106
        %v3108 = vpop.f32.mrf.mxu0
        %3109 = vdwg.mxu0
        %v3110 = vmul.f32 %v3107, 0.19611613
        %v3111 = vadd.f32 %v3110, %v2103
        %v3112 = vsel %vm2106, %v3111, -inf
        %3113 = vmax.xlane.f32.xlu0 %v3112
        %v3114 = vpop.xlane.xlu0 %3113
        %v3115 = vsub.f32 %v3111, %v3114
        %v3116 = vmul.f32 %v3115, 1.442695
        %v3117 = vpow.pop %v3116
        %v3118 = vsel %vm2106, %v3117, 0.0
        %3119 = vadd.xlane.f32.xlu0 %v3118
        %v3120 = vpop.xlane.xlu0 %3119
        %v3121 = vrcp.pop %v3120
        %v3122 = vmul.f32 %v3117, %v3121
        %v3123 = vpack.c.bf16 %v3122, %v3122
        %3124 = vrot.lane.b32.xlu0 %v2690, 32
        %v3125 = vpop.permute.xlu0 %3124
        %v3127 = vsel %vm2106, %v3123, 0
        %v3130 = vsel %vm2123, %v3125, 0
        %3132 = vmatpush.bf16.msra.mxu0 0
        %3133 = vmatpush.bf16.msra.mxu0 0
        %3134 = vmatpush.bf16.msra.mxu0 0
        %3135 = vmatpush.bf16.msra.mxu0 0
        %3136 = vmatpush.bf16.msra.mxu0 0
        %3137 = vmatpush.bf16.msra.mxu0 0
        %3138 = vmatpush.bf16.msra.mxu0 0
        %3139 = vmatpush.bf16.msra.mxu0 %v3130
        %3140 = vmatmul.bf16.gmra.mxu0 %v3127
        %v3141 = vpop.f32.mrf.mxu0
        %v3142 = vadd.f32 0.0, %v3141
        %v3143 = vpop.f32.mrf.mxu0
        %3144 = vdwg.mxu0
        %v3145 = vpack.c.bf16 %v3142, %v3142
        %v3146 = vld [vmem:[#allocation4 + $0x150] sm:$0xff]
        %v3147 = vld [vmem:[#allocation4 + $0x158] sm:$0xf]
        %v3148 = vld [vmem:[#allocation4 + $0x15c] sm:$0xff]
        %v3149 = vld [vmem:[#allocation4 + $0x164] sm:$0xf]
        %v3150 = vld [vmem:[#allocation4 + $0x168] sm:$0xff]
        %v3151 = vld [vmem:[#allocation4 + $0x170] sm:$0xf]
        %v3152 = vld [vmem:[#allocation4 + $0x174] sm:$0xff]
        %v3153 = vld [vmem:[#allocation4 + $0x17c] sm:$0xf]
        %v3162 = vunpack.c.l.b16 %v3146
        %v3163 = vunpack.c.h.b16 %v3146
        %v3164 = vunpack.c.l.b16 %v3147
        %v3165 = vunpack.c.l.b16 %v3148
        %v3166 = vunpack.c.h.b16 %v3148
        %v3167 = vunpack.c.l.b16 %v3149
        %v3168 = vunpack.c.l.b16 %v3150
        %v3169 = vunpack.c.h.b16 %v3150
        %v3170 = vunpack.c.l.b16 %v3151
        %v3171 = vunpack.c.l.b16 %v3152
        %v3172 = vunpack.c.h.b16 %v3152
        %v3173 = vunpack.c.l.b16 %v3153
        %v3174 = vpack.c.b16 %v3165, %v3162
        %v3175 = vpack.c.b16 %v3166, %v3163
        %v3176 = vpack.c.b16 %v3167, %v3164
        %v3177 = vpack.c.b16 %v3171, %v3168
        %v3178 = vpack.c.b16 %v3172, %v3169
        %v3179 = vpack.c.b16 %v3173, %v3170
        %v3187 = vsel %vm2081, %v3145, 0
        %3189 = vmatpush.bf16.msra.mxu0 0
        %3190 = vmatpush.bf16.msra.mxu0 0
        %3191 = vmatpush.bf16.msra.mxu0 0
        %3192 = vmatpush.bf16.msra.mxu0 0
        %3193 = vmatpush.bf16.msra.mxu0 0
        %3194 = vmatpush.bf16.msra.mxu0 0
        %3195 = vmatpush.bf16.msra.mxu0 %v3177
        %3196 = vmatpush.bf16.msra.mxu0 %v3174
        %3197 = vmatmul.bf16.gmra.mxu0 %v3187
        %v3198 = vpop.f32.mrf.mxu0
        %v3199 = vadd.f32 0.0, %v3198
        %v3200 = vpop.f32.mrf.mxu0
        %3201 = vdwg.mxu0
        %3202 = vmatpush.bf16.msra.mxu0 0
        %3203 = vmatpush.bf16.msra.mxu0 0
        %3204 = vmatpush.bf16.msra.mxu0 0
        %3205 = vmatpush.bf16.msra.mxu0 0
        %3206 = vmatpush.bf16.msra.mxu0 0
        %3207 = vmatpush.bf16.msra.mxu0 0
        %3208 = vmatpush.bf16.msra.mxu0 %v3178
        %3209 = vmatpush.bf16.msra.mxu0 %v3175
        %3210 = vmatmul.bf16.gmra.mxu0 %v3187
        %v3211 = vpop.f32.mrf.mxu0
        %v3212 = vadd.f32 0.0, %v3211
        %v3213 = vpop.f32.mrf.mxu0
        %3214 = vdwg.mxu0
        %3215 = vmatpush.bf16.msra.mxu0 0
        %3216 = vmatpush.bf16.msra.mxu0 0
        %3217 = vmatpush.bf16.msra.mxu0 0
        %3218 = vmatpush.bf16.msra.mxu0 0
        %3219 = vmatpush.bf16.msra.mxu0 0
        %3220 = vmatpush.bf16.msra.mxu0 0
        %3221 = vmatpush.bf16.msra.mxu0 %v3179
        %3222 = vmatpush.bf16.msra.mxu0 %v3176
        %3223 = vmatmul.bf16.gmra.mxu0 %v3187
        %v3224 = vpop.f32.mrf.mxu0
        %v3225 = vadd.f32 0.0, %v3224
        %v3226 = vpop.f32.mrf.mxu0
        %3227 = vdwg.mxu0
        %v3228 = vadd.f32 %v3084, %v3199
        %v3229 = vadd.f32 %v3085, %v3212
        %v3230 = vadd.f32 %v3086, %v3225
        %v3231 = vpack.c.bf16 %v1841, %v1841
        %v3232 = vpack.c.bf16 %v1958, %v1958
        %v3234 = vsel %vm2081, %v3231, 0
        %v3237 = vsel %vm2081, %v3232, 0
        %3239 = vmatpush.bf16.xpose.msra.mxu0 0
        %3240 = vmatpush.bf16.xpose.msra.mxu0 0
        %3241 = vmatpush.bf16.xpose.msra.mxu0 0
        %3242 = vmatpush.bf16.xpose.msra.mxu0 0
        %3243 = vmatpush.bf16.xpose.msra.mxu0 0
        %3244 = vmatpush.bf16.xpose.msra.mxu0 0
        %3245 = vmatpush.bf16.xpose.msra.mxu0 0
        %3246 = vmatpush.bf16.xpose.msra.mxu0 %v3237
        %3247 = vmatmul.bf16.gmra.mxu0 %v3234
        %v3248 = vpop.f32.mrf.mxu0
        %v3249 = vadd.f32 0.0, %v3248
        %v3250 = vpop.f32.mrf.mxu0
        %3251 = vdwg.mxu0
        %v3252 = vmul.f32 %v3249, 0.19611613
        %v3253 = vadd.f32 %v3252, %v2103
        %v3254 = vsel %vm2106, %v3253, -inf
        %3255 = vmax.xlane.f32.xlu0 %v3254
        %v3256 = vpop.xlane.xlu0 %3255
        %v3257 = vsub.f32 %v3253, %v3256
        %v3258 = vmul.f32 %v3257, 1.442695
        %v3259 = vpow.pop %v3258
        %v3260 = vsel %vm2106, %v3259, 0.0
        %3261 = vadd.xlane.f32.xlu0 %v3260
        %v3262 = vpop.xlane.xlu0 %3261
        %v3263 = vrcp.pop %v3262
        %v3264 = vmul.f32 %v3259, %v3263
        %v3265 = vpack.c.bf16 %v3264, %v3264
        %v3266 = vpack.c.bf16 %v2075, %v2075
        %v3268 = vsel %vm2106, %v3265, 0
        %v3271 = vsel %vm2123, %v3266, 0
        %3273 = vmatpush.bf16.msra.mxu0 0
        %3274 = vmatpush.bf16.msra.mxu0 0
        %3275 = vmatpush.bf16.msra.mxu0 0
        %3276 = vmatpush.bf16.msra.mxu0 0
        %3277 = vmatpush.bf16.msra.mxu0 0
        %3278 = vmatpush.bf16.msra.mxu0 0
        %3279 = vmatpush.bf16.msra.mxu0 0
        %3280 = vmatpush.bf16.msra.mxu0 %v3271
        %3281 = vmatmul.bf16.gmra.mxu0 %v3268
        %v3282 = vpop.f32.mrf.mxu0
        %v3283 = vadd.f32 0.0, %v3282
        %v3284 = vpop.f32.mrf.mxu0
        %3285 = vdwg.mxu0
        %v3286 = vpack.c.bf16 %v3283, %v3283
        %v3287 = vld [vmem:[#allocation4 + $0x180] sm:$0xff]
        %v3288 = vld [vmem:[#allocation4 + $0x188] sm:$0xf]
        %v3289 = vld [vmem:[#allocation4 + $0x18c] sm:$0xff]
        %v3290 = vld [vmem:[#allocation4 + $0x194] sm:$0xf]
        %v3291 = vld [vmem:[#allocation4 + $0x198] sm:$0xff]
        %v3292 = vld [vmem:[#allocation4 + $0x1a0] sm:$0xf]
        %v3293 = vld [vmem:[#allocation4 + $0x1a4] sm:$0xff]
        %v3294 = vld [vmem:[#allocation4 + $0x1ac] sm:$0xf]
        %v3303 = vunpack.c.l.b16 %v3287
        %v3304 = vunpack.c.h.b16 %v3287
        %v3305 = vunpack.c.l.b16 %v3288
        %v3306 = vunpack.c.l.b16 %v3289
        %v3307 = vunpack.c.h.b16 %v3289
        %v3308 = vunpack.c.l.b16 %v3290
        %v3309 = vunpack.c.l.b16 %v3291
        %v3310 = vunpack.c.h.b16 %v3291
        %v3311 = vunpack.c.l.b16 %v3292
        %v3312 = vunpack.c.l.b16 %v3293
        %v3313 = vunpack.c.h.b16 %v3293
        %v3314 = vunpack.c.l.b16 %v3294
        %v3315 = vpack.c.b16 %v3306, %v3303
        %v3316 = vpack.c.b16 %v3307, %v3304
        %v3317 = vpack.c.b16 %v3308, %v3305
        %v3318 = vpack.c.b16 %v3312, %v3309
        %v3319 = vpack.c.b16 %v3313, %v3310
        %v3320 = vpack.c.b16 %v3314, %v3311
        %v3328 = vsel %vm2081, %v3286, 0
        %3330 = vmatpush.bf16.msra.mxu0 0
        %3331 = vmatpush.bf16.msra.mxu0 0
        %3332 = vmatpush.bf16.msra.mxu0 0
        %3333 = vmatpush.bf16.msra.mxu0 0
        %3334 = vmatpush.bf16.msra.mxu0 0
        %3335 = vmatpush.bf16.msra.mxu0 0
        %3336 = vmatpush.bf16.msra.mxu0 %v3318
        %3337 = vmatpush.bf16.msra.mxu0 %v3315
        %3338 = vmatmul.bf16.gmra.mxu0 %v3328
        %v3339 = vpop.f32.mrf.mxu0
        %v3340 = vadd.f32 0.0, %v3339
        %v3341 = vpop.f32.mrf.mxu0
        %3342 = vdwg.mxu0
        %3343 = vmatpush.bf16.msra.mxu0 0
        %3344 = vmatpush.bf16.msra.mxu0 0
        %3345 = vmatpush.bf16.msra.mxu0 0
        %3346 = vmatpush.bf16.msra.mxu0 0
        %3347 = vmatpush.bf16.msra.mxu0 0
        %3348 = vmatpush.bf16.msra.mxu0 0
        %3349 = vmatpush.bf16.msra.mxu0 %v3319
        %3350 = vmatpush.bf16.msra.mxu0 %v3316
        %3351 = vmatmul.bf16.gmra.mxu0 %v3328
        %v3352 = vpop.f32.mrf.mxu0
        %v3353 = vadd.f32 0.0, %v3352
        %v3354 = vpop.f32.mrf.mxu0
        %3355 = vdwg.mxu0
        %3356 = vmatpush.bf16.msra.mxu0 0
        %3357 = vmatpush.bf16.msra.mxu0 0
        %3358 = vmatpush.bf16.msra.mxu0 0
        %3359 = vmatpush.bf16.msra.mxu0 0
        %3360 = vmatpush.bf16.msra.mxu0 0
        %3361 = vmatpush.bf16.msra.mxu0 0
        %3362 = vmatpush.bf16.msra.mxu0 %v3320
        %3363 = vmatpush.bf16.msra.mxu0 %v3317
        %3364 = vmatmul.bf16.gmra.mxu0 %v3328
        %v3365 = vpop.f32.mrf.mxu0
        %v3366 = vadd.f32 0.0, %v3365
        %v3367 = vpop.f32.mrf.mxu0
        %3368 = vdwg.mxu0
        %v3369 = vadd.f32 %v3228, %v3340
        %v3370 = vadd.f32 %v3229, %v3353
        %v3371 = vadd.f32 %v3230, %v3366
        %3373 = vrot.lane.b32.xlu0 %v3231, 96
        %v3374 = vpop.permute.xlu0 %3373
        %3376 = vrot.lane.b32.xlu0 %v3232, 96
        %v3377 = vpop.permute.xlu0 %3376
        %v3379 = vsel %vm2081, %v3374, 0
        %v3382 = vsel %vm2081, %v3377, 0
        %3384 = vmatpush.bf16.xpose.msra.mxu0 0
        %3385 = vmatpush.bf16.xpose.msra.mxu0 0
        %3386 = vmatpush.bf16.xpose.msra.mxu0 0
        %3387 = vmatpush.bf16.xpose.msra.mxu0 0
        %3388 = vmatpush.bf16.xpose.msra.mxu0 0
        %3389 = vmatpush.bf16.xpose.msra.mxu0 0
        %3390 = vmatpush.bf16.xpose.msra.mxu0 0
        %3391 = vmatpush.bf16.xpose.msra.mxu0 %v3382
        %3392 = vmatmul.bf16.gmra.mxu0 %v3379
        %v3393 = vpop.f32.mrf.mxu0
        %v3394 = vadd.f32 0.0, %v3393
        %v3395 = vpop.f32.mrf.mxu0
        %3396 = vdwg.mxu0
        %v3397 = vmul.f32 %v3394, 0.19611613
        %v3398 = vadd.f32 %v3397, %v2103
        %v3399 = vsel %vm2106, %v3398, -inf
        %3400 = vmax.xlane.f32.xlu0 %v3399
        %v3401 = vpop.xlane.xlu0 %3400
        %v3402 = vsub.f32 %v3398, %v3401
        %v3403 = vmul.f32 %v3402, 1.442695
        %v3404 = vpow.pop %v3403
        %v3405 = vsel %vm2106, %v3404, 0.0
        %3406 = vadd.xlane.f32.xlu0 %v3405
        %v3407 = vpop.xlane.xlu0 %3406
        %v3408 = vrcp.pop %v3407
        %v3409 = vmul.f32 %v3404, %v3408
        %v3410 = vpack.c.bf16 %v3409, %v3409
        %3412 = vrot.lane.b32.xlu0 %v3266, 96
        %v3413 = vpop.permute.xlu0 %3412
        %v3415 = vsel %vm2106, %v3410, 0
        %v3418 = vsel %vm2123, %v3413, 0
        %3420 = vmatpush.bf16.msra.mxu0 0
        %3421 = vmatpush.bf16.msra.mxu0 0
        %3422 = vmatpush.bf16.msra.mxu0 0
        %3423 = vmatpush.bf16.msra.mxu0 0
        %3424 = vmatpush.bf16.msra.mxu0 0
        %3425 = vmatpush.bf16.msra.mxu0 0
        %3426 = vmatpush.bf16.msra.mxu0 0
        %3427 = vmatpush.bf16.msra.mxu0 %v3418
        %3428 = vmatmul.bf16.gmra.mxu0 %v3415
        %v3429 = vpop.f32.mrf.mxu0
        %v3430 = vadd.f32 0.0, %v3429
        %v3431 = vpop.f32.mrf.mxu0
        %3432 = vdwg.mxu0
        %v3433 = vpack.c.bf16 %v3430, %v3430
        %v3434 = vld [vmem:[#allocation4 + $0x1b0] sm:$0xff]
        %v3435 = vld [vmem:[#allocation4 + $0x1b8] sm:$0xf]
        %v3436 = vld [vmem:[#allocation4 + $0x1bc] sm:$0xff]
        %v3437 = vld [vmem:[#allocation4 + $0x1c4] sm:$0xf]
        %v3438 = vld [vmem:[#allocation4 + $0x1c8] sm:$0xff]
        %v3439 = vld [vmem:[#allocation4 + $0x1d0] sm:$0xf]
        %v3440 = vld [vmem:[#allocation4 + $0x1d4] sm:$0xff]
        %v3441 = vld [vmem:[#allocation4 + $0x1dc] sm:$0xf]
        %v3450 = vunpack.c.l.b16 %v3434
        %v3451 = vunpack.c.h.b16 %v3434
        %v3452 = vunpack.c.l.b16 %v3435
        %v3453 = vunpack.c.l.b16 %v3436
        %v3454 = vunpack.c.h.b16 %v3436
        %v3455 = vunpack.c.l.b16 %v3437
        %v3456 = vunpack.c.l.b16 %v3438
        %v3457 = vunpack.c.h.b16 %v3438
        %v3458 = vunpack.c.l.b16 %v3439
        %v3459 = vunpack.c.l.b16 %v3440
        %v3460 = vunpack.c.h.b16 %v3440
        %v3461 = vunpack.c.l.b16 %v3441
        %v3462 = vpack.c.b16 %v3453, %v3450
        %v3463 = vpack.c.b16 %v3454, %v3451
        %v3464 = vpack.c.b16 %v3455, %v3452
        %v3465 = vpack.c.b16 %v3459, %v3456
        %v3466 = vpack.c.b16 %v3460, %v3457
        %v3467 = vpack.c.b16 %v3461, %v3458
        %v3475 = vsel %vm2081, %v3433, 0
        %3477 = vmatpush.bf16.msra.mxu0 0
        %3478 = vmatpush.bf16.msra.mxu0 0
        %3479 = vmatpush.bf16.msra.mxu0 0
        %3480 = vmatpush.bf16.msra.mxu0 0
        %3481 = vmatpush.bf16.msra.mxu0 0
        %3482 = vmatpush.bf16.msra.mxu0 0
        %3483 = vmatpush.bf16.msra.mxu0 %v3465
        %3484 = vmatpush.bf16.msra.mxu0 %v3462
        %3485 = vmatmul.bf16.gmra.mxu0 %v3475
        %v3486 = vpop.f32.mrf.mxu0
        %v3487 = vadd.f32 0.0, %v3486
        %v3488 = vpop.f32.mrf.mxu0
        %3489 = vdwg.mxu0
        %3490 = vmatpush.bf16.msra.mxu0 0
        %3491 = vmatpush.bf16.msra.mxu0 0
        %3492 = vmatpush.bf16.msra.mxu0 0
        %3493 = vmatpush.bf16.msra.mxu0 0
        %3494 = vmatpush.bf16.msra.mxu0 0
        %3495 = vmatpush.bf16.msra.mxu0 0
        %3496 = vmatpush.bf16.msra.mxu0 %v3466
        %3497 = vmatpush.bf16.msra.mxu0 %v3463
        %3498 = vmatmul.bf16.gmra.mxu0 %v3475
        %v3499 = vpop.f32.mrf.mxu0
        %v3500 = vadd.f32 0.0, %v3499
        %v3501 = vpop.f32.mrf.mxu0
        %3502 = vdwg.mxu0
        %3503 = vmatpush.bf16.msra.mxu0 0
        %3504 = vmatpush.bf16.msra.mxu0 0
        %3505 = vmatpush.bf16.msra.mxu0 0
        %3506 = vmatpush.bf16.msra.mxu0 0
        %3507 = vmatpush.bf16.msra.mxu0 0
        %3508 = vmatpush.bf16.msra.mxu0 0
        %3509 = vmatpush.bf16.msra.mxu0 %v3467
        %3510 = vmatpush.bf16.msra.mxu0 %v3464
        %3511 = vmatmul.bf16.gmra.mxu0 %v3475
        %v3512 = vpop.f32.mrf.mxu0
        %v3513 = vadd.f32 0.0, %v3512
        %v3514 = vpop.f32.mrf.mxu0
        %3515 = vdwg.mxu0
        %v3516 = vadd.f32 %v3369, %v3487
        %v3517 = vadd.f32 %v3370, %v3500
        %v3518 = vadd.f32 %v3371, %v3513
        %3519 = vrot.lane.b32.xlu0 %v3231, 64
        %v3520 = vpop.permute.xlu0 %3519
        %3521 = vrot.lane.b32.xlu0 %v3232, 64
        %v3522 = vpop.permute.xlu0 %3521
        %v3524 = vsel %vm2081, %v3520, 0
        %v3527 = vsel %vm2081, %v3522, 0
        %3529 = vmatpush.bf16.xpose.msra.mxu0 0
        %3530 = vmatpush.bf16.xpose.msra.mxu0 0
        %3531 = vmatpush.bf16.xpose.msra.mxu0 0
        %3532 = vmatpush.bf16.xpose.msra.mxu0 0
        %3533 = vmatpush.bf16.xpose.msra.mxu0 0
        %3534 = vmatpush.bf16.xpose.msra.mxu0 0
        %3535 = vmatpush.bf16.xpose.msra.mxu0 0
        %3536 = vmatpush.bf16.xpose.msra.mxu0 %v3527
        %3537 = vmatmul.bf16.gmra.mxu0 %v3524
        %v3538 = vpop.f32.mrf.mxu0
        %v3539 = vadd.f32 0.0, %v3538
        %v3540 = vpop.f32.mrf.mxu0
        %3541 = vdwg.mxu0
        %v3542 = vmul.f32 %v3539, 0.19611613
        %v3543 = vadd.f32 %v3542, %v2103
        %v3544 = vsel %vm2106, %v3543, -inf
        %3545 = vmax.xlane.f32.xlu0 %v3544
        %v3546 = vpop.xlane.xlu0 %3545
        %v3547 = vsub.f32 %v3543, %v3546
        %v3548 = vmul.f32 %v3547, 1.442695
        %v3549 = vpow.pop %v3548
        %v3550 = vsel %vm2106, %v3549, 0.0
        %3551 = vadd.xlane.f32.xlu0 %v3550
        %v3552 = vpop.xlane.xlu0 %3551
        %v3553 = vrcp.pop %v3552
        %v3554 = vmul.f32 %v3549, %v3553
        %v3555 = vpack.c.bf16 %v3554, %v3554
        %3556 = vrot.lane.b32.xlu0 %v3266, 64
        %v3557 = vpop.permute.xlu0 %3556
        %v3559 = vsel %vm2106, %v3555, 0
        %v3562 = vsel %vm2123, %v3557, 0
        %3564 = vmatpush.bf16.msra.mxu0 0
        %3565 = vmatpush.bf16.msra.mxu0 0
        %3566 = vmatpush.bf16.msra.mxu0 0
        %3567 = vmatpush.bf16.msra.mxu0 0
        %3568 = vmatpush.bf16.msra.mxu0 0
        %3569 = vmatpush.bf16.msra.mxu0 0
        %3570 = vmatpush.bf16.msra.mxu0 0
        %3571 = vmatpush.bf16.msra.mxu0 %v3562
        %3572 = vmatmul.bf16.gmra.mxu0 %v3559
        %v3573 = vpop.f32.mrf.mxu0
        %v3574 = vadd.f32 0.0, %v3573
        %v3575 = vpop.f32.mrf.mxu0
        %3576 = vdwg.mxu0
        %v3577 = vpack.c.bf16 %v3574, %v3574
        %v3578 = vld [vmem:[#allocation4 + $0x1e0] sm:$0xff]
        %v3579 = vld [vmem:[#allocation4 + $0x1e8] sm:$0xf]
        %v3580 = vld [vmem:[#allocation4 + $0x1ec] sm:$0xff]
        %v3581 = vld [vmem:[#allocation4 + $0x1f4] sm:$0xf]
        %v3582 = vld [vmem:[#allocation4 + $0x1f8] sm:$0xff]
        %v3583 = vld [vmem:[#allocation4 + $0x200] sm:$0xf]
        %v3584 = vld [vmem:[#allocation4 + $0x204] sm:$0xff]
        %v3585 = vld [vmem:[#allocation4 + $0x20c] sm:$0xf]
        %v3594 = vunpack.c.l.b16 %v3578
        %v3595 = vunpack.c.h.b16 %v3578
        %v3596 = vunpack.c.l.b16 %v3579
        %v3597 = vunpack.c.l.b16 %v3580
        %v3598 = vunpack.c.h.b16 %v3580
        %v3599 = vunpack.c.l.b16 %v3581
        %v3600 = vunpack.c.l.b16 %v3582
        %v3601 = vunpack.c.h.b16 %v3582
        %v3602 = vunpack.c.l.b16 %v3583
        %v3603 = vunpack.c.l.b16 %v3584
        %v3604 = vunpack.c.h.b16 %v3584
        %v3605 = vunpack.c.l.b16 %v3585
        %v3606 = vpack.c.b16 %v3597, %v3594
        %v3607 = vpack.c.b16 %v3598, %v3595
        %v3608 = vpack.c.b16 %v3599, %v3596
        %v3609 = vpack.c.b16 %v3603, %v3600
        %v3610 = vpack.c.b16 %v3604, %v3601
        %v3611 = vpack.c.b16 %v3605, %v3602
        %v3619 = vsel %vm2081, %v3577, 0
        %3621 = vmatpush.bf16.msra.mxu0 0
        %3622 = vmatpush.bf16.msra.mxu0 0
        %3623 = vmatpush.bf16.msra.mxu0 0
        %3624 = vmatpush.bf16.msra.mxu0 0
        %3625 = vmatpush.bf16.msra.mxu0 0
        %3626 = vmatpush.bf16.msra.mxu0 0
        %3627 = vmatpush.bf16.msra.mxu0 %v3609
        %3628 = vmatpush.bf16.msra.mxu0 %v3606
        %3629 = vmatmul.bf16.gmra.mxu0 %v3619
        %v3630 = vpop.f32.mrf.mxu0
        %v3631 = vadd.f32 0.0, %v3630
        %v3632 = vpop.f32.mrf.mxu0
        %3633 = vdwg.mxu0
        %3634 = vmatpush.bf16.msra.mxu0 0
        %3635 = vmatpush.bf16.msra.mxu0 0
        %3636 = vmatpush.bf16.msra.mxu0 0
        %3637 = vmatpush.bf16.msra.mxu0 0
        %3638 = vmatpush.bf16.msra.mxu0 0
        %3639 = vmatpush.bf16.msra.mxu0 0
        %3640 = vmatpush.bf16.msra.mxu0 %v3610
        %3641 = vmatpush.bf16.msra.mxu0 %v3607
        %3642 = vmatmul.bf16.gmra.mxu0 %v3619
        %v3643 = vpop.f32.mrf.mxu0
        %v3644 = vadd.f32 0.0, %v3643
        %v3645 = vpop.f32.mrf.mxu0
        %3646 = vdwg.mxu0
        %3647 = vmatpush.bf16.msra.mxu0 0
        %3648 = vmatpush.bf16.msra.mxu0 0
        %3649 = vmatpush.bf16.msra.mxu0 0
        %3650 = vmatpush.bf16.msra.mxu0 0
        %3651 = vmatpush.bf16.msra.mxu0 0
        %3652 = vmatpush.bf16.msra.mxu0 0
        %3653 = vmatpush.bf16.msra.mxu0 %v3611
        %3654 = vmatpush.bf16.msra.mxu0 %v3608
        %3655 = vmatmul.bf16.gmra.mxu0 %v3619
        %v3656 = vpop.f32.mrf.mxu0
        %v3657 = vadd.f32 0.0, %v3656
        %v3658 = vpop.f32.mrf.mxu0
        %3659 = vdwg.mxu0
        %v3660 = vadd.f32 %v3516, %v3631
        %v3661 = vadd.f32 %v3517, %v3644
        %v3662 = vadd.f32 %v3518, %v3657
        %3663 = vrot.lane.b32.xlu0 %v3231, 32
        %v3664 = vpop.permute.xlu0 %3663
        %3665 = vrot.lane.b32.xlu0 %v3232, 32
        %v3666 = vpop.permute.xlu0 %3665
        %v3668 = vsel %vm2081, %v3664, 0
        %v3671 = vsel %vm2081, %v3666, 0
        %3673 = vmatpush.bf16.xpose.msra.mxu0 0
        %3674 = vmatpush.bf16.xpose.msra.mxu0 0
        %3675 = vmatpush.bf16.xpose.msra.mxu0 0
        %3676 = vmatpush.bf16.xpose.msra.mxu0 0
        %3677 = vmatpush.bf16.xpose.msra.mxu0 0
        %3678 = vmatpush.bf16.xpose.msra.mxu0 0
        %3679 = vmatpush.bf16.xpose.msra.mxu0 0
        %3680 = vmatpush.bf16.xpose.msra.mxu0 %v3671
        %3681 = vmatmul.bf16.gmra.mxu0 %v3668
        %v3682 = vpop.f32.mrf.mxu0
        %v3683 = vadd.f32 0.0, %v3682
        %v3684 = vpop.f32.mrf.mxu0
        %3685 = vdwg.mxu0
        %v3686 = vmul.f32 %v3683, 0.19611613
        %v3687 = vadd.f32 %v3686, %v2103
        %v3688 = vsel %vm2106, %v3687, -inf
        %3689 = vmax.xlane.f32.xlu0 %v3688
        %v3690 = vpop.xlane.xlu0 %3689
        %v3691 = vsub.f32 %v3687, %v3690
        %v3692 = vmul.f32 %v3691, 1.442695
        %v3693 = vpow.pop %v3692
        %v3694 = vsel %vm2106, %v3693, 0.0
        %3695 = vadd.xlane.f32.xlu0 %v3694
        %v3696 = vpop.xlane.xlu0 %3695
        %v3697 = vrcp.pop %v3696
        %v3698 = vmul.f32 %v3693, %v3697
        %v3699 = vpack.c.bf16 %v3698, %v3698
        %3700 = vrot.lane.b32.xlu0 %v3266, 32
        %v3701 = vpop.permute.xlu0 %3700
        %v3703 = vsel %vm2106, %v3699, 0
        %v3706 = vsel %vm2123, %v3701, 0
        %3708 = vmatpush.bf16.msra.mxu0 0
        %3709 = vmatpush.bf16.msra.mxu0 0
        %3710 = vmatpush.bf16.msra.mxu0 0
        %3711 = vmatpush.bf16.msra.mxu0 0
        %3712 = vmatpush.bf16.msra.mxu0 0
        %3713 = vmatpush.bf16.msra.mxu0 0
        %3714 = vmatpush.bf16.msra.mxu0 0
        %3715 = vmatpush.bf16.msra.mxu0 %v3706
        %3716 = vmatmul.bf16.gmra.mxu0 %v3703
        %v3717 = vpop.f32.mrf.mxu0
        %v3718 = vadd.f32 0.0, %v3717
        %v3719 = vpop.f32.mrf.mxu0
        %3720 = vdwg.mxu0
        %v3721 = vpack.c.bf16 %v3718, %v3718
        %v3722 = vld [vmem:[#allocation4 + $0x210] sm:$0xff]
        %v3723 = vld [vmem:[#allocation4 + $0x218] sm:$0xf]
        %v3724 = vld [vmem:[#allocation4 + $0x21c] sm:$0xff]
        %v3725 = vld [vmem:[#allocation4 + $0x224] sm:$0xf]
        %v3726 = vld [vmem:[#allocation4 + $0x228] sm:$0xff]
        %v3727 = vld [vmem:[#allocation4 + $0x230] sm:$0xf]
        %v3728 = vld [vmem:[#allocation4 + $0x234] sm:$0xff]
        %v3729 = vld [vmem:[#allocation4 + $0x23c] sm:$0xf]
        %v3738 = vunpack.c.l.b16 %v3722
        %v3739 = vunpack.c.h.b16 %v3722
        %v3740 = vunpack.c.l.b16 %v3723
        %v3741 = vunpack.c.l.b16 %v3724
        %v3742 = vunpack.c.h.b16 %v3724
        %v3743 = vunpack.c.l.b16 %v3725
        %v3744 = vunpack.c.l.b16 %v3726
        %v3745 = vunpack.c.h.b16 %v3726
        %v3746 = vunpack.c.l.b16 %v3727
        %v3747 = vunpack.c.l.b16 %v3728
        %v3748 = vunpack.c.h.b16 %v3728
        %v3749 = vunpack.c.l.b16 %v3729
        %v3750 = vpack.c.b16 %v3741, %v3738
        %v3751 = vpack.c.b16 %v3742, %v3739
        %v3752 = vpack.c.b16 %v3743, %v3740
        %v3753 = vpack.c.b16 %v3747, %v3744
        %v3754 = vpack.c.b16 %v3748, %v3745
        %v3755 = vpack.c.b16 %v3749, %v3746
        %v3763 = vsel %vm2081, %v3721, 0
        %3765 = vmatpush.bf16.msra.mxu0 0
        %3766 = vmatpush.bf16.msra.mxu0 0
        %3767 = vmatpush.bf16.msra.mxu0 0
        %3768 = vmatpush.bf16.msra.mxu0 0
        %3769 = vmatpush.bf16.msra.mxu0 0
        %3770 = vmatpush.bf16.msra.mxu0 0
        %3771 = vmatpush.bf16.msra.mxu0 %v3753
        %3772 = vmatpush.bf16.msra.mxu0 %v3750
        %3773 = vmatmul.bf16.gmra.mxu0 %v3763
        %v3774 = vpop.f32.mrf.mxu0
        %v3775 = vadd.f32 0.0, %v3774
        %v3776 = vpop.f32.mrf.mxu0
        %3777 = vdwg.mxu0
        %3778 = vmatpush.bf16.msra.mxu0 0
        %3779 = vmatpush.bf16.msra.mxu0 0
        %3780 = vmatpush.bf16.msra.mxu0 0
        %3781 = vmatpush.bf16.msra.mxu0 0
        %3782 = vmatpush.bf16.msra.mxu0 0
        %3783 = vmatpush.bf16.msra.mxu0 0
        %3784 = vmatpush.bf16.msra.mxu0 %v3754
        %3785 = vmatpush.bf16.msra.mxu0 %v3751
        %3786 = vmatmul.bf16.gmra.mxu0 %v3763
        %v3787 = vpop.f32.mrf.mxu0
        %v3788 = vadd.f32 0.0, %v3787
        %v3789 = vpop.f32.mrf.mxu0
        %3790 = vdwg.mxu0
        %3791 = vmatpush.bf16.msra.mxu0 0
        %3792 = vmatpush.bf16.msra.mxu0 0
        %3793 = vmatpush.bf16.msra.mxu0 0
        %3794 = vmatpush.bf16.msra.mxu0 0
        %3795 = vmatpush.bf16.msra.mxu0 0
        %3796 = vmatpush.bf16.msra.mxu0 0
        %3797 = vmatpush.bf16.msra.mxu0 %v3755
        %3798 = vmatpush.bf16.msra.mxu0 %v3752
        %3799 = vmatmul.bf16.gmra.mxu0 %v3763
        %v3800 = vpop.f32.mrf.mxu0
        %v3801 = vadd.f32 0.0, %v3800
        %v3802 = vpop.f32.mrf.mxu0
        %3803 = vdwg.mxu0
        %v3804 = vadd.f32 %v3660, %v3775
        %v3805 = vadd.f32 %v3661, %v3788
        %v3806 = vadd.f32 %v3662, %v3801
        %v3807 = vld [vmem:[%s5] sm:$0x7]
        %v3809 = vperm.slane %v3807, 0
        %v3810 = vperm.slane %v3807, 1
        %v3811 = vperm.slane %v3807, 2
        %v3815 = vadd.f32 %v3804, %v3809
        %v3816 = vadd.f32 %v3805, %v3810
        %v3817 = vadd.f32 %v3806, %v3811
        %v3818 = vadd.f32 %v3815, %v355
        %v3819 = vadd.f32 %v3816, %v356
        %v3820 = vadd.f32 %v3817, %v357
        %v3821 = vld [vmem:[%s6] sm:$0x7]
        %v3822 = vld [vmem:[%s7] sm:$0x7]
        %v3823 = vadd.f32 %v3818, %v3819
        %v3824 = vadd.f32 %v3823, %v3820
        %3825 = vadd.xlane.f32.xlu0 %v3824
        %v3826 = vpop.xlane.xlu0 %3825
        %v3827 = vmul.f32 %v3826, 0.0032051282
        %v3828 = vlaneseq
        %v3829 = vand.u32 %v3828, 127
        %v3830 = vadd.s32 %v3829, 128
        %v3831 = vadd.s32 %v3829, 256
        %vm3832 = vcmp.lt.s32.totalorder %v3829, 312
        %vm3833 = vcmp.lt.s32.totalorder %v3830, 312
        %vm3834 = vcmp.lt.s32.totalorder %v3831, 312
        %v3835 = vsel %vm3832, 1, 0
        %v3836 = vsel %vm3833, 1, 0
        %v3837 = vsel %vm3834, 1, 0
        %v3838 = vcvt.s32.f32 %v3835
        %v3839 = vcvt.s32.f32 %v3836
        %v3840 = vcvt.s32.f32 %v3837
        %v3841 = vsub.f32 %v3818, %v3827
        %v3842 = vsub.f32 %v3819, %v3827
        %v3843 = vsub.f32 %v3820, %v3827
        %v3844 = vmul.f32 %v3841, %v3838
        %v3845 = vmul.f32 %v3842, %v3839
        %v3846 = vmul.f32 %v3843, %v3840
        %v3847 = vmul.f32 %v3844, %v3844
        %v3848 = vmul.f32 %v3845, %v3845
        %v3849 = vmul.f32 %v3846, %v3846
        %v3850 = vadd.f32 %v3847, %v3848
        %v3851 = vadd.f32 %v3850, %v3849
        %3852 = vadd.xlane.f32.xlu0 %v3851
        %v3853 = vpop.xlane.xlu0 %3852
        %v3854 = vmul.f32 %v3853, 0.0032051282
        %v3855 = vadd.f32 %v3854, 1e-12
        %v3856 = vrsqrt.pop %v3855
        %v3857 = vmul.f32 %v3856, %v3855
        %v3858 = vmul.f32 %v3857, %v3856
        %v3859 = vmul.f32 0.5, %v3858
        %v3860 = vsub.f32 1.5, %v3859
        %v3861 = vmul.f32 %v3856, %v3860
        %vm3862 = vweird.f32 %v3855
        %vm3863 = vweird.f32 %v3856
        %vm3864 = vmor %vm3862, %vm3863
        %v3865 = vsel %vm3864, %v3856, %v3861
        %v3866 = vmul.f32 %v3844, %v3865
        %v3867 = vmul.f32 %v3845, %v3865
        %v3868 = vmul.f32 %v3846, %v3865
        %v3870 = vperm.slane %v3821, 0
        %v3871 = vperm.slane %v3821, 1
        %v3872 = vperm.slane %v3821, 2
        %v3876 = vmul.f32 %v3866, %v3870
        %v3877 = vmul.f32 %v3867, %v3871
        %v3878 = vmul.f32 %v3868, %v3872
        %v3880 = vperm.slane %v3822, 0
        %v3881 = vperm.slane %v3822, 1
        %v3882 = vperm.slane %v3822, 2
        %v3886 = vadd.f32 %v3876, %v3880
        %v3887 = vadd.f32 %v3877, %v3881
        %v3888 = vadd.f32 %v3878, %v3882
        %3889 = vst [vmem:[%s353] sm:$0xff] %v3886
        %3890 = vst [vmem:[%s353 + $0x8] sm:$0xff] %v3887
        %3891 = vst [vmem:[%s353 + $0x10] sm:$0xff] %v3888
        %p3892 = scmp.lt.s32.totalorder %s21, 1
        %s3893 = scalar_select %p3892, %s21, 1
        %s3894 = smul.addr %s3893, 3
        %s3895 = smul.addr %s3894, 8
        %s3896 = scalar_lea.vmem %s8, %s3895
        // Predicated region
        $region61: #{bert_classifier_forward.9} parent=51 // pred_check
          %p3897 = pneg %p217
        $region62: #{bert_classifier_forward.9} parent=51 // pred_check_branch
          %3899 = sbr.rel (%p3897) target = $region64
        $region63: #{bert_classifier_forward.9} parent=51 // pred_region
          _
        $region64: #{bert_classifier_forward.9} parent=51 // pred_fallthru
          _
      $region52: #{bert_classifier_forward.9} parent=5 // pred_fallthru
        _
      %p3900 = scmp.le.s32.totalorder 2, %s16
      // Predicated region
      $region65: #{bert_classifier_forward.9} parent=5 // pred_check
        %p3901 = pneg %p3900
      $region66: #{bert_classifier_forward.9} parent=5 // pred_check_branch
        %3903 = sbr.rel (%p3901) target = $region68
      $region67: #{bert_classifier_forward.9} parent=5 // pred_region
        %s3904 = ssub.s32 %s16, 2
        // Predicated region
        $region69: #{bert_classifier_forward.9} parent=67 // pred_check
          %p3905 = pneg %p223
        $region70: #{bert_classifier_forward.9} parent=67 // pred_check_branch
          %3907 = sbr.rel (%p3905) target = $region72
        $region71: #{bert_classifier_forward.9} parent=67 // pred_region
          %p3908 = scmp.lt.s32.totalorder %s22, 1
          %s3909 = scalar_select %p3908, %s22, 1
          %s3910 = smul.addr %s3909, 3
          %s3911 = smul.addr %s3910, 8
          %s3912 = scalar_lea.vmem %s8, %s3911
        $region72: #{bert_classifier_forward.9} parent=67 // pred_fallthru
          _
      $region68: #{bert_classifier_forward.9} parent=5 // pred_fallthru
        _
    $region6: #{bert_classifier_forward.9} parent=1 // loop_footer
      %s20 = sadd.s32 1, %s16
    $region7: #{bert_classifier_forward.9} parent=1 // loop_footer_branch
      %15 = sbr.rel target = $region3
    $region8: #{bert_classifier_forward.9} parent=1 // loop_exit
      _
    %3913 = vsyncpa [#allocation3], 1
    %s3914 = scalar_lea.sflag [#allocation3], 1
    %3915 = vsyncpa %s3914, 1
    %3916 = vsyncpa [#allocation5], 1

</llo_original>
